<compile_context>
chip_gen: v7x
topology: tpu7x:2x2x1
jax: 0.10.0
libtpu: 0.0.40
codegen_flags: <defaults>
</compile_context>

<pallas_src>
import jax
import jax.numpy as jnp
from jax.experimental import pallas as pl
from jax.experimental.pallas import tpu as pltpu


def _round_up(x, m):
    return ((x + m - 1) // m) * m


def _deconv_cell_kernel(e_ref, h_ref, w_ref, o_ref):
    """One row-tile of "cells": each cell = 2x2 output pixels from a 2x2 input block.

    e_ref: (1, tc, Wp, Cin)   rows [t*tc, t*tc+tc) of edge-padded x   (Wp = W+2)
    h_ref: (1, 1,  Wp, Cin)   halo row t*tc+tc of the same tensor
    w_ref: (4*Cin, Npad)      folded per-phase 2x2 weights, K order (a, b, cin)
    o_ref: (1, tc, Wc, Npad)  phase-packed output cells (Wc = W+1)
    """
    _, tc, Wc, Npad = o_ref.shape
    et = jnp.concatenate([e_ref[0], h_ref[0]], axis=0)          # (tc+1, Wp, Cin)
    Cin = et.shape[-1]

    # 4 taps (2x2 source offsets) at ORIGINAL resolution -> one wide-K matmul.
    taps = []
    for a in range(2):
        for b in range(2):
            taps.append(et[a:a + tc, b:b + Wc, :].reshape(tc * Wc, Cin))
    patches = jnp.concatenate(taps, axis=1)                     # (tc*Wc, 4*Cin)

    acc = jnp.dot(patches, w_ref[...], preferred_element_type=jnp.float32)
    o_ref[...] = acc.reshape(1, tc, Wc, Npad).astype(o_ref.dtype)


def _fold_weights(weight_oihw):
    """OIHW 3x3 conv weight -> (4*Cin, 4*Cout) per-phase 2x2 weights.

    K index = (a*2 + b)*Cin + cin     (a, b) = 2x2 source offset
    N index = (u*2 + v)*Cout + cout   (u, v) = output phase inside a cell
    """
    Cout, Cin, _, _ = weight_oihw.shape
    w = jnp.transpose(weight_oihw, (2, 3, 1, 0))                # (3,3,Cin,Cout) HWIO
    # R[u, a, d] = 1 iff (d + u)//2 == a : which 2x2 offset tap d lands on
    R = jnp.array([[[1, 1, 0], [0, 0, 1]],
                   [[1, 0, 0], [0, 1, 1]]], dtype=w.dtype)
    wf = jnp.einsum("uay,vbx,yxci->abcuvi", R, R, w)            # (2,2,Cin,2,2,Cout)
    return wf.reshape(4 * Cin, 4 * Cout)


def _pick_cell_tile(Hc, Wp, Wc, Cin, Npad, itemsize, vmem_limit_bytes):
    """Largest tc (cell rows per tile) whose blocks + in-kernel temporaries fit VMEM."""
    lane = 128
    rl = lambda c: _round_up(max(int(c), 1), lane)
    per_tc = 0
    per_tc += 2 * Wp * rl(Cin) * itemsize           # double-buffered main input block
    per_tc += 2 * Wc * rl(Npad) * itemsize          # double-buffered output block
    per_tc += Wp * rl(Cin) * itemsize               # concatenated tile copy
    per_tc += 4 * Wc * rl(Cin) * itemsize           # 4 tap copies
    per_tc += Wc * rl(4 * Cin) * itemsize           # im2col patches
    per_tc += Wc * rl(Npad) * 4                     # f32 accumulator
    per_tc += Wc * rl(Npad) * itemsize              # store staging
    fixed = 2 * _round_up(4 * Cin, 8) * rl(Npad) * itemsize     # (double-buffered) weights
    fixed += 2 * Wp * rl(Cin) * itemsize                        # halo blocks
    budget = int(0.8 * vmem_limit_bytes) - fixed
    tc = max(1, min(int(Hc), budget // per_tc))
    return int(tc)


def deconv_forward(x_nchw, weight_oihw, scale=2, compute_dtype=None):
    """Equivalent of DeConv.forward. x_nchw: (N, Cin, H, W); returns NCHW.

    compute_dtype: optionally cast input/weights (e.g. jnp.bfloat16) to halve HBM
    traffic; accumulation stays f32.  Default keeps the input dtype (exact vs ref).
    """
    assert scale == 2, "fused kernel implements the module's default scale=2"
    N, Cin, H, W = x_nchw.shape
    Cout, Cin_w, kh, kw = weight_oihw.shape
    assert (Cin_w, kh, kw) == (Cin, 3, 3)

    out_dtype = x_nchw.dtype
    Hc, Wc, Wp = H + 1, W + 1, W + 2                 # cell grid over edge-padded x
    n_out = 4 * Cout
    Npad = n_out if n_out >= 128 else 128            # lane-dense store; pad sliced off below

    # ---- generation-aware VMEM budget & tile size --------------------------
    try:
        vmem_cap = int(pltpu.get_tpu_info().vmem_capacity_bytes)
    except Exception:
        vmem_cap = 64 << 20                          # conservative (v7x-sized) fallback
    vmem_limit = max(32 << 20, min(int(0.7 * vmem_cap), 96 << 20))

    cdt = jnp.dtype(compute_dtype) if compute_dtype is not None else jnp.dtype(out_dtype)
    itemsize = cdt.itemsize
    tc = _pick_cell_tile(Hc, Wp, Wc, Cin, Npad, itemsize, vmem_limit)
    n_tiles = -(-Hc // tc)                           # cdiv: tc need not divide Hc
    if N * n_tiles < 2 and Hc >= 2:                  # keep both v7x TensorCores busy
        tc = -(-Hc // 2)
        n_tiles = -(-Hc // tc)
    Hc_pad = n_tiles * tc

    # ---- cheap glue on the SMALL pre-upsample tensor only ------------------
    x = jnp.transpose(x_nchw, (0, 2, 3, 1))                                  # NHWC
    e = jnp.pad(x, ((0, 0), (1, 1), (1, 1), (0, 0)), mode="edge")            # (N, H+2, W+2, Cin)
    if Hc_pad > Hc:                                  # round cell rows up to the tile grid
        e = jnp.pad(e, ((0, 0), (0, Hc_pad - Hc), (0, 0), (0, 0)), mode="edge")
    # e now has exactly Hc_pad + 1 rows (main tiles + 1-row halo stay in bounds)

    w_fold = _fold_weights(weight_oihw)                                      # (4*Cin, 4*Cout)
    if Npad > n_out:
        w_fold = jnp.pad(w_fold, ((0, 0), (0, Npad - n_out)))

    if compute_dtype is not None:
        e = e.astype(compute_dtype)
        w_fold = w_fold.astype(compute_dtype)

    cost = pl.CostEstimate(
        flops=2 * N * Hc_pad * Wc * (4 * Cin) * Npad,
        transcendentals=0,
        bytes_accessed=(e.size + w_fold.size) * itemsize
        + N * Hc_pad * Wc * Npad * jnp.dtype(out_dtype).itemsize,
    )

    slab = pl.pallas_call(
        _deconv_cell_kernel,
        out_shape=jax.ShapeDtypeStruct((N, Hc_pad, Wc, Npad), out_dtype),
        grid=(N, n_tiles),
        in_specs=[
            # main rows of the tile (block-indexed, non-overlapping)
            pl.BlockSpec((1, tc, Wp, Cin), lambda n, t: (n, t, 0, 0)),
            # 1-row halo (block size 1 -> block index == row index)
            pl.BlockSpec((1, 1, Wp, Cin), lambda n, t: (n, t * tc + tc, 0, 0)),
            # folded weights, constant across the grid
            pl.BlockSpec((4 * Cin, Npad), lambda n, t: (0, 0)),
        ],
        out_specs=pl.BlockSpec((1, tc, Wc, Npad), lambda n, t: (n, t, 0, 0)),
        compiler_params=pltpu.CompilerParams(
            dimension_semantics=("parallel", "parallel"),
            vmem_limit_bytes=vmem_limit,
        ),
        cost_estimate=cost,
    )(e, e, w_fold)
    # TODO(synk): single-buffering the constant-weight operand (pipeline_mode=pl.Buffered(1))
    # would reclaim a little VMEM on v7x; left at the default for lowering robustness.

    # ---- de-interleave the 4 phase planes, crop, back to NCHW --------------
    o = slab[:, :Hc, :, :n_out].reshape(N, Hc, Wc, 2, 2, Cout)
    o = jnp.transpose(o, (0, 1, 3, 2, 4, 5)).reshape(N, 2 * Hc, 2 * Wc, Cout)
    o = o[:, 1:2 * H + 1, 1:2 * W + 1, :]
    return jnp.transpose(o, (0, 3, 1, 2))


def xavier_uniform_conv_weight(key, c_out, c_in, k):
    # matches nn.init.xavier_uniform_ on a (c_out, c_in, k, k) conv weight
    fan_in = c_in * k * k
    fan_out = c_out * k * k
    bound = (6.0 / (fan_in + fan_out)) ** 0.5
    return jax.random.uniform(key, (c_out, c_in, k, k),
                              minval=-bound, maxval=bound, dtype=jnp.float32)


if __name__ == "__main__":
    key = jax.random.PRNGKey(0)
    kx, kw = jax.random.split(key)

    N, C_IN, C_OUT, H, W = 2, 4, 8, 16, 16
    x = jax.random.normal(kx, (N, C_IN, H, W), dtype=jnp.float32)
    weight = xavier_uniform_conv_weight(kw, C_OUT, C_IN, 3)

    out = jax.jit(deconv_forward)(x, weight)
    out = jax.block_until_ready(out)
    assert out.shape == (N, C_OUT, 2 * H, 2 * W)

    # pure-JAX reference (explicit upsample + reflect pad + valid conv, as in PyTorch)
    x_nhwc = jnp.transpose(x, (0, 2, 3, 1))
    up = jnp.repeat(jnp.repeat(x_nhwc, 2, axis=1), 2, axis=2)
    xp = jnp.pad(up, ((0, 0), (1, 1), (1, 1), (0, 0)), mode="reflect")
    ref = jax.lax.conv_general_dilated(
        xp, jnp.transpose(weight, (2, 3, 1, 0)),
        window_strides=(1, 1), padding="VALID",
        dimension_numbers=("NHWC", "HWIO", "NHWC"))
    ref = jnp.transpose(ref, (0, 3, 1, 2))
    assert jnp.allclose(out, ref, atol=1e-4, rtol=1e-4)

    print("KERNEL_OK")
</pallas_src>

<mosaic_0001>
module attributes {stable_mosaic.version = 11 : i64} {
  func.func @_deconv_cell_kernel(%arg0: i32, %arg1: i32, %arg2: memref<1x17x18x4xf32, #tpu.memory_space<vmem>>, %arg3: memref<1x1x18x4xf32, #tpu.memory_space<vmem>>, %arg4: memref<16x128xf32, #tpu.memory_space<vmem>>, %arg5: memref<1x17x17x128xf32, #tpu.memory_space<vmem>>) attributes {dimension_semantics = [#tpu.dimension_semantics<parallel>, #tpu.dimension_semantics<parallel>], iteration_bounds = array<i64: 2, 1>, scalar_prefetch = 0 : i64, scratch_operands = 0 : i64, tpu.core_type = #tpu.core_type<tc>, window_params = [{transform_indices = @transform_0, window_bounds = array<i64: 1, 17, 18, 4>}, {transform_indices = @transform_1, window_bounds = array<i64: 1, 1, 18, 4>}, {pipeline_mode = #tpu.pipeline_mode<synchronous>, transform_indices = @transform_2, window_bounds = array<i64: 16, 128>}, {transform_indices = @transform_3, window_bounds = array<i64: 1, 17, 17, 128>}]} {
    %c0 = arith.constant 0 : index
    %c0_0 = arith.constant 0 : index
    %c0_1 = arith.constant 0 : index
    %c0_2 = arith.constant 0 : index
    %0 = vector.load %arg2[%c0, %c0_0, %c0_1, %c0_2] : memref<1x17x18x4xf32, #tpu.memory_space<vmem>>, vector<1x17x18x4xf32>
    %1 = vector.shape_cast %0 : vector<1x17x18x4xf32> to vector<17x18x4xf32>
    %c0_3 = arith.constant 0 : index
    %c0_4 = arith.constant 0 : index
    %c0_5 = arith.constant 0 : index
    %c0_6 = arith.constant 0 : index
    %2 = vector.load %arg3[%c0_3, %c0_4, %c0_5, %c0_6] : memref<1x1x18x4xf32, #tpu.memory_space<vmem>>, vector<1x1x18x4xf32>
    %3 = vector.shape_cast %2 : vector<1x1x18x4xf32> to vector<1x18x4xf32>
    %4 = tpu.concatenate %1, %3 in 0 : vector<17x18x4xf32>, vector<1x18x4xf32> -> vector<18x18x4xf32>
    %5 = vector.extract_strided_slice %4 {offsets = [0, 0, 0], sizes = [17, 17, 4], strides = [1, 1, 1]} : vector<18x18x4xf32> to vector<17x17x4xf32>
    %6 = vector.shape_cast %5 : vector<17x17x4xf32> to vector<289x4xf32>
    %7 = vector.extract_strided_slice %4 {offsets = [0, 1, 0], sizes = [17, 17, 4], strides = [1, 1, 1]} : vector<18x18x4xf32> to vector<17x17x4xf32>
    %8 = vector.shape_cast %7 : vector<17x17x4xf32> to vector<289x4xf32>
    %9 = vector.extract_strided_slice %4 {offsets = [1, 0, 0], sizes = [17, 17, 4], strides = [1, 1, 1]} : vector<18x18x4xf32> to vector<17x17x4xf32>
    %10 = vector.shape_cast %9 : vector<17x17x4xf32> to vector<289x4xf32>
    %11 = vector.extract_strided_slice %4 {offsets = [1, 1, 0], sizes = [17, 17, 4], strides = [1, 1, 1]} : vector<18x18x4xf32> to vector<17x17x4xf32>
    %12 = vector.shape_cast %11 : vector<17x17x4xf32> to vector<289x4xf32>
    %13 = tpu.concatenate %6, %8, %10, %12 in 1 : vector<289x4xf32>, vector<289x4xf32>, vector<289x4xf32>, vector<289x4xf32> -> vector<289x16xf32>
    %c0_7 = arith.constant 0 : index
    %c0_8 = arith.constant 0 : index
    %14 = vector.load %arg4[%c0_7, %c0_8] : memref<16x128xf32, #tpu.memory_space<vmem>>, vector<16x128xf32>
    %cst = arith.constant dense<0.000000e+00> : vector<289x128xf32>
    %15 = tpu.matmul %13, %14, %cst {dimension_numbers = #tpu.dot_dimension_numbers<[1], [0], [0], [1], [0, 0, 1, 1], [], []>} : vector<289x16xf32>, vector<16x128xf32>, vector<289x128xf32> -> vector<289x128xf32>
    %16 = vector.shape_cast %15 : vector<289x128xf32> to vector<1x17x17x128xf32>
    %c0_9 = arith.constant 0 : index
    %c0_10 = arith.constant 0 : index
    %c0_11 = arith.constant 0 : index
    %c0_12 = arith.constant 0 : index
    %17 = vector.load %arg5[%c0_9, %c0_10, %c0_11, %c0_12] : memref<1x17x17x128xf32, #tpu.memory_space<vmem>>, vector<1x17x17x128xf32>
    tpu.vector_store %arg5[%c0_9, %c0_10, %c0_11, %c0_12], %16 {strides = array<i32>} : memref<1x17x17x128xf32, #tpu.memory_space<vmem>>, vector<1x17x17x128xf32>,
    return
  }
  func.func @transform_0(%arg0: i32, %arg1: i32) -> (i32, i32, i32, i32) {
    %c0_i32 = arith.constant 0 : i32
    %c0_i32_0 = arith.constant 0 : i32
    %c0_i32_1 = arith.constant 0 : i32
    return %arg0, %arg1, %c0_i32, %c0_i32_0 : i32, i32, i32, i32
  }
  func.func @transform_1(%arg0: i32, %arg1: i32) -> (i32, i32, i32, i32) {
    %c17_i32 = arith.constant 17 : i32
    %0 = arith.muli %arg1, %c17_i32 : i32
    %c17_i32_0 = arith.constant 17 : i32
    %1 = arith.addi %0, %c17_i32_0 : i32
    %c0_i32 = arith.constant 0 : i32
    %c0_i32_1 = arith.constant 0 : i32
    %c0_i32_2 = arith.constant 0 : i32
    return %arg0, %1, %c0_i32, %c0_i32_1 : i32, i32, i32, i32
  }
  func.func @transform_2(%arg0: i32, %arg1: i32) -> (i32, i32) {
    %c0_i32 = arith.constant 0 : i32
    %c0_i32_0 = arith.constant 0 : i32
    %c0_i32_1 = arith.constant 0 : i32
    return %c0_i32, %c0_i32_0 : i32, i32
  }
  func.func @transform_3(%arg0: i32, %arg1: i32) -> (i32, i32, i32, i32) {
    %c0_i32 = arith.constant 0 : i32
    %c0_i32_0 = arith.constant 0 : i32
    %c0_i32_1 = arith.constant 0 : i32
    return %arg0, %arg1, %c0_i32, %c0_i32_0 : i32, i32, i32, i32
  }
}

</mosaic_0001>

<llo_original>
// kernel: deconv_forward.1
$region0: #{deconv_forward.1}
  #allocation0 [shape = 'u32[]', space=smem, size = 0x4, offset = 0x4, fixed_abs, tag = 'smem constant byte address 0x4 - core index']
  #allocation1 [shape = 'u32[144,128]{1,0:T(1,128)}', space=vmem, size = 0x12000, scoped, tag = 'internal scratch']
  %s0 = inlined_call_operand.vmem [shape: f32[2,18,18,4], index: 0, kind: input, shape index: {}, may-alias: {0,1}]
  %s1 = inlined_call_operand.vmem [shape: f32[2,18,18,4], index: 1, kind: input, shape index: {}, may-alias: {0,1}]
  %s2 = inlined_call_operand.vmem [shape: f32[16,128], index: 2, kind: input, shape index: {}]
  %s3 = inlined_call_operand.vmem [shape: f32[2,17,17,128], index: 3, kind: output, shape index: {}]
  %s4 = sld [smem:[#allocation0]]
  $region45: #{deconv_forward.1} parent=0
    _
  %s6 = ssub.s32 1, %s4
  %s7 = scalar_select 0, %s6, %s4
  loop: start=0, step=1, limit=4
  $region2: #{deconv_forward.1} parent=0 // loop_pre_header
    _
  $region3: #{deconv_forward.1} parent=0 // loop_header
    %s9 = sphi 0, %s13
    %p10 = scmp.ge.s32.totalorder %s9, 4
    %s16 = sphi 0, %s28
    %s17 = sphi 0, %s24
    %s18 = sphi 0, %s16
    %s19 = sphi 0, %s17
    %s20 = sphi 0, %s18
    %s21 = sphi 0, %s19
    %s33 = sphi 0, %s35
    %s36 = sphi 0, %s33
    %s37 = sphi 0, %s36
    %s53 = sphi 0, %s37
    %s65 = sphi 0, %s67
    %s68 = sphi 0, %s65
    %s69 = sphi 0, %s68
    %s85 = sphi 0, %s69
    %s89 = sphi 0, %s89
    %s91 = sphi 0, %s89
    %s92 = sphi 0, %s91
    %s106 = sphi 0, %s92
    %s114 = sphi 0, %s116
    %s117 = sphi 0, %s114
    %s118 = sphi 0, %s117
    %s134 = sphi 0, %s118
  $region4: #{deconv_forward.1} parent=0 // loop_header_branch
    %12 = sbr.rel (%p10) target = $region8
  $region5: #{deconv_forward.1} parent=0 // loop_body
    %s14 = ssub.s32 %s9, 1
    %s15 = ssub.s32 %s9, 2
    %s22 = sadd.s32 1, %s17
    %p23 = scmp.ge.s32.totalorder %s22, 1
    %s24 = scalar_select %p23, 0, %s22
    %s25 = sadd.s32 1, %s16
    %s26 = scalar_select %p23, %s25, %s16
    %p27 = scmp.ge.s32.totalorder %s26, 2
    %s28 = scalar_select %p27, 0, %s26
    %s29 = ssub.s32 %s16, %s28
    %s30 = ssub.s32 %s17, %s24
    %s31 = sor.u32 %s29, %s30
    %p32 = scmp.eq.s32.totalorder %s31, 0
    %s34 = sadd.s32 %s33, 1
    %s35 = scalar_select %p32, %s33, %s34
    %p38 = pneg %p32
    %p39 = scmp.eq.s32.totalorder %s9, 1
    %p40 = por %p38, %p39
    %p41 = scmp.ne.s32.totalorder %s33, %s36
    %p42 = scmp.eq.s32.totalorder %s9, 0
    %p43 = por %p41, %p42
    %p44 = scmp.ne.s32.totalorder %s33, %s36
    %p45 = scmp.eq.s32.totalorder %s14, 1
    %p46 = por %p44, %p45
    %p47 = scmp.ne.s32.totalorder %s36, %s37
    %p48 = scmp.eq.s32.totalorder %s14, 0
    %p49 = por %p47, %p48
    %p50 = scmp.ne.s32.totalorder %s36, %s37
    %p51 = scmp.eq.s32.totalorder %s15, 1
    %p52 = por %p50, %p51
    %p54 = scmp.ne.s32.totalorder %s37, %s53
    %p55 = scmp.eq.s32.totalorder %s15, 0
    %p56 = por %p54, %p55
    %s57 = smul.u32 %s17, 17
    %s58 = sadd.s32 %s57, 17
    %s59 = smul.u32 %s24, 17
    %s60 = sadd.s32 %s59, 17
    %s61 = ssub.s32 %s16, %s28
    %s62 = ssub.s32 %s58, %s60
    %s63 = sor.u32 %s61, %s62
    %p64 = scmp.eq.s32.totalorder %s63, 0
    %s66 = sadd.s32 %s65, 1
    %s67 = scalar_select %p64, %s65, %s66
    %p70 = pneg %p64
    %p71 = scmp.eq.s32.totalorder %s9, 1
    %p72 = por %p70, %p71
    %p73 = scmp.ne.s32.totalorder %s65, %s68
    %p74 = scmp.eq.s32.totalorder %s9, 0
    %p75 = por %p73, %p74
    %p76 = scmp.ne.s32.totalorder %s65, %s68
    %p77 = scmp.eq.s32.totalorder %s14, 1
    %p78 = por %p76, %p77
    %p79 = scmp.ne.s32.totalorder %s68, %s69
    %p80 = scmp.eq.s32.totalorder %s14, 0
    %p81 = por %p79, %p80
    %p82 = scmp.ne.s32.totalorder %s68, %s69
    %p83 = scmp.eq.s32.totalorder %s15, 1
    %p84 = por %p82, %p83
    %p86 = scmp.ne.s32.totalorder %s69, %s85
    %p87 = scmp.eq.s32.totalorder %s15, 0
    %p88 = por %p86, %p87
    %s90 = sadd.s32 %s89, 1
    %p93 = scmp.eq.s32.totalorder %s9, 1
    %p94 = scmp.ne.s32.totalorder %s89, %s91
    %p95 = scmp.eq.s32.totalorder %s9, 0
    %p96 = por %p94, %p95
    %p97 = scmp.ne.s32.totalorder %s89, %s91
    %p98 = scmp.eq.s32.totalorder %s14, 1
    %p99 = por %p97, %p98
    %p100 = scmp.ne.s32.totalorder %s91, %s92
    %p101 = scmp.eq.s32.totalorder %s14, 0
    %p102 = por %p100, %p101
    %p103 = scmp.ne.s32.totalorder %s91, %s92
    %p104 = scmp.eq.s32.totalorder %s15, 1
    %p105 = por %p103, %p104
    %p107 = scmp.ne.s32.totalorder %s92, %s106
    %p108 = scmp.eq.s32.totalorder %s15, 0
    %p109 = por %p107, %p108
    %s110 = ssub.s32 %s16, %s28
    %s111 = ssub.s32 %s17, %s24
    %s112 = sor.u32 %s110, %s111
    %p113 = scmp.eq.s32.totalorder %s112, 0
    %s115 = sadd.s32 %s114, 1
    %s116 = scalar_select %p113, %s114, %s115
    %p119 = pneg %p113
    %p120 = scmp.eq.s32.totalorder %s9, 1
    %p121 = por %p119, %p120
    %p122 = scmp.ne.s32.totalorder %s114, %s117
    %p123 = scmp.eq.s32.totalorder %s9, 0
    %p124 = por %p122, %p123
    %p125 = scmp.ne.s32.totalorder %s114, %s117
    %p126 = scmp.eq.s32.totalorder %s14, 1
    %p127 = por %p125, %p126
    %p128 = scmp.ne.s32.totalorder %s117, %s118
    %p129 = scmp.eq.s32.totalorder %s14, 0
    %p130 = por %p128, %p129
    %p131 = scmp.ne.s32.totalorder %s117, %s118
    %p132 = scmp.eq.s32.totalorder %s15, 1
    %p133 = por %p131, %p132
    %p135 = scmp.ne.s32.totalorder %s118, %s134
    %p136 = scmp.eq.s32.totalorder %s15, 0
    %p137 = por %p135, %p136
    %p138 = scmp.le.s32.totalorder 1, %s9
    %p139 = scmp.lt.s32.totalorder %s9, 3
    %p140 = pnand %p138, %p139
    %p141 = pneg %p140
    // Predicated region
    $region9: #{deconv_forward.1} parent=5 // pred_check
      _
    $region10: #{deconv_forward.1} parent=5 // pred_check_branch
      %143 = sbr.rel (%p140) target = $region12
    $region11: #{deconv_forward.1} parent=5 // pred_region
      %s144 = ssub.s32 %s9, 1
      // Predicated region
      $region13: #{deconv_forward.1} parent=11 // pred_check
        %p145 = pneg %p102
      $region14: #{deconv_forward.1} parent=11 // pred_check_branch
        %147 = sbr.rel (%p145) target = $region16
      $region15: #{deconv_forward.1} parent=11 // pred_region
        _
      $region16: #{deconv_forward.1} parent=11 // pred_fallthru
        _
    $region12: #{deconv_forward.1} parent=5 // pred_fallthru
      _
    %p148 = scmp.lt.s32.totalorder %s9, 2
    // Predicated region
    $region17: #{deconv_forward.1} parent=5 // pred_check
      %p149 = pneg %p148
    $region18: #{deconv_forward.1} parent=5 // pred_check_branch
      %151 = sbr.rel (%p149) target = $region20
    $region19: #{deconv_forward.1} parent=5 // pred_region
      // Predicated region
      $region21: #{deconv_forward.1} parent=19 // pred_check
        %p152 = pneg %p43
      $region22: #{deconv_forward.1} parent=19 // pred_check_branch
        %154 = sbr.rel (%p152) target = $region24
      $region23: #{deconv_forward.1} parent=19 // pred_region
        %s155 = smul.u32 17, %s17
        %s156 = ssub.s32 18, %s155
        %p157 = scmp.lt.s32.totalorder %s156, 17
        %s158 = scalar_select %p157, %s156, 17
        %s159 = smul.u32 128, %s158
        %s160 = smul.u32 %s159, 3
        %p161 = scmp.lt.s32.totalorder %s16, 1
        %s162 = scalar_select %p161, %s16, 1
        %p163 = scmp.lt.s32.totalorder %s155, 17
        %s164 = scalar_select %p163, %s155, 17
        %s165 = smul.addr %s164, 3
        %s166 = smul.addr %s162, 54
        %s167 = sadd.s32 %s165, %s166
        %s168 = smul.addr %s167, 8
        %s169 = scalar_lea.vmem %s0, %s168
        %s170 = smul.u32 17, %s17
        %s171 = ssub.s32 18, %s170
        %p172 = scmp.lt.s32.totalorder %s171, 17
        %s173 = scalar_select %p172, %s171, 17
        %s174 = smul.u32 128, %s173
        %s175 = smul.u32 %s174, 3
      $region24: #{deconv_forward.1} parent=19 // pred_fallthru
        _
      // Predicated region
      $region25: #{deconv_forward.1} parent=19 // pred_check
        %p176 = pneg %p75
      $region26: #{deconv_forward.1} parent=19 // pred_check_branch
        %178 = sbr.rel (%p176) target = $region28
      $region27: #{deconv_forward.1} parent=19 // pred_region
        %s179 = smul.u32 %s17, 17
        %s180 = sadd.s32 %s179, 17
        %p181 = scmp.lt.s32.totalorder %s16, 1
        %s182 = scalar_select %p181, %s16, 1
        %p183 = scmp.lt.s32.totalorder %s180, 17
        %s184 = scalar_select %p183, %s180, 17
        %s185 = smul.addr %s184, 3
        %s186 = smul.addr %s182, 54
        %s187 = sadd.s32 %s185, %s186
        %s188 = smul.addr %s187, 8
        %s189 = scalar_lea.vmem %s1, %s188
        %s190 = smul.u32 %s17, 17
        %s191 = sadd.s32 %s190, 17
      $region28: #{deconv_forward.1} parent=19 // pred_fallthru
        _
    $region20: #{deconv_forward.1} parent=5 // pred_fallthru
      _
    %p192 = scmp.le.s32.totalorder 1, %s9
    %p193 = scmp.lt.s32.totalorder %s9, 3
    %p194 = pnand %p192, %p193
    %p195 = pneg %p194
    // Predicated region
    $region29: #{deconv_forward.1} parent=5 // pred_check
      _
    $region30: #{deconv_forward.1} parent=5 // pred_check_branch
      %197 = sbr.rel (%p194) target = $region32
    $region31: #{deconv_forward.1} parent=5 // pred_region
      %s198 = ssub.s32 %s9, 1
      %s199 = smul.u32 17, %s19
      %s200 = ssub.s32 18, %s199
      %p201 = scmp.lt.s32.totalorder %s200, 17
      %s202 = scalar_select %p201, %s200, 17
      %s203 = smul.u32 128, %s202
      %s204 = smul.u32 %s203, 3
      %p205 = scmp.lt.s32.totalorder %s18, 1
      %s206 = scalar_select %p205, %s18, 1
      %p207 = scmp.lt.s32.totalorder %s199, 17
      %s208 = scalar_select %p207, %s199, 17
      %s209 = smul.addr %s208, 3
      %s210 = smul.addr %s206, 54
      %s211 = sadd.s32 %s209, %s210
      %s212 = smul.addr %s211, 8
      %s213 = scalar_lea.vmem %s0, %s212
      %p214 = pneg %p49
      %p215 = pneg %p46
      %s216 = smul.u32 %s19, 17
      %s217 = sadd.s32 %s216, 17
      %p218 = scmp.lt.s32.totalorder %s18, 1
      %s219 = scalar_select %p218, %s18, 1
      %p220 = scmp.lt.s32.totalorder %s217, 17
      %s221 = scalar_select %p220, %s217, 17
      %s222 = smul.addr %s221, 3
      %s223 = smul.addr %s219, 54
      %s224 = sadd.s32 %s222, %s223
      %s225 = smul.addr %s224, 8
      %s226 = scalar_lea.vmem %s1, %s225
      %p227 = pneg %p81
      %p228 = pneg %p78
      %p229 = pneg %p102
      %p230 = pneg %p99
      %p231 = pneg %p130
      %p232 = pneg %p127
      %s233 = smul.u32 17, %s19
      %p234 = scmp.lt.s32.totalorder %s18, 1
      %s235 = scalar_select %p234, %s18, 1
      %p236 = scmp.lt.s32.totalorder %s233, 16
      %s237 = scalar_select %p236, %s233, 16
      %s238 = smul.addr %s237, 3
      %s239 = smul.addr %s235, 51
      %s240 = sadd.s32 %s238, %s239
      %s241 = smul.addr %s240, 8
      %s242 = scalar_lea.vmem %s3, %s241
      %s243 = smul.u32 17, %s19
      %s244 = ssub.s32 18, %s243
      %p245 = scmp.lt.s32.totalorder %s244, 17
      %s246 = scalar_select %p245, %s244, 17
      %s247 = smul.u32 128, %s246
      %s248 = smul.u32 %s247, 3
      %p249 = scmp.lt.s32.totalorder %s18, 1
      %s250 = scalar_select %p249, %s18, 1
      %p251 = scmp.lt.s32.totalorder %s243, 17
      %s252 = scalar_select %p251, %s243, 17
      %s253 = smul.addr %s252, 3
      %s254 = smul.addr %s250, 54
      %s255 = sadd.s32 %s253, %s254
      %s256 = smul.addr %s255, 8
      %s257 = scalar_lea.vmem %s0, %s256
      %s258 = smul.u32 17, %s19
      %s259 = ssub.s32 18, %s258
      %p260 = scmp.lt.s32.totalorder %s259, 17
      %s261 = scalar_select %p260, %s259, 17
      %s262 = smul.u32 128, %s261
      %s263 = smul.u32 %s262, 3
      %s264 = smul.u32 %s19, 17
      %s265 = sadd.s32 %s264, 17
      %p266 = scmp.lt.s32.totalorder %s18, 1
      %s267 = scalar_select %p266, %s18, 1
      %p268 = scmp.lt.s32.totalorder %s265, 17
      %s269 = scalar_select %p268, %s265, 17
      %s270 = smul.addr %s269, 3
      %s271 = smul.addr %s267, 54
      %s272 = sadd.s32 %s270, %s271
      %s273 = smul.addr %s272, 8
      %s274 = scalar_lea.vmem %s1, %s273
      %s275 = smul.u32 %s19, 17
      %s276 = sadd.s32 %s275, 17
      %s277 = smul.u32 17, %s19
      %p278 = scmp.lt.s32.totalorder %s18, 1
      %s279 = scalar_select %p278, %s18, 1
      %p280 = scmp.lt.s32.totalorder %s277, 16
      %s281 = scalar_select %p280, %s277, 16
      %s282 = smul.addr %s281, 3
      %s283 = smul.addr %s279, 51
      %s284 = sadd.s32 %s282, %s283
      %s285 = smul.addr %s284, 8
      %s286 = scalar_lea.vmem %s3, %s285
      %s287 = smul.u32 17, %s19
      %v288 = vld [vmem:[%s257] sm:$0xff]
      %v289 = vld [vmem:[%s257 + $0x8] sm:$0xff]
      %v290 = vld [vmem:[%s257 + $0x10] sm:$0x3]
      %v291 = vld [vmem:[%s257 + $0x18] sm:$0xff]
      %v292 = vld [vmem:[%s257 + $0x20] sm:$0xff]
      %v293 = vld [vmem:[%s257 + $0x28] sm:$0x3]
      %v294 = vld [vmem:[%s257 + $0x30] sm:$0xff]
      %v295 = vld [vmem:[%s257 + $0x38] sm:$0xff]
      %v296 = vld [vmem:[%s257 + $0x40] sm:$0x3]
      %v297 = vld [vmem:[%s257 + $0x48] sm:$0xff]
      %v298 = vld [vmem:[%s257 + $0x50] sm:$0xff]
      %v299 = vld [vmem:[%s257 + $0x58] sm:$0x3]
      %v300 = vld [vmem:[%s257 + $0x60] sm:$0xff]
      %v301 = vld [vmem:[%s257 + $0x68] sm:$0xff]
      %v302 = vld [vmem:[%s257 + $0x70] sm:$0x3]
      %v303 = vld [vmem:[%s257 + $0x78] sm:$0xff]
      %v304 = vld [vmem:[%s257 + $0x80] sm:$0xff]
      %v305 = vld [vmem:[%s257 + $0x88] sm:$0x3]
      %v306 = vld [vmem:[%s257 + $0x90] sm:$0xff]
      %v307 = vld [vmem:[%s257 + $0x98] sm:$0xff]
      %v308 = vld [vmem:[%s257 + $0xa0] sm:$0x3]
      %v309 = vld [vmem:[%s257 + $0xa8] sm:$0xff]
      %v310 = vld [vmem:[%s257 + $0xb0] sm:$0xff]
      %v311 = vld [vmem:[%s257 + $0xb8] sm:$0x3]
      %v312 = vld [vmem:[%s257 + $0xc0] sm:$0xff]
      %v313 = vld [vmem:[%s257 + $0xc8] sm:$0xff]
      %v314 = vld [vmem:[%s257 + $0xd0] sm:$0x3]
      %v315 = vld [vmem:[%s257 + $0xd8] sm:$0xff]
      %v316 = vld [vmem:[%s257 + $0xe0] sm:$0xff]
      %v317 = vld [vmem:[%s257 + $0xe8] sm:$0x3]
      %v318 = vld [vmem:[%s257 + $0xf0] sm:$0xff]
      %v319 = vld [vmem:[%s257 + $0xf8] sm:$0xff]
      %v320 = vld [vmem:[%s257 + $0x100] sm:$0x3]
      %v321 = vld [vmem:[%s257 + $0x108] sm:$0xff]
      %v322 = vld [vmem:[%s257 + $0x110] sm:$0xff]
      %v323 = vld [vmem:[%s257 + $0x118] sm:$0x3]
      %v324 = vld [vmem:[%s257 + $0x120] sm:$0xff]
      %v325 = vld [vmem:[%s257 + $0x128] sm:$0xff]
      %v326 = vld [vmem:[%s257 + $0x130] sm:$0x3]
      %v327 = vld [vmem:[%s257 + $0x138] sm:$0xff]
      %v328 = vld [vmem:[%s257 + $0x140] sm:$0xff]
      %v329 = vld [vmem:[%s257 + $0x148] sm:$0x3]
      %v330 = vld [vmem:[%s257 + $0x150] sm:$0xff]
      %v331 = vld [vmem:[%s257 + $0x158] sm:$0xff]
      %v332 = vld [vmem:[%s257 + $0x160] sm:$0x3]
      %v333 = vld [vmem:[%s257 + $0x168] sm:$0xff]
      %v334 = vld [vmem:[%s257 + $0x170] sm:$0xff]
      %v335 = vld [vmem:[%s257 + $0x178] sm:$0x3]
      %v336 = vld [vmem:[%s257 + $0x180] sm:$0xff]
      %v337 = vld [vmem:[%s257 + $0x188] sm:$0xff]
      %v338 = vld [vmem:[%s257 + $0x190] sm:$0x3]
      %v339 = vld [vmem:[%s274] sm:$0xff]
      %v340 = vld [vmem:[%s274 + $0x8] sm:$0xff]
      %v341 = vld [vmem:[%s274 + $0x10] sm:$0x3]
      %v393 = vcombine.high %v288, %v288
      %v395 = vunpack.c.l.s4 1966171168
      %v396 = vunpack.c.0.s8 %v395
      %v397 = vlaneseq
      %v398 = vshrl.u32 %v397, 7
      %v399 = vsub.s32 %v396, %v398
      %v400 = vrot.slane %v288, %v399
      %v402 = vunpack.c.l.s4 1966171168
      %v403 = vunpack.c.0.s8 %v402
      %v404 = vlaneseq
      %v405 = vshrl.u32 %v404, 7
      %v406 = vsub.s32 %v403, %v405
      %v407 = vrot.slane %v393, %v406
      %v408 = vcombine.high %v400, %v400
      %v409 = vcombine.high %v407, %v407
      %v411 = vunpack.c.l.s4 1966171168
      %v412 = vunpack.c.0.s8 %v411
      %v413 = vlaneseq
      %v414 = vshrl.u32 %v413, 7
      %v415 = vsub.s32 %v412, %v414
      %v416 = vrot.slane %v400, %v415
      %v418 = vunpack.c.l.s4 1966171168
      %v419 = vunpack.c.0.s8 %v418
      %v420 = vlaneseq
      %v421 = vshrl.u32 %v420, 7
      %v422 = vsub.s32 %v419, %v421
      %v423 = vrot.slane %v407, %v422
      %v425 = vunpack.c.l.s4 1966171168
      %v426 = vunpack.c.0.s8 %v425
      %v427 = vlaneseq
      %v428 = vshrl.u32 %v427, 7
      %v429 = vsub.s32 %v426, %v428
      %v430 = vrot.slane %v408, %v429
      %v432 = vunpack.c.l.s4 1966171168
      %v433 = vunpack.c.0.s8 %v432
      %v434 = vlaneseq
      %v435 = vshrl.u32 %v434, 7
      %v436 = vsub.s32 %v433, %v435
      %v437 = vrot.slane %v409, %v436
      %v438 = vcombine.high %v416, %v416
      %v439 = vcombine.high %v423, %v423
      %v440 = vcombine.high %v430, %v430
      %v441 = vcombine.high %v437, %v437
      %v442 = vcombine.high %v289, %v289
      %v444 = vunpack.c.l.s4 1966171168
      %v445 = vunpack.c.0.s8 %v444
      %v446 = vlaneseq
      %v447 = vshrl.u32 %v446, 7
      %v448 = vsub.s32 %v445, %v447
      %v449 = vrot.slane %v289, %v448
      %v451 = vunpack.c.l.s4 1966171168
      %v452 = vunpack.c.0.s8 %v451
      %v453 = vlaneseq
      %v454 = vshrl.u32 %v453, 7
      %v455 = vsub.s32 %v452, %v454
      %v456 = vrot.slane %v442, %v455
      %v457 = vcombine.high %v449, %v449
      %v458 = vcombine.high %v456, %v456
      %v460 = vunpack.c.l.s4 1966171168
      %v461 = vunpack.c.0.s8 %v460
      %v462 = vlaneseq
      %v463 = vshrl.u32 %v462, 7
      %v464 = vsub.s32 %v461, %v463
      %v465 = vrot.slane %v449, %v464
      %v467 = vunpack.c.l.s4 1966171168
      %v468 = vunpack.c.0.s8 %v467
      %v469 = vlaneseq
      %v470 = vshrl.u32 %v469, 7
      %v471 = vsub.s32 %v468, %v470
      %v472 = vrot.slane %v456, %v471
      %v474 = vunpack.c.l.s4 1966171168
      %v475 = vunpack.c.0.s8 %v474
      %v476 = vlaneseq
      %v477 = vshrl.u32 %v476, 7
      %v478 = vsub.s32 %v475, %v477
      %v479 = vrot.slane %v457, %v478
      %v481 = vunpack.c.l.s4 1966171168
      %v482 = vunpack.c.0.s8 %v481
      %v483 = vlaneseq
      %v484 = vshrl.u32 %v483, 7
      %v485 = vsub.s32 %v482, %v484
      %v486 = vrot.slane %v458, %v485
      %v487 = vcombine.high %v465, %v465
      %v488 = vcombine.high %v472, %v472
      %v489 = vcombine.high %v479, %v479
      %v490 = vcombine.high %v486, %v486
      %v492 = vunpack.c.l.s4 1966171168
      %v493 = vunpack.c.0.s8 %v492
      %v494 = vlaneseq
      %v495 = vshrl.u32 %v494, 7
      %v496 = vsub.s32 %v493, %v495
      %v497 = vrot.slane %v290, %v496
      %v499 = vunpack.c.l.s4 1966171168
      %v500 = vunpack.c.0.s8 %v499
      %v501 = vlaneseq
      %v502 = vshrl.u32 %v501, 7
      %v503 = vsub.s32 %v500, %v502
      %v504 = vrot.slane %v497, %v503
      %v505 = vcombine.high %v291, %v291
      %v507 = vunpack.c.l.s4 1966171168
      %v508 = vunpack.c.0.s8 %v507
      %v509 = vlaneseq
      %v510 = vshrl.u32 %v509, 7
      %v511 = vsub.s32 %v508, %v510
      %v512 = vrot.slane %v291, %v511
      %v514 = vunpack.c.l.s4 1966171168
      %v515 = vunpack.c.0.s8 %v514
      %v516 = vlaneseq
      %v517 = vshrl.u32 %v516, 7
      %v518 = vsub.s32 %v515, %v517
      %v519 = vrot.slane %v505, %v518
      %v520 = vcombine.high %v512, %v512
      %v521 = vcombine.high %v519, %v519
      %v523 = vunpack.c.l.s4 1966171168
      %v524 = vunpack.c.0.s8 %v523
      %v525 = vlaneseq
      %v526 = vshrl.u32 %v525, 7
      %v527 = vsub.s32 %v524, %v526
      %v528 = vrot.slane %v512, %v527
      %v530 = vunpack.c.l.s4 1966171168
      %v531 = vunpack.c.0.s8 %v530
      %v532 = vlaneseq
      %v533 = vshrl.u32 %v532, 7
      %v534 = vsub.s32 %v531, %v533
      %v535 = vrot.slane %v519, %v534
      %v537 = vunpack.c.l.s4 1966171168
      %v538 = vunpack.c.0.s8 %v537
      %v539 = vlaneseq
      %v540 = vshrl.u32 %v539, 7
      %v541 = vsub.s32 %v538, %v540
      %v542 = vrot.slane %v520, %v541
      %v544 = vunpack.c.l.s4 1966171168
      %v545 = vunpack.c.0.s8 %v544
      %v546 = vlaneseq
      %v547 = vshrl.u32 %v546, 7
      %v548 = vsub.s32 %v545, %v547
      %v549 = vrot.slane %v521, %v548
      %v550 = vcombine.high %v528, %v528
      %v551 = vcombine.high %v535, %v535
      %v552 = vcombine.high %v542, %v542
      %v553 = vcombine.high %v549, %v549
      %v554 = vcombine.high %v292, %v292
      %v556 = vunpack.c.l.s4 1966171168
      %v557 = vunpack.c.0.s8 %v556
      %v558 = vlaneseq
      %v559 = vshrl.u32 %v558, 7
      %v560 = vsub.s32 %v557, %v559
      %v561 = vrot.slane %v292, %v560
      %v563 = vunpack.c.l.s4 1966171168
      %v564 = vunpack.c.0.s8 %v563
      %v565 = vlaneseq
      %v566 = vshrl.u32 %v565, 7
      %v567 = vsub.s32 %v564, %v566
      %v568 = vrot.slane %v554, %v567
      %v569 = vcombine.high %v561, %v561
      %v570 = vcombine.high %v568, %v568
      %v572 = vunpack.c.l.s4 1966171168
      %v573 = vunpack.c.0.s8 %v572
      %v574 = vlaneseq
      %v575 = vshrl.u32 %v574, 7
      %v576 = vsub.s32 %v573, %v575
      %v577 = vrot.slane %v561, %v576
      %v579 = vunpack.c.l.s4 1966171168
      %v580 = vunpack.c.0.s8 %v579
      %v581 = vlaneseq
      %v582 = vshrl.u32 %v581, 7
      %v583 = vsub.s32 %v580, %v582
      %v584 = vrot.slane %v568, %v583
      %v586 = vunpack.c.l.s4 1966171168
      %v587 = vunpack.c.0.s8 %v586
      %v588 = vlaneseq
      %v589 = vshrl.u32 %v588, 7
      %v590 = vsub.s32 %v587, %v589
      %v591 = vrot.slane %v569, %v590
      %v593 = vunpack.c.l.s4 1966171168
      %v594 = vunpack.c.0.s8 %v593
      %v595 = vlaneseq
      %v596 = vshrl.u32 %v595, 7
      %v597 = vsub.s32 %v594, %v596
      %v598 = vrot.slane %v570, %v597
      %v599 = vcombine.high %v577, %v577
      %v600 = vcombine.high %v584, %v584
      %v601 = vcombine.high %v591, %v591
      %v602 = vcombine.high %v598, %v598
      %v604 = vunpack.c.l.s4 1966171168
      %v605 = vunpack.c.0.s8 %v604
      %v606 = vlaneseq
      %v607 = vshrl.u32 %v606, 7
      %v608 = vsub.s32 %v605, %v607
      %v609 = vrot.slane %v293, %v608
      %v611 = vunpack.c.l.s4 1966171168
      %v612 = vunpack.c.0.s8 %v611
      %v613 = vlaneseq
      %v614 = vshrl.u32 %v613, 7
      %v615 = vsub.s32 %v612, %v614
      %v616 = vrot.slane %v609, %v615
      %v617 = vcombine.high %v294, %v294
      %v619 = vunpack.c.l.s4 1966171168
      %v620 = vunpack.c.0.s8 %v619
      %v621 = vlaneseq
      %v622 = vshrl.u32 %v621, 7
      %v623 = vsub.s32 %v620, %v622
      %v624 = vrot.slane %v294, %v623
      %v626 = vunpack.c.l.s4 1966171168
      %v627 = vunpack.c.0.s8 %v626
      %v628 = vlaneseq
      %v629 = vshrl.u32 %v628, 7
      %v630 = vsub.s32 %v627, %v629
      %v631 = vrot.slane %v617, %v630
      %v632 = vcombine.high %v624, %v624
      %v633 = vcombine.high %v631, %v631
      %v635 = vunpack.c.l.s4 1966171168
      %v636 = vunpack.c.0.s8 %v635
      %v637 = vlaneseq
      %v638 = vshrl.u32 %v637, 7
      %v639 = vsub.s32 %v636, %v638
      %v640 = vrot.slane %v624, %v639
      %v642 = vunpack.c.l.s4 1966171168
      %v643 = vunpack.c.0.s8 %v642
      %v644 = vlaneseq
      %v645 = vshrl.u32 %v644, 7
      %v646 = vsub.s32 %v643, %v645
      %v647 = vrot.slane %v631, %v646
      %v649 = vunpack.c.l.s4 1966171168
      %v650 = vunpack.c.0.s8 %v649
      %v651 = vlaneseq
      %v652 = vshrl.u32 %v651, 7
      %v653 = vsub.s32 %v650, %v652
      %v654 = vrot.slane %v632, %v653
      %v656 = vunpack.c.l.s4 1966171168
      %v657 = vunpack.c.0.s8 %v656
      %v658 = vlaneseq
      %v659 = vshrl.u32 %v658, 7
      %v660 = vsub.s32 %v657, %v659
      %v661 = vrot.slane %v633, %v660
      %v662 = vcombine.high %v640, %v640
      %v663 = vcombine.high %v647, %v647
      %v664 = vcombine.high %v654, %v654
      %v665 = vcombine.high %v661, %v661
      %v666 = vcombine.high %v295, %v295
      %v668 = vunpack.c.l.s4 1966171168
      %v669 = vunpack.c.0.s8 %v668
      %v670 = vlaneseq
      %v671 = vshrl.u32 %v670, 7
      %v672 = vsub.s32 %v669, %v671
      %v673 = vrot.slane %v295, %v672
      %v675 = vunpack.c.l.s4 1966171168
      %v676 = vunpack.c.0.s8 %v675
      %v677 = vlaneseq
      %v678 = vshrl.u32 %v677, 7
      %v679 = vsub.s32 %v676, %v678
      %v680 = vrot.slane %v666, %v679
      %v681 = vcombine.high %v673, %v673
      %v682 = vcombine.high %v680, %v680
      %v684 = vunpack.c.l.s4 1966171168
      %v685 = vunpack.c.0.s8 %v684
      %v686 = vlaneseq
      %v687 = vshrl.u32 %v686, 7
      %v688 = vsub.s32 %v685, %v687
      %v689 = vrot.slane %v673, %v688
      %v691 = vunpack.c.l.s4 1966171168
      %v692 = vunpack.c.0.s8 %v691
      %v693 = vlaneseq
      %v694 = vshrl.u32 %v693, 7
      %v695 = vsub.s32 %v692, %v694
      %v696 = vrot.slane %v680, %v695
      %v698 = vunpack.c.l.s4 1966171168
      %v699 = vunpack.c.0.s8 %v698
      %v700 = vlaneseq
      %v701 = vshrl.u32 %v700, 7
      %v702 = vsub.s32 %v699, %v701
      %v703 = vrot.slane %v681, %v702
      %v705 = vunpack.c.l.s4 1966171168
      %v706 = vunpack.c.0.s8 %v705
      %v707 = vlaneseq
      %v708 = vshrl.u32 %v707, 7
      %v709 = vsub.s32 %v706, %v708
      %v710 = vrot.slane %v682, %v709
      %v711 = vcombine.high %v689, %v689
      %v712 = vcombine.high %v696, %v696
      %v713 = vcombine.high %v703, %v703
      %v714 = vcombine.high %v710, %v710
      %v716 = vunpack.c.l.s4 1966171168
      %v717 = vunpack.c.0.s8 %v716
      %v718 = vlaneseq
      %v719 = vshrl.u32 %v718, 7
      %v720 = vsub.s32 %v717, %v719
      %v721 = vrot.slane %v296, %v720
      %v723 = vunpack.c.l.s4 1966171168
      %v724 = vunpack.c.0.s8 %v723
      %v725 = vlaneseq
      %v726 = vshrl.u32 %v725, 7
      %v727 = vsub.s32 %v724, %v726
      %v728 = vrot.slane %v721, %v727
      %v729 = vcombine.high %v297, %v297
      %v731 = vunpack.c.l.s4 1966171168
      %v732 = vunpack.c.0.s8 %v731
      %v733 = vlaneseq
      %v734 = vshrl.u32 %v733, 7
      %v735 = vsub.s32 %v732, %v734
      %v736 = vrot.slane %v297, %v735
      %v738 = vunpack.c.l.s4 1966171168
      %v739 = vunpack.c.0.s8 %v738
      %v740 = vlaneseq
      %v741 = vshrl.u32 %v740, 7
      %v742 = vsub.s32 %v739, %v741
      %v743 = vrot.slane %v729, %v742
      %v744 = vcombine.high %v736, %v736
      %v745 = vcombine.high %v743, %v743
      %v747 = vunpack.c.l.s4 1966171168
      %v748 = vunpack.c.0.s8 %v747
      %v749 = vlaneseq
      %v750 = vshrl.u32 %v749, 7
      %v751 = vsub.s32 %v748, %v750
      %v752 = vrot.slane %v736, %v751
      %v754 = vunpack.c.l.s4 1966171168
      %v755 = vunpack.c.0.s8 %v754
      %v756 = vlaneseq
      %v757 = vshrl.u32 %v756, 7
      %v758 = vsub.s32 %v755, %v757
      %v759 = vrot.slane %v743, %v758
      %v761 = vunpack.c.l.s4 1966171168
      %v762 = vunpack.c.0.s8 %v761
      %v763 = vlaneseq
      %v764 = vshrl.u32 %v763, 7
      %v765 = vsub.s32 %v762, %v764
      %v766 = vrot.slane %v744, %v765
      %v768 = vunpack.c.l.s4 1966171168
      %v769 = vunpack.c.0.s8 %v768
      %v770 = vlaneseq
      %v771 = vshrl.u32 %v770, 7
      %v772 = vsub.s32 %v769, %v771
      %v773 = vrot.slane %v745, %v772
      %v774 = vcombine.high %v752, %v752
      %v775 = vcombine.high %v759, %v759
      %v776 = vcombine.high %v766, %v766
      %v777 = vcombine.high %v773, %v773
      %v778 = vcombine.high %v298, %v298
      %v780 = vunpack.c.l.s4 1966171168
      %v781 = vunpack.c.0.s8 %v780
      %v782 = vlaneseq
      %v783 = vshrl.u32 %v782, 7
      %v784 = vsub.s32 %v781, %v783
      %v785 = vrot.slane %v298, %v784
      %v787 = vunpack.c.l.s4 1966171168
      %v788 = vunpack.c.0.s8 %v787
      %v789 = vlaneseq
      %v790 = vshrl.u32 %v789, 7
      %v791 = vsub.s32 %v788, %v790
      %v792 = vrot.slane %v778, %v791
      %v793 = vcombine.high %v785, %v785
      %v794 = vcombine.high %v792, %v792
      %v796 = vunpack.c.l.s4 1966171168
      %v797 = vunpack.c.0.s8 %v796
      %v798 = vlaneseq
      %v799 = vshrl.u32 %v798, 7
      %v800 = vsub.s32 %v797, %v799
      %v801 = vrot.slane %v785, %v800
      %v803 = vunpack.c.l.s4 1966171168
      %v804 = vunpack.c.0.s8 %v803
      %v805 = vlaneseq
      %v806 = vshrl.u32 %v805, 7
      %v807 = vsub.s32 %v804, %v806
      %v808 = vrot.slane %v792, %v807
      %v810 = vunpack.c.l.s4 1966171168
      %v811 = vunpack.c.0.s8 %v810
      %v812 = vlaneseq
      %v813 = vshrl.u32 %v812, 7
      %v814 = vsub.s32 %v811, %v813
      %v815 = vrot.slane %v793, %v814
      %v817 = vunpack.c.l.s4 1966171168
      %v818 = vunpack.c.0.s8 %v817
      %v819 = vlaneseq
      %v820 = vshrl.u32 %v819, 7
      %v821 = vsub.s32 %v818, %v820
      %v822 = vrot.slane %v794, %v821
      %v823 = vcombine.high %v801, %v801
      %v824 = vcombine.high %v808, %v808
      %v825 = vcombine.high %v815, %v815
      %v826 = vcombine.high %v822, %v822
      %v828 = vunpack.c.l.s4 1966171168
      %v829 = vunpack.c.0.s8 %v828
      %v830 = vlaneseq
      %v831 = vshrl.u32 %v830, 7
      %v832 = vsub.s32 %v829, %v831
      %v833 = vrot.slane %v299, %v832
      %v835 = vunpack.c.l.s4 1966171168
      %v836 = vunpack.c.0.s8 %v835
      %v837 = vlaneseq
      %v838 = vshrl.u32 %v837, 7
      %v839 = vsub.s32 %v836, %v838
      %v840 = vrot.slane %v833, %v839
      %v841 = vcombine.high %v300, %v300
      %v843 = vunpack.c.l.s4 1966171168
      %v844 = vunpack.c.0.s8 %v843
      %v845 = vlaneseq
      %v846 = vshrl.u32 %v845, 7
      %v847 = vsub.s32 %v844, %v846
      %v848 = vrot.slane %v300, %v847
      %v850 = vunpack.c.l.s4 1966171168
      %v851 = vunpack.c.0.s8 %v850
      %v852 = vlaneseq
      %v853 = vshrl.u32 %v852, 7
      %v854 = vsub.s32 %v851, %v853
      %v855 = vrot.slane %v841, %v854
      %v856 = vcombine.high %v848, %v848
      %v857 = vcombine.high %v855, %v855
      %v859 = vunpack.c.l.s4 1966171168
      %v860 = vunpack.c.0.s8 %v859
      %v861 = vlaneseq
      %v862 = vshrl.u32 %v861, 7
      %v863 = vsub.s32 %v860, %v862
      %v864 = vrot.slane %v848, %v863
      %v866 = vunpack.c.l.s4 1966171168
      %v867 = vunpack.c.0.s8 %v866
      %v868 = vlaneseq
      %v869 = vshrl.u32 %v868, 7
      %v870 = vsub.s32 %v867, %v869
      %v871 = vrot.slane %v855, %v870
      %v873 = vunpack.c.l.s4 1966171168
      %v874 = vunpack.c.0.s8 %v873
      %v875 = vlaneseq
      %v876 = vshrl.u32 %v875, 7
      %v877 = vsub.s32 %v874, %v876
      %v878 = vrot.slane %v856, %v877
      %v880 = vunpack.c.l.s4 1966171168
      %v881 = vunpack.c.0.s8 %v880
      %v882 = vlaneseq
      %v883 = vshrl.u32 %v882, 7
      %v884 = vsub.s32 %v881, %v883
      %v885 = vrot.slane %v857, %v884
      %v886 = vcombine.high %v864, %v864
      %v887 = vcombine.high %v871, %v871
      %v888 = vcombine.high %v878, %v878
      %v889 = vcombine.high %v885, %v885
      %v890 = vcombine.high %v301, %v301
      %v892 = vunpack.c.l.s4 1966171168
      %v893 = vunpack.c.0.s8 %v892
      %v894 = vlaneseq
      %v895 = vshrl.u32 %v894, 7
      %v896 = vsub.s32 %v893, %v895
      %v897 = vrot.slane %v301, %v896
      %v899 = vunpack.c.l.s4 1966171168
      %v900 = vunpack.c.0.s8 %v899
      %v901 = vlaneseq
      %v902 = vshrl.u32 %v901, 7
      %v903 = vsub.s32 %v900, %v902
      %v904 = vrot.slane %v890, %v903
      %v905 = vcombine.high %v897, %v897
      %v906 = vcombine.high %v904, %v904
      %v908 = vunpack.c.l.s4 1966171168
      %v909 = vunpack.c.0.s8 %v908
      %v910 = vlaneseq
      %v911 = vshrl.u32 %v910, 7
      %v912 = vsub.s32 %v909, %v911
      %v913 = vrot.slane %v897, %v912
      %v915 = vunpack.c.l.s4 1966171168
      %v916 = vunpack.c.0.s8 %v915
      %v917 = vlaneseq
      %v918 = vshrl.u32 %v917, 7
      %v919 = vsub.s32 %v916, %v918
      %v920 = vrot.slane %v904, %v919
      %v922 = vunpack.c.l.s4 1966171168
      %v923 = vunpack.c.0.s8 %v922
      %v924 = vlaneseq
      %v925 = vshrl.u32 %v924, 7
      %v926 = vsub.s32 %v923, %v925
      %v927 = vrot.slane %v905, %v926
      %v929 = vunpack.c.l.s4 1966171168
      %v930 = vunpack.c.0.s8 %v929
      %v931 = vlaneseq
      %v932 = vshrl.u32 %v931, 7
      %v933 = vsub.s32 %v930, %v932
      %v934 = vrot.slane %v906, %v933
      %v935 = vcombine.high %v913, %v913
      %v936 = vcombine.high %v920, %v920
      %v937 = vcombine.high %v927, %v927
      %v938 = vcombine.high %v934, %v934
      %v940 = vunpack.c.l.s4 1966171168
      %v941 = vunpack.c.0.s8 %v940
      %v942 = vlaneseq
      %v943 = vshrl.u32 %v942, 7
      %v944 = vsub.s32 %v941, %v943
      %v945 = vrot.slane %v302, %v944
      %v947 = vunpack.c.l.s4 1966171168
      %v948 = vunpack.c.0.s8 %v947
      %v949 = vlaneseq
      %v950 = vshrl.u32 %v949, 7
      %v951 = vsub.s32 %v948, %v950
      %v952 = vrot.slane %v945, %v951
      %v953 = vcombine.high %v303, %v303
      %v955 = vunpack.c.l.s4 1966171168
      %v956 = vunpack.c.0.s8 %v955
      %v957 = vlaneseq
      %v958 = vshrl.u32 %v957, 7
      %v959 = vsub.s32 %v956, %v958
      %v960 = vrot.slane %v303, %v959
      %v962 = vunpack.c.l.s4 1966171168
      %v963 = vunpack.c.0.s8 %v962
      %v964 = vlaneseq
      %v965 = vshrl.u32 %v964, 7
      %v966 = vsub.s32 %v963, %v965
      %v967 = vrot.slane %v953, %v966
      %v968 = vcombine.high %v960, %v960
      %v969 = vcombine.high %v967, %v967
      %v971 = vunpack.c.l.s4 1966171168
      %v972 = vunpack.c.0.s8 %v971
      %v973 = vlaneseq
      %v974 = vshrl.u32 %v973, 7
      %v975 = vsub.s32 %v972, %v974
      %v976 = vrot.slane %v960, %v975
      %v978 = vunpack.c.l.s4 1966171168
      %v979 = vunpack.c.0.s8 %v978
      %v980 = vlaneseq
      %v981 = vshrl.u32 %v980, 7
      %v982 = vsub.s32 %v979, %v981
      %v983 = vrot.slane %v967, %v982
      %v985 = vunpack.c.l.s4 1966171168
      %v986 = vunpack.c.0.s8 %v985
      %v987 = vlaneseq
      %v988 = vshrl.u32 %v987, 7
      %v989 = vsub.s32 %v986, %v988
      %v990 = vrot.slane %v968, %v989
      %v992 = vunpack.c.l.s4 1966171168
      %v993 = vunpack.c.0.s8 %v992
      %v994 = vlaneseq
      %v995 = vshrl.u32 %v994, 7
      %v996 = vsub.s32 %v993, %v995
      %v997 = vrot.slane %v969, %v996
      %v998 = vcombine.high %v976, %v976
      %v999 = vcombine.high %v983, %v983
      %v1000 = vcombine.high %v990, %v990
      %v1001 = vcombine.high %v997, %v997
      %v1002 = vcombine.high %v304, %v304
      %v1004 = vunpack.c.l.s4 1966171168
      %v1005 = vunpack.c.0.s8 %v1004
      %v1006 = vlaneseq
      %v1007 = vshrl.u32 %v1006, 7
      %v1008 = vsub.s32 %v1005, %v1007
      %v1009 = vrot.slane %v304, %v1008
      %v1011 = vunpack.c.l.s4 1966171168
      %v1012 = vunpack.c.0.s8 %v1011
      %v1013 = vlaneseq
      %v1014 = vshrl.u32 %v1013, 7
      %v1015 = vsub.s32 %v1012, %v1014
      %v1016 = vrot.slane %v1002, %v1015
      %v1017 = vcombine.high %v1009, %v1009
      %v1018 = vcombine.high %v1016, %v1016
      %v1020 = vunpack.c.l.s4 1966171168
      %v1021 = vunpack.c.0.s8 %v1020
      %v1022 = vlaneseq
      %v1023 = vshrl.u32 %v1022, 7
      %v1024 = vsub.s32 %v1021, %v1023
      %v1025 = vrot.slane %v1009, %v1024
      %v1027 = vunpack.c.l.s4 1966171168
      %v1028 = vunpack.c.0.s8 %v1027
      %v1029 = vlaneseq
      %v1030 = vshrl.u32 %v1029, 7
      %v1031 = vsub.s32 %v1028, %v1030
      %v1032 = vrot.slane %v1016, %v1031
      %v1034 = vunpack.c.l.s4 1966171168
      %v1035 = vunpack.c.0.s8 %v1034
      %v1036 = vlaneseq
      %v1037 = vshrl.u32 %v1036, 7
      %v1038 = vsub.s32 %v1035, %v1037
      %v1039 = vrot.slane %v1017, %v1038
      %v1041 = vunpack.c.l.s4 1966171168
      %v1042 = vunpack.c.0.s8 %v1041
      %v1043 = vlaneseq
      %v1044 = vshrl.u32 %v1043, 7
      %v1045 = vsub.s32 %v1042, %v1044
      %v1046 = vrot.slane %v1018, %v1045
      %v1047 = vcombine.high %v1025, %v1025
      %v1048 = vcombine.high %v1032, %v1032
      %v1049 = vcombine.high %v1039, %v1039
      %v1050 = vcombine.high %v1046, %v1046
      %v1052 = vunpack.c.l.s4 1966171168
      %v1053 = vunpack.c.0.s8 %v1052
      %v1054 = vlaneseq
      %v1055 = vshrl.u32 %v1054, 7
      %v1056 = vsub.s32 %v1053, %v1055
      %v1057 = vrot.slane %v305, %v1056
      %v1059 = vunpack.c.l.s4 1966171168
      %v1060 = vunpack.c.0.s8 %v1059
      %v1061 = vlaneseq
      %v1062 = vshrl.u32 %v1061, 7
      %v1063 = vsub.s32 %v1060, %v1062
      %v1064 = vrot.slane %v1057, %v1063
      %v1065 = vcombine.high %v306, %v306
      %v1067 = vunpack.c.l.s4 1966171168
      %v1068 = vunpack.c.0.s8 %v1067
      %v1069 = vlaneseq
      %v1070 = vshrl.u32 %v1069, 7
      %v1071 = vsub.s32 %v1068, %v1070
      %v1072 = vrot.slane %v306, %v1071
      %v1074 = vunpack.c.l.s4 1966171168
      %v1075 = vunpack.c.0.s8 %v1074
      %v1076 = vlaneseq
      %v1077 = vshrl.u32 %v1076, 7
      %v1078 = vsub.s32 %v1075, %v1077
      %v1079 = vrot.slane %v1065, %v1078
      %v1080 = vcombine.high %v1072, %v1072
      %v1081 = vcombine.high %v1079, %v1079
      %v1083 = vunpack.c.l.s4 1966171168
      %v1084 = vunpack.c.0.s8 %v1083
      %v1085 = vlaneseq
      %v1086 = vshrl.u32 %v1085, 7
      %v1087 = vsub.s32 %v1084, %v1086
      %v1088 = vrot.slane %v1072, %v1087
      %v1090 = vunpack.c.l.s4 1966171168
      %v1091 = vunpack.c.0.s8 %v1090
      %v1092 = vlaneseq
      %v1093 = vshrl.u32 %v1092, 7
      %v1094 = vsub.s32 %v1091, %v1093
      %v1095 = vrot.slane %v1079, %v1094
      %v1097 = vunpack.c.l.s4 1966171168
      %v1098 = vunpack.c.0.s8 %v1097
      %v1099 = vlaneseq
      %v1100 = vshrl.u32 %v1099, 7
      %v1101 = vsub.s32 %v1098, %v1100
      %v1102 = vrot.slane %v1080, %v1101
      %v1104 = vunpack.c.l.s4 1966171168
      %v1105 = vunpack.c.0.s8 %v1104
      %v1106 = vlaneseq
      %v1107 = vshrl.u32 %v1106, 7
      %v1108 = vsub.s32 %v1105, %v1107
      %v1109 = vrot.slane %v1081, %v1108
      %v1110 = vcombine.high %v1088, %v1088
      %v1111 = vcombine.high %v1095, %v1095
      %v1112 = vcombine.high %v1102, %v1102
      %v1113 = vcombine.high %v1109, %v1109
      %v1114 = vcombine.high %v307, %v307
      %v1116 = vunpack.c.l.s4 1966171168
      %v1117 = vunpack.c.0.s8 %v1116
      %v1118 = vlaneseq
      %v1119 = vshrl.u32 %v1118, 7
      %v1120 = vsub.s32 %v1117, %v1119
      %v1121 = vrot.slane %v307, %v1120
      %v1123 = vunpack.c.l.s4 1966171168
      %v1124 = vunpack.c.0.s8 %v1123
      %v1125 = vlaneseq
      %v1126 = vshrl.u32 %v1125, 7
      %v1127 = vsub.s32 %v1124, %v1126
      %v1128 = vrot.slane %v1114, %v1127
      %v1129 = vcombine.high %v1121, %v1121
      %v1130 = vcombine.high %v1128, %v1128
      %v1132 = vunpack.c.l.s4 1966171168
      %v1133 = vunpack.c.0.s8 %v1132
      %v1134 = vlaneseq
      %v1135 = vshrl.u32 %v1134, 7
      %v1136 = vsub.s32 %v1133, %v1135
      %v1137 = vrot.slane %v1121, %v1136
      %v1139 = vunpack.c.l.s4 1966171168
      %v1140 = vunpack.c.0.s8 %v1139
      %v1141 = vlaneseq
      %v1142 = vshrl.u32 %v1141, 7
      %v1143 = vsub.s32 %v1140, %v1142
      %v1144 = vrot.slane %v1128, %v1143
      %v1146 = vunpack.c.l.s4 1966171168
      %v1147 = vunpack.c.0.s8 %v1146
      %v1148 = vlaneseq
      %v1149 = vshrl.u32 %v1148, 7
      %v1150 = vsub.s32 %v1147, %v1149
      %v1151 = vrot.slane %v1129, %v1150
      %v1153 = vunpack.c.l.s4 1966171168
      %v1154 = vunpack.c.0.s8 %v1153
      %v1155 = vlaneseq
      %v1156 = vshrl.u32 %v1155, 7
      %v1157 = vsub.s32 %v1154, %v1156
      %v1158 = vrot.slane %v1130, %v1157
      %v1159 = vcombine.high %v1137, %v1137
      %v1160 = vcombine.high %v1144, %v1144
      %v1161 = vcombine.high %v1151, %v1151
      %v1162 = vcombine.high %v1158, %v1158
      %v1164 = vunpack.c.l.s4 1966171168
      %v1165 = vunpack.c.0.s8 %v1164
      %v1166 = vlaneseq
      %v1167 = vshrl.u32 %v1166, 7
      %v1168 = vsub.s32 %v1165, %v1167
      %v1169 = vrot.slane %v308, %v1168
      %v1171 = vunpack.c.l.s4 1966171168
      %v1172 = vunpack.c.0.s8 %v1171
      %v1173 = vlaneseq
      %v1174 = vshrl.u32 %v1173, 7
      %v1175 = vsub.s32 %v1172, %v1174
      %v1176 = vrot.slane %v1169, %v1175
      %v1177 = vcombine.high %v309, %v309
      %v1179 = vunpack.c.l.s4 1966171168
      %v1180 = vunpack.c.0.s8 %v1179
      %v1181 = vlaneseq
      %v1182 = vshrl.u32 %v1181, 7
      %v1183 = vsub.s32 %v1180, %v1182
      %v1184 = vrot.slane %v309, %v1183
      %v1186 = vunpack.c.l.s4 1966171168
      %v1187 = vunpack.c.0.s8 %v1186
      %v1188 = vlaneseq
      %v1189 = vshrl.u32 %v1188, 7
      %v1190 = vsub.s32 %v1187, %v1189
      %v1191 = vrot.slane %v1177, %v1190
      %v1192 = vcombine.high %v1184, %v1184
      %v1193 = vcombine.high %v1191, %v1191
      %v1195 = vunpack.c.l.s4 1966171168
      %v1196 = vunpack.c.0.s8 %v1195
      %v1197 = vlaneseq
      %v1198 = vshrl.u32 %v1197, 7
      %v1199 = vsub.s32 %v1196, %v1198
      %v1200 = vrot.slane %v1184, %v1199
      %v1202 = vunpack.c.l.s4 1966171168
      %v1203 = vunpack.c.0.s8 %v1202
      %v1204 = vlaneseq
      %v1205 = vshrl.u32 %v1204, 7
      %v1206 = vsub.s32 %v1203, %v1205
      %v1207 = vrot.slane %v1191, %v1206
      %v1209 = vunpack.c.l.s4 1966171168
      %v1210 = vunpack.c.0.s8 %v1209
      %v1211 = vlaneseq
      %v1212 = vshrl.u32 %v1211, 7
      %v1213 = vsub.s32 %v1210, %v1212
      %v1214 = vrot.slane %v1192, %v1213
      %v1216 = vunpack.c.l.s4 1966171168
      %v1217 = vunpack.c.0.s8 %v1216
      %v1218 = vlaneseq
      %v1219 = vshrl.u32 %v1218, 7
      %v1220 = vsub.s32 %v1217, %v1219
      %v1221 = vrot.slane %v1193, %v1220
      %v1222 = vcombine.high %v1200, %v1200
      %v1223 = vcombine.high %v1207, %v1207
      %v1224 = vcombine.high %v1214, %v1214
      %v1225 = vcombine.high %v1221, %v1221
      %v1226 = vcombine.high %v310, %v310
      %v1228 = vunpack.c.l.s4 1966171168
      %v1229 = vunpack.c.0.s8 %v1228
      %v1230 = vlaneseq
      %v1231 = vshrl.u32 %v1230, 7
      %v1232 = vsub.s32 %v1229, %v1231
      %v1233 = vrot.slane %v310, %v1232
      %v1235 = vunpack.c.l.s4 1966171168
      %v1236 = vunpack.c.0.s8 %v1235
      %v1237 = vlaneseq
      %v1238 = vshrl.u32 %v1237, 7
      %v1239 = vsub.s32 %v1236, %v1238
      %v1240 = vrot.slane %v1226, %v1239
      %v1241 = vcombine.high %v1233, %v1233
      %v1242 = vcombine.high %v1240, %v1240
      %v1244 = vunpack.c.l.s4 1966171168
      %v1245 = vunpack.c.0.s8 %v1244
      %v1246 = vlaneseq
      %v1247 = vshrl.u32 %v1246, 7
      %v1248 = vsub.s32 %v1245, %v1247
      %v1249 = vrot.slane %v1233, %v1248
      %v1251 = vunpack.c.l.s4 1966171168
      %v1252 = vunpack.c.0.s8 %v1251
      %v1253 = vlaneseq
      %v1254 = vshrl.u32 %v1253, 7
      %v1255 = vsub.s32 %v1252, %v1254
      %v1256 = vrot.slane %v1240, %v1255
      %v1258 = vunpack.c.l.s4 1966171168
      %v1259 = vunpack.c.0.s8 %v1258
      %v1260 = vlaneseq
      %v1261 = vshrl.u32 %v1260, 7
      %v1262 = vsub.s32 %v1259, %v1261
      %v1263 = vrot.slane %v1241, %v1262
      %v1265 = vunpack.c.l.s4 1966171168
      %v1266 = vunpack.c.0.s8 %v1265
      %v1267 = vlaneseq
      %v1268 = vshrl.u32 %v1267, 7
      %v1269 = vsub.s32 %v1266, %v1268
      %v1270 = vrot.slane %v1242, %v1269
      %v1271 = vcombine.high %v1249, %v1249
      %v1272 = vcombine.high %v1256, %v1256
      %v1273 = vcombine.high %v1263, %v1263
      %v1274 = vcombine.high %v1270, %v1270
      %v1276 = vunpack.c.l.s4 1966171168
      %v1277 = vunpack.c.0.s8 %v1276
      %v1278 = vlaneseq
      %v1279 = vshrl.u32 %v1278, 7
      %v1280 = vsub.s32 %v1277, %v1279
      %v1281 = vrot.slane %v311, %v1280
      %v1283 = vunpack.c.l.s4 1966171168
      %v1284 = vunpack.c.0.s8 %v1283
      %v1285 = vlaneseq
      %v1286 = vshrl.u32 %v1285, 7
      %v1287 = vsub.s32 %v1284, %v1286
      %v1288 = vrot.slane %v1281, %v1287
      %v1289 = vcombine.high %v312, %v312
      %v1291 = vunpack.c.l.s4 1966171168
      %v1292 = vunpack.c.0.s8 %v1291
      %v1293 = vlaneseq
      %v1294 = vshrl.u32 %v1293, 7
      %v1295 = vsub.s32 %v1292, %v1294
      %v1296 = vrot.slane %v312, %v1295
      %v1298 = vunpack.c.l.s4 1966171168
      %v1299 = vunpack.c.0.s8 %v1298
      %v1300 = vlaneseq
      %v1301 = vshrl.u32 %v1300, 7
      %v1302 = vsub.s32 %v1299, %v1301
      %v1303 = vrot.slane %v1289, %v1302
      %v1304 = vcombine.high %v1296, %v1296
      %v1305 = vcombine.high %v1303, %v1303
      %v1307 = vunpack.c.l.s4 1966171168
      %v1308 = vunpack.c.0.s8 %v1307
      %v1309 = vlaneseq
      %v1310 = vshrl.u32 %v1309, 7
      %v1311 = vsub.s32 %v1308, %v1310
      %v1312 = vrot.slane %v1296, %v1311
      %v1314 = vunpack.c.l.s4 1966171168
      %v1315 = vunpack.c.0.s8 %v1314
      %v1316 = vlaneseq
      %v1317 = vshrl.u32 %v1316, 7
      %v1318 = vsub.s32 %v1315, %v1317
      %v1319 = vrot.slane %v1303, %v1318
      %v1321 = vunpack.c.l.s4 1966171168
      %v1322 = vunpack.c.0.s8 %v1321
      %v1323 = vlaneseq
      %v1324 = vshrl.u32 %v1323, 7
      %v1325 = vsub.s32 %v1322, %v1324
      %v1326 = vrot.slane %v1304, %v1325
      %v1328 = vunpack.c.l.s4 1966171168
      %v1329 = vunpack.c.0.s8 %v1328
      %v1330 = vlaneseq
      %v1331 = vshrl.u32 %v1330, 7
      %v1332 = vsub.s32 %v1329, %v1331
      %v1333 = vrot.slane %v1305, %v1332
      %v1334 = vcombine.high %v1312, %v1312
      %v1335 = vcombine.high %v1319, %v1319
      %v1336 = vcombine.high %v1326, %v1326
      %v1337 = vcombine.high %v1333, %v1333
      %v1338 = vcombine.high %v313, %v313
      %v1340 = vunpack.c.l.s4 1966171168
      %v1341 = vunpack.c.0.s8 %v1340
      %v1342 = vlaneseq
      %v1343 = vshrl.u32 %v1342, 7
      %v1344 = vsub.s32 %v1341, %v1343
      %v1345 = vrot.slane %v313, %v1344
      %v1347 = vunpack.c.l.s4 1966171168
      %v1348 = vunpack.c.0.s8 %v1347
      %v1349 = vlaneseq
      %v1350 = vshrl.u32 %v1349, 7
      %v1351 = vsub.s32 %v1348, %v1350
      %v1352 = vrot.slane %v1338, %v1351
      %v1353 = vcombine.high %v1345, %v1345
      %v1354 = vcombine.high %v1352, %v1352
      %v1356 = vunpack.c.l.s4 1966171168
      %v1357 = vunpack.c.0.s8 %v1356
      %v1358 = vlaneseq
      %v1359 = vshrl.u32 %v1358, 7
      %v1360 = vsub.s32 %v1357, %v1359
      %v1361 = vrot.slane %v1345, %v1360
      %v1363 = vunpack.c.l.s4 1966171168
      %v1364 = vunpack.c.0.s8 %v1363
      %v1365 = vlaneseq
      %v1366 = vshrl.u32 %v1365, 7
      %v1367 = vsub.s32 %v1364, %v1366
      %v1368 = vrot.slane %v1352, %v1367
      %v1370 = vunpack.c.l.s4 1966171168
      %v1371 = vunpack.c.0.s8 %v1370
      %v1372 = vlaneseq
      %v1373 = vshrl.u32 %v1372, 7
      %v1374 = vsub.s32 %v1371, %v1373
      %v1375 = vrot.slane %v1353, %v1374
      %v1377 = vunpack.c.l.s4 1966171168
      %v1378 = vunpack.c.0.s8 %v1377
      %v1379 = vlaneseq
      %v1380 = vshrl.u32 %v1379, 7
      %v1381 = vsub.s32 %v1378, %v1380
      %v1382 = vrot.slane %v1354, %v1381
      %v1383 = vcombine.high %v1361, %v1361
      %v1384 = vcombine.high %v1368, %v1368
      %v1385 = vcombine.high %v1375, %v1375
      %v1386 = vcombine.high %v1382, %v1382
      %v1388 = vunpack.c.l.s4 1966171168
      %v1389 = vunpack.c.0.s8 %v1388
      %v1390 = vlaneseq
      %v1391 = vshrl.u32 %v1390, 7
      %v1392 = vsub.s32 %v1389, %v1391
      %v1393 = vrot.slane %v314, %v1392
      %v1395 = vunpack.c.l.s4 1966171168
      %v1396 = vunpack.c.0.s8 %v1395
      %v1397 = vlaneseq
      %v1398 = vshrl.u32 %v1397, 7
      %v1399 = vsub.s32 %v1396, %v1398
      %v1400 = vrot.slane %v1393, %v1399
      %v1401 = vcombine.high %v315, %v315
      %v1403 = vunpack.c.l.s4 1966171168
      %v1404 = vunpack.c.0.s8 %v1403
      %v1405 = vlaneseq
      %v1406 = vshrl.u32 %v1405, 7
      %v1407 = vsub.s32 %v1404, %v1406
      %v1408 = vrot.slane %v315, %v1407
      %v1410 = vunpack.c.l.s4 1966171168
      %v1411 = vunpack.c.0.s8 %v1410
      %v1412 = vlaneseq
      %v1413 = vshrl.u32 %v1412, 7
      %v1414 = vsub.s32 %v1411, %v1413
      %v1415 = vrot.slane %v1401, %v1414
      %v1416 = vcombine.high %v1408, %v1408
      %v1417 = vcombine.high %v1415, %v1415
      %v1419 = vunpack.c.l.s4 1966171168
      %v1420 = vunpack.c.0.s8 %v1419
      %v1421 = vlaneseq
      %v1422 = vshrl.u32 %v1421, 7
      %v1423 = vsub.s32 %v1420, %v1422
      %v1424 = vrot.slane %v1408, %v1423
      %v1426 = vunpack.c.l.s4 1966171168
      %v1427 = vunpack.c.0.s8 %v1426
      %v1428 = vlaneseq
      %v1429 = vshrl.u32 %v1428, 7
      %v1430 = vsub.s32 %v1427, %v1429
      %v1431 = vrot.slane %v1415, %v1430
      %v1433 = vunpack.c.l.s4 1966171168
      %v1434 = vunpack.c.0.s8 %v1433
      %v1435 = vlaneseq
      %v1436 = vshrl.u32 %v1435, 7
      %v1437 = vsub.s32 %v1434, %v1436
      %v1438 = vrot.slane %v1416, %v1437
      %v1440 = vunpack.c.l.s4 1966171168
      %v1441 = vunpack.c.0.s8 %v1440
      %v1442 = vlaneseq
      %v1443 = vshrl.u32 %v1442, 7
      %v1444 = vsub.s32 %v1441, %v1443
      %v1445 = vrot.slane %v1417, %v1444
      %v1446 = vcombine.high %v1424, %v1424
      %v1447 = vcombine.high %v1431, %v1431
      %v1448 = vcombine.high %v1438, %v1438
      %v1449 = vcombine.high %v1445, %v1445
      %v1450 = vcombine.high %v316, %v316
      %v1452 = vunpack.c.l.s4 1966171168
      %v1453 = vunpack.c.0.s8 %v1452
      %v1454 = vlaneseq
      %v1455 = vshrl.u32 %v1454, 7
      %v1456 = vsub.s32 %v1453, %v1455
      %v1457 = vrot.slane %v316, %v1456
      %v1459 = vunpack.c.l.s4 1966171168
      %v1460 = vunpack.c.0.s8 %v1459
      %v1461 = vlaneseq
      %v1462 = vshrl.u32 %v1461, 7
      %v1463 = vsub.s32 %v1460, %v1462
      %v1464 = vrot.slane %v1450, %v1463
      %v1465 = vcombine.high %v1457, %v1457
      %v1466 = vcombine.high %v1464, %v1464
      %v1468 = vunpack.c.l.s4 1966171168
      %v1469 = vunpack.c.0.s8 %v1468
      %v1470 = vlaneseq
      %v1471 = vshrl.u32 %v1470, 7
      %v1472 = vsub.s32 %v1469, %v1471
      %v1473 = vrot.slane %v1457, %v1472
      %v1475 = vunpack.c.l.s4 1966171168
      %v1476 = vunpack.c.0.s8 %v1475
      %v1477 = vlaneseq
      %v1478 = vshrl.u32 %v1477, 7
      %v1479 = vsub.s32 %v1476, %v1478
      %v1480 = vrot.slane %v1464, %v1479
      %v1482 = vunpack.c.l.s4 1966171168
      %v1483 = vunpack.c.0.s8 %v1482
      %v1484 = vlaneseq
      %v1485 = vshrl.u32 %v1484, 7
      %v1486 = vsub.s32 %v1483, %v1485
      %v1487 = vrot.slane %v1465, %v1486
      %v1489 = vunpack.c.l.s4 1966171168
      %v1490 = vunpack.c.0.s8 %v1489
      %v1491 = vlaneseq
      %v1492 = vshrl.u32 %v1491, 7
      %v1493 = vsub.s32 %v1490, %v1492
      %v1494 = vrot.slane %v1466, %v1493
      %v1495 = vcombine.high %v1473, %v1473
      %v1496 = vcombine.high %v1480, %v1480
      %v1497 = vcombine.high %v1487, %v1487
      %v1498 = vcombine.high %v1494, %v1494
      %v1500 = vunpack.c.l.s4 1966171168
      %v1501 = vunpack.c.0.s8 %v1500
      %v1502 = vlaneseq
      %v1503 = vshrl.u32 %v1502, 7
      %v1504 = vsub.s32 %v1501, %v1503
      %v1505 = vrot.slane %v317, %v1504
      %v1507 = vunpack.c.l.s4 1966171168
      %v1508 = vunpack.c.0.s8 %v1507
      %v1509 = vlaneseq
      %v1510 = vshrl.u32 %v1509, 7
      %v1511 = vsub.s32 %v1508, %v1510
      %v1512 = vrot.slane %v1505, %v1511
      %v1513 = vcombine.high %v318, %v318
      %v1515 = vunpack.c.l.s4 1966171168
      %v1516 = vunpack.c.0.s8 %v1515
      %v1517 = vlaneseq
      %v1518 = vshrl.u32 %v1517, 7
      %v1519 = vsub.s32 %v1516, %v1518
      %v1520 = vrot.slane %v318, %v1519
      %v1522 = vunpack.c.l.s4 1966171168
      %v1523 = vunpack.c.0.s8 %v1522
      %v1524 = vlaneseq
      %v1525 = vshrl.u32 %v1524, 7
      %v1526 = vsub.s32 %v1523, %v1525
      %v1527 = vrot.slane %v1513, %v1526
      %v1528 = vcombine.high %v1520, %v1520
      %v1529 = vcombine.high %v1527, %v1527
      %v1531 = vunpack.c.l.s4 1966171168
      %v1532 = vunpack.c.0.s8 %v1531
      %v1533 = vlaneseq
      %v1534 = vshrl.u32 %v1533, 7
      %v1535 = vsub.s32 %v1532, %v1534
      %v1536 = vrot.slane %v1520, %v1535
      %v1538 = vunpack.c.l.s4 1966171168
      %v1539 = vunpack.c.0.s8 %v1538
      %v1540 = vlaneseq
      %v1541 = vshrl.u32 %v1540, 7
      %v1542 = vsub.s32 %v1539, %v1541
      %v1543 = vrot.slane %v1527, %v1542
      %v1545 = vunpack.c.l.s4 1966171168
      %v1546 = vunpack.c.0.s8 %v1545
      %v1547 = vlaneseq
      %v1548 = vshrl.u32 %v1547, 7
      %v1549 = vsub.s32 %v1546, %v1548
      %v1550 = vrot.slane %v1528, %v1549
      %v1552 = vunpack.c.l.s4 1966171168
      %v1553 = vunpack.c.0.s8 %v1552
      %v1554 = vlaneseq
      %v1555 = vshrl.u32 %v1554, 7
      %v1556 = vsub.s32 %v1553, %v1555
      %v1557 = vrot.slane %v1529, %v1556
      %v1558 = vcombine.high %v1536, %v1536
      %v1559 = vcombine.high %v1543, %v1543
      %v1560 = vcombine.high %v1550, %v1550
      %v1561 = vcombine.high %v1557, %v1557
      %v1562 = vcombine.high %v319, %v319
      %v1564 = vunpack.c.l.s4 1966171168
      %v1565 = vunpack.c.0.s8 %v1564
      %v1566 = vlaneseq
      %v1567 = vshrl.u32 %v1566, 7
      %v1568 = vsub.s32 %v1565, %v1567
      %v1569 = vrot.slane %v319, %v1568
      %v1571 = vunpack.c.l.s4 1966171168
      %v1572 = vunpack.c.0.s8 %v1571
      %v1573 = vlaneseq
      %v1574 = vshrl.u32 %v1573, 7
      %v1575 = vsub.s32 %v1572, %v1574
      %v1576 = vrot.slane %v1562, %v1575
      %v1577 = vcombine.high %v1569, %v1569
      %v1578 = vcombine.high %v1576, %v1576
      %v1580 = vunpack.c.l.s4 1966171168
      %v1581 = vunpack.c.0.s8 %v1580
      %v1582 = vlaneseq
      %v1583 = vshrl.u32 %v1582, 7
      %v1584 = vsub.s32 %v1581, %v1583
      %v1585 = vrot.slane %v1569, %v1584
      %v1587 = vunpack.c.l.s4 1966171168
      %v1588 = vunpack.c.0.s8 %v1587
      %v1589 = vlaneseq
      %v1590 = vshrl.u32 %v1589, 7
      %v1591 = vsub.s32 %v1588, %v1590
      %v1592 = vrot.slane %v1576, %v1591
      %v1594 = vunpack.c.l.s4 1966171168
      %v1595 = vunpack.c.0.s8 %v1594
      %v1596 = vlaneseq
      %v1597 = vshrl.u32 %v1596, 7
      %v1598 = vsub.s32 %v1595, %v1597
      %v1599 = vrot.slane %v1577, %v1598
      %v1601 = vunpack.c.l.s4 1966171168
      %v1602 = vunpack.c.0.s8 %v1601
      %v1603 = vlaneseq
      %v1604 = vshrl.u32 %v1603, 7
      %v1605 = vsub.s32 %v1602, %v1604
      %v1606 = vrot.slane %v1578, %v1605
      %v1607 = vcombine.high %v1585, %v1585
      %v1608 = vcombine.high %v1592, %v1592
      %v1609 = vcombine.high %v1599, %v1599
      %v1610 = vcombine.high %v1606, %v1606
      %v1612 = vunpack.c.l.s4 1966171168
      %v1613 = vunpack.c.0.s8 %v1612
      %v1614 = vlaneseq
      %v1615 = vshrl.u32 %v1614, 7
      %v1616 = vsub.s32 %v1613, %v1615
      %v1617 = vrot.slane %v320, %v1616
      %v1619 = vunpack.c.l.s4 1966171168
      %v1620 = vunpack.c.0.s8 %v1619
      %v1621 = vlaneseq
      %v1622 = vshrl.u32 %v1621, 7
      %v1623 = vsub.s32 %v1620, %v1622
      %v1624 = vrot.slane %v1617, %v1623
      %v1625 = vcombine.high %v321, %v321
      %v1627 = vunpack.c.l.s4 1966171168
      %v1628 = vunpack.c.0.s8 %v1627
      %v1629 = vlaneseq
      %v1630 = vshrl.u32 %v1629, 7
      %v1631 = vsub.s32 %v1628, %v1630
      %v1632 = vrot.slane %v321, %v1631
      %v1634 = vunpack.c.l.s4 1966171168
      %v1635 = vunpack.c.0.s8 %v1634
      %v1636 = vlaneseq
      %v1637 = vshrl.u32 %v1636, 7
      %v1638 = vsub.s32 %v1635, %v1637
      %v1639 = vrot.slane %v1625, %v1638
      %v1640 = vcombine.high %v1632, %v1632
      %v1641 = vcombine.high %v1639, %v1639
      %v1643 = vunpack.c.l.s4 1966171168
      %v1644 = vunpack.c.0.s8 %v1643
      %v1645 = vlaneseq
      %v1646 = vshrl.u32 %v1645, 7
      %v1647 = vsub.s32 %v1644, %v1646
      %v1648 = vrot.slane %v1632, %v1647
      %v1650 = vunpack.c.l.s4 1966171168
      %v1651 = vunpack.c.0.s8 %v1650
      %v1652 = vlaneseq
      %v1653 = vshrl.u32 %v1652, 7
      %v1654 = vsub.s32 %v1651, %v1653
      %v1655 = vrot.slane %v1639, %v1654
      %v1657 = vunpack.c.l.s4 1966171168
      %v1658 = vunpack.c.0.s8 %v1657
      %v1659 = vlaneseq
      %v1660 = vshrl.u32 %v1659, 7
      %v1661 = vsub.s32 %v1658, %v1660
      %v1662 = vrot.slane %v1640, %v1661
      %v1664 = vunpack.c.l.s4 1966171168
      %v1665 = vunpack.c.0.s8 %v1664
      %v1666 = vlaneseq
      %v1667 = vshrl.u32 %v1666, 7
      %v1668 = vsub.s32 %v1665, %v1667
      %v1669 = vrot.slane %v1641, %v1668
      %v1670 = vcombine.high %v1648, %v1648
      %v1671 = vcombine.high %v1655, %v1655
      %v1672 = vcombine.high %v1662, %v1662
      %v1673 = vcombine.high %v1669, %v1669
      %v1674 = vcombine.high %v322, %v322
      %v1676 = vunpack.c.l.s4 1966171168
      %v1677 = vunpack.c.0.s8 %v1676
      %v1678 = vlaneseq
      %v1679 = vshrl.u32 %v1678, 7
      %v1680 = vsub.s32 %v1677, %v1679
      %v1681 = vrot.slane %v322, %v1680
      %v1683 = vunpack.c.l.s4 1966171168
      %v1684 = vunpack.c.0.s8 %v1683
      %v1685 = vlaneseq
      %v1686 = vshrl.u32 %v1685, 7
      %v1687 = vsub.s32 %v1684, %v1686
      %v1688 = vrot.slane %v1674, %v1687
      %v1689 = vcombine.high %v1681, %v1681
      %v1690 = vcombine.high %v1688, %v1688
      %v1692 = vunpack.c.l.s4 1966171168
      %v1693 = vunpack.c.0.s8 %v1692
      %v1694 = vlaneseq
      %v1695 = vshrl.u32 %v1694, 7
      %v1696 = vsub.s32 %v1693, %v1695
      %v1697 = vrot.slane %v1681, %v1696
      %v1699 = vunpack.c.l.s4 1966171168
      %v1700 = vunpack.c.0.s8 %v1699
      %v1701 = vlaneseq
      %v1702 = vshrl.u32 %v1701, 7
      %v1703 = vsub.s32 %v1700, %v1702
      %v1704 = vrot.slane %v1688, %v1703
      %v1706 = vunpack.c.l.s4 1966171168
      %v1707 = vunpack.c.0.s8 %v1706
      %v1708 = vlaneseq
      %v1709 = vshrl.u32 %v1708, 7
      %v1710 = vsub.s32 %v1707, %v1709
      %v1711 = vrot.slane %v1689, %v1710
      %v1713 = vunpack.c.l.s4 1966171168
      %v1714 = vunpack.c.0.s8 %v1713
      %v1715 = vlaneseq
      %v1716 = vshrl.u32 %v1715, 7
      %v1717 = vsub.s32 %v1714, %v1716
      %v1718 = vrot.slane %v1690, %v1717
      %v1719 = vcombine.high %v1697, %v1697
      %v1720 = vcombine.high %v1704, %v1704
      %v1721 = vcombine.high %v1711, %v1711
      %v1722 = vcombine.high %v1718, %v1718
      %v1724 = vunpack.c.l.s4 1966171168
      %v1725 = vunpack.c.0.s8 %v1724
      %v1726 = vlaneseq
      %v1727 = vshrl.u32 %v1726, 7
      %v1728 = vsub.s32 %v1725, %v1727
      %v1729 = vrot.slane %v323, %v1728
      %v1731 = vunpack.c.l.s4 1966171168
      %v1732 = vunpack.c.0.s8 %v1731
      %v1733 = vlaneseq
      %v1734 = vshrl.u32 %v1733, 7
      %v1735 = vsub.s32 %v1732, %v1734
      %v1736 = vrot.slane %v1729, %v1735
      %v1737 = vcombine.high %v324, %v324
      %v1739 = vunpack.c.l.s4 1966171168
      %v1740 = vunpack.c.0.s8 %v1739
      %v1741 = vlaneseq
      %v1742 = vshrl.u32 %v1741, 7
      %v1743 = vsub.s32 %v1740, %v1742
      %v1744 = vrot.slane %v324, %v1743
      %v1746 = vunpack.c.l.s4 1966171168
      %v1747 = vunpack.c.0.s8 %v1746
      %v1748 = vlaneseq
      %v1749 = vshrl.u32 %v1748, 7
      %v1750 = vsub.s32 %v1747, %v1749
      %v1751 = vrot.slane %v1737, %v1750
      %v1752 = vcombine.high %v1744, %v1744
      %v1753 = vcombine.high %v1751, %v1751
      %v1755 = vunpack.c.l.s4 1966171168
      %v1756 = vunpack.c.0.s8 %v1755
      %v1757 = vlaneseq
      %v1758 = vshrl.u32 %v1757, 7
      %v1759 = vsub.s32 %v1756, %v1758
      %v1760 = vrot.slane %v1744, %v1759
      %v1762 = vunpack.c.l.s4 1966171168
      %v1763 = vunpack.c.0.s8 %v1762
      %v1764 = vlaneseq
      %v1765 = vshrl.u32 %v1764, 7
      %v1766 = vsub.s32 %v1763, %v1765
      %v1767 = vrot.slane %v1751, %v1766
      %v1769 = vunpack.c.l.s4 1966171168
      %v1770 = vunpack.c.0.s8 %v1769
      %v1771 = vlaneseq
      %v1772 = vshrl.u32 %v1771, 7
      %v1773 = vsub.s32 %v1770, %v1772
      %v1774 = vrot.slane %v1752, %v1773
      %v1776 = vunpack.c.l.s4 1966171168
      %v1777 = vunpack.c.0.s8 %v1776
      %v1778 = vlaneseq
      %v1779 = vshrl.u32 %v1778, 7
      %v1780 = vsub.s32 %v1777, %v1779
      %v1781 = vrot.slane %v1753, %v1780
      %v1782 = vcombine.high %v1760, %v1760
      %v1783 = vcombine.high %v1767, %v1767
      %v1784 = vcombine.high %v1774, %v1774
      %v1785 = vcombine.high %v1781, %v1781
      %v1786 = vcombine.high %v325, %v325
      %v1788 = vunpack.c.l.s4 1966171168
      %v1789 = vunpack.c.0.s8 %v1788
      %v1790 = vlaneseq
      %v1791 = vshrl.u32 %v1790, 7
      %v1792 = vsub.s32 %v1789, %v1791
      %v1793 = vrot.slane %v325, %v1792
      %v1795 = vunpack.c.l.s4 1966171168
      %v1796 = vunpack.c.0.s8 %v1795
      %v1797 = vlaneseq
      %v1798 = vshrl.u32 %v1797, 7
      %v1799 = vsub.s32 %v1796, %v1798
      %v1800 = vrot.slane %v1786, %v1799
      %v1801 = vcombine.high %v1793, %v1793
      %v1802 = vcombine.high %v1800, %v1800
      %v1804 = vunpack.c.l.s4 1966171168
      %v1805 = vunpack.c.0.s8 %v1804
      %v1806 = vlaneseq
      %v1807 = vshrl.u32 %v1806, 7
      %v1808 = vsub.s32 %v1805, %v1807
      %v1809 = vrot.slane %v1793, %v1808
      %v1811 = vunpack.c.l.s4 1966171168
      %v1812 = vunpack.c.0.s8 %v1811
      %v1813 = vlaneseq
      %v1814 = vshrl.u32 %v1813, 7
      %v1815 = vsub.s32 %v1812, %v1814
      %v1816 = vrot.slane %v1800, %v1815
      %v1818 = vunpack.c.l.s4 1966171168
      %v1819 = vunpack.c.0.s8 %v1818
      %v1820 = vlaneseq
      %v1821 = vshrl.u32 %v1820, 7
      %v1822 = vsub.s32 %v1819, %v1821
      %v1823 = vrot.slane %v1801, %v1822
      %v1825 = vunpack.c.l.s4 1966171168
      %v1826 = vunpack.c.0.s8 %v1825
      %v1827 = vlaneseq
      %v1828 = vshrl.u32 %v1827, 7
      %v1829 = vsub.s32 %v1826, %v1828
      %v1830 = vrot.slane %v1802, %v1829
      %v1831 = vcombine.high %v1809, %v1809
      %v1832 = vcombine.high %v1816, %v1816
      %v1833 = vcombine.high %v1823, %v1823
      %v1834 = vcombine.high %v1830, %v1830
      %v1836 = vunpack.c.l.s4 1966171168
      %v1837 = vunpack.c.0.s8 %v1836
      %v1838 = vlaneseq
      %v1839 = vshrl.u32 %v1838, 7
      %v1840 = vsub.s32 %v1837, %v1839
      %v1841 = vrot.slane %v326, %v1840
      %v1843 = vunpack.c.l.s4 1966171168
      %v1844 = vunpack.c.0.s8 %v1843
      %v1845 = vlaneseq
      %v1846 = vshrl.u32 %v1845, 7
      %v1847 = vsub.s32 %v1844, %v1846
      %v1848 = vrot.slane %v1841, %v1847
      %v1849 = vcombine.high %v327, %v327
      %v1851 = vunpack.c.l.s4 1966171168
      %v1852 = vunpack.c.0.s8 %v1851
      %v1853 = vlaneseq
      %v1854 = vshrl.u32 %v1853, 7
      %v1855 = vsub.s32 %v1852, %v1854
      %v1856 = vrot.slane %v327, %v1855
      %v1858 = vunpack.c.l.s4 1966171168
      %v1859 = vunpack.c.0.s8 %v1858
      %v1860 = vlaneseq
      %v1861 = vshrl.u32 %v1860, 7
      %v1862 = vsub.s32 %v1859, %v1861
      %v1863 = vrot.slane %v1849, %v1862
      %v1864 = vcombine.high %v1856, %v1856
      %v1865 = vcombine.high %v1863, %v1863
      %v1867 = vunpack.c.l.s4 1966171168
      %v1868 = vunpack.c.0.s8 %v1867
      %v1869 = vlaneseq
      %v1870 = vshrl.u32 %v1869, 7
      %v1871 = vsub.s32 %v1868, %v1870
      %v1872 = vrot.slane %v1856, %v1871
      %v1874 = vunpack.c.l.s4 1966171168
      %v1875 = vunpack.c.0.s8 %v1874
      %v1876 = vlaneseq
      %v1877 = vshrl.u32 %v1876, 7
      %v1878 = vsub.s32 %v1875, %v1877
      %v1879 = vrot.slane %v1863, %v1878
      %v1881 = vunpack.c.l.s4 1966171168
      %v1882 = vunpack.c.0.s8 %v1881
      %v1883 = vlaneseq
      %v1884 = vshrl.u32 %v1883, 7
      %v1885 = vsub.s32 %v1882, %v1884
      %v1886 = vrot.slane %v1864, %v1885
      %v1888 = vunpack.c.l.s4 1966171168
      %v1889 = vunpack.c.0.s8 %v1888
      %v1890 = vlaneseq
      %v1891 = vshrl.u32 %v1890, 7
      %v1892 = vsub.s32 %v1889, %v1891
      %v1893 = vrot.slane %v1865, %v1892
      %v1894 = vcombine.high %v1872, %v1872
      %v1895 = vcombine.high %v1879, %v1879
      %v1896 = vcombine.high %v1886, %v1886
      %v1897 = vcombine.high %v1893, %v1893
      %v1898 = vcombine.high %v328, %v328
      %v1900 = vunpack.c.l.s4 1966171168
      %v1901 = vunpack.c.0.s8 %v1900
      %v1902 = vlaneseq
      %v1903 = vshrl.u32 %v1902, 7
      %v1904 = vsub.s32 %v1901, %v1903
      %v1905 = vrot.slane %v328, %v1904
      %v1907 = vunpack.c.l.s4 1966171168
      %v1908 = vunpack.c.0.s8 %v1907
      %v1909 = vlaneseq
      %v1910 = vshrl.u32 %v1909, 7
      %v1911 = vsub.s32 %v1908, %v1910
      %v1912 = vrot.slane %v1898, %v1911
      %v1913 = vcombine.high %v1905, %v1905
      %v1914 = vcombine.high %v1912, %v1912
      %v1916 = vunpack.c.l.s4 1966171168
      %v1917 = vunpack.c.0.s8 %v1916
      %v1918 = vlaneseq
      %v1919 = vshrl.u32 %v1918, 7
      %v1920 = vsub.s32 %v1917, %v1919
      %v1921 = vrot.slane %v1905, %v1920
      %v1923 = vunpack.c.l.s4 1966171168
      %v1924 = vunpack.c.0.s8 %v1923
      %v1925 = vlaneseq
      %v1926 = vshrl.u32 %v1925, 7
      %v1927 = vsub.s32 %v1924, %v1926
      %v1928 = vrot.slane %v1912, %v1927
      %v1930 = vunpack.c.l.s4 1966171168
      %v1931 = vunpack.c.0.s8 %v1930
      %v1932 = vlaneseq
      %v1933 = vshrl.u32 %v1932, 7
      %v1934 = vsub.s32 %v1931, %v1933
      %v1935 = vrot.slane %v1913, %v1934
      %v1937 = vunpack.c.l.s4 1966171168
      %v1938 = vunpack.c.0.s8 %v1937
      %v1939 = vlaneseq
      %v1940 = vshrl.u32 %v1939, 7
      %v1941 = vsub.s32 %v1938, %v1940
      %v1942 = vrot.slane %v1914, %v1941
      %v1943 = vcombine.high %v1921, %v1921
      %v1944 = vcombine.high %v1928, %v1928
      %v1945 = vcombine.high %v1935, %v1935
      %v1946 = vcombine.high %v1942, %v1942
      %v1948 = vunpack.c.l.s4 1966171168
      %v1949 = vunpack.c.0.s8 %v1948
      %v1950 = vlaneseq
      %v1951 = vshrl.u32 %v1950, 7
      %v1952 = vsub.s32 %v1949, %v1951
      %v1953 = vrot.slane %v329, %v1952
      %v1955 = vunpack.c.l.s4 1966171168
      %v1956 = vunpack.c.0.s8 %v1955
      %v1957 = vlaneseq
      %v1958 = vshrl.u32 %v1957, 7
      %v1959 = vsub.s32 %v1956, %v1958
      %v1960 = vrot.slane %v1953, %v1959
      %v1961 = vcombine.high %v330, %v330
      %v1963 = vunpack.c.l.s4 1966171168
      %v1964 = vunpack.c.0.s8 %v1963
      %v1965 = vlaneseq
      %v1966 = vshrl.u32 %v1965, 7
      %v1967 = vsub.s32 %v1964, %v1966
      %v1968 = vrot.slane %v330, %v1967
      %v1970 = vunpack.c.l.s4 1966171168
      %v1971 = vunpack.c.0.s8 %v1970
      %v1972 = vlaneseq
      %v1973 = vshrl.u32 %v1972, 7
      %v1974 = vsub.s32 %v1971, %v1973
      %v1975 = vrot.slane %v1961, %v1974
      %v1976 = vcombine.high %v1968, %v1968
      %v1977 = vcombine.high %v1975, %v1975
      %v1979 = vunpack.c.l.s4 1966171168
      %v1980 = vunpack.c.0.s8 %v1979
      %v1981 = vlaneseq
      %v1982 = vshrl.u32 %v1981, 7
      %v1983 = vsub.s32 %v1980, %v1982
      %v1984 = vrot.slane %v1968, %v1983
      %v1986 = vunpack.c.l.s4 1966171168
      %v1987 = vunpack.c.0.s8 %v1986
      %v1988 = vlaneseq
      %v1989 = vshrl.u32 %v1988, 7
      %v1990 = vsub.s32 %v1987, %v1989
      %v1991 = vrot.slane %v1975, %v1990
      %v1993 = vunpack.c.l.s4 1966171168
      %v1994 = vunpack.c.0.s8 %v1993
      %v1995 = vlaneseq
      %v1996 = vshrl.u32 %v1995, 7
      %v1997 = vsub.s32 %v1994, %v1996
      %v1998 = vrot.slane %v1976, %v1997
      %v2000 = vunpack.c.l.s4 1966171168
      %v2001 = vunpack.c.0.s8 %v2000
      %v2002 = vlaneseq
      %v2003 = vshrl.u32 %v2002, 7
      %v2004 = vsub.s32 %v2001, %v2003
      %v2005 = vrot.slane %v1977, %v2004
      %v2006 = vcombine.high %v1984, %v1984
      %v2007 = vcombine.high %v1991, %v1991
      %v2008 = vcombine.high %v1998, %v1998
      %v2009 = vcombine.high %v2005, %v2005
      %v2010 = vcombine.high %v331, %v331
      %v2012 = vunpack.c.l.s4 1966171168
      %v2013 = vunpack.c.0.s8 %v2012
      %v2014 = vlaneseq
      %v2015 = vshrl.u32 %v2014, 7
      %v2016 = vsub.s32 %v2013, %v2015
      %v2017 = vrot.slane %v331, %v2016
      %v2019 = vunpack.c.l.s4 1966171168
      %v2020 = vunpack.c.0.s8 %v2019
      %v2021 = vlaneseq
      %v2022 = vshrl.u32 %v2021, 7
      %v2023 = vsub.s32 %v2020, %v2022
      %v2024 = vrot.slane %v2010, %v2023
      %v2025 = vcombine.high %v2017, %v2017
      %v2026 = vcombine.high %v2024, %v2024
      %v2028 = vunpack.c.l.s4 1966171168
      %v2029 = vunpack.c.0.s8 %v2028
      %v2030 = vlaneseq
      %v2031 = vshrl.u32 %v2030, 7
      %v2032 = vsub.s32 %v2029, %v2031
      %v2033 = vrot.slane %v2017, %v2032
      %v2035 = vunpack.c.l.s4 1966171168
      %v2036 = vunpack.c.0.s8 %v2035
      %v2037 = vlaneseq
      %v2038 = vshrl.u32 %v2037, 7
      %v2039 = vsub.s32 %v2036, %v2038
      %v2040 = vrot.slane %v2024, %v2039
      %v2042 = vunpack.c.l.s4 1966171168
      %v2043 = vunpack.c.0.s8 %v2042
      %v2044 = vlaneseq
      %v2045 = vshrl.u32 %v2044, 7
      %v2046 = vsub.s32 %v2043, %v2045
      %v2047 = vrot.slane %v2025, %v2046
      %v2049 = vunpack.c.l.s4 1966171168
      %v2050 = vunpack.c.0.s8 %v2049
      %v2051 = vlaneseq
      %v2052 = vshrl.u32 %v2051, 7
      %v2053 = vsub.s32 %v2050, %v2052
      %v2054 = vrot.slane %v2026, %v2053
      %v2055 = vcombine.high %v2033, %v2033
      %v2056 = vcombine.high %v2040, %v2040
      %v2057 = vcombine.high %v2047, %v2047
      %v2058 = vcombine.high %v2054, %v2054
      %v2060 = vunpack.c.l.s4 1966171168
      %v2061 = vunpack.c.0.s8 %v2060
      %v2062 = vlaneseq
      %v2063 = vshrl.u32 %v2062, 7
      %v2064 = vsub.s32 %v2061, %v2063
      %v2065 = vrot.slane %v332, %v2064
      %v2067 = vunpack.c.l.s4 1966171168
      %v2068 = vunpack.c.0.s8 %v2067
      %v2069 = vlaneseq
      %v2070 = vshrl.u32 %v2069, 7
      %v2071 = vsub.s32 %v2068, %v2070
      %v2072 = vrot.slane %v2065, %v2071
      %v2073 = vcombine.high %v333, %v333
      %v2075 = vunpack.c.l.s4 1966171168
      %v2076 = vunpack.c.0.s8 %v2075
      %v2077 = vlaneseq
      %v2078 = vshrl.u32 %v2077, 7
      %v2079 = vsub.s32 %v2076, %v2078
      %v2080 = vrot.slane %v333, %v2079
      %v2082 = vunpack.c.l.s4 1966171168
      %v2083 = vunpack.c.0.s8 %v2082
      %v2084 = vlaneseq
      %v2085 = vshrl.u32 %v2084, 7
      %v2086 = vsub.s32 %v2083, %v2085
      %v2087 = vrot.slane %v2073, %v2086
      %v2088 = vcombine.high %v2080, %v2080
      %v2089 = vcombine.high %v2087, %v2087
      %v2091 = vunpack.c.l.s4 1966171168
      %v2092 = vunpack.c.0.s8 %v2091
      %v2093 = vlaneseq
      %v2094 = vshrl.u32 %v2093, 7
      %v2095 = vsub.s32 %v2092, %v2094
      %v2096 = vrot.slane %v2080, %v2095
      %v2098 = vunpack.c.l.s4 1966171168
      %v2099 = vunpack.c.0.s8 %v2098
      %v2100 = vlaneseq
      %v2101 = vshrl.u32 %v2100, 7
      %v2102 = vsub.s32 %v2099, %v2101
      %v2103 = vrot.slane %v2087, %v2102
      %v2105 = vunpack.c.l.s4 1966171168
      %v2106 = vunpack.c.0.s8 %v2105
      %v2107 = vlaneseq
      %v2108 = vshrl.u32 %v2107, 7
      %v2109 = vsub.s32 %v2106, %v2108
      %v2110 = vrot.slane %v2088, %v2109
      %v2112 = vunpack.c.l.s4 1966171168
      %v2113 = vunpack.c.0.s8 %v2112
      %v2114 = vlaneseq
      %v2115 = vshrl.u32 %v2114, 7
      %v2116 = vsub.s32 %v2113, %v2115
      %v2117 = vrot.slane %v2089, %v2116
      %v2118 = vcombine.high %v2096, %v2096
      %v2119 = vcombine.high %v2103, %v2103
      %v2120 = vcombine.high %v2110, %v2110
      %v2121 = vcombine.high %v2117, %v2117
      %v2122 = vcombine.high %v334, %v334
      %v2124 = vunpack.c.l.s4 1966171168
      %v2125 = vunpack.c.0.s8 %v2124
      %v2126 = vlaneseq
      %v2127 = vshrl.u32 %v2126, 7
      %v2128 = vsub.s32 %v2125, %v2127
      %v2129 = vrot.slane %v334, %v2128
      %v2131 = vunpack.c.l.s4 1966171168
      %v2132 = vunpack.c.0.s8 %v2131
      %v2133 = vlaneseq
      %v2134 = vshrl.u32 %v2133, 7
      %v2135 = vsub.s32 %v2132, %v2134
      %v2136 = vrot.slane %v2122, %v2135
      %v2137 = vcombine.high %v2129, %v2129
      %v2138 = vcombine.high %v2136, %v2136
      %v2140 = vunpack.c.l.s4 1966171168
      %v2141 = vunpack.c.0.s8 %v2140
      %v2142 = vlaneseq
      %v2143 = vshrl.u32 %v2142, 7
      %v2144 = vsub.s32 %v2141, %v2143
      %v2145 = vrot.slane %v2129, %v2144
      %v2147 = vunpack.c.l.s4 1966171168
      %v2148 = vunpack.c.0.s8 %v2147
      %v2149 = vlaneseq
      %v2150 = vshrl.u32 %v2149, 7
      %v2151 = vsub.s32 %v2148, %v2150
      %v2152 = vrot.slane %v2136, %v2151
      %v2154 = vunpack.c.l.s4 1966171168
      %v2155 = vunpack.c.0.s8 %v2154
      %v2156 = vlaneseq
      %v2157 = vshrl.u32 %v2156, 7
      %v2158 = vsub.s32 %v2155, %v2157
      %v2159 = vrot.slane %v2137, %v2158
      %v2161 = vunpack.c.l.s4 1966171168
      %v2162 = vunpack.c.0.s8 %v2161
      %v2163 = vlaneseq
      %v2164 = vshrl.u32 %v2163, 7
      %v2165 = vsub.s32 %v2162, %v2164
      %v2166 = vrot.slane %v2138, %v2165
      %v2167 = vcombine.high %v2145, %v2145
      %v2168 = vcombine.high %v2152, %v2152
      %v2169 = vcombine.high %v2159, %v2159
      %v2170 = vcombine.high %v2166, %v2166
      %v2172 = vunpack.c.l.s4 1966171168
      %v2173 = vunpack.c.0.s8 %v2172
      %v2174 = vlaneseq
      %v2175 = vshrl.u32 %v2174, 7
      %v2176 = vsub.s32 %v2173, %v2175
      %v2177 = vrot.slane %v335, %v2176
      %v2179 = vunpack.c.l.s4 1966171168
      %v2180 = vunpack.c.0.s8 %v2179
      %v2181 = vlaneseq
      %v2182 = vshrl.u32 %v2181, 7
      %v2183 = vsub.s32 %v2180, %v2182
      %v2184 = vrot.slane %v2177, %v2183
      %v2185 = vcombine.high %v336, %v336
      %v2187 = vunpack.c.l.s4 1966171168
      %v2188 = vunpack.c.0.s8 %v2187
      %v2189 = vlaneseq
      %v2190 = vshrl.u32 %v2189, 7
      %v2191 = vsub.s32 %v2188, %v2190
      %v2192 = vrot.slane %v336, %v2191
      %v2194 = vunpack.c.l.s4 1966171168
      %v2195 = vunpack.c.0.s8 %v2194
      %v2196 = vlaneseq
      %v2197 = vshrl.u32 %v2196, 7
      %v2198 = vsub.s32 %v2195, %v2197
      %v2199 = vrot.slane %v2185, %v2198
      %v2200 = vcombine.high %v2192, %v2192
      %v2201 = vcombine.high %v2199, %v2199
      %v2203 = vunpack.c.l.s4 1966171168
      %v2204 = vunpack.c.0.s8 %v2203
      %v2205 = vlaneseq
      %v2206 = vshrl.u32 %v2205, 7
      %v2207 = vsub.s32 %v2204, %v2206
      %v2208 = vrot.slane %v2192, %v2207
      %v2210 = vunpack.c.l.s4 1966171168
      %v2211 = vunpack.c.0.s8 %v2210
      %v2212 = vlaneseq
      %v2213 = vshrl.u32 %v2212, 7
      %v2214 = vsub.s32 %v2211, %v2213
      %v2215 = vrot.slane %v2199, %v2214
      %v2217 = vunpack.c.l.s4 1966171168
      %v2218 = vunpack.c.0.s8 %v2217
      %v2219 = vlaneseq
      %v2220 = vshrl.u32 %v2219, 7
      %v2221 = vsub.s32 %v2218, %v2220
      %v2222 = vrot.slane %v2200, %v2221
      %v2224 = vunpack.c.l.s4 1966171168
      %v2225 = vunpack.c.0.s8 %v2224
      %v2226 = vlaneseq
      %v2227 = vshrl.u32 %v2226, 7
      %v2228 = vsub.s32 %v2225, %v2227
      %v2229 = vrot.slane %v2201, %v2228
      %v2230 = vcombine.high %v2208, %v2208
      %v2231 = vcombine.high %v2215, %v2215
      %v2232 = vcombine.high %v2222, %v2222
      %v2233 = vcombine.high %v2229, %v2229
      %v2234 = vcombine.high %v337, %v337
      %v2236 = vunpack.c.l.s4 1966171168
      %v2237 = vunpack.c.0.s8 %v2236
      %v2238 = vlaneseq
      %v2239 = vshrl.u32 %v2238, 7
      %v2240 = vsub.s32 %v2237, %v2239
      %v2241 = vrot.slane %v337, %v2240
      %v2243 = vunpack.c.l.s4 1966171168
      %v2244 = vunpack.c.0.s8 %v2243
      %v2245 = vlaneseq
      %v2246 = vshrl.u32 %v2245, 7
      %v2247 = vsub.s32 %v2244, %v2246
      %v2248 = vrot.slane %v2234, %v2247
      %v2249 = vcombine.high %v2241, %v2241
      %v2250 = vcombine.high %v2248, %v2248
      %v2252 = vunpack.c.l.s4 1966171168
      %v2253 = vunpack.c.0.s8 %v2252
      %v2254 = vlaneseq
      %v2255 = vshrl.u32 %v2254, 7
      %v2256 = vsub.s32 %v2253, %v2255
      %v2257 = vrot.slane %v2241, %v2256
      %v2259 = vunpack.c.l.s4 1966171168
      %v2260 = vunpack.c.0.s8 %v2259
      %v2261 = vlaneseq
      %v2262 = vshrl.u32 %v2261, 7
      %v2263 = vsub.s32 %v2260, %v2262
      %v2264 = vrot.slane %v2248, %v2263
      %v2266 = vunpack.c.l.s4 1966171168
      %v2267 = vunpack.c.0.s8 %v2266
      %v2268 = vlaneseq
      %v2269 = vshrl.u32 %v2268, 7
      %v2270 = vsub.s32 %v2267, %v2269
      %v2271 = vrot.slane %v2249, %v2270
      %v2273 = vunpack.c.l.s4 1966171168
      %v2274 = vunpack.c.0.s8 %v2273
      %v2275 = vlaneseq
      %v2276 = vshrl.u32 %v2275, 7
      %v2277 = vsub.s32 %v2274, %v2276
      %v2278 = vrot.slane %v2250, %v2277
      %v2279 = vcombine.high %v2257, %v2257
      %v2280 = vcombine.high %v2264, %v2264
      %v2281 = vcombine.high %v2271, %v2271
      %v2282 = vcombine.high %v2278, %v2278
      %v2284 = vunpack.c.l.s4 1966171168
      %v2285 = vunpack.c.0.s8 %v2284
      %v2286 = vlaneseq
      %v2287 = vshrl.u32 %v2286, 7
      %v2288 = vsub.s32 %v2285, %v2287
      %v2289 = vrot.slane %v338, %v2288
      %v2291 = vunpack.c.l.s4 1966171168
      %v2292 = vunpack.c.0.s8 %v2291
      %v2293 = vlaneseq
      %v2294 = vshrl.u32 %v2293, 7
      %v2295 = vsub.s32 %v2292, %v2294
      %v2296 = vrot.slane %v2289, %v2295
      %v2297 = vcombine.high %v497, %v497
      %v2299 = vunpack.c.l.s4 1966171168
      %v2300 = vunpack.c.0.s8 %v2299
      %v2301 = vlaneseq
      %v2302 = vshrl.u32 %v2301, 7
      %v2303 = vsub.s32 %v2300, %v2302
      %v2304 = vrot.slane %v2297, %v2303
      %v2305 = vcombine.high %v609, %v609
      %v2307 = vunpack.c.l.s4 1966171168
      %v2308 = vunpack.c.0.s8 %v2307
      %v2309 = vlaneseq
      %v2310 = vshrl.u32 %v2309, 7
      %v2311 = vsub.s32 %v2308, %v2310
      %v2312 = vrot.slane %v2305, %v2311
      %v2313 = vcombine.high %v721, %v721
      %v2315 = vunpack.c.l.s4 1966171168
      %v2316 = vunpack.c.0.s8 %v2315
      %v2317 = vlaneseq
      %v2318 = vshrl.u32 %v2317, 7
      %v2319 = vsub.s32 %v2316, %v2318
      %v2320 = vrot.slane %v2313, %v2319
      %v2321 = vcombine.high %v833, %v833
      %v2323 = vunpack.c.l.s4 1966171168
      %v2324 = vunpack.c.0.s8 %v2323
      %v2325 = vlaneseq
      %v2326 = vshrl.u32 %v2325, 7
      %v2327 = vsub.s32 %v2324, %v2326
      %v2328 = vrot.slane %v2321, %v2327
      %v2329 = vcombine.high %v945, %v945
      %v2331 = vunpack.c.l.s4 1966171168
      %v2332 = vunpack.c.0.s8 %v2331
      %v2333 = vlaneseq
      %v2334 = vshrl.u32 %v2333, 7
      %v2335 = vsub.s32 %v2332, %v2334
      %v2336 = vrot.slane %v2329, %v2335
      %v2337 = vcombine.high %v1057, %v1057
      %v2339 = vunpack.c.l.s4 1966171168
      %v2340 = vunpack.c.0.s8 %v2339
      %v2341 = vlaneseq
      %v2342 = vshrl.u32 %v2341, 7
      %v2343 = vsub.s32 %v2340, %v2342
      %v2344 = vrot.slane %v2337, %v2343
      %v2345 = vcombine.high %v1169, %v1169
      %v2347 = vunpack.c.l.s4 1966171168
      %v2348 = vunpack.c.0.s8 %v2347
      %v2349 = vlaneseq
      %v2350 = vshrl.u32 %v2349, 7
      %v2351 = vsub.s32 %v2348, %v2350
      %v2352 = vrot.slane %v2345, %v2351
      %v2353 = vcombine.high %v1281, %v1281
      %v2355 = vunpack.c.l.s4 1966171168
      %v2356 = vunpack.c.0.s8 %v2355
      %v2357 = vlaneseq
      %v2358 = vshrl.u32 %v2357, 7
      %v2359 = vsub.s32 %v2356, %v2358
      %v2360 = vrot.slane %v2353, %v2359
      %v2361 = vcombine.high %v1393, %v1393
      %v2363 = vunpack.c.l.s4 1966171168
      %v2364 = vunpack.c.0.s8 %v2363
      %v2365 = vlaneseq
      %v2366 = vshrl.u32 %v2365, 7
      %v2367 = vsub.s32 %v2364, %v2366
      %v2368 = vrot.slane %v2361, %v2367
      %v2369 = vcombine.high %v1505, %v1505
      %v2371 = vunpack.c.l.s4 1966171168
      %v2372 = vunpack.c.0.s8 %v2371
      %v2373 = vlaneseq
      %v2374 = vshrl.u32 %v2373, 7
      %v2375 = vsub.s32 %v2372, %v2374
      %v2376 = vrot.slane %v2369, %v2375
      %v2377 = vcombine.high %v1617, %v1617
      %v2379 = vunpack.c.l.s4 1966171168
      %v2380 = vunpack.c.0.s8 %v2379
      %v2381 = vlaneseq
      %v2382 = vshrl.u32 %v2381, 7
      %v2383 = vsub.s32 %v2380, %v2382
      %v2384 = vrot.slane %v2377, %v2383
      %v2385 = vcombine.high %v1729, %v1729
      %v2387 = vunpack.c.l.s4 1966171168
      %v2388 = vunpack.c.0.s8 %v2387
      %v2389 = vlaneseq
      %v2390 = vshrl.u32 %v2389, 7
      %v2391 = vsub.s32 %v2388, %v2390
      %v2392 = vrot.slane %v2385, %v2391
      %v2393 = vcombine.high %v1841, %v1841
      %v2395 = vunpack.c.l.s4 1966171168
      %v2396 = vunpack.c.0.s8 %v2395
      %v2397 = vlaneseq
      %v2398 = vshrl.u32 %v2397, 7
      %v2399 = vsub.s32 %v2396, %v2398
      %v2400 = vrot.slane %v2393, %v2399
      %v2401 = vcombine.high %v1953, %v1953
      %v2403 = vunpack.c.l.s4 1966171168
      %v2404 = vunpack.c.0.s8 %v2403
      %v2405 = vlaneseq
      %v2406 = vshrl.u32 %v2405, 7
      %v2407 = vsub.s32 %v2404, %v2406
      %v2408 = vrot.slane %v2401, %v2407
      %v2409 = vcombine.high %v2065, %v2065
      %v2411 = vunpack.c.l.s4 1966171168
      %v2412 = vunpack.c.0.s8 %v2411
      %v2413 = vlaneseq
      %v2414 = vshrl.u32 %v2413, 7
      %v2415 = vsub.s32 %v2412, %v2414
      %v2416 = vrot.slane %v2409, %v2415
      %v2417 = vcombine.high %v2177, %v2177
      %v2419 = vunpack.c.l.s4 1966171168
      %v2420 = vunpack.c.0.s8 %v2419
      %v2421 = vlaneseq
      %v2422 = vshrl.u32 %v2421, 7
      %v2423 = vsub.s32 %v2420, %v2422
      %v2424 = vrot.slane %v2417, %v2423
      %v2425 = vcombine.high %v2289, %v2289
      %v2427 = vunpack.c.l.s4 1966171168
      %v2428 = vunpack.c.0.s8 %v2427
      %v2429 = vlaneseq
      %v2430 = vshrl.u32 %v2429, 7
      %v2431 = vsub.s32 %v2428, %v2430
      %v2432 = vrot.slane %v2425, %v2431
      %v2436 = vcombine.high %v339, %v339
      %v2438 = vunpack.c.l.s4 1966171168
      %v2439 = vunpack.c.0.s8 %v2438
      %v2440 = vlaneseq
      %v2441 = vshrl.u32 %v2440, 7
      %v2442 = vsub.s32 %v2439, %v2441
      %v2443 = vrot.slane %v339, %v2442
      %v2445 = vunpack.c.l.s4 1966171168
      %v2446 = vunpack.c.0.s8 %v2445
      %v2447 = vlaneseq
      %v2448 = vshrl.u32 %v2447, 7
      %v2449 = vsub.s32 %v2446, %v2448
      %v2450 = vrot.slane %v2436, %v2449
      %v2451 = vcombine.high %v2443, %v2443
      %v2452 = vcombine.high %v2450, %v2450
      %v2454 = vunpack.c.l.s4 1966171168
      %v2455 = vunpack.c.0.s8 %v2454
      %v2456 = vlaneseq
      %v2457 = vshrl.u32 %v2456, 7
      %v2458 = vsub.s32 %v2455, %v2457
      %v2459 = vrot.slane %v2443, %v2458
      %v2461 = vunpack.c.l.s4 1966171168
      %v2462 = vunpack.c.0.s8 %v2461
      %v2463 = vlaneseq
      %v2464 = vshrl.u32 %v2463, 7
      %v2465 = vsub.s32 %v2462, %v2464
      %v2466 = vrot.slane %v2450, %v2465
      %v2468 = vunpack.c.l.s4 1966171168
      %v2469 = vunpack.c.0.s8 %v2468
      %v2470 = vlaneseq
      %v2471 = vshrl.u32 %v2470, 7
      %v2472 = vsub.s32 %v2469, %v2471
      %v2473 = vrot.slane %v2451, %v2472
      %v2475 = vunpack.c.l.s4 1966171168
      %v2476 = vunpack.c.0.s8 %v2475
      %v2477 = vlaneseq
      %v2478 = vshrl.u32 %v2477, 7
      %v2479 = vsub.s32 %v2476, %v2478
      %v2480 = vrot.slane %v2452, %v2479
      %v2481 = vcombine.high %v2459, %v2459
      %v2482 = vcombine.high %v2466, %v2466
      %v2483 = vcombine.high %v2473, %v2473
      %v2484 = vcombine.high %v2480, %v2480
      %v2485 = vcombine.high %v340, %v340
      %v2487 = vunpack.c.l.s4 1966171168
      %v2488 = vunpack.c.0.s8 %v2487
      %v2489 = vlaneseq
      %v2490 = vshrl.u32 %v2489, 7
      %v2491 = vsub.s32 %v2488, %v2490
      %v2492 = vrot.slane %v340, %v2491
      %v2494 = vunpack.c.l.s4 1966171168
      %v2495 = vunpack.c.0.s8 %v2494
      %v2496 = vlaneseq
      %v2497 = vshrl.u32 %v2496, 7
      %v2498 = vsub.s32 %v2495, %v2497
      %v2499 = vrot.slane %v2485, %v2498
      %v2500 = vcombine.high %v2492, %v2492
      %v2501 = vcombine.high %v2499, %v2499
      %v2503 = vunpack.c.l.s4 1966171168
      %v2504 = vunpack.c.0.s8 %v2503
      %v2505 = vlaneseq
      %v2506 = vshrl.u32 %v2505, 7
      %v2507 = vsub.s32 %v2504, %v2506
      %v2508 = vrot.slane %v2492, %v2507
      %v2510 = vunpack.c.l.s4 1966171168
      %v2511 = vunpack.c.0.s8 %v2510
      %v2512 = vlaneseq
      %v2513 = vshrl.u32 %v2512, 7
      %v2514 = vsub.s32 %v2511, %v2513
      %v2515 = vrot.slane %v2499, %v2514
      %v2517 = vunpack.c.l.s4 1966171168
      %v2518 = vunpack.c.0.s8 %v2517
      %v2519 = vlaneseq
      %v2520 = vshrl.u32 %v2519, 7
      %v2521 = vsub.s32 %v2518, %v2520
      %v2522 = vrot.slane %v2500, %v2521
      %v2524 = vunpack.c.l.s4 1966171168
      %v2525 = vunpack.c.0.s8 %v2524
      %v2526 = vlaneseq
      %v2527 = vshrl.u32 %v2526, 7
      %v2528 = vsub.s32 %v2525, %v2527
      %v2529 = vrot.slane %v2501, %v2528
      %v2530 = vcombine.high %v2508, %v2508
      %v2531 = vcombine.high %v2515, %v2515
      %v2532 = vcombine.high %v2522, %v2522
      %v2533 = vcombine.high %v2529, %v2529
      %v2535 = vunpack.c.l.s4 1966171168
      %v2536 = vunpack.c.0.s8 %v2535
      %v2537 = vlaneseq
      %v2538 = vshrl.u32 %v2537, 7
      %v2539 = vsub.s32 %v2536, %v2538
      %v2540 = vrot.slane %v341, %v2539
      %v2542 = vunpack.c.l.s4 1966171168
      %v2543 = vunpack.c.0.s8 %v2542
      %v2544 = vlaneseq
      %v2545 = vshrl.u32 %v2544, 7
      %v2546 = vsub.s32 %v2543, %v2545
      %v2547 = vrot.slane %v2540, %v2546
      %v2548 = vcombine.high %v2540, %v2540
      %v2550 = vunpack.c.l.s4 1966171168
      %v2551 = vunpack.c.0.s8 %v2550
      %v2552 = vlaneseq
      %v2553 = vshrl.u32 %v2552, 7
      %v2554 = vsub.s32 %v2551, %v2553
      %v2555 = vrot.slane %v2548, %v2554
      %v2556 = vcombine.low %v416, %v430
      %v2557 = vcombine.low %v438, %v440
      %v2558 = vcombine.low %v423, %v437
      %v2559 = vcombine.low %v439, %v441
      %v2561 = vunpack.c.l.s4 1966171168
      %v2562 = vunpack.c.0.s8 %v2561
      %v2563 = vlaneseq
      %v2564 = vshrl.u32 %v2563, 7
      %v2565 = vsub.s32 %v2562, %v2564
      %v2566 = vrot.slane %v2556, %v2565
      %v2568 = vunpack.c.l.s4 1966171168
      %v2569 = vunpack.c.0.s8 %v2568
      %v2570 = vlaneseq
      %v2571 = vshrl.u32 %v2570, 7
      %v2572 = vsub.s32 %v2569, %v2571
      %v2573 = vrot.slane %v2557, %v2572
      %v2575 = vunpack.c.l.s4 1966171168
      %v2576 = vunpack.c.0.s8 %v2575
      %v2577 = vlaneseq
      %v2578 = vshrl.u32 %v2577, 7
      %v2579 = vsub.s32 %v2576, %v2578
      %v2580 = vrot.slane %v2558, %v2579
      %v2582 = vunpack.c.l.s4 1966171168
      %v2583 = vunpack.c.0.s8 %v2582
      %v2584 = vlaneseq
      %v2585 = vshrl.u32 %v2584, 7
      %v2586 = vsub.s32 %v2583, %v2585
      %v2587 = vrot.slane %v2559, %v2586
      %v2588 = vcombine.low %v2566, %v2573
      %v2589 = vcombine.low %v2580, %v2587
      %v2591 = vunpack.c.l.s4 1966171168
      %v2592 = vunpack.c.0.s8 %v2591
      %v2593 = vlaneseq
      %v2594 = vshrl.u32 %v2593, 7
      %v2595 = vsub.s32 %v2592, %v2594
      %v2596 = vrot.slane %v2588, %v2595
      %v2598 = vunpack.c.l.s4 1966171168
      %v2599 = vunpack.c.0.s8 %v2598
      %v2600 = vlaneseq
      %v2601 = vshrl.u32 %v2600, 7
      %v2602 = vsub.s32 %v2599, %v2601
      %v2603 = vrot.slane %v2589, %v2602
      %v2604 = vcombine.low %v2596, %v2603
      %v2605 = vcombine.low %v465, %v479
      %v2606 = vcombine.low %v487, %v489
      %v2607 = vcombine.low %v472, %v486
      %v2608 = vcombine.low %v488, %v490
      %v2610 = vunpack.c.l.s4 1966171168
      %v2611 = vunpack.c.0.s8 %v2610
      %v2612 = vlaneseq
      %v2613 = vshrl.u32 %v2612, 7
      %v2614 = vsub.s32 %v2611, %v2613
      %v2615 = vrot.slane %v2605, %v2614
      %v2617 = vunpack.c.l.s4 1966171168
      %v2618 = vunpack.c.0.s8 %v2617
      %v2619 = vlaneseq
      %v2620 = vshrl.u32 %v2619, 7
      %v2621 = vsub.s32 %v2618, %v2620
      %v2622 = vrot.slane %v2606, %v2621
      %v2624 = vunpack.c.l.s4 1966171168
      %v2625 = vunpack.c.0.s8 %v2624
      %v2626 = vlaneseq
      %v2627 = vshrl.u32 %v2626, 7
      %v2628 = vsub.s32 %v2625, %v2627
      %v2629 = vrot.slane %v2607, %v2628
      %v2631 = vunpack.c.l.s4 1966171168
      %v2632 = vunpack.c.0.s8 %v2631
      %v2633 = vlaneseq
      %v2634 = vshrl.u32 %v2633, 7
      %v2635 = vsub.s32 %v2632, %v2634
      %v2636 = vrot.slane %v2608, %v2635
      %v2637 = vcombine.low %v2615, %v2622
      %v2638 = vcombine.low %v2629, %v2636
      %v2640 = vunpack.c.l.s4 1966171168
      %v2641 = vunpack.c.0.s8 %v2640
      %v2642 = vlaneseq
      %v2643 = vshrl.u32 %v2642, 7
      %v2644 = vsub.s32 %v2641, %v2643
      %v2645 = vrot.slane %v2637, %v2644
      %v2647 = vunpack.c.l.s4 1966171168
      %v2648 = vunpack.c.0.s8 %v2647
      %v2649 = vlaneseq
      %v2650 = vshrl.u32 %v2649, 7
      %v2651 = vsub.s32 %v2648, %v2650
      %v2652 = vrot.slane %v2638, %v2651
      %v2653 = vcombine.low %v2645, %v2652
      %v2654 = vcombine.low %v504, %v528
      %v2655 = vcombine.low %v542, %v550
      %v2656 = vcombine.low %v552, %v535
      %v2657 = vcombine.low %v549, %v551
      %v2659 = vunpack.c.l.s4 1966171168
      %v2660 = vunpack.c.0.s8 %v2659
      %v2661 = vlaneseq
      %v2662 = vshrl.u32 %v2661, 7
      %v2663 = vsub.s32 %v2660, %v2662
      %v2664 = vrot.slane %v2654, %v2663
      %v2666 = vunpack.c.l.s4 1966171168
      %v2667 = vunpack.c.0.s8 %v2666
      %v2668 = vlaneseq
      %v2669 = vshrl.u32 %v2668, 7
      %v2670 = vsub.s32 %v2667, %v2669
      %v2671 = vrot.slane %v2655, %v2670
      %v2673 = vunpack.c.l.s4 1966171168
      %v2674 = vunpack.c.0.s8 %v2673
      %v2675 = vlaneseq
      %v2676 = vshrl.u32 %v2675, 7
      %v2677 = vsub.s32 %v2674, %v2676
      %v2678 = vrot.slane %v2656, %v2677
      %v2680 = vunpack.c.l.s4 1966171168
      %v2681 = vunpack.c.0.s8 %v2680
      %v2682 = vlaneseq
      %v2683 = vshrl.u32 %v2682, 7
      %v2684 = vsub.s32 %v2681, %v2683
      %v2685 = vrot.slane %v2657, %v2684
      %v2686 = vcombine.low %v2664, %v2671
      %v2687 = vcombine.low %v2678, %v2685
      %v2689 = vunpack.c.l.s4 1966171168
      %v2690 = vunpack.c.0.s8 %v2689
      %v2691 = vlaneseq
      %v2692 = vshrl.u32 %v2691, 7
      %v2693 = vsub.s32 %v2690, %v2692
      %v2694 = vrot.slane %v2686, %v2693
      %v2696 = vunpack.c.l.s4 1966171168
      %v2697 = vunpack.c.0.s8 %v2696
      %v2698 = vlaneseq
      %v2699 = vshrl.u32 %v2698, 7
      %v2700 = vsub.s32 %v2697, %v2699
      %v2701 = vrot.slane %v2687, %v2700
      %v2702 = vcombine.low %v2694, %v2701
      %v2703 = vcombine.low %v553, %v577
      %v2704 = vcombine.low %v591, %v599
      %v2705 = vcombine.low %v601, %v584
      %v2706 = vcombine.low %v598, %v600
      %v2708 = vunpack.c.l.s4 1966171168
      %v2709 = vunpack.c.0.s8 %v2708
      %v2710 = vlaneseq
      %v2711 = vshrl.u32 %v2710, 7
      %v2712 = vsub.s32 %v2709, %v2711
      %v2713 = vrot.slane %v2703, %v2712
      %v2715 = vunpack.c.l.s4 1966171168
      %v2716 = vunpack.c.0.s8 %v2715
      %v2717 = vlaneseq
      %v2718 = vshrl.u32 %v2717, 7
      %v2719 = vsub.s32 %v2716, %v2718
      %v2720 = vrot.slane %v2704, %v2719
      %v2722 = vunpack.c.l.s4 1966171168
      %v2723 = vunpack.c.0.s8 %v2722
      %v2724 = vlaneseq
      %v2725 = vshrl.u32 %v2724, 7
      %v2726 = vsub.s32 %v2723, %v2725
      %v2727 = vrot.slane %v2705, %v2726
      %v2729 = vunpack.c.l.s4 1966171168
      %v2730 = vunpack.c.0.s8 %v2729
      %v2731 = vlaneseq
      %v2732 = vshrl.u32 %v2731, 7
      %v2733 = vsub.s32 %v2730, %v2732
      %v2734 = vrot.slane %v2706, %v2733
      %v2735 = vcombine.low %v2713, %v2720
      %v2736 = vcombine.low %v2727, %v2734
      %v2738 = vunpack.c.l.s4 1966171168
      %v2739 = vunpack.c.0.s8 %v2738
      %v2740 = vlaneseq
      %v2741 = vshrl.u32 %v2740, 7
      %v2742 = vsub.s32 %v2739, %v2741
      %v2743 = vrot.slane %v2735, %v2742
      %v2745 = vunpack.c.l.s4 1966171168
      %v2746 = vunpack.c.0.s8 %v2745
      %v2747 = vlaneseq
      %v2748 = vshrl.u32 %v2747, 7
      %v2749 = vsub.s32 %v2746, %v2748
      %v2750 = vrot.slane %v2736, %v2749
      %v2751 = vcombine.low %v2743, %v2750
      %v2752 = vcombine.low %v602, %v616
      %v2753 = vcombine.low %v640, %v654
      %v2754 = vcombine.low %v662, %v664
      %v2755 = vcombine.low %v647, %v661
      %v2757 = vunpack.c.l.s4 1966171168
      %v2758 = vunpack.c.0.s8 %v2757
      %v2759 = vlaneseq
      %v2760 = vshrl.u32 %v2759, 7
      %v2761 = vsub.s32 %v2758, %v2760
      %v2762 = vrot.slane %v2752, %v2761
      %v2764 = vunpack.c.l.s4 1966171168
      %v2765 = vunpack.c.0.s8 %v2764
      %v2766 = vlaneseq
      %v2767 = vshrl.u32 %v2766, 7
      %v2768 = vsub.s32 %v2765, %v2767
      %v2769 = vrot.slane %v2753, %v2768
      %v2771 = vunpack.c.l.s4 1966171168
      %v2772 = vunpack.c.0.s8 %v2771
      %v2773 = vlaneseq
      %v2774 = vshrl.u32 %v2773, 7
      %v2775 = vsub.s32 %v2772, %v2774
      %v2776 = vrot.slane %v2754, %v2775
      %v2778 = vunpack.c.l.s4 1966171168
      %v2779 = vunpack.c.0.s8 %v2778
      %v2780 = vlaneseq
      %v2781 = vshrl.u32 %v2780, 7
      %v2782 = vsub.s32 %v2779, %v2781
      %v2783 = vrot.slane %v2755, %v2782
      %v2784 = vcombine.low %v2762, %v2769
      %v2785 = vcombine.low %v2776, %v2783
      %v2787 = vunpack.c.l.s4 1966171168
      %v2788 = vunpack.c.0.s8 %v2787
      %v2789 = vlaneseq
      %v2790 = vshrl.u32 %v2789, 7
      %v2791 = vsub.s32 %v2788, %v2790
      %v2792 = vrot.slane %v2784, %v2791
      %v2794 = vunpack.c.l.s4 1966171168
      %v2795 = vunpack.c.0.s8 %v2794
      %v2796 = vlaneseq
      %v2797 = vshrl.u32 %v2796, 7
      %v2798 = vsub.s32 %v2795, %v2797
      %v2799 = vrot.slane %v2785, %v2798
      %v2800 = vcombine.low %v2792, %v2799
      %v2801 = vcombine.low %v663, %v665
      %v2802 = vcombine.low %v689, %v703
      %v2803 = vcombine.low %v711, %v713
      %v2804 = vcombine.low %v696, %v710
      %v2806 = vunpack.c.l.s4 1966171168
      %v2807 = vunpack.c.0.s8 %v2806
      %v2808 = vlaneseq
      %v2809 = vshrl.u32 %v2808, 7
      %v2810 = vsub.s32 %v2807, %v2809
      %v2811 = vrot.slane %v2801, %v2810
      %v2813 = vunpack.c.l.s4 1966171168
      %v2814 = vunpack.c.0.s8 %v2813
      %v2815 = vlaneseq
      %v2816 = vshrl.u32 %v2815, 7
      %v2817 = vsub.s32 %v2814, %v2816
      %v2818 = vrot.slane %v2802, %v2817
      %v2820 = vunpack.c.l.s4 1966171168
      %v2821 = vunpack.c.0.s8 %v2820
      %v2822 = vlaneseq
      %v2823 = vshrl.u32 %v2822, 7
      %v2824 = vsub.s32 %v2821, %v2823
      %v2825 = vrot.slane %v2803, %v2824
      %v2827 = vunpack.c.l.s4 1966171168
      %v2828 = vunpack.c.0.s8 %v2827
      %v2829 = vlaneseq
      %v2830 = vshrl.u32 %v2829, 7
      %v2831 = vsub.s32 %v2828, %v2830
      %v2832 = vrot.slane %v2804, %v2831
      %v2833 = vcombine.low %v2811, %v2818
      %v2834 = vcombine.low %v2825, %v2832
      %v2836 = vunpack.c.l.s4 1966171168
      %v2837 = vunpack.c.0.s8 %v2836
      %v2838 = vlaneseq
      %v2839 = vshrl.u32 %v2838, 7
      %v2840 = vsub.s32 %v2837, %v2839
      %v2841 = vrot.slane %v2833, %v2840
      %v2843 = vunpack.c.l.s4 1966171168
      %v2844 = vunpack.c.0.s8 %v2843
      %v2845 = vlaneseq
      %v2846 = vshrl.u32 %v2845, 7
      %v2847 = vsub.s32 %v2844, %v2846
      %v2848 = vrot.slane %v2834, %v2847
      %v2849 = vcombine.low %v2841, %v2848
      %v2850 = vcombine.low %v712, %v714
      %v2851 = vcombine.low %v728, %v752
      %v2852 = vcombine.low %v766, %v774
      %v2853 = vcombine.low %v776, %v759
      %v2855 = vunpack.c.l.s4 1966171168
      %v2856 = vunpack.c.0.s8 %v2855
      %v2857 = vlaneseq
      %v2858 = vshrl.u32 %v2857, 7
      %v2859 = vsub.s32 %v2856, %v2858
      %v2860 = vrot.slane %v2850, %v2859
      %v2862 = vunpack.c.l.s4 1966171168
      %v2863 = vunpack.c.0.s8 %v2862
      %v2864 = vlaneseq
      %v2865 = vshrl.u32 %v2864, 7
      %v2866 = vsub.s32 %v2863, %v2865
      %v2867 = vrot.slane %v2851, %v2866
      %v2869 = vunpack.c.l.s4 1966171168
      %v2870 = vunpack.c.0.s8 %v2869
      %v2871 = vlaneseq
      %v2872 = vshrl.u32 %v2871, 7
      %v2873 = vsub.s32 %v2870, %v2872
      %v2874 = vrot.slane %v2852, %v2873
      %v2876 = vunpack.c.l.s4 1966171168
      %v2877 = vunpack.c.0.s8 %v2876
      %v2878 = vlaneseq
      %v2879 = vshrl.u32 %v2878, 7
      %v2880 = vsub.s32 %v2877, %v2879
      %v2881 = vrot.slane %v2853, %v2880
      %v2882 = vcombine.low %v2860, %v2867
      %v2883 = vcombine.low %v2874, %v2881
      %v2885 = vunpack.c.l.s4 1966171168
      %v2886 = vunpack.c.0.s8 %v2885
      %v2887 = vlaneseq
      %v2888 = vshrl.u32 %v2887, 7
      %v2889 = vsub.s32 %v2886, %v2888
      %v2890 = vrot.slane %v2882, %v2889
      %v2892 = vunpack.c.l.s4 1966171168
      %v2893 = vunpack.c.0.s8 %v2892
      %v2894 = vlaneseq
      %v2895 = vshrl.u32 %v2894, 7
      %v2896 = vsub.s32 %v2893, %v2895
      %v2897 = vrot.slane %v2883, %v2896
      %v2898 = vcombine.low %v2890, %v2897
      %v2899 = vcombine.low %v773, %v775
      %v2900 = vcombine.low %v777, %v801
      %v2901 = vcombine.low %v815, %v823
      %v2902 = vcombine.low %v825, %v808
      %v2904 = vunpack.c.l.s4 1966171168
      %v2905 = vunpack.c.0.s8 %v2904
      %v2906 = vlaneseq
      %v2907 = vshrl.u32 %v2906, 7
      %v2908 = vsub.s32 %v2905, %v2907
      %v2909 = vrot.slane %v2899, %v2908
      %v2911 = vunpack.c.l.s4 1966171168
      %v2912 = vunpack.c.0.s8 %v2911
      %v2913 = vlaneseq
      %v2914 = vshrl.u32 %v2913, 7
      %v2915 = vsub.s32 %v2912, %v2914
      %v2916 = vrot.slane %v2900, %v2915
      %v2918 = vunpack.c.l.s4 1966171168
      %v2919 = vunpack.c.0.s8 %v2918
      %v2920 = vlaneseq
      %v2921 = vshrl.u32 %v2920, 7
      %v2922 = vsub.s32 %v2919, %v2921
      %v2923 = vrot.slane %v2901, %v2922
      %v2925 = vunpack.c.l.s4 1966171168
      %v2926 = vunpack.c.0.s8 %v2925
      %v2927 = vlaneseq
      %v2928 = vshrl.u32 %v2927, 7
      %v2929 = vsub.s32 %v2926, %v2928
      %v2930 = vrot.slane %v2902, %v2929
      %v2931 = vcombine.low %v2909, %v2916
      %v2932 = vcombine.low %v2923, %v2930
      %v2934 = vunpack.c.l.s4 1966171168
      %v2935 = vunpack.c.0.s8 %v2934
      %v2936 = vlaneseq
      %v2937 = vshrl.u32 %v2936, 7
      %v2938 = vsub.s32 %v2935, %v2937
      %v2939 = vrot.slane %v2931, %v2938
      %v2941 = vunpack.c.l.s4 1966171168
      %v2942 = vunpack.c.0.s8 %v2941
      %v2943 = vlaneseq
      %v2944 = vshrl.u32 %v2943, 7
      %v2945 = vsub.s32 %v2942, %v2944
      %v2946 = vrot.slane %v2932, %v2945
      %v2947 = vcombine.low %v2939, %v2946
      %v2948 = vcombine.low %v822, %v824
      %v2949 = vcombine.low %v826, %v840
      %v2950 = vcombine.low %v864, %v878
      %v2951 = vcombine.low %v886, %v888
      %v2953 = vunpack.c.l.s4 1966171168
      %v2954 = vunpack.c.0.s8 %v2953
      %v2955 = vlaneseq
      %v2956 = vshrl.u32 %v2955, 7
      %v2957 = vsub.s32 %v2954, %v2956
      %v2958 = vrot.slane %v2948, %v2957
      %v2960 = vunpack.c.l.s4 1966171168
      %v2961 = vunpack.c.0.s8 %v2960
      %v2962 = vlaneseq
      %v2963 = vshrl.u32 %v2962, 7
      %v2964 = vsub.s32 %v2961, %v2963
      %v2965 = vrot.slane %v2949, %v2964
      %v2967 = vunpack.c.l.s4 1966171168
      %v2968 = vunpack.c.0.s8 %v2967
      %v2969 = vlaneseq
      %v2970 = vshrl.u32 %v2969, 7
      %v2971 = vsub.s32 %v2968, %v2970
      %v2972 = vrot.slane %v2950, %v2971
      %v2974 = vunpack.c.l.s4 1966171168
      %v2975 = vunpack.c.0.s8 %v2974
      %v2976 = vlaneseq
      %v2977 = vshrl.u32 %v2976, 7
      %v2978 = vsub.s32 %v2975, %v2977
      %v2979 = vrot.slane %v2951, %v2978
      %v2980 = vcombine.low %v2958, %v2965
      %v2981 = vcombine.low %v2972, %v2979
      %v2983 = vunpack.c.l.s4 1966171168
      %v2984 = vunpack.c.0.s8 %v2983
      %v2985 = vlaneseq
      %v2986 = vshrl.u32 %v2985, 7
      %v2987 = vsub.s32 %v2984, %v2986
      %v2988 = vrot.slane %v2980, %v2987
      %v2990 = vunpack.c.l.s4 1966171168
      %v2991 = vunpack.c.0.s8 %v2990
      %v2992 = vlaneseq
      %v2993 = vshrl.u32 %v2992, 7
      %v2994 = vsub.s32 %v2991, %v2993
      %v2995 = vrot.slane %v2981, %v2994
      %v2996 = vcombine.low %v2988, %v2995
      %v2997 = vcombine.low %v871, %v885
      %v2998 = vcombine.low %v887, %v889
      %v2999 = vcombine.low %v913, %v927
      %v3000 = vcombine.low %v935, %v937
      %v3002 = vunpack.c.l.s4 1966171168
      %v3003 = vunpack.c.0.s8 %v3002
      %v3004 = vlaneseq
      %v3005 = vshrl.u32 %v3004, 7
      %v3006 = vsub.s32 %v3003, %v3005
      %v3007 = vrot.slane %v2997, %v3006
      %v3009 = vunpack.c.l.s4 1966171168
      %v3010 = vunpack.c.0.s8 %v3009
      %v3011 = vlaneseq
      %v3012 = vshrl.u32 %v3011, 7
      %v3013 = vsub.s32 %v3010, %v3012
      %v3014 = vrot.slane %v2998, %v3013
      %v3016 = vunpack.c.l.s4 1966171168
      %v3017 = vunpack.c.0.s8 %v3016
      %v3018 = vlaneseq
      %v3019 = vshrl.u32 %v3018, 7
      %v3020 = vsub.s32 %v3017, %v3019
      %v3021 = vrot.slane %v2999, %v3020
      %v3023 = vunpack.c.l.s4 1966171168
      %v3024 = vunpack.c.0.s8 %v3023
      %v3025 = vlaneseq
      %v3026 = vshrl.u32 %v3025, 7
      %v3027 = vsub.s32 %v3024, %v3026
      %v3028 = vrot.slane %v3000, %v3027
      %v3029 = vcombine.low %v3007, %v3014
      %v3030 = vcombine.low %v3021, %v3028
      %v3032 = vunpack.c.l.s4 1966171168
      %v3033 = vunpack.c.0.s8 %v3032
      %v3034 = vlaneseq
      %v3035 = vshrl.u32 %v3034, 7
      %v3036 = vsub.s32 %v3033, %v3035
      %v3037 = vrot.slane %v3029, %v3036
      %v3039 = vunpack.c.l.s4 1966171168
      %v3040 = vunpack.c.0.s8 %v3039
      %v3041 = vlaneseq
      %v3042 = vshrl.u32 %v3041, 7
      %v3043 = vsub.s32 %v3040, %v3042
      %v3044 = vrot.slane %v3030, %v3043
      %v3045 = vcombine.low %v3037, %v3044
      %v3046 = vcombine.low %v920, %v934
      %v3047 = vcombine.low %v936, %v938
      %v3048 = vcombine.low %v952, %v976
      %v3049 = vcombine.low %v990, %v998
      %v3051 = vunpack.c.l.s4 1966171168
      %v3052 = vunpack.c.0.s8 %v3051
      %v3053 = vlaneseq
      %v3054 = vshrl.u32 %v3053, 7
      %v3055 = vsub.s32 %v3052, %v3054
      %v3056 = vrot.slane %v3046, %v3055
      %v3058 = vunpack.c.l.s4 1966171168
      %v3059 = vunpack.c.0.s8 %v3058
      %v3060 = vlaneseq
      %v3061 = vshrl.u32 %v3060, 7
      %v3062 = vsub.s32 %v3059, %v3061
      %v3063 = vrot.slane %v3047, %v3062
      %v3065 = vunpack.c.l.s4 1966171168
      %v3066 = vunpack.c.0.s8 %v3065
      %v3067 = vlaneseq
      %v3068 = vshrl.u32 %v3067, 7
      %v3069 = vsub.s32 %v3066, %v3068
      %v3070 = vrot.slane %v3048, %v3069
      %v3072 = vunpack.c.l.s4 1966171168
      %v3073 = vunpack.c.0.s8 %v3072
      %v3074 = vlaneseq
      %v3075 = vshrl.u32 %v3074, 7
      %v3076 = vsub.s32 %v3073, %v3075
      %v3077 = vrot.slane %v3049, %v3076
      %v3078 = vcombine.low %v3056, %v3063
      %v3079 = vcombine.low %v3070, %v3077
      %v3081 = vunpack.c.l.s4 1966171168
      %v3082 = vunpack.c.0.s8 %v3081
      %v3083 = vlaneseq
      %v3084 = vshrl.u32 %v3083, 7
      %v3085 = vsub.s32 %v3082, %v3084
      %v3086 = vrot.slane %v3078, %v3085
      %v3088 = vunpack.c.l.s4 1966171168
      %v3089 = vunpack.c.0.s8 %v3088
      %v3090 = vlaneseq
      %v3091 = vshrl.u32 %v3090, 7
      %v3092 = vsub.s32 %v3089, %v3091
      %v3093 = vrot.slane %v3079, %v3092
      %v3094 = vcombine.low %v3086, %v3093
      %v3095 = vcombine.low %v1000, %v983
      %v3096 = vcombine.low %v997, %v999
      %v3097 = vcombine.low %v1001, %v1025
      %v3098 = vcombine.low %v1039, %v1047
      %v3100 = vunpack.c.l.s4 1966171168
      %v3101 = vunpack.c.0.s8 %v3100
      %v3102 = vlaneseq
      %v3103 = vshrl.u32 %v3102, 7
      %v3104 = vsub.s32 %v3101, %v3103
      %v3105 = vrot.slane %v3095, %v3104
      %v3107 = vunpack.c.l.s4 1966171168
      %v3108 = vunpack.c.0.s8 %v3107
      %v3109 = vlaneseq
      %v3110 = vshrl.u32 %v3109, 7
      %v3111 = vsub.s32 %v3108, %v3110
      %v3112 = vrot.slane %v3096, %v3111
      %v3114 = vunpack.c.l.s4 1966171168
      %v3115 = vunpack.c.0.s8 %v3114
      %v3116 = vlaneseq
      %v3117 = vshrl.u32 %v3116, 7
      %v3118 = vsub.s32 %v3115, %v3117
      %v3119 = vrot.slane %v3097, %v3118
      %v3121 = vunpack.c.l.s4 1966171168
      %v3122 = vunpack.c.0.s8 %v3121
      %v3123 = vlaneseq
      %v3124 = vshrl.u32 %v3123, 7
      %v3125 = vsub.s32 %v3122, %v3124
      %v3126 = vrot.slane %v3098, %v3125
      %v3127 = vcombine.low %v3105, %v3112
      %v3128 = vcombine.low %v3119, %v3126
      %v3130 = vunpack.c.l.s4 1966171168
      %v3131 = vunpack.c.0.s8 %v3130
      %v3132 = vlaneseq
      %v3133 = vshrl.u32 %v3132, 7
      %v3134 = vsub.s32 %v3131, %v3133
      %v3135 = vrot.slane %v3127, %v3134
      %v3137 = vunpack.c.l.s4 1966171168
      %v3138 = vunpack.c.0.s8 %v3137
      %v3139 = vlaneseq
      %v3140 = vshrl.u32 %v3139, 7
      %v3141 = vsub.s32 %v3138, %v3140
      %v3142 = vrot.slane %v3128, %v3141
      %v3143 = vcombine.low %v3135, %v3142
      %v3144 = vcombine.low %v1049, %v1032
      %v3145 = vcombine.low %v1046, %v1048
      %v3146 = vcombine.low %v1050, %v1064
      %v3147 = vcombine.low %v1088, %v1102
      %v3149 = vunpack.c.l.s4 1966171168
      %v3150 = vunpack.c.0.s8 %v3149
      %v3151 = vlaneseq
      %v3152 = vshrl.u32 %v3151, 7
      %v3153 = vsub.s32 %v3150, %v3152
      %v3154 = vrot.slane %v3144, %v3153
      %v3156 = vunpack.c.l.s4 1966171168
      %v3157 = vunpack.c.0.s8 %v3156
      %v3158 = vlaneseq
      %v3159 = vshrl.u32 %v3158, 7
      %v3160 = vsub.s32 %v3157, %v3159
      %v3161 = vrot.slane %v3145, %v3160
      %v3163 = vunpack.c.l.s4 1966171168
      %v3164 = vunpack.c.0.s8 %v3163
      %v3165 = vlaneseq
      %v3166 = vshrl.u32 %v3165, 7
      %v3167 = vsub.s32 %v3164, %v3166
      %v3168 = vrot.slane %v3146, %v3167
      %v3170 = vunpack.c.l.s4 1966171168
      %v3171 = vunpack.c.0.s8 %v3170
      %v3172 = vlaneseq
      %v3173 = vshrl.u32 %v3172, 7
      %v3174 = vsub.s32 %v3171, %v3173
      %v3175 = vrot.slane %v3147, %v3174
      %v3176 = vcombine.low %v3154, %v3161
      %v3177 = vcombine.low %v3168, %v3175
      %v3179 = vunpack.c.l.s4 1966171168
      %v3180 = vunpack.c.0.s8 %v3179
      %v3181 = vlaneseq
      %v3182 = vshrl.u32 %v3181, 7
      %v3183 = vsub.s32 %v3180, %v3182
      %v3184 = vrot.slane %v3176, %v3183
      %v3186 = vunpack.c.l.s4 1966171168
      %v3187 = vunpack.c.0.s8 %v3186
      %v3188 = vlaneseq
      %v3189 = vshrl.u32 %v3188, 7
      %v3190 = vsub.s32 %v3187, %v3189
      %v3191 = vrot.slane %v3177, %v3190
      %v3192 = vcombine.low %v3184, %v3191
      %v3193 = vcombine.low %v1110, %v1112
      %v3194 = vcombine.low %v1095, %v1109
      %v3195 = vcombine.low %v1111, %v1113
      %v3196 = vcombine.low %v1137, %v1151
      %v3198 = vunpack.c.l.s4 1966171168
      %v3199 = vunpack.c.0.s8 %v3198
      %v3200 = vlaneseq
      %v3201 = vshrl.u32 %v3200, 7
      %v3202 = vsub.s32 %v3199, %v3201
      %v3203 = vrot.slane %v3193, %v3202
      %v3205 = vunpack.c.l.s4 1966171168
      %v3206 = vunpack.c.0.s8 %v3205
      %v3207 = vlaneseq
      %v3208 = vshrl.u32 %v3207, 7
      %v3209 = vsub.s32 %v3206, %v3208
      %v3210 = vrot.slane %v3194, %v3209
      %v3212 = vunpack.c.l.s4 1966171168
      %v3213 = vunpack.c.0.s8 %v3212
      %v3214 = vlaneseq
      %v3215 = vshrl.u32 %v3214, 7
      %v3216 = vsub.s32 %v3213, %v3215
      %v3217 = vrot.slane %v3195, %v3216
      %v3219 = vunpack.c.l.s4 1966171168
      %v3220 = vunpack.c.0.s8 %v3219
      %v3221 = vlaneseq
      %v3222 = vshrl.u32 %v3221, 7
      %v3223 = vsub.s32 %v3220, %v3222
      %v3224 = vrot.slane %v3196, %v3223
      %v3225 = vcombine.low %v3203, %v3210
      %v3226 = vcombine.low %v3217, %v3224
      %v3228 = vunpack.c.l.s4 1966171168
      %v3229 = vunpack.c.0.s8 %v3228
      %v3230 = vlaneseq
      %v3231 = vshrl.u32 %v3230, 7
      %v3232 = vsub.s32 %v3229, %v3231
      %v3233 = vrot.slane %v3225, %v3232
      %v3235 = vunpack.c.l.s4 1966171168
      %v3236 = vunpack.c.0.s8 %v3235
      %v3237 = vlaneseq
      %v3238 = vshrl.u32 %v3237, 7
      %v3239 = vsub.s32 %v3236, %v3238
      %v3240 = vrot.slane %v3226, %v3239
      %v3241 = vcombine.low %v3233, %v3240
      %v3242 = vcombine.low %v1159, %v1161
      %v3243 = vcombine.low %v1144, %v1158
      %v3244 = vcombine.low %v1160, %v1162
      %v3245 = vcombine.low %v1176, %v1200
      %v3247 = vunpack.c.l.s4 1966171168
      %v3248 = vunpack.c.0.s8 %v3247
      %v3249 = vlaneseq
      %v3250 = vshrl.u32 %v3249, 7
      %v3251 = vsub.s32 %v3248, %v3250
      %v3252 = vrot.slane %v3242, %v3251
      %v3254 = vunpack.c.l.s4 1966171168
      %v3255 = vunpack.c.0.s8 %v3254
      %v3256 = vlaneseq
      %v3257 = vshrl.u32 %v3256, 7
      %v3258 = vsub.s32 %v3255, %v3257
      %v3259 = vrot.slane %v3243, %v3258
      %v3261 = vunpack.c.l.s4 1966171168
      %v3262 = vunpack.c.0.s8 %v3261
      %v3263 = vlaneseq
      %v3264 = vshrl.u32 %v3263, 7
      %v3265 = vsub.s32 %v3262, %v3264
      %v3266 = vrot.slane %v3244, %v3265
      %v3268 = vunpack.c.l.s4 1966171168
      %v3269 = vunpack.c.0.s8 %v3268
      %v3270 = vlaneseq
      %v3271 = vshrl.u32 %v3270, 7
      %v3272 = vsub.s32 %v3269, %v3271
      %v3273 = vrot.slane %v3245, %v3272
      %v3274 = vcombine.low %v3252, %v3259
      %v3275 = vcombine.low %v3266, %v3273
      %v3277 = vunpack.c.l.s4 1966171168
      %v3278 = vunpack.c.0.s8 %v3277
      %v3279 = vlaneseq
      %v3280 = vshrl.u32 %v3279, 7
      %v3281 = vsub.s32 %v3278, %v3280
      %v3282 = vrot.slane %v3274, %v3281
      %v3284 = vunpack.c.l.s4 1966171168
      %v3285 = vunpack.c.0.s8 %v3284
      %v3286 = vlaneseq
      %v3287 = vshrl.u32 %v3286, 7
      %v3288 = vsub.s32 %v3285, %v3287
      %v3289 = vrot.slane %v3275, %v3288
      %v3290 = vcombine.low %v3282, %v3289
      %v3291 = vcombine.low %v1214, %v1222
      %v3292 = vcombine.low %v1224, %v1207
      %v3293 = vcombine.low %v1221, %v1223
      %v3294 = vcombine.low %v1225, %v1249
      %v3296 = vunpack.c.l.s4 1966171168
      %v3297 = vunpack.c.0.s8 %v3296
      %v3298 = vlaneseq
      %v3299 = vshrl.u32 %v3298, 7
      %v3300 = vsub.s32 %v3297, %v3299
      %v3301 = vrot.slane %v3291, %v3300
      %v3303 = vunpack.c.l.s4 1966171168
      %v3304 = vunpack.c.0.s8 %v3303
      %v3305 = vlaneseq
      %v3306 = vshrl.u32 %v3305, 7
      %v3307 = vsub.s32 %v3304, %v3306
      %v3308 = vrot.slane %v3292, %v3307
      %v3310 = vunpack.c.l.s4 1966171168
      %v3311 = vunpack.c.0.s8 %v3310
      %v3312 = vlaneseq
      %v3313 = vshrl.u32 %v3312, 7
      %v3314 = vsub.s32 %v3311, %v3313
      %v3315 = vrot.slane %v3293, %v3314
      %v3317 = vunpack.c.l.s4 1966171168
      %v3318 = vunpack.c.0.s8 %v3317
      %v3319 = vlaneseq
      %v3320 = vshrl.u32 %v3319, 7
      %v3321 = vsub.s32 %v3318, %v3320
      %v3322 = vrot.slane %v3294, %v3321
      %v3323 = vcombine.low %v3301, %v3308
      %v3324 = vcombine.low %v3315, %v3322
      %v3326 = vunpack.c.l.s4 1966171168
      %v3327 = vunpack.c.0.s8 %v3326
      %v3328 = vlaneseq
      %v3329 = vshrl.u32 %v3328, 7
      %v3330 = vsub.s32 %v3327, %v3329
      %v3331 = vrot.slane %v3323, %v3330
      %v3333 = vunpack.c.l.s4 1966171168
      %v3334 = vunpack.c.0.s8 %v3333
      %v3335 = vlaneseq
      %v3336 = vshrl.u32 %v3335, 7
      %v3337 = vsub.s32 %v3334, %v3336
      %v3338 = vrot.slane %v3324, %v3337
      %v3339 = vcombine.low %v3331, %v3338
      %v3340 = vcombine.low %v1263, %v1271
      %v3341 = vcombine.low %v1273, %v1256
      %v3342 = vcombine.low %v1270, %v1272
      %v3343 = vcombine.low %v1274, %v1288
      %v3345 = vunpack.c.l.s4 1966171168
      %v3346 = vunpack.c.0.s8 %v3345
      %v3347 = vlaneseq
      %v3348 = vshrl.u32 %v3347, 7
      %v3349 = vsub.s32 %v3346, %v3348
      %v3350 = vrot.slane %v3340, %v3349
      %v3352 = vunpack.c.l.s4 1966171168
      %v3353 = vunpack.c.0.s8 %v3352
      %v3354 = vlaneseq
      %v3355 = vshrl.u32 %v3354, 7
      %v3356 = vsub.s32 %v3353, %v3355
      %v3357 = vrot.slane %v3341, %v3356
      %v3359 = vunpack.c.l.s4 1966171168
      %v3360 = vunpack.c.0.s8 %v3359
      %v3361 = vlaneseq
      %v3362 = vshrl.u32 %v3361, 7
      %v3363 = vsub.s32 %v3360, %v3362
      %v3364 = vrot.slane %v3342, %v3363
      %v3366 = vunpack.c.l.s4 1966171168
      %v3367 = vunpack.c.0.s8 %v3366
      %v3368 = vlaneseq
      %v3369 = vshrl.u32 %v3368, 7
      %v3370 = vsub.s32 %v3367, %v3369
      %v3371 = vrot.slane %v3343, %v3370
      %v3372 = vcombine.low %v3350, %v3357
      %v3373 = vcombine.low %v3364, %v3371
      %v3375 = vunpack.c.l.s4 1966171168
      %v3376 = vunpack.c.0.s8 %v3375
      %v3377 = vlaneseq
      %v3378 = vshrl.u32 %v3377, 7
      %v3379 = vsub.s32 %v3376, %v3378
      %v3380 = vrot.slane %v3372, %v3379
      %v3382 = vunpack.c.l.s4 1966171168
      %v3383 = vunpack.c.0.s8 %v3382
      %v3384 = vlaneseq
      %v3385 = vshrl.u32 %v3384, 7
      %v3386 = vsub.s32 %v3383, %v3385
      %v3387 = vrot.slane %v3373, %v3386
      %v3388 = vcombine.low %v3380, %v3387
      %v3389 = vcombine.low %v1312, %v1326
      %v3390 = vcombine.low %v1334, %v1336
      %v3391 = vcombine.low %v1319, %v1333
      %v3392 = vcombine.low %v1335, %v1337
      %v3394 = vunpack.c.l.s4 1966171168
      %v3395 = vunpack.c.0.s8 %v3394
      %v3396 = vlaneseq
      %v3397 = vshrl.u32 %v3396, 7
      %v3398 = vsub.s32 %v3395, %v3397
      %v3399 = vrot.slane %v3389, %v3398
      %v3401 = vunpack.c.l.s4 1966171168
      %v3402 = vunpack.c.0.s8 %v3401
      %v3403 = vlaneseq
      %v3404 = vshrl.u32 %v3403, 7
      %v3405 = vsub.s32 %v3402, %v3404
      %v3406 = vrot.slane %v3390, %v3405
      %v3408 = vunpack.c.l.s4 1966171168
      %v3409 = vunpack.c.0.s8 %v3408
      %v3410 = vlaneseq
      %v3411 = vshrl.u32 %v3410, 7
      %v3412 = vsub.s32 %v3409, %v3411
      %v3413 = vrot.slane %v3391, %v3412
      %v3415 = vunpack.c.l.s4 1966171168
      %v3416 = vunpack.c.0.s8 %v3415
      %v3417 = vlaneseq
      %v3418 = vshrl.u32 %v3417, 7
      %v3419 = vsub.s32 %v3416, %v3418
      %v3420 = vrot.slane %v3392, %v3419
      %v3421 = vcombine.low %v3399, %v3406
      %v3422 = vcombine.low %v3413, %v3420
      %v3424 = vunpack.c.l.s4 1966171168
      %v3425 = vunpack.c.0.s8 %v3424
      %v3426 = vlaneseq
      %v3427 = vshrl.u32 %v3426, 7
      %v3428 = vsub.s32 %v3425, %v3427
      %v3429 = vrot.slane %v3421, %v3428
      %v3431 = vunpack.c.l.s4 1966171168
      %v3432 = vunpack.c.0.s8 %v3431
      %v3433 = vlaneseq
      %v3434 = vshrl.u32 %v3433, 7
      %v3435 = vsub.s32 %v3432, %v3434
      %v3436 = vrot.slane %v3422, %v3435
      %v3437 = vcombine.low %v3429, %v3436
      %v3438 = vcombine.low %v1361, %v1375
      %v3439 = vcombine.low %v1383, %v1385
      %v3440 = vcombine.low %v1368, %v1382
      %v3441 = vcombine.low %v1384, %v1386
      %v3443 = vunpack.c.l.s4 1966171168
      %v3444 = vunpack.c.0.s8 %v3443
      %v3445 = vlaneseq
      %v3446 = vshrl.u32 %v3445, 7
      %v3447 = vsub.s32 %v3444, %v3446
      %v3448 = vrot.slane %v3438, %v3447
      %v3450 = vunpack.c.l.s4 1966171168
      %v3451 = vunpack.c.0.s8 %v3450
      %v3452 = vlaneseq
      %v3453 = vshrl.u32 %v3452, 7
      %v3454 = vsub.s32 %v3451, %v3453
      %v3455 = vrot.slane %v3439, %v3454
      %v3457 = vunpack.c.l.s4 1966171168
      %v3458 = vunpack.c.0.s8 %v3457
      %v3459 = vlaneseq
      %v3460 = vshrl.u32 %v3459, 7
      %v3461 = vsub.s32 %v3458, %v3460
      %v3462 = vrot.slane %v3440, %v3461
      %v3464 = vunpack.c.l.s4 1966171168
      %v3465 = vunpack.c.0.s8 %v3464
      %v3466 = vlaneseq
      %v3467 = vshrl.u32 %v3466, 7
      %v3468 = vsub.s32 %v3465, %v3467
      %v3469 = vrot.slane %v3441, %v3468
      %v3470 = vcombine.low %v3448, %v3455
      %v3471 = vcombine.low %v3462, %v3469
      %v3473 = vunpack.c.l.s4 1966171168
      %v3474 = vunpack.c.0.s8 %v3473
      %v3475 = vlaneseq
      %v3476 = vshrl.u32 %v3475, 7
      %v3477 = vsub.s32 %v3474, %v3476
      %v3478 = vrot.slane %v3470, %v3477
      %v3480 = vunpack.c.l.s4 1966171168
      %v3481 = vunpack.c.0.s8 %v3480
      %v3482 = vlaneseq
      %v3483 = vshrl.u32 %v3482, 7
      %v3484 = vsub.s32 %v3481, %v3483
      %v3485 = vrot.slane %v3471, %v3484
      %v3486 = vcombine.low %v3478, %v3485
      %v3487 = vcombine.low %v1400, %v1424
      %v3488 = vcombine.low %v1438, %v1446
      %v3489 = vcombine.low %v1448, %v1431
      %v3490 = vcombine.low %v1445, %v1447
      %v3492 = vunpack.c.l.s4 1966171168
      %v3493 = vunpack.c.0.s8 %v3492
      %v3494 = vlaneseq
      %v3495 = vshrl.u32 %v3494, 7
      %v3496 = vsub.s32 %v3493, %v3495
      %v3497 = vrot.slane %v3487, %v3496
      %v3499 = vunpack.c.l.s4 1966171168
      %v3500 = vunpack.c.0.s8 %v3499
      %v3501 = vlaneseq
      %v3502 = vshrl.u32 %v3501, 7
      %v3503 = vsub.s32 %v3500, %v3502
      %v3504 = vrot.slane %v3488, %v3503
      %v3506 = vunpack.c.l.s4 1966171168
      %v3507 = vunpack.c.0.s8 %v3506
      %v3508 = vlaneseq
      %v3509 = vshrl.u32 %v3508, 7
      %v3510 = vsub.s32 %v3507, %v3509
      %v3511 = vrot.slane %v3489, %v3510
      %v3513 = vunpack.c.l.s4 1966171168
      %v3514 = vunpack.c.0.s8 %v3513
      %v3515 = vlaneseq
      %v3516 = vshrl.u32 %v3515, 7
      %v3517 = vsub.s32 %v3514, %v3516
      %v3518 = vrot.slane %v3490, %v3517
      %v3519 = vcombine.low %v3497, %v3504
      %v3520 = vcombine.low %v3511, %v3518
      %v3522 = vunpack.c.l.s4 1966171168
      %v3523 = vunpack.c.0.s8 %v3522
      %v3524 = vlaneseq
      %v3525 = vshrl.u32 %v3524, 7
      %v3526 = vsub.s32 %v3523, %v3525
      %v3527 = vrot.slane %v3519, %v3526
      %v3529 = vunpack.c.l.s4 1966171168
      %v3530 = vunpack.c.0.s8 %v3529
      %v3531 = vlaneseq
      %v3532 = vshrl.u32 %v3531, 7
      %v3533 = vsub.s32 %v3530, %v3532
      %v3534 = vrot.slane %v3520, %v3533
      %v3535 = vcombine.low %v3527, %v3534
      %v3536 = vcombine.low %v1449, %v1473
      %v3537 = vcombine.low %v1487, %v1495
      %v3538 = vcombine.low %v1497, %v1480
      %v3539 = vcombine.low %v1494, %v1496
      %v3541 = vunpack.c.l.s4 1966171168
      %v3542 = vunpack.c.0.s8 %v3541
      %v3543 = vlaneseq
      %v3544 = vshrl.u32 %v3543, 7
      %v3545 = vsub.s32 %v3542, %v3544
      %v3546 = vrot.slane %v3536, %v3545
      %v3548 = vunpack.c.l.s4 1966171168
      %v3549 = vunpack.c.0.s8 %v3548
      %v3550 = vlaneseq
      %v3551 = vshrl.u32 %v3550, 7
      %v3552 = vsub.s32 %v3549, %v3551
      %v3553 = vrot.slane %v3537, %v3552
      %v3555 = vunpack.c.l.s4 1966171168
      %v3556 = vunpack.c.0.s8 %v3555
      %v3557 = vlaneseq
      %v3558 = vshrl.u32 %v3557, 7
      %v3559 = vsub.s32 %v3556, %v3558
      %v3560 = vrot.slane %v3538, %v3559
      %v3562 = vunpack.c.l.s4 1966171168
      %v3563 = vunpack.c.0.s8 %v3562
      %v3564 = vlaneseq
      %v3565 = vshrl.u32 %v3564, 7
      %v3566 = vsub.s32 %v3563, %v3565
      %v3567 = vrot.slane %v3539, %v3566
      %v3568 = vcombine.low %v3546, %v3553
      %v3569 = vcombine.low %v3560, %v3567
      %v3571 = vunpack.c.l.s4 1966171168
      %v3572 = vunpack.c.0.s8 %v3571
      %v3573 = vlaneseq
      %v3574 = vshrl.u32 %v3573, 7
      %v3575 = vsub.s32 %v3572, %v3574
      %v3576 = vrot.slane %v3568, %v3575
      %v3578 = vunpack.c.l.s4 1966171168
      %v3579 = vunpack.c.0.s8 %v3578
      %v3580 = vlaneseq
      %v3581 = vshrl.u32 %v3580, 7
      %v3582 = vsub.s32 %v3579, %v3581
      %v3583 = vrot.slane %v3569, %v3582
      %v3584 = vcombine.low %v3576, %v3583
      %v3585 = vcombine.low %v1498, %v1512
      %v3586 = vcombine.low %v1536, %v1550
      %v3587 = vcombine.low %v1558, %v1560
      %v3588 = vcombine.low %v1543, %v1557
      %v3590 = vunpack.c.l.s4 1966171168
      %v3591 = vunpack.c.0.s8 %v3590
      %v3592 = vlaneseq
      %v3593 = vshrl.u32 %v3592, 7
      %v3594 = vsub.s32 %v3591, %v3593
      %v3595 = vrot.slane %v3585, %v3594
      %v3597 = vunpack.c.l.s4 1966171168
      %v3598 = vunpack.c.0.s8 %v3597
      %v3599 = vlaneseq
      %v3600 = vshrl.u32 %v3599, 7
      %v3601 = vsub.s32 %v3598, %v3600
      %v3602 = vrot.slane %v3586, %v3601
      %v3604 = vunpack.c.l.s4 1966171168
      %v3605 = vunpack.c.0.s8 %v3604
      %v3606 = vlaneseq
      %v3607 = vshrl.u32 %v3606, 7
      %v3608 = vsub.s32 %v3605, %v3607
      %v3609 = vrot.slane %v3587, %v3608
      %v3611 = vunpack.c.l.s4 1966171168
      %v3612 = vunpack.c.0.s8 %v3611
      %v3613 = vlaneseq
      %v3614 = vshrl.u32 %v3613, 7
      %v3615 = vsub.s32 %v3612, %v3614
      %v3616 = vrot.slane %v3588, %v3615
      %v3617 = vcombine.low %v3595, %v3602
      %v3618 = vcombine.low %v3609, %v3616
      %v3620 = vunpack.c.l.s4 1966171168
      %v3621 = vunpack.c.0.s8 %v3620
      %v3622 = vlaneseq
      %v3623 = vshrl.u32 %v3622, 7
      %v3624 = vsub.s32 %v3621, %v3623
      %v3625 = vrot.slane %v3617, %v3624
      %v3627 = vunpack.c.l.s4 1966171168
      %v3628 = vunpack.c.0.s8 %v3627
      %v3629 = vlaneseq
      %v3630 = vshrl.u32 %v3629, 7
      %v3631 = vsub.s32 %v3628, %v3630
      %v3632 = vrot.slane %v3618, %v3631
      %v3633 = vcombine.low %v3625, %v3632
      %v3634 = vcombine.low %v1559, %v1561
      %v3635 = vcombine.low %v1585, %v1599
      %v3636 = vcombine.low %v1607, %v1609
      %v3637 = vcombine.low %v1592, %v1606
      %v3639 = vunpack.c.l.s4 1966171168
      %v3640 = vunpack.c.0.s8 %v3639
      %v3641 = vlaneseq
      %v3642 = vshrl.u32 %v3641, 7
      %v3643 = vsub.s32 %v3640, %v3642
      %v3644 = vrot.slane %v3634, %v3643
      %v3646 = vunpack.c.l.s4 1966171168
      %v3647 = vunpack.c.0.s8 %v3646
      %v3648 = vlaneseq
      %v3649 = vshrl.u32 %v3648, 7
      %v3650 = vsub.s32 %v3647, %v3649
      %v3651 = vrot.slane %v3635, %v3650
      %v3653 = vunpack.c.l.s4 1966171168
      %v3654 = vunpack.c.0.s8 %v3653
      %v3655 = vlaneseq
      %v3656 = vshrl.u32 %v3655, 7
      %v3657 = vsub.s32 %v3654, %v3656
      %v3658 = vrot.slane %v3636, %v3657
      %v3660 = vunpack.c.l.s4 1966171168
      %v3661 = vunpack.c.0.s8 %v3660
      %v3662 = vlaneseq
      %v3663 = vshrl.u32 %v3662, 7
      %v3664 = vsub.s32 %v3661, %v3663
      %v3665 = vrot.slane %v3637, %v3664
      %v3666 = vcombine.low %v3644, %v3651
      %v3667 = vcombine.low %v3658, %v3665
      %v3669 = vunpack.c.l.s4 1966171168
      %v3670 = vunpack.c.0.s8 %v3669
      %v3671 = vlaneseq
      %v3672 = vshrl.u32 %v3671, 7
      %v3673 = vsub.s32 %v3670, %v3672
      %v3674 = vrot.slane %v3666, %v3673
      %v3676 = vunpack.c.l.s4 1966171168
      %v3677 = vunpack.c.0.s8 %v3676
      %v3678 = vlaneseq
      %v3679 = vshrl.u32 %v3678, 7
      %v3680 = vsub.s32 %v3677, %v3679
      %v3681 = vrot.slane %v3667, %v3680
      %v3682 = vcombine.low %v3674, %v3681
      %v3683 = vcombine.low %v1608, %v1610
      %v3684 = vcombine.low %v1624, %v1648
      %v3685 = vcombine.low %v1662, %v1670
      %v3686 = vcombine.low %v1672, %v1655
      %v3688 = vunpack.c.l.s4 1966171168
      %v3689 = vunpack.c.0.s8 %v3688
      %v3690 = vlaneseq
      %v3691 = vshrl.u32 %v3690, 7
      %v3692 = vsub.s32 %v3689, %v3691
      %v3693 = vrot.slane %v3683, %v3692
      %v3695 = vunpack.c.l.s4 1966171168
      %v3696 = vunpack.c.0.s8 %v3695
      %v3697 = vlaneseq
      %v3698 = vshrl.u32 %v3697, 7
      %v3699 = vsub.s32 %v3696, %v3698
      %v3700 = vrot.slane %v3684, %v3699
      %v3702 = vunpack.c.l.s4 1966171168
      %v3703 = vunpack.c.0.s8 %v3702
      %v3704 = vlaneseq
      %v3705 = vshrl.u32 %v3704, 7
      %v3706 = vsub.s32 %v3703, %v3705
      %v3707 = vrot.slane %v3685, %v3706
      %v3709 = vunpack.c.l.s4 1966171168
      %v3710 = vunpack.c.0.s8 %v3709
      %v3711 = vlaneseq
      %v3712 = vshrl.u32 %v3711, 7
      %v3713 = vsub.s32 %v3710, %v3712
      %v3714 = vrot.slane %v3686, %v3713
      %v3715 = vcombine.low %v3693, %v3700
      %v3716 = vcombine.low %v3707, %v3714
      %v3718 = vunpack.c.l.s4 1966171168
      %v3719 = vunpack.c.0.s8 %v3718
      %v3720 = vlaneseq
      %v3721 = vshrl.u32 %v3720, 7
      %v3722 = vsub.s32 %v3719, %v3721
      %v3723 = vrot.slane %v3715, %v3722
      %v3725 = vunpack.c.l.s4 1966171168
      %v3726 = vunpack.c.0.s8 %v3725
      %v3727 = vlaneseq
      %v3728 = vshrl.u32 %v3727, 7
      %v3729 = vsub.s32 %v3726, %v3728
      %v3730 = vrot.slane %v3716, %v3729
      %v3731 = vcombine.low %v3723, %v3730
      %v3732 = vcombine.low %v1669, %v1671
      %v3733 = vcombine.low %v1673, %v1697
      %v3734 = vcombine.low %v1711, %v1719
      %v3735 = vcombine.low %v1721, %v1704
      %v3737 = vunpack.c.l.s4 1966171168
      %v3738 = vunpack.c.0.s8 %v3737
      %v3739 = vlaneseq
      %v3740 = vshrl.u32 %v3739, 7
      %v3741 = vsub.s32 %v3738, %v3740
      %v3742 = vrot.slane %v3732, %v3741
      %v3744 = vunpack.c.l.s4 1966171168
      %v3745 = vunpack.c.0.s8 %v3744
      %v3746 = vlaneseq
      %v3747 = vshrl.u32 %v3746, 7
      %v3748 = vsub.s32 %v3745, %v3747
      %v3749 = vrot.slane %v3733, %v3748
      %v3751 = vunpack.c.l.s4 1966171168
      %v3752 = vunpack.c.0.s8 %v3751
      %v3753 = vlaneseq
      %v3754 = vshrl.u32 %v3753, 7
      %v3755 = vsub.s32 %v3752, %v3754
      %v3756 = vrot.slane %v3734, %v3755
      %v3758 = vunpack.c.l.s4 1966171168
      %v3759 = vunpack.c.0.s8 %v3758
      %v3760 = vlaneseq
      %v3761 = vshrl.u32 %v3760, 7
      %v3762 = vsub.s32 %v3759, %v3761
      %v3763 = vrot.slane %v3735, %v3762
      %v3764 = vcombine.low %v3742, %v3749
      %v3765 = vcombine.low %v3756, %v3763
      %v3767 = vunpack.c.l.s4 1966171168
      %v3768 = vunpack.c.0.s8 %v3767
      %v3769 = vlaneseq
      %v3770 = vshrl.u32 %v3769, 7
      %v3771 = vsub.s32 %v3768, %v3770
      %v3772 = vrot.slane %v3764, %v3771
      %v3774 = vunpack.c.l.s4 1966171168
      %v3775 = vunpack.c.0.s8 %v3774
      %v3776 = vlaneseq
      %v3777 = vshrl.u32 %v3776, 7
      %v3778 = vsub.s32 %v3775, %v3777
      %v3779 = vrot.slane %v3765, %v3778
      %v3780 = vcombine.low %v3772, %v3779
      %v3781 = vcombine.low %v1718, %v1720
      %v3782 = vcombine.low %v1722, %v1736
      %v3783 = vcombine.low %v1760, %v1774
      %v3784 = vcombine.low %v1782, %v1784
      %v3786 = vunpack.c.l.s4 1966171168
      %v3787 = vunpack.c.0.s8 %v3786
      %v3788 = vlaneseq
      %v3789 = vshrl.u32 %v3788, 7
      %v3790 = vsub.s32 %v3787, %v3789
      %v3791 = vrot.slane %v3781, %v3790
      %v3793 = vunpack.c.l.s4 1966171168
      %v3794 = vunpack.c.0.s8 %v3793
      %v3795 = vlaneseq
      %v3796 = vshrl.u32 %v3795, 7
      %v3797 = vsub.s32 %v3794, %v3796
      %v3798 = vrot.slane %v3782, %v3797
      %v3800 = vunpack.c.l.s4 1966171168
      %v3801 = vunpack.c.0.s8 %v3800
      %v3802 = vlaneseq
      %v3803 = vshrl.u32 %v3802, 7
      %v3804 = vsub.s32 %v3801, %v3803
      %v3805 = vrot.slane %v3783, %v3804
      %v3807 = vunpack.c.l.s4 1966171168
      %v3808 = vunpack.c.0.s8 %v3807
      %v3809 = vlaneseq
      %v3810 = vshrl.u32 %v3809, 7
      %v3811 = vsub.s32 %v3808, %v3810
      %v3812 = vrot.slane %v3784, %v3811
      %v3813 = vcombine.low %v3791, %v3798
      %v3814 = vcombine.low %v3805, %v3812
      %v3816 = vunpack.c.l.s4 1966171168
      %v3817 = vunpack.c.0.s8 %v3816
      %v3818 = vlaneseq
      %v3819 = vshrl.u32 %v3818, 7
      %v3820 = vsub.s32 %v3817, %v3819
      %v3821 = vrot.slane %v3813, %v3820
      %v3823 = vunpack.c.l.s4 1966171168
      %v3824 = vunpack.c.0.s8 %v3823
      %v3825 = vlaneseq
      %v3826 = vshrl.u32 %v3825, 7
      %v3827 = vsub.s32 %v3824, %v3826
      %v3828 = vrot.slane %v3814, %v3827
      %v3829 = vcombine.low %v3821, %v3828
      %v3830 = vcombine.low %v1767, %v1781
      %v3831 = vcombine.low %v1783, %v1785
      %v3832 = vcombine.low %v1809, %v1823
      %v3833 = vcombine.low %v1831, %v1833
      %v3835 = vunpack.c.l.s4 1966171168
      %v3836 = vunpack.c.0.s8 %v3835
      %v3837 = vlaneseq
      %v3838 = vshrl.u32 %v3837, 7
      %v3839 = vsub.s32 %v3836, %v3838
      %v3840 = vrot.slane %v3830, %v3839
      %v3842 = vunpack.c.l.s4 1966171168
      %v3843 = vunpack.c.0.s8 %v3842
      %v3844 = vlaneseq
      %v3845 = vshrl.u32 %v3844, 7
      %v3846 = vsub.s32 %v3843, %v3845
      %v3847 = vrot.slane %v3831, %v3846
      %v3849 = vunpack.c.l.s4 1966171168
      %v3850 = vunpack.c.0.s8 %v3849
      %v3851 = vlaneseq
      %v3852 = vshrl.u32 %v3851, 7
      %v3853 = vsub.s32 %v3850, %v3852
      %v3854 = vrot.slane %v3832, %v3853
      %v3856 = vunpack.c.l.s4 1966171168
      %v3857 = vunpack.c.0.s8 %v3856
      %v3858 = vlaneseq
      %v3859 = vshrl.u32 %v3858, 7
      %v3860 = vsub.s32 %v3857, %v3859
      %v3861 = vrot.slane %v3833, %v3860
      %v3862 = vcombine.low %v3840, %v3847
      %v3863 = vcombine.low %v3854, %v3861
      %v3865 = vunpack.c.l.s4 1966171168
      %v3866 = vunpack.c.0.s8 %v3865
      %v3867 = vlaneseq
      %v3868 = vshrl.u32 %v3867, 7
      %v3869 = vsub.s32 %v3866, %v3868
      %v3870 = vrot.slane %v3862, %v3869
      %v3872 = vunpack.c.l.s4 1966171168
      %v3873 = vunpack.c.0.s8 %v3872
      %v3874 = vlaneseq
      %v3875 = vshrl.u32 %v3874, 7
      %v3876 = vsub.s32 %v3873, %v3875
      %v3877 = vrot.slane %v3863, %v3876
      %v3878 = vcombine.low %v3870, %v3877
      %v3879 = vcombine.low %v1816, %v1830
      %v3880 = vcombine.low %v1832, %v1834
      %v3881 = vcombine.low %v1848, %v1872
      %v3882 = vcombine.low %v1886, %v1894
      %v3884 = vunpack.c.l.s4 1966171168
      %v3885 = vunpack.c.0.s8 %v3884
      %v3886 = vlaneseq
      %v3887 = vshrl.u32 %v3886, 7
      %v3888 = vsub.s32 %v3885, %v3887
      %v3889 = vrot.slane %v3879, %v3888
      %v3891 = vunpack.c.l.s4 1966171168
      %v3892 = vunpack.c.0.s8 %v3891
      %v3893 = vlaneseq
      %v3894 = vshrl.u32 %v3893, 7
      %v3895 = vsub.s32 %v3892, %v3894
      %v3896 = vrot.slane %v3880, %v3895
      %v3898 = vunpack.c.l.s4 1966171168
      %v3899 = vunpack.c.0.s8 %v3898
      %v3900 = vlaneseq
      %v3901 = vshrl.u32 %v3900, 7
      %v3902 = vsub.s32 %v3899, %v3901
      %v3903 = vrot.slane %v3881, %v3902
      %v3905 = vunpack.c.l.s4 1966171168
      %v3906 = vunpack.c.0.s8 %v3905
      %v3907 = vlaneseq
      %v3908 = vshrl.u32 %v3907, 7
      %v3909 = vsub.s32 %v3906, %v3908
      %v3910 = vrot.slane %v3882, %v3909
      %v3911 = vcombine.low %v3889, %v3896
      %v3912 = vcombine.low %v3903, %v3910
      %v3914 = vunpack.c.l.s4 1966171168
      %v3915 = vunpack.c.0.s8 %v3914
      %v3916 = vlaneseq
      %v3917 = vshrl.u32 %v3916, 7
      %v3918 = vsub.s32 %v3915, %v3917
      %v3919 = vrot.slane %v3911, %v3918
      %v3921 = vunpack.c.l.s4 1966171168
      %v3922 = vunpack.c.0.s8 %v3921
      %v3923 = vlaneseq
      %v3924 = vshrl.u32 %v3923, 7
      %v3925 = vsub.s32 %v3922, %v3924
      %v3926 = vrot.slane %v3912, %v3925
      %v3927 = vcombine.low %v3919, %v3926
      %v3928 = vcombine.low %v1896, %v1879
      %v3929 = vcombine.low %v1893, %v1895
      %v3930 = vcombine.low %v1897, %v1921
      %v3931 = vcombine.low %v1935, %v1943
      %v3933 = vunpack.c.l.s4 1966171168
      %v3934 = vunpack.c.0.s8 %v3933
      %v3935 = vlaneseq
      %v3936 = vshrl.u32 %v3935, 7
      %v3937 = vsub.s32 %v3934, %v3936
      %v3938 = vrot.slane %v3928, %v3937
      %v3940 = vunpack.c.l.s4 1966171168
      %v3941 = vunpack.c.0.s8 %v3940
      %v3942 = vlaneseq
      %v3943 = vshrl.u32 %v3942, 7
      %v3944 = vsub.s32 %v3941, %v3943
      %v3945 = vrot.slane %v3929, %v3944
      %v3947 = vunpack.c.l.s4 1966171168
      %v3948 = vunpack.c.0.s8 %v3947
      %v3949 = vlaneseq
      %v3950 = vshrl.u32 %v3949, 7
      %v3951 = vsub.s32 %v3948, %v3950
      %v3952 = vrot.slane %v3930, %v3951
      %v3954 = vunpack.c.l.s4 1966171168
      %v3955 = vunpack.c.0.s8 %v3954
      %v3956 = vlaneseq
      %v3957 = vshrl.u32 %v3956, 7
      %v3958 = vsub.s32 %v3955, %v3957
      %v3959 = vrot.slane %v3931, %v3958
      %v3960 = vcombine.low %v3938, %v3945
      %v3961 = vcombine.low %v3952, %v3959
      %v3963 = vunpack.c.l.s4 1966171168
      %v3964 = vunpack.c.0.s8 %v3963
      %v3965 = vlaneseq
      %v3966 = vshrl.u32 %v3965, 7
      %v3967 = vsub.s32 %v3964, %v3966
      %v3968 = vrot.slane %v3960, %v3967
      %v3970 = vunpack.c.l.s4 1966171168
      %v3971 = vunpack.c.0.s8 %v3970
      %v3972 = vlaneseq
      %v3973 = vshrl.u32 %v3972, 7
      %v3974 = vsub.s32 %v3971, %v3973
      %v3975 = vrot.slane %v3961, %v3974
      %v3976 = vcombine.low %v3968, %v3975
      %v3977 = vcombine.low %v1945, %v1928
      %v3978 = vcombine.low %v1942, %v1944
      %v3979 = vcombine.low %v1946, %v1960
      %v3980 = vcombine.low %v1984, %v1998
      %v3982 = vunpack.c.l.s4 1966171168
      %v3983 = vunpack.c.0.s8 %v3982
      %v3984 = vlaneseq
      %v3985 = vshrl.u32 %v3984, 7
      %v3986 = vsub.s32 %v3983, %v3985
      %v3987 = vrot.slane %v3977, %v3986
      %v3989 = vunpack.c.l.s4 1966171168
      %v3990 = vunpack.c.0.s8 %v3989
      %v3991 = vlaneseq
      %v3992 = vshrl.u32 %v3991, 7
      %v3993 = vsub.s32 %v3990, %v3992
      %v3994 = vrot.slane %v3978, %v3993
      %v3996 = vunpack.c.l.s4 1966171168
      %v3997 = vunpack.c.0.s8 %v3996
      %v3998 = vlaneseq
      %v3999 = vshrl.u32 %v3998, 7
      %v4000 = vsub.s32 %v3997, %v3999
      %v4001 = vrot.slane %v3979, %v4000
      %v4003 = vunpack.c.l.s4 1966171168
      %v4004 = vunpack.c.0.s8 %v4003
      %v4005 = vlaneseq
      %v4006 = vshrl.u32 %v4005, 7
      %v4007 = vsub.s32 %v4004, %v4006
      %v4008 = vrot.slane %v3980, %v4007
      %v4009 = vcombine.low %v3987, %v3994
      %v4010 = vcombine.low %v4001, %v4008
      %v4012 = vunpack.c.l.s4 1966171168
      %v4013 = vunpack.c.0.s8 %v4012
      %v4014 = vlaneseq
      %v4015 = vshrl.u32 %v4014, 7
      %v4016 = vsub.s32 %v4013, %v4015
      %v4017 = vrot.slane %v4009, %v4016
      %v4019 = vunpack.c.l.s4 1966171168
      %v4020 = vunpack.c.0.s8 %v4019
      %v4021 = vlaneseq
      %v4022 = vshrl.u32 %v4021, 7
      %v4023 = vsub.s32 %v4020, %v4022
      %v4024 = vrot.slane %v4010, %v4023
      %v4025 = vcombine.low %v4017, %v4024
      %v4026 = vcombine.low %v2006, %v2008
      %v4027 = vcombine.low %v1991, %v2005
      %v4028 = vcombine.low %v2007, %v2009
      %v4029 = vcombine.low %v2033, %v2047
      %v4031 = vunpack.c.l.s4 1966171168
      %v4032 = vunpack.c.0.s8 %v4031
      %v4033 = vlaneseq
      %v4034 = vshrl.u32 %v4033, 7
      %v4035 = vsub.s32 %v4032, %v4034
      %v4036 = vrot.slane %v4026, %v4035
      %v4038 = vunpack.c.l.s4 1966171168
      %v4039 = vunpack.c.0.s8 %v4038
      %v4040 = vlaneseq
      %v4041 = vshrl.u32 %v4040, 7
      %v4042 = vsub.s32 %v4039, %v4041
      %v4043 = vrot.slane %v4027, %v4042
      %v4045 = vunpack.c.l.s4 1966171168
      %v4046 = vunpack.c.0.s8 %v4045
      %v4047 = vlaneseq
      %v4048 = vshrl.u32 %v4047, 7
      %v4049 = vsub.s32 %v4046, %v4048
      %v4050 = vrot.slane %v4028, %v4049
      %v4052 = vunpack.c.l.s4 1966171168
      %v4053 = vunpack.c.0.s8 %v4052
      %v4054 = vlaneseq
      %v4055 = vshrl.u32 %v4054, 7
      %v4056 = vsub.s32 %v4053, %v4055
      %v4057 = vrot.slane %v4029, %v4056
      %v4058 = vcombine.low %v4036, %v4043
      %v4059 = vcombine.low %v4050, %v4057
      %v4061 = vunpack.c.l.s4 1966171168
      %v4062 = vunpack.c.0.s8 %v4061
      %v4063 = vlaneseq
      %v4064 = vshrl.u32 %v4063, 7
      %v4065 = vsub.s32 %v4062, %v4064
      %v4066 = vrot.slane %v4058, %v4065
      %v4068 = vunpack.c.l.s4 1966171168
      %v4069 = vunpack.c.0.s8 %v4068
      %v4070 = vlaneseq
      %v4071 = vshrl.u32 %v4070, 7
      %v4072 = vsub.s32 %v4069, %v4071
      %v4073 = vrot.slane %v4059, %v4072
      %v4074 = vcombine.low %v4066, %v4073
      %v4075 = vcombine.low %v2055, %v2057
      %v4076 = vcombine.low %v2040, %v2054
      %v4077 = vcombine.low %v2056, %v2058
      %v4078 = vcombine.low %v2072, %v2096
      %v4080 = vunpack.c.l.s4 1966171168
      %v4081 = vunpack.c.0.s8 %v4080
      %v4082 = vlaneseq
      %v4083 = vshrl.u32 %v4082, 7
      %v4084 = vsub.s32 %v4081, %v4083
      %v4085 = vrot.slane %v4075, %v4084
      %v4087 = vunpack.c.l.s4 1966171168
      %v4088 = vunpack.c.0.s8 %v4087
      %v4089 = vlaneseq
      %v4090 = vshrl.u32 %v4089, 7
      %v4091 = vsub.s32 %v4088, %v4090
      %v4092 = vrot.slane %v4076, %v4091
      %v4094 = vunpack.c.l.s4 1966171168
      %v4095 = vunpack.c.0.s8 %v4094
      %v4096 = vlaneseq
      %v4097 = vshrl.u32 %v4096, 7
      %v4098 = vsub.s32 %v4095, %v4097
      %v4099 = vrot.slane %v4077, %v4098
      %v4101 = vunpack.c.l.s4 1966171168
      %v4102 = vunpack.c.0.s8 %v4101
      %v4103 = vlaneseq
      %v4104 = vshrl.u32 %v4103, 7
      %v4105 = vsub.s32 %v4102, %v4104
      %v4106 = vrot.slane %v4078, %v4105
      %v4107 = vcombine.low %v4085, %v4092
      %v4108 = vcombine.low %v4099, %v4106
      %v4110 = vunpack.c.l.s4 1966171168
      %v4111 = vunpack.c.0.s8 %v4110
      %v4112 = vlaneseq
      %v4113 = vshrl.u32 %v4112, 7
      %v4114 = vsub.s32 %v4111, %v4113
      %v4115 = vrot.slane %v4107, %v4114
      %v4117 = vunpack.c.l.s4 1966171168
      %v4118 = vunpack.c.0.s8 %v4117
      %v4119 = vlaneseq
      %v4120 = vshrl.u32 %v4119, 7
      %v4121 = vsub.s32 %v4118, %v4120
      %v4122 = vrot.slane %v4108, %v4121
      %v4123 = vcombine.low %v4115, %v4122
      %v4124 = vcombine.low %v2110, %v2118
      %v4125 = vcombine.low %v2120, %v2103
      %v4126 = vcombine.low %v2117, %v2119
      %v4127 = vcombine.low %v2121, %v2145
      %v4129 = vunpack.c.l.s4 1966171168
      %v4130 = vunpack.c.0.s8 %v4129
      %v4131 = vlaneseq
      %v4132 = vshrl.u32 %v4131, 7
      %v4133 = vsub.s32 %v4130, %v4132
      %v4134 = vrot.slane %v4124, %v4133
      %v4136 = vunpack.c.l.s4 1966171168
      %v4137 = vunpack.c.0.s8 %v4136
      %v4138 = vlaneseq
      %v4139 = vshrl.u32 %v4138, 7
      %v4140 = vsub.s32 %v4137, %v4139
      %v4141 = vrot.slane %v4125, %v4140
      %v4143 = vunpack.c.l.s4 1966171168
      %v4144 = vunpack.c.0.s8 %v4143
      %v4145 = vlaneseq
      %v4146 = vshrl.u32 %v4145, 7
      %v4147 = vsub.s32 %v4144, %v4146
      %v4148 = vrot.slane %v4126, %v4147
      %v4150 = vunpack.c.l.s4 1966171168
      %v4151 = vunpack.c.0.s8 %v4150
      %v4152 = vlaneseq
      %v4153 = vshrl.u32 %v4152, 7
      %v4154 = vsub.s32 %v4151, %v4153
      %v4155 = vrot.slane %v4127, %v4154
      %v4156 = vcombine.low %v4134, %v4141
      %v4157 = vcombine.low %v4148, %v4155
      %v4159 = vunpack.c.l.s4 1966171168
      %v4160 = vunpack.c.0.s8 %v4159
      %v4161 = vlaneseq
      %v4162 = vshrl.u32 %v4161, 7
      %v4163 = vsub.s32 %v4160, %v4162
      %v4164 = vrot.slane %v4156, %v4163
      %v4166 = vunpack.c.l.s4 1966171168
      %v4167 = vunpack.c.0.s8 %v4166
      %v4168 = vlaneseq
      %v4169 = vshrl.u32 %v4168, 7
      %v4170 = vsub.s32 %v4167, %v4169
      %v4171 = vrot.slane %v4157, %v4170
      %v4172 = vcombine.low %v4164, %v4171
      %v4173 = vcombine.low %v2159, %v2167
      %v4174 = vcombine.low %v2169, %v2152
      %v4175 = vcombine.low %v2166, %v2168
      %v4176 = vcombine.low %v2170, %v2184
      %v4178 = vunpack.c.l.s4 1966171168
      %v4179 = vunpack.c.0.s8 %v4178
      %v4180 = vlaneseq
      %v4181 = vshrl.u32 %v4180, 7
      %v4182 = vsub.s32 %v4179, %v4181
      %v4183 = vrot.slane %v4173, %v4182
      %v4185 = vunpack.c.l.s4 1966171168
      %v4186 = vunpack.c.0.s8 %v4185
      %v4187 = vlaneseq
      %v4188 = vshrl.u32 %v4187, 7
      %v4189 = vsub.s32 %v4186, %v4188
      %v4190 = vrot.slane %v4174, %v4189
      %v4192 = vunpack.c.l.s4 1966171168
      %v4193 = vunpack.c.0.s8 %v4192
      %v4194 = vlaneseq
      %v4195 = vshrl.u32 %v4194, 7
      %v4196 = vsub.s32 %v4193, %v4195
      %v4197 = vrot.slane %v4175, %v4196
      %v4199 = vunpack.c.l.s4 1966171168
      %v4200 = vunpack.c.0.s8 %v4199
      %v4201 = vlaneseq
      %v4202 = vshrl.u32 %v4201, 7
      %v4203 = vsub.s32 %v4200, %v4202
      %v4204 = vrot.slane %v4176, %v4203
      %v4205 = vcombine.low %v4183, %v4190
      %v4206 = vcombine.low %v4197, %v4204
      %v4208 = vunpack.c.l.s4 1966171168
      %v4209 = vunpack.c.0.s8 %v4208
      %v4210 = vlaneseq
      %v4211 = vshrl.u32 %v4210, 7
      %v4212 = vsub.s32 %v4209, %v4211
      %v4213 = vrot.slane %v4205, %v4212
      %v4215 = vunpack.c.l.s4 1966171168
      %v4216 = vunpack.c.0.s8 %v4215
      %v4217 = vlaneseq
      %v4218 = vshrl.u32 %v4217, 7
      %v4219 = vsub.s32 %v4216, %v4218
      %v4220 = vrot.slane %v4206, %v4219
      %v4221 = vcombine.low %v4213, %v4220
      %v4222 = vcombine.low %v2208, %v2222
      %v4223 = vcombine.low %v2230, %v2232
      %v4224 = vcombine.low %v2215, %v2229
      %v4225 = vcombine.low %v2231, %v2233
      %v4227 = vunpack.c.l.s4 1966171168
      %v4228 = vunpack.c.0.s8 %v4227
      %v4229 = vlaneseq
      %v4230 = vshrl.u32 %v4229, 7
      %v4231 = vsub.s32 %v4228, %v4230
      %v4232 = vrot.slane %v4222, %v4231
      %v4234 = vunpack.c.l.s4 1966171168
      %v4235 = vunpack.c.0.s8 %v4234
      %v4236 = vlaneseq
      %v4237 = vshrl.u32 %v4236, 7
      %v4238 = vsub.s32 %v4235, %v4237
      %v4239 = vrot.slane %v4223, %v4238
      %v4241 = vunpack.c.l.s4 1966171168
      %v4242 = vunpack.c.0.s8 %v4241
      %v4243 = vlaneseq
      %v4244 = vshrl.u32 %v4243, 7
      %v4245 = vsub.s32 %v4242, %v4244
      %v4246 = vrot.slane %v4224, %v4245
      %v4248 = vunpack.c.l.s4 1966171168
      %v4249 = vunpack.c.0.s8 %v4248
      %v4250 = vlaneseq
      %v4251 = vshrl.u32 %v4250, 7
      %v4252 = vsub.s32 %v4249, %v4251
      %v4253 = vrot.slane %v4225, %v4252
      %v4254 = vcombine.low %v4232, %v4239
      %v4255 = vcombine.low %v4246, %v4253
      %v4257 = vunpack.c.l.s4 1966171168
      %v4258 = vunpack.c.0.s8 %v4257
      %v4259 = vlaneseq
      %v4260 = vshrl.u32 %v4259, 7
      %v4261 = vsub.s32 %v4258, %v4260
      %v4262 = vrot.slane %v4254, %v4261
      %v4264 = vunpack.c.l.s4 1966171168
      %v4265 = vunpack.c.0.s8 %v4264
      %v4266 = vlaneseq
      %v4267 = vshrl.u32 %v4266, 7
      %v4268 = vsub.s32 %v4265, %v4267
      %v4269 = vrot.slane %v4255, %v4268
      %v4270 = vcombine.low %v4262, %v4269
      %v4271 = vcombine.low %v2257, %v2271
      %v4272 = vcombine.low %v2279, %v2281
      %v4273 = vcombine.low %v2264, %v2278
      %v4274 = vcombine.low %v2280, %v2282
      %v4276 = vunpack.c.l.s4 1966171168
      %v4277 = vunpack.c.0.s8 %v4276
      %v4278 = vlaneseq
      %v4279 = vshrl.u32 %v4278, 7
      %v4280 = vsub.s32 %v4277, %v4279
      %v4281 = vrot.slane %v4271, %v4280
      %v4283 = vunpack.c.l.s4 1966171168
      %v4284 = vunpack.c.0.s8 %v4283
      %v4285 = vlaneseq
      %v4286 = vshrl.u32 %v4285, 7
      %v4287 = vsub.s32 %v4284, %v4286
      %v4288 = vrot.slane %v4272, %v4287
      %v4290 = vunpack.c.l.s4 1966171168
      %v4291 = vunpack.c.0.s8 %v4290
      %v4292 = vlaneseq
      %v4293 = vshrl.u32 %v4292, 7
      %v4294 = vsub.s32 %v4291, %v4293
      %v4295 = vrot.slane %v4273, %v4294
      %v4297 = vunpack.c.l.s4 1966171168
      %v4298 = vunpack.c.0.s8 %v4297
      %v4299 = vlaneseq
      %v4300 = vshrl.u32 %v4299, 7
      %v4301 = vsub.s32 %v4298, %v4300
      %v4302 = vrot.slane %v4274, %v4301
      %v4303 = vcombine.low %v4281, %v4288
      %v4304 = vcombine.low %v4295, %v4302
      %v4306 = vunpack.c.l.s4 1966171168
      %v4307 = vunpack.c.0.s8 %v4306
      %v4308 = vlaneseq
      %v4309 = vshrl.u32 %v4308, 7
      %v4310 = vsub.s32 %v4307, %v4309
      %v4311 = vrot.slane %v4303, %v4310
      %v4313 = vunpack.c.l.s4 1966171168
      %v4314 = vunpack.c.0.s8 %v4313
      %v4315 = vlaneseq
      %v4316 = vshrl.u32 %v4315, 7
      %v4317 = vsub.s32 %v4314, %v4316
      %v4318 = vrot.slane %v4304, %v4317
      %v4319 = vcombine.low %v4311, %v4318
      %v4321 = vunpack.c.l.s4 1966171168
      %v4322 = vunpack.c.0.s8 %v4321
      %v4323 = vlaneseq
      %v4324 = vshrl.u32 %v4323, 7
      %v4325 = vsub.s32 %v4322, %v4324
      %v4326 = vrot.slane %v2296, %v4325
      %v4328 = vunpack.c.l.s4 1966171168
      %v4329 = vunpack.c.0.s8 %v4328
      %v4330 = vlaneseq
      %v4331 = vshrl.u32 %v4330, 7
      %v4332 = vsub.s32 %v4329, %v4331
      %v4333 = vrot.slane %v4326, %v4332
      %v4371 = vcombine.low %v430, %v438
      %v4372 = vcombine.low %v440, %v423
      %v4373 = vcombine.low %v437, %v439
      %v4374 = vcombine.low %v441, %v465
      %v4376 = vunpack.c.l.s4 1966171168
      %v4377 = vunpack.c.0.s8 %v4376
      %v4378 = vlaneseq
      %v4379 = vshrl.u32 %v4378, 7
      %v4380 = vsub.s32 %v4377, %v4379
      %v4381 = vrot.slane %v4371, %v4380
      %v4383 = vunpack.c.l.s4 1966171168
      %v4384 = vunpack.c.0.s8 %v4383
      %v4385 = vlaneseq
      %v4386 = vshrl.u32 %v4385, 7
      %v4387 = vsub.s32 %v4384, %v4386
      %v4388 = vrot.slane %v4372, %v4387
      %v4390 = vunpack.c.l.s4 1966171168
      %v4391 = vunpack.c.0.s8 %v4390
      %v4392 = vlaneseq
      %v4393 = vshrl.u32 %v4392, 7
      %v4394 = vsub.s32 %v4391, %v4393
      %v4395 = vrot.slane %v4373, %v4394
      %v4397 = vunpack.c.l.s4 1966171168
      %v4398 = vunpack.c.0.s8 %v4397
      %v4399 = vlaneseq
      %v4400 = vshrl.u32 %v4399, 7
      %v4401 = vsub.s32 %v4398, %v4400
      %v4402 = vrot.slane %v4374, %v4401
      %v4403 = vcombine.low %v4381, %v4388
      %v4404 = vcombine.low %v4395, %v4402
      %v4406 = vunpack.c.l.s4 1966171168
      %v4407 = vunpack.c.0.s8 %v4406
      %v4408 = vlaneseq
      %v4409 = vshrl.u32 %v4408, 7
      %v4410 = vsub.s32 %v4407, %v4409
      %v4411 = vrot.slane %v4403, %v4410
      %v4413 = vunpack.c.l.s4 1966171168
      %v4414 = vunpack.c.0.s8 %v4413
      %v4415 = vlaneseq
      %v4416 = vshrl.u32 %v4415, 7
      %v4417 = vsub.s32 %v4414, %v4416
      %v4418 = vrot.slane %v4404, %v4417
      %v4419 = vcombine.low %v4411, %v4418
      %v4420 = vcombine.low %v479, %v487
      %v4421 = vcombine.low %v489, %v472
      %v4422 = vcombine.low %v486, %v488
      %v4423 = vcombine.low %v490, %v504
      %v4425 = vunpack.c.l.s4 1966171168
      %v4426 = vunpack.c.0.s8 %v4425
      %v4427 = vlaneseq
      %v4428 = vshrl.u32 %v4427, 7
      %v4429 = vsub.s32 %v4426, %v4428
      %v4430 = vrot.slane %v4420, %v4429
      %v4432 = vunpack.c.l.s4 1966171168
      %v4433 = vunpack.c.0.s8 %v4432
      %v4434 = vlaneseq
      %v4435 = vshrl.u32 %v4434, 7
      %v4436 = vsub.s32 %v4433, %v4435
      %v4437 = vrot.slane %v4421, %v4436
      %v4439 = vunpack.c.l.s4 1966171168
      %v4440 = vunpack.c.0.s8 %v4439
      %v4441 = vlaneseq
      %v4442 = vshrl.u32 %v4441, 7
      %v4443 = vsub.s32 %v4440, %v4442
      %v4444 = vrot.slane %v4422, %v4443
      %v4446 = vunpack.c.l.s4 1966171168
      %v4447 = vunpack.c.0.s8 %v4446
      %v4448 = vlaneseq
      %v4449 = vshrl.u32 %v4448, 7
      %v4450 = vsub.s32 %v4447, %v4449
      %v4451 = vrot.slane %v4423, %v4450
      %v4452 = vcombine.low %v4430, %v4437
      %v4453 = vcombine.low %v4444, %v4451
      %v4455 = vunpack.c.l.s4 1966171168
      %v4456 = vunpack.c.0.s8 %v4455
      %v4457 = vlaneseq
      %v4458 = vshrl.u32 %v4457, 7
      %v4459 = vsub.s32 %v4456, %v4458
      %v4460 = vrot.slane %v4452, %v4459
      %v4462 = vunpack.c.l.s4 1966171168
      %v4463 = vunpack.c.0.s8 %v4462
      %v4464 = vlaneseq
      %v4465 = vshrl.u32 %v4464, 7
      %v4466 = vsub.s32 %v4463, %v4465
      %v4467 = vrot.slane %v4453, %v4466
      %v4468 = vcombine.low %v4460, %v4467
      %v4469 = vcombine.low %v2304, %v542
      %v4470 = vcombine.low %v550, %v552
      %v4471 = vcombine.low %v535, %v549
      %v4472 = vcombine.low %v551, %v553
      %v4474 = vunpack.c.l.s4 1966171168
      %v4475 = vunpack.c.0.s8 %v4474
      %v4476 = vlaneseq
      %v4477 = vshrl.u32 %v4476, 7
      %v4478 = vsub.s32 %v4475, %v4477
      %v4479 = vrot.slane %v4469, %v4478
      %v4481 = vunpack.c.l.s4 1966171168
      %v4482 = vunpack.c.0.s8 %v4481
      %v4483 = vlaneseq
      %v4484 = vshrl.u32 %v4483, 7
      %v4485 = vsub.s32 %v4482, %v4484
      %v4486 = vrot.slane %v4470, %v4485
      %v4488 = vunpack.c.l.s4 1966171168
      %v4489 = vunpack.c.0.s8 %v4488
      %v4490 = vlaneseq
      %v4491 = vshrl.u32 %v4490, 7
      %v4492 = vsub.s32 %v4489, %v4491
      %v4493 = vrot.slane %v4471, %v4492
      %v4495 = vunpack.c.l.s4 1966171168
      %v4496 = vunpack.c.0.s8 %v4495
      %v4497 = vlaneseq
      %v4498 = vshrl.u32 %v4497, 7
      %v4499 = vsub.s32 %v4496, %v4498
      %v4500 = vrot.slane %v4472, %v4499
      %v4501 = vcombine.low %v4479, %v4486
      %v4502 = vcombine.low %v4493, %v4500
      %v4504 = vunpack.c.l.s4 1966171168
      %v4505 = vunpack.c.0.s8 %v4504
      %v4506 = vlaneseq
      %v4507 = vshrl.u32 %v4506, 7
      %v4508 = vsub.s32 %v4505, %v4507
      %v4509 = vrot.slane %v4501, %v4508
      %v4511 = vunpack.c.l.s4 1966171168
      %v4512 = vunpack.c.0.s8 %v4511
      %v4513 = vlaneseq
      %v4514 = vshrl.u32 %v4513, 7
      %v4515 = vsub.s32 %v4512, %v4514
      %v4516 = vrot.slane %v4502, %v4515
      %v4517 = vcombine.low %v4509, %v4516
      %v4518 = vcombine.low %v577, %v591
      %v4519 = vcombine.low %v599, %v601
      %v4520 = vcombine.low %v584, %v598
      %v4521 = vcombine.low %v600, %v602
      %v4523 = vunpack.c.l.s4 1966171168
      %v4524 = vunpack.c.0.s8 %v4523
      %v4525 = vlaneseq
      %v4526 = vshrl.u32 %v4525, 7
      %v4527 = vsub.s32 %v4524, %v4526
      %v4528 = vrot.slane %v4518, %v4527
      %v4530 = vunpack.c.l.s4 1966171168
      %v4531 = vunpack.c.0.s8 %v4530
      %v4532 = vlaneseq
      %v4533 = vshrl.u32 %v4532, 7
      %v4534 = vsub.s32 %v4531, %v4533
      %v4535 = vrot.slane %v4519, %v4534
      %v4537 = vunpack.c.l.s4 1966171168
      %v4538 = vunpack.c.0.s8 %v4537
      %v4539 = vlaneseq
      %v4540 = vshrl.u32 %v4539, 7
      %v4541 = vsub.s32 %v4538, %v4540
      %v4542 = vrot.slane %v4520, %v4541
      %v4544 = vunpack.c.l.s4 1966171168
      %v4545 = vunpack.c.0.s8 %v4544
      %v4546 = vlaneseq
      %v4547 = vshrl.u32 %v4546, 7
      %v4548 = vsub.s32 %v4545, %v4547
      %v4549 = vrot.slane %v4521, %v4548
      %v4550 = vcombine.low %v4528, %v4535
      %v4551 = vcombine.low %v4542, %v4549
      %v4553 = vunpack.c.l.s4 1966171168
      %v4554 = vunpack.c.0.s8 %v4553
      %v4555 = vlaneseq
      %v4556 = vshrl.u32 %v4555, 7
      %v4557 = vsub.s32 %v4554, %v4556
      %v4558 = vrot.slane %v4550, %v4557
      %v4560 = vunpack.c.l.s4 1966171168
      %v4561 = vunpack.c.0.s8 %v4560
      %v4562 = vlaneseq
      %v4563 = vshrl.u32 %v4562, 7
      %v4564 = vsub.s32 %v4561, %v4563
      %v4565 = vrot.slane %v4551, %v4564
      %v4566 = vcombine.low %v4558, %v4565
      %v4567 = vcombine.low %v616, %v2312
      %v4568 = vcombine.low %v654, %v662
      %v4569 = vcombine.low %v664, %v647
      %v4570 = vcombine.low %v661, %v663
      %v4572 = vunpack.c.l.s4 1966171168
      %v4573 = vunpack.c.0.s8 %v4572
      %v4574 = vlaneseq
      %v4575 = vshrl.u32 %v4574, 7
      %v4576 = vsub.s32 %v4573, %v4575
      %v4577 = vrot.slane %v4567, %v4576
      %v4579 = vunpack.c.l.s4 1966171168
      %v4580 = vunpack.c.0.s8 %v4579
      %v4581 = vlaneseq
      %v4582 = vshrl.u32 %v4581, 7
      %v4583 = vsub.s32 %v4580, %v4582
      %v4584 = vrot.slane %v4568, %v4583
      %v4586 = vunpack.c.l.s4 1966171168
      %v4587 = vunpack.c.0.s8 %v4586
      %v4588 = vlaneseq
      %v4589 = vshrl.u32 %v4588, 7
      %v4590 = vsub.s32 %v4587, %v4589
      %v4591 = vrot.slane %v4569, %v4590
      %v4593 = vunpack.c.l.s4 1966171168
      %v4594 = vunpack.c.0.s8 %v4593
      %v4595 = vlaneseq
      %v4596 = vshrl.u32 %v4595, 7
      %v4597 = vsub.s32 %v4594, %v4596
      %v4598 = vrot.slane %v4570, %v4597
      %v4599 = vcombine.low %v4577, %v4584
      %v4600 = vcombine.low %v4591, %v4598
      %v4602 = vunpack.c.l.s4 1966171168
      %v4603 = vunpack.c.0.s8 %v4602
      %v4604 = vlaneseq
      %v4605 = vshrl.u32 %v4604, 7
      %v4606 = vsub.s32 %v4603, %v4605
      %v4607 = vrot.slane %v4599, %v4606
      %v4609 = vunpack.c.l.s4 1966171168
      %v4610 = vunpack.c.0.s8 %v4609
      %v4611 = vlaneseq
      %v4612 = vshrl.u32 %v4611, 7
      %v4613 = vsub.s32 %v4610, %v4612
      %v4614 = vrot.slane %v4600, %v4613
      %v4615 = vcombine.low %v4607, %v4614
      %v4616 = vcombine.low %v665, %v689
      %v4617 = vcombine.low %v703, %v711
      %v4618 = vcombine.low %v713, %v696
      %v4619 = vcombine.low %v710, %v712
      %v4621 = vunpack.c.l.s4 1966171168
      %v4622 = vunpack.c.0.s8 %v4621
      %v4623 = vlaneseq
      %v4624 = vshrl.u32 %v4623, 7
      %v4625 = vsub.s32 %v4622, %v4624
      %v4626 = vrot.slane %v4616, %v4625
      %v4628 = vunpack.c.l.s4 1966171168
      %v4629 = vunpack.c.0.s8 %v4628
      %v4630 = vlaneseq
      %v4631 = vshrl.u32 %v4630, 7
      %v4632 = vsub.s32 %v4629, %v4631
      %v4633 = vrot.slane %v4617, %v4632
      %v4635 = vunpack.c.l.s4 1966171168
      %v4636 = vunpack.c.0.s8 %v4635
      %v4637 = vlaneseq
      %v4638 = vshrl.u32 %v4637, 7
      %v4639 = vsub.s32 %v4636, %v4638
      %v4640 = vrot.slane %v4618, %v4639
      %v4642 = vunpack.c.l.s4 1966171168
      %v4643 = vunpack.c.0.s8 %v4642
      %v4644 = vlaneseq
      %v4645 = vshrl.u32 %v4644, 7
      %v4646 = vsub.s32 %v4643, %v4645
      %v4647 = vrot.slane %v4619, %v4646
      %v4648 = vcombine.low %v4626, %v4633
      %v4649 = vcombine.low %v4640, %v4647
      %v4651 = vunpack.c.l.s4 1966171168
      %v4652 = vunpack.c.0.s8 %v4651
      %v4653 = vlaneseq
      %v4654 = vshrl.u32 %v4653, 7
      %v4655 = vsub.s32 %v4652, %v4654
      %v4656 = vrot.slane %v4648, %v4655
      %v4658 = vunpack.c.l.s4 1966171168
      %v4659 = vunpack.c.0.s8 %v4658
      %v4660 = vlaneseq
      %v4661 = vshrl.u32 %v4660, 7
      %v4662 = vsub.s32 %v4659, %v4661
      %v4663 = vrot.slane %v4649, %v4662
      %v4664 = vcombine.low %v4656, %v4663
      %v4665 = vcombine.low %v714, %v728
      %v4666 = vcombine.low %v2320, %v766
      %v4667 = vcombine.low %v774, %v776
      %v4668 = vcombine.low %v759, %v773
      %v4670 = vunpack.c.l.s4 1966171168
      %v4671 = vunpack.c.0.s8 %v4670
      %v4672 = vlaneseq
      %v4673 = vshrl.u32 %v4672, 7
      %v4674 = vsub.s32 %v4671, %v4673
      %v4675 = vrot.slane %v4665, %v4674
      %v4677 = vunpack.c.l.s4 1966171168
      %v4678 = vunpack.c.0.s8 %v4677
      %v4679 = vlaneseq
      %v4680 = vshrl.u32 %v4679, 7
      %v4681 = vsub.s32 %v4678, %v4680
      %v4682 = vrot.slane %v4666, %v4681
      %v4684 = vunpack.c.l.s4 1966171168
      %v4685 = vunpack.c.0.s8 %v4684
      %v4686 = vlaneseq
      %v4687 = vshrl.u32 %v4686, 7
      %v4688 = vsub.s32 %v4685, %v4687
      %v4689 = vrot.slane %v4667, %v4688
      %v4691 = vunpack.c.l.s4 1966171168
      %v4692 = vunpack.c.0.s8 %v4691
      %v4693 = vlaneseq
      %v4694 = vshrl.u32 %v4693, 7
      %v4695 = vsub.s32 %v4692, %v4694
      %v4696 = vrot.slane %v4668, %v4695
      %v4697 = vcombine.low %v4675, %v4682
      %v4698 = vcombine.low %v4689, %v4696
      %v4700 = vunpack.c.l.s4 1966171168
      %v4701 = vunpack.c.0.s8 %v4700
      %v4702 = vlaneseq
      %v4703 = vshrl.u32 %v4702, 7
      %v4704 = vsub.s32 %v4701, %v4703
      %v4705 = vrot.slane %v4697, %v4704
      %v4707 = vunpack.c.l.s4 1966171168
      %v4708 = vunpack.c.0.s8 %v4707
      %v4709 = vlaneseq
      %v4710 = vshrl.u32 %v4709, 7
      %v4711 = vsub.s32 %v4708, %v4710
      %v4712 = vrot.slane %v4698, %v4711
      %v4713 = vcombine.low %v4705, %v4712
      %v4714 = vcombine.low %v775, %v777
      %v4715 = vcombine.low %v801, %v815
      %v4716 = vcombine.low %v823, %v825
      %v4717 = vcombine.low %v808, %v822
      %v4719 = vunpack.c.l.s4 1966171168
      %v4720 = vunpack.c.0.s8 %v4719
      %v4721 = vlaneseq
      %v4722 = vshrl.u32 %v4721, 7
      %v4723 = vsub.s32 %v4720, %v4722
      %v4724 = vrot.slane %v4714, %v4723
      %v4726 = vunpack.c.l.s4 1966171168
      %v4727 = vunpack.c.0.s8 %v4726
      %v4728 = vlaneseq
      %v4729 = vshrl.u32 %v4728, 7
      %v4730 = vsub.s32 %v4727, %v4729
      %v4731 = vrot.slane %v4715, %v4730
      %v4733 = vunpack.c.l.s4 1966171168
      %v4734 = vunpack.c.0.s8 %v4733
      %v4735 = vlaneseq
      %v4736 = vshrl.u32 %v4735, 7
      %v4737 = vsub.s32 %v4734, %v4736
      %v4738 = vrot.slane %v4716, %v4737
      %v4740 = vunpack.c.l.s4 1966171168
      %v4741 = vunpack.c.0.s8 %v4740
      %v4742 = vlaneseq
      %v4743 = vshrl.u32 %v4742, 7
      %v4744 = vsub.s32 %v4741, %v4743
      %v4745 = vrot.slane %v4717, %v4744
      %v4746 = vcombine.low %v4724, %v4731
      %v4747 = vcombine.low %v4738, %v4745
      %v4749 = vunpack.c.l.s4 1966171168
      %v4750 = vunpack.c.0.s8 %v4749
      %v4751 = vlaneseq
      %v4752 = vshrl.u32 %v4751, 7
      %v4753 = vsub.s32 %v4750, %v4752
      %v4754 = vrot.slane %v4746, %v4753
      %v4756 = vunpack.c.l.s4 1966171168
      %v4757 = vunpack.c.0.s8 %v4756
      %v4758 = vlaneseq
      %v4759 = vshrl.u32 %v4758, 7
      %v4760 = vsub.s32 %v4757, %v4759
      %v4761 = vrot.slane %v4747, %v4760
      %v4762 = vcombine.low %v4754, %v4761
      %v4763 = vcombine.low %v824, %v826
      %v4764 = vcombine.low %v840, %v2328
      %v4765 = vcombine.low %v878, %v886
      %v4766 = vcombine.low %v888, %v871
      %v4768 = vunpack.c.l.s4 1966171168
      %v4769 = vunpack.c.0.s8 %v4768
      %v4770 = vlaneseq
      %v4771 = vshrl.u32 %v4770, 7
      %v4772 = vsub.s32 %v4769, %v4771
      %v4773 = vrot.slane %v4763, %v4772
      %v4775 = vunpack.c.l.s4 1966171168
      %v4776 = vunpack.c.0.s8 %v4775
      %v4777 = vlaneseq
      %v4778 = vshrl.u32 %v4777, 7
      %v4779 = vsub.s32 %v4776, %v4778
      %v4780 = vrot.slane %v4764, %v4779
      %v4782 = vunpack.c.l.s4 1966171168
      %v4783 = vunpack.c.0.s8 %v4782
      %v4784 = vlaneseq
      %v4785 = vshrl.u32 %v4784, 7
      %v4786 = vsub.s32 %v4783, %v4785
      %v4787 = vrot.slane %v4765, %v4786
      %v4789 = vunpack.c.l.s4 1966171168
      %v4790 = vunpack.c.0.s8 %v4789
      %v4791 = vlaneseq
      %v4792 = vshrl.u32 %v4791, 7
      %v4793 = vsub.s32 %v4790, %v4792
      %v4794 = vrot.slane %v4766, %v4793
      %v4795 = vcombine.low %v4773, %v4780
      %v4796 = vcombine.low %v4787, %v4794
      %v4798 = vunpack.c.l.s4 1966171168
      %v4799 = vunpack.c.0.s8 %v4798
      %v4800 = vlaneseq
      %v4801 = vshrl.u32 %v4800, 7
      %v4802 = vsub.s32 %v4799, %v4801
      %v4803 = vrot.slane %v4795, %v4802
      %v4805 = vunpack.c.l.s4 1966171168
      %v4806 = vunpack.c.0.s8 %v4805
      %v4807 = vlaneseq
      %v4808 = vshrl.u32 %v4807, 7
      %v4809 = vsub.s32 %v4806, %v4808
      %v4810 = vrot.slane %v4796, %v4809
      %v4811 = vcombine.low %v4803, %v4810
      %v4812 = vcombine.low %v885, %v887
      %v4813 = vcombine.low %v889, %v913
      %v4814 = vcombine.low %v927, %v935
      %v4815 = vcombine.low %v937, %v920
      %v4817 = vunpack.c.l.s4 1966171168
      %v4818 = vunpack.c.0.s8 %v4817
      %v4819 = vlaneseq
      %v4820 = vshrl.u32 %v4819, 7
      %v4821 = vsub.s32 %v4818, %v4820
      %v4822 = vrot.slane %v4812, %v4821
      %v4824 = vunpack.c.l.s4 1966171168
      %v4825 = vunpack.c.0.s8 %v4824
      %v4826 = vlaneseq
      %v4827 = vshrl.u32 %v4826, 7
      %v4828 = vsub.s32 %v4825, %v4827
      %v4829 = vrot.slane %v4813, %v4828
      %v4831 = vunpack.c.l.s4 1966171168
      %v4832 = vunpack.c.0.s8 %v4831
      %v4833 = vlaneseq
      %v4834 = vshrl.u32 %v4833, 7
      %v4835 = vsub.s32 %v4832, %v4834
      %v4836 = vrot.slane %v4814, %v4835
      %v4838 = vunpack.c.l.s4 1966171168
      %v4839 = vunpack.c.0.s8 %v4838
      %v4840 = vlaneseq
      %v4841 = vshrl.u32 %v4840, 7
      %v4842 = vsub.s32 %v4839, %v4841
      %v4843 = vrot.slane %v4815, %v4842
      %v4844 = vcombine.low %v4822, %v4829
      %v4845 = vcombine.low %v4836, %v4843
      %v4847 = vunpack.c.l.s4 1966171168
      %v4848 = vunpack.c.0.s8 %v4847
      %v4849 = vlaneseq
      %v4850 = vshrl.u32 %v4849, 7
      %v4851 = vsub.s32 %v4848, %v4850
      %v4852 = vrot.slane %v4844, %v4851
      %v4854 = vunpack.c.l.s4 1966171168
      %v4855 = vunpack.c.0.s8 %v4854
      %v4856 = vlaneseq
      %v4857 = vshrl.u32 %v4856, 7
      %v4858 = vsub.s32 %v4855, %v4857
      %v4859 = vrot.slane %v4845, %v4858
      %v4860 = vcombine.low %v4852, %v4859
      %v4861 = vcombine.low %v934, %v936
      %v4862 = vcombine.low %v938, %v952
      %v4863 = vcombine.low %v2336, %v990
      %v4864 = vcombine.low %v998, %v1000
      %v4866 = vunpack.c.l.s4 1966171168
      %v4867 = vunpack.c.0.s8 %v4866
      %v4868 = vlaneseq
      %v4869 = vshrl.u32 %v4868, 7
      %v4870 = vsub.s32 %v4867, %v4869
      %v4871 = vrot.slane %v4861, %v4870
      %v4873 = vunpack.c.l.s4 1966171168
      %v4874 = vunpack.c.0.s8 %v4873
      %v4875 = vlaneseq
      %v4876 = vshrl.u32 %v4875, 7
      %v4877 = vsub.s32 %v4874, %v4876
      %v4878 = vrot.slane %v4862, %v4877
      %v4880 = vunpack.c.l.s4 1966171168
      %v4881 = vunpack.c.0.s8 %v4880
      %v4882 = vlaneseq
      %v4883 = vshrl.u32 %v4882, 7
      %v4884 = vsub.s32 %v4881, %v4883
      %v4885 = vrot.slane %v4863, %v4884
      %v4887 = vunpack.c.l.s4 1966171168
      %v4888 = vunpack.c.0.s8 %v4887
      %v4889 = vlaneseq
      %v4890 = vshrl.u32 %v4889, 7
      %v4891 = vsub.s32 %v4888, %v4890
      %v4892 = vrot.slane %v4864, %v4891
      %v4893 = vcombine.low %v4871, %v4878
      %v4894 = vcombine.low %v4885, %v4892
      %v4896 = vunpack.c.l.s4 1966171168
      %v4897 = vunpack.c.0.s8 %v4896
      %v4898 = vlaneseq
      %v4899 = vshrl.u32 %v4898, 7
      %v4900 = vsub.s32 %v4897, %v4899
      %v4901 = vrot.slane %v4893, %v4900
      %v4903 = vunpack.c.l.s4 1966171168
      %v4904 = vunpack.c.0.s8 %v4903
      %v4905 = vlaneseq
      %v4906 = vshrl.u32 %v4905, 7
      %v4907 = vsub.s32 %v4904, %v4906
      %v4908 = vrot.slane %v4894, %v4907
      %v4909 = vcombine.low %v4901, %v4908
      %v4910 = vcombine.low %v983, %v997
      %v4911 = vcombine.low %v999, %v1001
      %v4912 = vcombine.low %v1025, %v1039
      %v4913 = vcombine.low %v1047, %v1049
      %v4915 = vunpack.c.l.s4 1966171168
      %v4916 = vunpack.c.0.s8 %v4915
      %v4917 = vlaneseq
      %v4918 = vshrl.u32 %v4917, 7
      %v4919 = vsub.s32 %v4916, %v4918
      %v4920 = vrot.slane %v4910, %v4919
      %v4922 = vunpack.c.l.s4 1966171168
      %v4923 = vunpack.c.0.s8 %v4922
      %v4924 = vlaneseq
      %v4925 = vshrl.u32 %v4924, 7
      %v4926 = vsub.s32 %v4923, %v4925
      %v4927 = vrot.slane %v4911, %v4926
      %v4929 = vunpack.c.l.s4 1966171168
      %v4930 = vunpack.c.0.s8 %v4929
      %v4931 = vlaneseq
      %v4932 = vshrl.u32 %v4931, 7
      %v4933 = vsub.s32 %v4930, %v4932
      %v4934 = vrot.slane %v4912, %v4933
      %v4936 = vunpack.c.l.s4 1966171168
      %v4937 = vunpack.c.0.s8 %v4936
      %v4938 = vlaneseq
      %v4939 = vshrl.u32 %v4938, 7
      %v4940 = vsub.s32 %v4937, %v4939
      %v4941 = vrot.slane %v4913, %v4940
      %v4942 = vcombine.low %v4920, %v4927
      %v4943 = vcombine.low %v4934, %v4941
      %v4945 = vunpack.c.l.s4 1966171168
      %v4946 = vunpack.c.0.s8 %v4945
      %v4947 = vlaneseq
      %v4948 = vshrl.u32 %v4947, 7
      %v4949 = vsub.s32 %v4946, %v4948
      %v4950 = vrot.slane %v4942, %v4949
      %v4952 = vunpack.c.l.s4 1966171168
      %v4953 = vunpack.c.0.s8 %v4952
      %v4954 = vlaneseq
      %v4955 = vshrl.u32 %v4954, 7
      %v4956 = vsub.s32 %v4953, %v4955
      %v4957 = vrot.slane %v4943, %v4956
      %v4958 = vcombine.low %v4950, %v4957
      %v4959 = vcombine.low %v1032, %v1046
      %v4960 = vcombine.low %v1048, %v1050
      %v4961 = vcombine.low %v1064, %v2344
      %v4962 = vcombine.low %v1102, %v1110
      %v4964 = vunpack.c.l.s4 1966171168
      %v4965 = vunpack.c.0.s8 %v4964
      %v4966 = vlaneseq
      %v4967 = vshrl.u32 %v4966, 7
      %v4968 = vsub.s32 %v4965, %v4967
      %v4969 = vrot.slane %v4959, %v4968
      %v4971 = vunpack.c.l.s4 1966171168
      %v4972 = vunpack.c.0.s8 %v4971
      %v4973 = vlaneseq
      %v4974 = vshrl.u32 %v4973, 7
      %v4975 = vsub.s32 %v4972, %v4974
      %v4976 = vrot.slane %v4960, %v4975
      %v4978 = vunpack.c.l.s4 1966171168
      %v4979 = vunpack.c.0.s8 %v4978
      %v4980 = vlaneseq
      %v4981 = vshrl.u32 %v4980, 7
      %v4982 = vsub.s32 %v4979, %v4981
      %v4983 = vrot.slane %v4961, %v4982
      %v4985 = vunpack.c.l.s4 1966171168
      %v4986 = vunpack.c.0.s8 %v4985
      %v4987 = vlaneseq
      %v4988 = vshrl.u32 %v4987, 7
      %v4989 = vsub.s32 %v4986, %v4988
      %v4990 = vrot.slane %v4962, %v4989
      %v4991 = vcombine.low %v4969, %v4976
      %v4992 = vcombine.low %v4983, %v4990
      %v4994 = vunpack.c.l.s4 1966171168
      %v4995 = vunpack.c.0.s8 %v4994
      %v4996 = vlaneseq
      %v4997 = vshrl.u32 %v4996, 7
      %v4998 = vsub.s32 %v4995, %v4997
      %v4999 = vrot.slane %v4991, %v4998
      %v5001 = vunpack.c.l.s4 1966171168
      %v5002 = vunpack.c.0.s8 %v5001
      %v5003 = vlaneseq
      %v5004 = vshrl.u32 %v5003, 7
      %v5005 = vsub.s32 %v5002, %v5004
      %v5006 = vrot.slane %v4992, %v5005
      %v5007 = vcombine.low %v4999, %v5006
      %v5008 = vcombine.low %v1112, %v1095
      %v5009 = vcombine.low %v1109, %v1111
      %v5010 = vcombine.low %v1113, %v1137
      %v5011 = vcombine.low %v1151, %v1159
      %v5013 = vunpack.c.l.s4 1966171168
      %v5014 = vunpack.c.0.s8 %v5013
      %v5015 = vlaneseq
      %v5016 = vshrl.u32 %v5015, 7
      %v5017 = vsub.s32 %v5014, %v5016
      %v5018 = vrot.slane %v5008, %v5017
      %v5020 = vunpack.c.l.s4 1966171168
      %v5021 = vunpack.c.0.s8 %v5020
      %v5022 = vlaneseq
      %v5023 = vshrl.u32 %v5022, 7
      %v5024 = vsub.s32 %v5021, %v5023
      %v5025 = vrot.slane %v5009, %v5024
      %v5027 = vunpack.c.l.s4 1966171168
      %v5028 = vunpack.c.0.s8 %v5027
      %v5029 = vlaneseq
      %v5030 = vshrl.u32 %v5029, 7
      %v5031 = vsub.s32 %v5028, %v5030
      %v5032 = vrot.slane %v5010, %v5031
      %v5034 = vunpack.c.l.s4 1966171168
      %v5035 = vunpack.c.0.s8 %v5034
      %v5036 = vlaneseq
      %v5037 = vshrl.u32 %v5036, 7
      %v5038 = vsub.s32 %v5035, %v5037
      %v5039 = vrot.slane %v5011, %v5038
      %v5040 = vcombine.low %v5018, %v5025
      %v5041 = vcombine.low %v5032, %v5039
      %v5043 = vunpack.c.l.s4 1966171168
      %v5044 = vunpack.c.0.s8 %v5043
      %v5045 = vlaneseq
      %v5046 = vshrl.u32 %v5045, 7
      %v5047 = vsub.s32 %v5044, %v5046
      %v5048 = vrot.slane %v5040, %v5047
      %v5050 = vunpack.c.l.s4 1966171168
      %v5051 = vunpack.c.0.s8 %v5050
      %v5052 = vlaneseq
      %v5053 = vshrl.u32 %v5052, 7
      %v5054 = vsub.s32 %v5051, %v5053
      %v5055 = vrot.slane %v5041, %v5054
      %v5056 = vcombine.low %v5048, %v5055
      %v5057 = vcombine.low %v1161, %v1144
      %v5058 = vcombine.low %v1158, %v1160
      %v5059 = vcombine.low %v1162, %v1176
      %v5060 = vcombine.low %v2352, %v1214
      %v5062 = vunpack.c.l.s4 1966171168
      %v5063 = vunpack.c.0.s8 %v5062
      %v5064 = vlaneseq
      %v5065 = vshrl.u32 %v5064, 7
      %v5066 = vsub.s32 %v5063, %v5065
      %v5067 = vrot.slane %v5057, %v5066
      %v5069 = vunpack.c.l.s4 1966171168
      %v5070 = vunpack.c.0.s8 %v5069
      %v5071 = vlaneseq
      %v5072 = vshrl.u32 %v5071, 7
      %v5073 = vsub.s32 %v5070, %v5072
      %v5074 = vrot.slane %v5058, %v5073
      %v5076 = vunpack.c.l.s4 1966171168
      %v5077 = vunpack.c.0.s8 %v5076
      %v5078 = vlaneseq
      %v5079 = vshrl.u32 %v5078, 7
      %v5080 = vsub.s32 %v5077, %v5079
      %v5081 = vrot.slane %v5059, %v5080
      %v5083 = vunpack.c.l.s4 1966171168
      %v5084 = vunpack.c.0.s8 %v5083
      %v5085 = vlaneseq
      %v5086 = vshrl.u32 %v5085, 7
      %v5087 = vsub.s32 %v5084, %v5086
      %v5088 = vrot.slane %v5060, %v5087
      %v5089 = vcombine.low %v5067, %v5074
      %v5090 = vcombine.low %v5081, %v5088
      %v5092 = vunpack.c.l.s4 1966171168
      %v5093 = vunpack.c.0.s8 %v5092
      %v5094 = vlaneseq
      %v5095 = vshrl.u32 %v5094, 7
      %v5096 = vsub.s32 %v5093, %v5095
      %v5097 = vrot.slane %v5089, %v5096
      %v5099 = vunpack.c.l.s4 1966171168
      %v5100 = vunpack.c.0.s8 %v5099
      %v5101 = vlaneseq
      %v5102 = vshrl.u32 %v5101, 7
      %v5103 = vsub.s32 %v5100, %v5102
      %v5104 = vrot.slane %v5090, %v5103
      %v5105 = vcombine.low %v5097, %v5104
      %v5106 = vcombine.low %v1222, %v1224
      %v5107 = vcombine.low %v1207, %v1221
      %v5108 = vcombine.low %v1223, %v1225
      %v5109 = vcombine.low %v1249, %v1263
      %v5111 = vunpack.c.l.s4 1966171168
      %v5112 = vunpack.c.0.s8 %v5111
      %v5113 = vlaneseq
      %v5114 = vshrl.u32 %v5113, 7
      %v5115 = vsub.s32 %v5112, %v5114
      %v5116 = vrot.slane %v5106, %v5115
      %v5118 = vunpack.c.l.s4 1966171168
      %v5119 = vunpack.c.0.s8 %v5118
      %v5120 = vlaneseq
      %v5121 = vshrl.u32 %v5120, 7
      %v5122 = vsub.s32 %v5119, %v5121
      %v5123 = vrot.slane %v5107, %v5122
      %v5125 = vunpack.c.l.s4 1966171168
      %v5126 = vunpack.c.0.s8 %v5125
      %v5127 = vlaneseq
      %v5128 = vshrl.u32 %v5127, 7
      %v5129 = vsub.s32 %v5126, %v5128
      %v5130 = vrot.slane %v5108, %v5129
      %v5132 = vunpack.c.l.s4 1966171168
      %v5133 = vunpack.c.0.s8 %v5132
      %v5134 = vlaneseq
      %v5135 = vshrl.u32 %v5134, 7
      %v5136 = vsub.s32 %v5133, %v5135
      %v5137 = vrot.slane %v5109, %v5136
      %v5138 = vcombine.low %v5116, %v5123
      %v5139 = vcombine.low %v5130, %v5137
      %v5141 = vunpack.c.l.s4 1966171168
      %v5142 = vunpack.c.0.s8 %v5141
      %v5143 = vlaneseq
      %v5144 = vshrl.u32 %v5143, 7
      %v5145 = vsub.s32 %v5142, %v5144
      %v5146 = vrot.slane %v5138, %v5145
      %v5148 = vunpack.c.l.s4 1966171168
      %v5149 = vunpack.c.0.s8 %v5148
      %v5150 = vlaneseq
      %v5151 = vshrl.u32 %v5150, 7
      %v5152 = vsub.s32 %v5149, %v5151
      %v5153 = vrot.slane %v5139, %v5152
      %v5154 = vcombine.low %v5146, %v5153
      %v5155 = vcombine.low %v1271, %v1273
      %v5156 = vcombine.low %v1256, %v1270
      %v5157 = vcombine.low %v1272, %v1274
      %v5158 = vcombine.low %v1288, %v2360
      %v5160 = vunpack.c.l.s4 1966171168
      %v5161 = vunpack.c.0.s8 %v5160
      %v5162 = vlaneseq
      %v5163 = vshrl.u32 %v5162, 7
      %v5164 = vsub.s32 %v5161, %v5163
      %v5165 = vrot.slane %v5155, %v5164
      %v5167 = vunpack.c.l.s4 1966171168
      %v5168 = vunpack.c.0.s8 %v5167
      %v5169 = vlaneseq
      %v5170 = vshrl.u32 %v5169, 7
      %v5171 = vsub.s32 %v5168, %v5170
      %v5172 = vrot.slane %v5156, %v5171
      %v5174 = vunpack.c.l.s4 1966171168
      %v5175 = vunpack.c.0.s8 %v5174
      %v5176 = vlaneseq
      %v5177 = vshrl.u32 %v5176, 7
      %v5178 = vsub.s32 %v5175, %v5177
      %v5179 = vrot.slane %v5157, %v5178
      %v5181 = vunpack.c.l.s4 1966171168
      %v5182 = vunpack.c.0.s8 %v5181
      %v5183 = vlaneseq
      %v5184 = vshrl.u32 %v5183, 7
      %v5185 = vsub.s32 %v5182, %v5184
      %v5186 = vrot.slane %v5158, %v5185
      %v5187 = vcombine.low %v5165, %v5172
      %v5188 = vcombine.low %v5179, %v5186
      %v5190 = vunpack.c.l.s4 1966171168
      %v5191 = vunpack.c.0.s8 %v5190
      %v5192 = vlaneseq
      %v5193 = vshrl.u32 %v5192, 7
      %v5194 = vsub.s32 %v5191, %v5193
      %v5195 = vrot.slane %v5187, %v5194
      %v5197 = vunpack.c.l.s4 1966171168
      %v5198 = vunpack.c.0.s8 %v5197
      %v5199 = vlaneseq
      %v5200 = vshrl.u32 %v5199, 7
      %v5201 = vsub.s32 %v5198, %v5200
      %v5202 = vrot.slane %v5188, %v5201
      %v5203 = vcombine.low %v5195, %v5202
      %v5204 = vcombine.low %v1326, %v1334
      %v5205 = vcombine.low %v1336, %v1319
      %v5206 = vcombine.low %v1333, %v1335
      %v5207 = vcombine.low %v1337, %v1361
      %v5209 = vunpack.c.l.s4 1966171168
      %v5210 = vunpack.c.0.s8 %v5209
      %v5211 = vlaneseq
      %v5212 = vshrl.u32 %v5211, 7
      %v5213 = vsub.s32 %v5210, %v5212
      %v5214 = vrot.slane %v5204, %v5213
      %v5216 = vunpack.c.l.s4 1966171168
      %v5217 = vunpack.c.0.s8 %v5216
      %v5218 = vlaneseq
      %v5219 = vshrl.u32 %v5218, 7
      %v5220 = vsub.s32 %v5217, %v5219
      %v5221 = vrot.slane %v5205, %v5220
      %v5223 = vunpack.c.l.s4 1966171168
      %v5224 = vunpack.c.0.s8 %v5223
      %v5225 = vlaneseq
      %v5226 = vshrl.u32 %v5225, 7
      %v5227 = vsub.s32 %v5224, %v5226
      %v5228 = vrot.slane %v5206, %v5227
      %v5230 = vunpack.c.l.s4 1966171168
      %v5231 = vunpack.c.0.s8 %v5230
      %v5232 = vlaneseq
      %v5233 = vshrl.u32 %v5232, 7
      %v5234 = vsub.s32 %v5231, %v5233
      %v5235 = vrot.slane %v5207, %v5234
      %v5236 = vcombine.low %v5214, %v5221
      %v5237 = vcombine.low %v5228, %v5235
      %v5239 = vunpack.c.l.s4 1966171168
      %v5240 = vunpack.c.0.s8 %v5239
      %v5241 = vlaneseq
      %v5242 = vshrl.u32 %v5241, 7
      %v5243 = vsub.s32 %v5240, %v5242
      %v5244 = vrot.slane %v5236, %v5243
      %v5246 = vunpack.c.l.s4 1966171168
      %v5247 = vunpack.c.0.s8 %v5246
      %v5248 = vlaneseq
      %v5249 = vshrl.u32 %v5248, 7
      %v5250 = vsub.s32 %v5247, %v5249
      %v5251 = vrot.slane %v5237, %v5250
      %v5252 = vcombine.low %v5244, %v5251
      %v5253 = vcombine.low %v1375, %v1383
      %v5254 = vcombine.low %v1385, %v1368
      %v5255 = vcombine.low %v1382, %v1384
      %v5256 = vcombine.low %v1386, %v1400
      %v5258 = vunpack.c.l.s4 1966171168
      %v5259 = vunpack.c.0.s8 %v5258
      %v5260 = vlaneseq
      %v5261 = vshrl.u32 %v5260, 7
      %v5262 = vsub.s32 %v5259, %v5261
      %v5263 = vrot.slane %v5253, %v5262
      %v5265 = vunpack.c.l.s4 1966171168
      %v5266 = vunpack.c.0.s8 %v5265
      %v5267 = vlaneseq
      %v5268 = vshrl.u32 %v5267, 7
      %v5269 = vsub.s32 %v5266, %v5268
      %v5270 = vrot.slane %v5254, %v5269
      %v5272 = vunpack.c.l.s4 1966171168
      %v5273 = vunpack.c.0.s8 %v5272
      %v5274 = vlaneseq
      %v5275 = vshrl.u32 %v5274, 7
      %v5276 = vsub.s32 %v5273, %v5275
      %v5277 = vrot.slane %v5255, %v5276
      %v5279 = vunpack.c.l.s4 1966171168
      %v5280 = vunpack.c.0.s8 %v5279
      %v5281 = vlaneseq
      %v5282 = vshrl.u32 %v5281, 7
      %v5283 = vsub.s32 %v5280, %v5282
      %v5284 = vrot.slane %v5256, %v5283
      %v5285 = vcombine.low %v5263, %v5270
      %v5286 = vcombine.low %v5277, %v5284
      %v5288 = vunpack.c.l.s4 1966171168
      %v5289 = vunpack.c.0.s8 %v5288
      %v5290 = vlaneseq
      %v5291 = vshrl.u32 %v5290, 7
      %v5292 = vsub.s32 %v5289, %v5291
      %v5293 = vrot.slane %v5285, %v5292
      %v5295 = vunpack.c.l.s4 1966171168
      %v5296 = vunpack.c.0.s8 %v5295
      %v5297 = vlaneseq
      %v5298 = vshrl.u32 %v5297, 7
      %v5299 = vsub.s32 %v5296, %v5298
      %v5300 = vrot.slane %v5286, %v5299
      %v5301 = vcombine.low %v5293, %v5300
      %v5302 = vcombine.low %v2368, %v1438
      %v5303 = vcombine.low %v1446, %v1448
      %v5304 = vcombine.low %v1431, %v1445
      %v5305 = vcombine.low %v1447, %v1449
      %v5307 = vunpack.c.l.s4 1966171168
      %v5308 = vunpack.c.0.s8 %v5307
      %v5309 = vlaneseq
      %v5310 = vshrl.u32 %v5309, 7
      %v5311 = vsub.s32 %v5308, %v5310
      %v5312 = vrot.slane %v5302, %v5311
      %v5314 = vunpack.c.l.s4 1966171168
      %v5315 = vunpack.c.0.s8 %v5314
      %v5316 = vlaneseq
      %v5317 = vshrl.u32 %v5316, 7
      %v5318 = vsub.s32 %v5315, %v5317
      %v5319 = vrot.slane %v5303, %v5318
      %v5321 = vunpack.c.l.s4 1966171168
      %v5322 = vunpack.c.0.s8 %v5321
      %v5323 = vlaneseq
      %v5324 = vshrl.u32 %v5323, 7
      %v5325 = vsub.s32 %v5322, %v5324
      %v5326 = vrot.slane %v5304, %v5325
      %v5328 = vunpack.c.l.s4 1966171168
      %v5329 = vunpack.c.0.s8 %v5328
      %v5330 = vlaneseq
      %v5331 = vshrl.u32 %v5330, 7
      %v5332 = vsub.s32 %v5329, %v5331
      %v5333 = vrot.slane %v5305, %v5332
      %v5334 = vcombine.low %v5312, %v5319
      %v5335 = vcombine.low %v5326, %v5333
      %v5337 = vunpack.c.l.s4 1966171168
      %v5338 = vunpack.c.0.s8 %v5337
      %v5339 = vlaneseq
      %v5340 = vshrl.u32 %v5339, 7
      %v5341 = vsub.s32 %v5338, %v5340
      %v5342 = vrot.slane %v5334, %v5341
      %v5344 = vunpack.c.l.s4 1966171168
      %v5345 = vunpack.c.0.s8 %v5344
      %v5346 = vlaneseq
      %v5347 = vshrl.u32 %v5346, 7
      %v5348 = vsub.s32 %v5345, %v5347
      %v5349 = vrot.slane %v5335, %v5348
      %v5350 = vcombine.low %v5342, %v5349
      %v5351 = vcombine.low %v1473, %v1487
      %v5352 = vcombine.low %v1495, %v1497
      %v5353 = vcombine.low %v1480, %v1494
      %v5354 = vcombine.low %v1496, %v1498
      %v5356 = vunpack.c.l.s4 1966171168
      %v5357 = vunpack.c.0.s8 %v5356
      %v5358 = vlaneseq
      %v5359 = vshrl.u32 %v5358, 7
      %v5360 = vsub.s32 %v5357, %v5359
      %v5361 = vrot.slane %v5351, %v5360
      %v5363 = vunpack.c.l.s4 1966171168
      %v5364 = vunpack.c.0.s8 %v5363
      %v5365 = vlaneseq
      %v5366 = vshrl.u32 %v5365, 7
      %v5367 = vsub.s32 %v5364, %v5366
      %v5368 = vrot.slane %v5352, %v5367
      %v5370 = vunpack.c.l.s4 1966171168
      %v5371 = vunpack.c.0.s8 %v5370
      %v5372 = vlaneseq
      %v5373 = vshrl.u32 %v5372, 7
      %v5374 = vsub.s32 %v5371, %v5373
      %v5375 = vrot.slane %v5353, %v5374
      %v5377 = vunpack.c.l.s4 1966171168
      %v5378 = vunpack.c.0.s8 %v5377
      %v5379 = vlaneseq
      %v5380 = vshrl.u32 %v5379, 7
      %v5381 = vsub.s32 %v5378, %v5380
      %v5382 = vrot.slane %v5354, %v5381
      %v5383 = vcombine.low %v5361, %v5368
      %v5384 = vcombine.low %v5375, %v5382
      %v5386 = vunpack.c.l.s4 1966171168
      %v5387 = vunpack.c.0.s8 %v5386
      %v5388 = vlaneseq
      %v5389 = vshrl.u32 %v5388, 7
      %v5390 = vsub.s32 %v5387, %v5389
      %v5391 = vrot.slane %v5383, %v5390
      %v5393 = vunpack.c.l.s4 1966171168
      %v5394 = vunpack.c.0.s8 %v5393
      %v5395 = vlaneseq
      %v5396 = vshrl.u32 %v5395, 7
      %v5397 = vsub.s32 %v5394, %v5396
      %v5398 = vrot.slane %v5384, %v5397
      %v5399 = vcombine.low %v5391, %v5398
      %v5400 = vcombine.low %v1512, %v2376
      %v5401 = vcombine.low %v1550, %v1558
      %v5402 = vcombine.low %v1560, %v1543
      %v5403 = vcombine.low %v1557, %v1559
      %v5405 = vunpack.c.l.s4 1966171168
      %v5406 = vunpack.c.0.s8 %v5405
      %v5407 = vlaneseq
      %v5408 = vshrl.u32 %v5407, 7
      %v5409 = vsub.s32 %v5406, %v5408
      %v5410 = vrot.slane %v5400, %v5409
      %v5412 = vunpack.c.l.s4 1966171168
      %v5413 = vunpack.c.0.s8 %v5412
      %v5414 = vlaneseq
      %v5415 = vshrl.u32 %v5414, 7
      %v5416 = vsub.s32 %v5413, %v5415
      %v5417 = vrot.slane %v5401, %v5416
      %v5419 = vunpack.c.l.s4 1966171168
      %v5420 = vunpack.c.0.s8 %v5419
      %v5421 = vlaneseq
      %v5422 = vshrl.u32 %v5421, 7
      %v5423 = vsub.s32 %v5420, %v5422
      %v5424 = vrot.slane %v5402, %v5423
      %v5426 = vunpack.c.l.s4 1966171168
      %v5427 = vunpack.c.0.s8 %v5426
      %v5428 = vlaneseq
      %v5429 = vshrl.u32 %v5428, 7
      %v5430 = vsub.s32 %v5427, %v5429
      %v5431 = vrot.slane %v5403, %v5430
      %v5432 = vcombine.low %v5410, %v5417
      %v5433 = vcombine.low %v5424, %v5431
      %v5435 = vunpack.c.l.s4 1966171168
      %v5436 = vunpack.c.0.s8 %v5435
      %v5437 = vlaneseq
      %v5438 = vshrl.u32 %v5437, 7
      %v5439 = vsub.s32 %v5436, %v5438
      %v5440 = vrot.slane %v5432, %v5439
      %v5442 = vunpack.c.l.s4 1966171168
      %v5443 = vunpack.c.0.s8 %v5442
      %v5444 = vlaneseq
      %v5445 = vshrl.u32 %v5444, 7
      %v5446 = vsub.s32 %v5443, %v5445
      %v5447 = vrot.slane %v5433, %v5446
      %v5448 = vcombine.low %v5440, %v5447
      %v5449 = vcombine.low %v1561, %v1585
      %v5450 = vcombine.low %v1599, %v1607
      %v5451 = vcombine.low %v1609, %v1592
      %v5452 = vcombine.low %v1606, %v1608
      %v5454 = vunpack.c.l.s4 1966171168
      %v5455 = vunpack.c.0.s8 %v5454
      %v5456 = vlaneseq
      %v5457 = vshrl.u32 %v5456, 7
      %v5458 = vsub.s32 %v5455, %v5457
      %v5459 = vrot.slane %v5449, %v5458
      %v5461 = vunpack.c.l.s4 1966171168
      %v5462 = vunpack.c.0.s8 %v5461
      %v5463 = vlaneseq
      %v5464 = vshrl.u32 %v5463, 7
      %v5465 = vsub.s32 %v5462, %v5464
      %v5466 = vrot.slane %v5450, %v5465
      %v5468 = vunpack.c.l.s4 1966171168
      %v5469 = vunpack.c.0.s8 %v5468
      %v5470 = vlaneseq
      %v5471 = vshrl.u32 %v5470, 7
      %v5472 = vsub.s32 %v5469, %v5471
      %v5473 = vrot.slane %v5451, %v5472
      %v5475 = vunpack.c.l.s4 1966171168
      %v5476 = vunpack.c.0.s8 %v5475
      %v5477 = vlaneseq
      %v5478 = vshrl.u32 %v5477, 7
      %v5479 = vsub.s32 %v5476, %v5478
      %v5480 = vrot.slane %v5452, %v5479
      %v5481 = vcombine.low %v5459, %v5466
      %v5482 = vcombine.low %v5473, %v5480
      %v5484 = vunpack.c.l.s4 1966171168
      %v5485 = vunpack.c.0.s8 %v5484
      %v5486 = vlaneseq
      %v5487 = vshrl.u32 %v5486, 7
      %v5488 = vsub.s32 %v5485, %v5487
      %v5489 = vrot.slane %v5481, %v5488
      %v5491 = vunpack.c.l.s4 1966171168
      %v5492 = vunpack.c.0.s8 %v5491
      %v5493 = vlaneseq
      %v5494 = vshrl.u32 %v5493, 7
      %v5495 = vsub.s32 %v5492, %v5494
      %v5496 = vrot.slane %v5482, %v5495
      %v5497 = vcombine.low %v5489, %v5496
      %v5498 = vcombine.low %v1610, %v1624
      %v5499 = vcombine.low %v2384, %v1662
      %v5500 = vcombine.low %v1670, %v1672
      %v5501 = vcombine.low %v1655, %v1669
      %v5503 = vunpack.c.l.s4 1966171168
      %v5504 = vunpack.c.0.s8 %v5503
      %v5505 = vlaneseq
      %v5506 = vshrl.u32 %v5505, 7
      %v5507 = vsub.s32 %v5504, %v5506
      %v5508 = vrot.slane %v5498, %v5507
      %v5510 = vunpack.c.l.s4 1966171168
      %v5511 = vunpack.c.0.s8 %v5510
      %v5512 = vlaneseq
      %v5513 = vshrl.u32 %v5512, 7
      %v5514 = vsub.s32 %v5511, %v5513
      %v5515 = vrot.slane %v5499, %v5514
      %v5517 = vunpack.c.l.s4 1966171168
      %v5518 = vunpack.c.0.s8 %v5517
      %v5519 = vlaneseq
      %v5520 = vshrl.u32 %v5519, 7
      %v5521 = vsub.s32 %v5518, %v5520
      %v5522 = vrot.slane %v5500, %v5521
      %v5524 = vunpack.c.l.s4 1966171168
      %v5525 = vunpack.c.0.s8 %v5524
      %v5526 = vlaneseq
      %v5527 = vshrl.u32 %v5526, 7
      %v5528 = vsub.s32 %v5525, %v5527
      %v5529 = vrot.slane %v5501, %v5528
      %v5530 = vcombine.low %v5508, %v5515
      %v5531 = vcombine.low %v5522, %v5529
      %v5533 = vunpack.c.l.s4 1966171168
      %v5534 = vunpack.c.0.s8 %v5533
      %v5535 = vlaneseq
      %v5536 = vshrl.u32 %v5535, 7
      %v5537 = vsub.s32 %v5534, %v5536
      %v5538 = vrot.slane %v5530, %v5537
      %v5540 = vunpack.c.l.s4 1966171168
      %v5541 = vunpack.c.0.s8 %v5540
      %v5542 = vlaneseq
      %v5543 = vshrl.u32 %v5542, 7
      %v5544 = vsub.s32 %v5541, %v5543
      %v5545 = vrot.slane %v5531, %v5544
      %v5546 = vcombine.low %v5538, %v5545
      %v5547 = vcombine.low %v1671, %v1673
      %v5548 = vcombine.low %v1697, %v1711
      %v5549 = vcombine.low %v1719, %v1721
      %v5550 = vcombine.low %v1704, %v1718
      %v5552 = vunpack.c.l.s4 1966171168
      %v5553 = vunpack.c.0.s8 %v5552
      %v5554 = vlaneseq
      %v5555 = vshrl.u32 %v5554, 7
      %v5556 = vsub.s32 %v5553, %v5555
      %v5557 = vrot.slane %v5547, %v5556
      %v5559 = vunpack.c.l.s4 1966171168
      %v5560 = vunpack.c.0.s8 %v5559
      %v5561 = vlaneseq
      %v5562 = vshrl.u32 %v5561, 7
      %v5563 = vsub.s32 %v5560, %v5562
      %v5564 = vrot.slane %v5548, %v5563
      %v5566 = vunpack.c.l.s4 1966171168
      %v5567 = vunpack.c.0.s8 %v5566
      %v5568 = vlaneseq
      %v5569 = vshrl.u32 %v5568, 7
      %v5570 = vsub.s32 %v5567, %v5569
      %v5571 = vrot.slane %v5549, %v5570
      %v5573 = vunpack.c.l.s4 1966171168
      %v5574 = vunpack.c.0.s8 %v5573
      %v5575 = vlaneseq
      %v5576 = vshrl.u32 %v5575, 7
      %v5577 = vsub.s32 %v5574, %v5576
      %v5578 = vrot.slane %v5550, %v5577
      %v5579 = vcombine.low %v5557, %v5564
      %v5580 = vcombine.low %v5571, %v5578
      %v5582 = vunpack.c.l.s4 1966171168
      %v5583 = vunpack.c.0.s8 %v5582
      %v5584 = vlaneseq
      %v5585 = vshrl.u32 %v5584, 7
      %v5586 = vsub.s32 %v5583, %v5585
      %v5587 = vrot.slane %v5579, %v5586
      %v5589 = vunpack.c.l.s4 1966171168
      %v5590 = vunpack.c.0.s8 %v5589
      %v5591 = vlaneseq
      %v5592 = vshrl.u32 %v5591, 7
      %v5593 = vsub.s32 %v5590, %v5592
      %v5594 = vrot.slane %v5580, %v5593
      %v5595 = vcombine.low %v5587, %v5594
      %v5596 = vcombine.low %v1720, %v1722
      %v5597 = vcombine.low %v1736, %v2392
      %v5598 = vcombine.low %v1774, %v1782
      %v5599 = vcombine.low %v1784, %v1767
      %v5601 = vunpack.c.l.s4 1966171168
      %v5602 = vunpack.c.0.s8 %v5601
      %v5603 = vlaneseq
      %v5604 = vshrl.u32 %v5603, 7
      %v5605 = vsub.s32 %v5602, %v5604
      %v5606 = vrot.slane %v5596, %v5605
      %v5608 = vunpack.c.l.s4 1966171168
      %v5609 = vunpack.c.0.s8 %v5608
      %v5610 = vlaneseq
      %v5611 = vshrl.u32 %v5610, 7
      %v5612 = vsub.s32 %v5609, %v5611
      %v5613 = vrot.slane %v5597, %v5612
      %v5615 = vunpack.c.l.s4 1966171168
      %v5616 = vunpack.c.0.s8 %v5615
      %v5617 = vlaneseq
      %v5618 = vshrl.u32 %v5617, 7
      %v5619 = vsub.s32 %v5616, %v5618
      %v5620 = vrot.slane %v5598, %v5619
      %v5622 = vunpack.c.l.s4 1966171168
      %v5623 = vunpack.c.0.s8 %v5622
      %v5624 = vlaneseq
      %v5625 = vshrl.u32 %v5624, 7
      %v5626 = vsub.s32 %v5623, %v5625
      %v5627 = vrot.slane %v5599, %v5626
      %v5628 = vcombine.low %v5606, %v5613
      %v5629 = vcombine.low %v5620, %v5627
      %v5631 = vunpack.c.l.s4 1966171168
      %v5632 = vunpack.c.0.s8 %v5631
      %v5633 = vlaneseq
      %v5634 = vshrl.u32 %v5633, 7
      %v5635 = vsub.s32 %v5632, %v5634
      %v5636 = vrot.slane %v5628, %v5635
      %v5638 = vunpack.c.l.s4 1966171168
      %v5639 = vunpack.c.0.s8 %v5638
      %v5640 = vlaneseq
      %v5641 = vshrl.u32 %v5640, 7
      %v5642 = vsub.s32 %v5639, %v5641
      %v5643 = vrot.slane %v5629, %v5642
      %v5644 = vcombine.low %v5636, %v5643
      %v5645 = vcombine.low %v1781, %v1783
      %v5646 = vcombine.low %v1785, %v1809
      %v5647 = vcombine.low %v1823, %v1831
      %v5648 = vcombine.low %v1833, %v1816
      %v5650 = vunpack.c.l.s4 1966171168
      %v5651 = vunpack.c.0.s8 %v5650
      %v5652 = vlaneseq
      %v5653 = vshrl.u32 %v5652, 7
      %v5654 = vsub.s32 %v5651, %v5653
      %v5655 = vrot.slane %v5645, %v5654
      %v5657 = vunpack.c.l.s4 1966171168
      %v5658 = vunpack.c.0.s8 %v5657
      %v5659 = vlaneseq
      %v5660 = vshrl.u32 %v5659, 7
      %v5661 = vsub.s32 %v5658, %v5660
      %v5662 = vrot.slane %v5646, %v5661
      %v5664 = vunpack.c.l.s4 1966171168
      %v5665 = vunpack.c.0.s8 %v5664
      %v5666 = vlaneseq
      %v5667 = vshrl.u32 %v5666, 7
      %v5668 = vsub.s32 %v5665, %v5667
      %v5669 = vrot.slane %v5647, %v5668
      %v5671 = vunpack.c.l.s4 1966171168
      %v5672 = vunpack.c.0.s8 %v5671
      %v5673 = vlaneseq
      %v5674 = vshrl.u32 %v5673, 7
      %v5675 = vsub.s32 %v5672, %v5674
      %v5676 = vrot.slane %v5648, %v5675
      %v5677 = vcombine.low %v5655, %v5662
      %v5678 = vcombine.low %v5669, %v5676
      %v5680 = vunpack.c.l.s4 1966171168
      %v5681 = vunpack.c.0.s8 %v5680
      %v5682 = vlaneseq
      %v5683 = vshrl.u32 %v5682, 7
      %v5684 = vsub.s32 %v5681, %v5683
      %v5685 = vrot.slane %v5677, %v5684
      %v5687 = vunpack.c.l.s4 1966171168
      %v5688 = vunpack.c.0.s8 %v5687
      %v5689 = vlaneseq
      %v5690 = vshrl.u32 %v5689, 7
      %v5691 = vsub.s32 %v5688, %v5690
      %v5692 = vrot.slane %v5678, %v5691
      %v5693 = vcombine.low %v5685, %v5692
      %v5694 = vcombine.low %v1830, %v1832
      %v5695 = vcombine.low %v1834, %v1848
      %v5696 = vcombine.low %v2400, %v1886
      %v5697 = vcombine.low %v1894, %v1896
      %v5699 = vunpack.c.l.s4 1966171168
      %v5700 = vunpack.c.0.s8 %v5699
      %v5701 = vlaneseq
      %v5702 = vshrl.u32 %v5701, 7
      %v5703 = vsub.s32 %v5700, %v5702
      %v5704 = vrot.slane %v5694, %v5703
      %v5706 = vunpack.c.l.s4 1966171168
      %v5707 = vunpack.c.0.s8 %v5706
      %v5708 = vlaneseq
      %v5709 = vshrl.u32 %v5708, 7
      %v5710 = vsub.s32 %v5707, %v5709
      %v5711 = vrot.slane %v5695, %v5710
      %v5713 = vunpack.c.l.s4 1966171168
      %v5714 = vunpack.c.0.s8 %v5713
      %v5715 = vlaneseq
      %v5716 = vshrl.u32 %v5715, 7
      %v5717 = vsub.s32 %v5714, %v5716
      %v5718 = vrot.slane %v5696, %v5717
      %v5720 = vunpack.c.l.s4 1966171168
      %v5721 = vunpack.c.0.s8 %v5720
      %v5722 = vlaneseq
      %v5723 = vshrl.u32 %v5722, 7
      %v5724 = vsub.s32 %v5721, %v5723
      %v5725 = vrot.slane %v5697, %v5724
      %v5726 = vcombine.low %v5704, %v5711
      %v5727 = vcombine.low %v5718, %v5725
      %v5729 = vunpack.c.l.s4 1966171168
      %v5730 = vunpack.c.0.s8 %v5729
      %v5731 = vlaneseq
      %v5732 = vshrl.u32 %v5731, 7
      %v5733 = vsub.s32 %v5730, %v5732
      %v5734 = vrot.slane %v5726, %v5733
      %v5736 = vunpack.c.l.s4 1966171168
      %v5737 = vunpack.c.0.s8 %v5736
      %v5738 = vlaneseq
      %v5739 = vshrl.u32 %v5738, 7
      %v5740 = vsub.s32 %v5737, %v5739
      %v5741 = vrot.slane %v5727, %v5740
      %v5742 = vcombine.low %v5734, %v5741
      %v5743 = vcombine.low %v1879, %v1893
      %v5744 = vcombine.low %v1895, %v1897
      %v5745 = vcombine.low %v1921, %v1935
      %v5746 = vcombine.low %v1943, %v1945
      %v5748 = vunpack.c.l.s4 1966171168
      %v5749 = vunpack.c.0.s8 %v5748
      %v5750 = vlaneseq
      %v5751 = vshrl.u32 %v5750, 7
      %v5752 = vsub.s32 %v5749, %v5751
      %v5753 = vrot.slane %v5743, %v5752
      %v5755 = vunpack.c.l.s4 1966171168
      %v5756 = vunpack.c.0.s8 %v5755
      %v5757 = vlaneseq
      %v5758 = vshrl.u32 %v5757, 7
      %v5759 = vsub.s32 %v5756, %v5758
      %v5760 = vrot.slane %v5744, %v5759
      %v5762 = vunpack.c.l.s4 1966171168
      %v5763 = vunpack.c.0.s8 %v5762
      %v5764 = vlaneseq
      %v5765 = vshrl.u32 %v5764, 7
      %v5766 = vsub.s32 %v5763, %v5765
      %v5767 = vrot.slane %v5745, %v5766
      %v5769 = vunpack.c.l.s4 1966171168
      %v5770 = vunpack.c.0.s8 %v5769
      %v5771 = vlaneseq
      %v5772 = vshrl.u32 %v5771, 7
      %v5773 = vsub.s32 %v5770, %v5772
      %v5774 = vrot.slane %v5746, %v5773
      %v5775 = vcombine.low %v5753, %v5760
      %v5776 = vcombine.low %v5767, %v5774
      %v5778 = vunpack.c.l.s4 1966171168
      %v5779 = vunpack.c.0.s8 %v5778
      %v5780 = vlaneseq
      %v5781 = vshrl.u32 %v5780, 7
      %v5782 = vsub.s32 %v5779, %v5781
      %v5783 = vrot.slane %v5775, %v5782
      %v5785 = vunpack.c.l.s4 1966171168
      %v5786 = vunpack.c.0.s8 %v5785
      %v5787 = vlaneseq
      %v5788 = vshrl.u32 %v5787, 7
      %v5789 = vsub.s32 %v5786, %v5788
      %v5790 = vrot.slane %v5776, %v5789
      %v5791 = vcombine.low %v5783, %v5790
      %v5792 = vcombine.low %v1928, %v1942
      %v5793 = vcombine.low %v1944, %v1946
      %v5794 = vcombine.low %v1960, %v2408
      %v5795 = vcombine.low %v1998, %v2006
      %v5797 = vunpack.c.l.s4 1966171168
      %v5798 = vunpack.c.0.s8 %v5797
      %v5799 = vlaneseq
      %v5800 = vshrl.u32 %v5799, 7
      %v5801 = vsub.s32 %v5798, %v5800
      %v5802 = vrot.slane %v5792, %v5801
      %v5804 = vunpack.c.l.s4 1966171168
      %v5805 = vunpack.c.0.s8 %v5804
      %v5806 = vlaneseq
      %v5807 = vshrl.u32 %v5806, 7
      %v5808 = vsub.s32 %v5805, %v5807
      %v5809 = vrot.slane %v5793, %v5808
      %v5811 = vunpack.c.l.s4 1966171168
      %v5812 = vunpack.c.0.s8 %v5811
      %v5813 = vlaneseq
      %v5814 = vshrl.u32 %v5813, 7
      %v5815 = vsub.s32 %v5812, %v5814
      %v5816 = vrot.slane %v5794, %v5815
      %v5818 = vunpack.c.l.s4 1966171168
      %v5819 = vunpack.c.0.s8 %v5818
      %v5820 = vlaneseq
      %v5821 = vshrl.u32 %v5820, 7
      %v5822 = vsub.s32 %v5819, %v5821
      %v5823 = vrot.slane %v5795, %v5822
      %v5824 = vcombine.low %v5802, %v5809
      %v5825 = vcombine.low %v5816, %v5823
      %v5827 = vunpack.c.l.s4 1966171168
      %v5828 = vunpack.c.0.s8 %v5827
      %v5829 = vlaneseq
      %v5830 = vshrl.u32 %v5829, 7
      %v5831 = vsub.s32 %v5828, %v5830
      %v5832 = vrot.slane %v5824, %v5831
      %v5834 = vunpack.c.l.s4 1966171168
      %v5835 = vunpack.c.0.s8 %v5834
      %v5836 = vlaneseq
      %v5837 = vshrl.u32 %v5836, 7
      %v5838 = vsub.s32 %v5835, %v5837
      %v5839 = vrot.slane %v5825, %v5838
      %v5840 = vcombine.low %v5832, %v5839
      %v5841 = vcombine.low %v2008, %v1991
      %v5842 = vcombine.low %v2005, %v2007
      %v5843 = vcombine.low %v2009, %v2033
      %v5844 = vcombine.low %v2047, %v2055
      %v5846 = vunpack.c.l.s4 1966171168
      %v5847 = vunpack.c.0.s8 %v5846
      %v5848 = vlaneseq
      %v5849 = vshrl.u32 %v5848, 7
      %v5850 = vsub.s32 %v5847, %v5849
      %v5851 = vrot.slane %v5841, %v5850
      %v5853 = vunpack.c.l.s4 1966171168
      %v5854 = vunpack.c.0.s8 %v5853
      %v5855 = vlaneseq
      %v5856 = vshrl.u32 %v5855, 7
      %v5857 = vsub.s32 %v5854, %v5856
      %v5858 = vrot.slane %v5842, %v5857
      %v5860 = vunpack.c.l.s4 1966171168
      %v5861 = vunpack.c.0.s8 %v5860
      %v5862 = vlaneseq
      %v5863 = vshrl.u32 %v5862, 7
      %v5864 = vsub.s32 %v5861, %v5863
      %v5865 = vrot.slane %v5843, %v5864
      %v5867 = vunpack.c.l.s4 1966171168
      %v5868 = vunpack.c.0.s8 %v5867
      %v5869 = vlaneseq
      %v5870 = vshrl.u32 %v5869, 7
      %v5871 = vsub.s32 %v5868, %v5870
      %v5872 = vrot.slane %v5844, %v5871
      %v5873 = vcombine.low %v5851, %v5858
      %v5874 = vcombine.low %v5865, %v5872
      %v5876 = vunpack.c.l.s4 1966171168
      %v5877 = vunpack.c.0.s8 %v5876
      %v5878 = vlaneseq
      %v5879 = vshrl.u32 %v5878, 7
      %v5880 = vsub.s32 %v5877, %v5879
      %v5881 = vrot.slane %v5873, %v5880
      %v5883 = vunpack.c.l.s4 1966171168
      %v5884 = vunpack.c.0.s8 %v5883
      %v5885 = vlaneseq
      %v5886 = vshrl.u32 %v5885, 7
      %v5887 = vsub.s32 %v5884, %v5886
      %v5888 = vrot.slane %v5874, %v5887
      %v5889 = vcombine.low %v5881, %v5888
      %v5890 = vcombine.low %v2057, %v2040
      %v5891 = vcombine.low %v2054, %v2056
      %v5892 = vcombine.low %v2058, %v2072
      %v5893 = vcombine.low %v2416, %v2110
      %v5895 = vunpack.c.l.s4 1966171168
      %v5896 = vunpack.c.0.s8 %v5895
      %v5897 = vlaneseq
      %v5898 = vshrl.u32 %v5897, 7
      %v5899 = vsub.s32 %v5896, %v5898
      %v5900 = vrot.slane %v5890, %v5899
      %v5902 = vunpack.c.l.s4 1966171168
      %v5903 = vunpack.c.0.s8 %v5902
      %v5904 = vlaneseq
      %v5905 = vshrl.u32 %v5904, 7
      %v5906 = vsub.s32 %v5903, %v5905
      %v5907 = vrot.slane %v5891, %v5906
      %v5909 = vunpack.c.l.s4 1966171168
      %v5910 = vunpack.c.0.s8 %v5909
      %v5911 = vlaneseq
      %v5912 = vshrl.u32 %v5911, 7
      %v5913 = vsub.s32 %v5910, %v5912
      %v5914 = vrot.slane %v5892, %v5913
      %v5916 = vunpack.c.l.s4 1966171168
      %v5917 = vunpack.c.0.s8 %v5916
      %v5918 = vlaneseq
      %v5919 = vshrl.u32 %v5918, 7
      %v5920 = vsub.s32 %v5917, %v5919
      %v5921 = vrot.slane %v5893, %v5920
      %v5922 = vcombine.low %v5900, %v5907
      %v5923 = vcombine.low %v5914, %v5921
      %v5925 = vunpack.c.l.s4 1966171168
      %v5926 = vunpack.c.0.s8 %v5925
      %v5927 = vlaneseq
      %v5928 = vshrl.u32 %v5927, 7
      %v5929 = vsub.s32 %v5926, %v5928
      %v5930 = vrot.slane %v5922, %v5929
      %v5932 = vunpack.c.l.s4 1966171168
      %v5933 = vunpack.c.0.s8 %v5932
      %v5934 = vlaneseq
      %v5935 = vshrl.u32 %v5934, 7
      %v5936 = vsub.s32 %v5933, %v5935
      %v5937 = vrot.slane %v5923, %v5936
      %v5938 = vcombine.low %v5930, %v5937
      %v5939 = vcombine.low %v2118, %v2120
      %v5940 = vcombine.low %v2103, %v2117
      %v5941 = vcombine.low %v2119, %v2121
      %v5942 = vcombine.low %v2145, %v2159
      %v5944 = vunpack.c.l.s4 1966171168
      %v5945 = vunpack.c.0.s8 %v5944
      %v5946 = vlaneseq
      %v5947 = vshrl.u32 %v5946, 7
      %v5948 = vsub.s32 %v5945, %v5947
      %v5949 = vrot.slane %v5939, %v5948
      %v5951 = vunpack.c.l.s4 1966171168
      %v5952 = vunpack.c.0.s8 %v5951
      %v5953 = vlaneseq
      %v5954 = vshrl.u32 %v5953, 7
      %v5955 = vsub.s32 %v5952, %v5954
      %v5956 = vrot.slane %v5940, %v5955
      %v5958 = vunpack.c.l.s4 1966171168
      %v5959 = vunpack.c.0.s8 %v5958
      %v5960 = vlaneseq
      %v5961 = vshrl.u32 %v5960, 7
      %v5962 = vsub.s32 %v5959, %v5961
      %v5963 = vrot.slane %v5941, %v5962
      %v5965 = vunpack.c.l.s4 1966171168
      %v5966 = vunpack.c.0.s8 %v5965
      %v5967 = vlaneseq
      %v5968 = vshrl.u32 %v5967, 7
      %v5969 = vsub.s32 %v5966, %v5968
      %v5970 = vrot.slane %v5942, %v5969
      %v5971 = vcombine.low %v5949, %v5956
      %v5972 = vcombine.low %v5963, %v5970
      %v5974 = vunpack.c.l.s4 1966171168
      %v5975 = vunpack.c.0.s8 %v5974
      %v5976 = vlaneseq
      %v5977 = vshrl.u32 %v5976, 7
      %v5978 = vsub.s32 %v5975, %v5977
      %v5979 = vrot.slane %v5971, %v5978
      %v5981 = vunpack.c.l.s4 1966171168
      %v5982 = vunpack.c.0.s8 %v5981
      %v5983 = vlaneseq
      %v5984 = vshrl.u32 %v5983, 7
      %v5985 = vsub.s32 %v5982, %v5984
      %v5986 = vrot.slane %v5972, %v5985
      %v5987 = vcombine.low %v5979, %v5986
      %v5988 = vcombine.low %v2167, %v2169
      %v5989 = vcombine.low %v2152, %v2166
      %v5990 = vcombine.low %v2168, %v2170
      %v5991 = vcombine.low %v2184, %v2424
      %v5993 = vunpack.c.l.s4 1966171168
      %v5994 = vunpack.c.0.s8 %v5993
      %v5995 = vlaneseq
      %v5996 = vshrl.u32 %v5995, 7
      %v5997 = vsub.s32 %v5994, %v5996
      %v5998 = vrot.slane %v5988, %v5997
      %v6000 = vunpack.c.l.s4 1966171168
      %v6001 = vunpack.c.0.s8 %v6000
      %v6002 = vlaneseq
      %v6003 = vshrl.u32 %v6002, 7
      %v6004 = vsub.s32 %v6001, %v6003
      %v6005 = vrot.slane %v5989, %v6004
      %v6007 = vunpack.c.l.s4 1966171168
      %v6008 = vunpack.c.0.s8 %v6007
      %v6009 = vlaneseq
      %v6010 = vshrl.u32 %v6009, 7
      %v6011 = vsub.s32 %v6008, %v6010
      %v6012 = vrot.slane %v5990, %v6011
      %v6014 = vunpack.c.l.s4 1966171168
      %v6015 = vunpack.c.0.s8 %v6014
      %v6016 = vlaneseq
      %v6017 = vshrl.u32 %v6016, 7
      %v6018 = vsub.s32 %v6015, %v6017
      %v6019 = vrot.slane %v5991, %v6018
      %v6020 = vcombine.low %v5998, %v6005
      %v6021 = vcombine.low %v6012, %v6019
      %v6023 = vunpack.c.l.s4 1966171168
      %v6024 = vunpack.c.0.s8 %v6023
      %v6025 = vlaneseq
      %v6026 = vshrl.u32 %v6025, 7
      %v6027 = vsub.s32 %v6024, %v6026
      %v6028 = vrot.slane %v6020, %v6027
      %v6030 = vunpack.c.l.s4 1966171168
      %v6031 = vunpack.c.0.s8 %v6030
      %v6032 = vlaneseq
      %v6033 = vshrl.u32 %v6032, 7
      %v6034 = vsub.s32 %v6031, %v6033
      %v6035 = vrot.slane %v6021, %v6034
      %v6036 = vcombine.low %v6028, %v6035
      %v6037 = vcombine.low %v2222, %v2230
      %v6038 = vcombine.low %v2232, %v2215
      %v6039 = vcombine.low %v2229, %v2231
      %v6040 = vcombine.low %v2233, %v2257
      %v6042 = vunpack.c.l.s4 1966171168
      %v6043 = vunpack.c.0.s8 %v6042
      %v6044 = vlaneseq
      %v6045 = vshrl.u32 %v6044, 7
      %v6046 = vsub.s32 %v6043, %v6045
      %v6047 = vrot.slane %v6037, %v6046
      %v6049 = vunpack.c.l.s4 1966171168
      %v6050 = vunpack.c.0.s8 %v6049
      %v6051 = vlaneseq
      %v6052 = vshrl.u32 %v6051, 7
      %v6053 = vsub.s32 %v6050, %v6052
      %v6054 = vrot.slane %v6038, %v6053
      %v6056 = vunpack.c.l.s4 1966171168
      %v6057 = vunpack.c.0.s8 %v6056
      %v6058 = vlaneseq
      %v6059 = vshrl.u32 %v6058, 7
      %v6060 = vsub.s32 %v6057, %v6059
      %v6061 = vrot.slane %v6039, %v6060
      %v6063 = vunpack.c.l.s4 1966171168
      %v6064 = vunpack.c.0.s8 %v6063
      %v6065 = vlaneseq
      %v6066 = vshrl.u32 %v6065, 7
      %v6067 = vsub.s32 %v6064, %v6066
      %v6068 = vrot.slane %v6040, %v6067
      %v6069 = vcombine.low %v6047, %v6054
      %v6070 = vcombine.low %v6061, %v6068
      %v6072 = vunpack.c.l.s4 1966171168
      %v6073 = vunpack.c.0.s8 %v6072
      %v6074 = vlaneseq
      %v6075 = vshrl.u32 %v6074, 7
      %v6076 = vsub.s32 %v6073, %v6075
      %v6077 = vrot.slane %v6069, %v6076
      %v6079 = vunpack.c.l.s4 1966171168
      %v6080 = vunpack.c.0.s8 %v6079
      %v6081 = vlaneseq
      %v6082 = vshrl.u32 %v6081, 7
      %v6083 = vsub.s32 %v6080, %v6082
      %v6084 = vrot.slane %v6070, %v6083
      %v6085 = vcombine.low %v6077, %v6084
      %v6086 = vcombine.low %v2271, %v2279
      %v6087 = vcombine.low %v2281, %v2264
      %v6088 = vcombine.low %v2278, %v2280
      %v6089 = vcombine.low %v2282, %v2296
      %v6091 = vunpack.c.l.s4 1966171168
      %v6092 = vunpack.c.0.s8 %v6091
      %v6093 = vlaneseq
      %v6094 = vshrl.u32 %v6093, 7
      %v6095 = vsub.s32 %v6092, %v6094
      %v6096 = vrot.slane %v6086, %v6095
      %v6098 = vunpack.c.l.s4 1966171168
      %v6099 = vunpack.c.0.s8 %v6098
      %v6100 = vlaneseq
      %v6101 = vshrl.u32 %v6100, 7
      %v6102 = vsub.s32 %v6099, %v6101
      %v6103 = vrot.slane %v6087, %v6102
      %v6105 = vunpack.c.l.s4 1966171168
      %v6106 = vunpack.c.0.s8 %v6105
      %v6107 = vlaneseq
      %v6108 = vshrl.u32 %v6107, 7
      %v6109 = vsub.s32 %v6106, %v6108
      %v6110 = vrot.slane %v6088, %v6109
      %v6112 = vunpack.c.l.s4 1966171168
      %v6113 = vunpack.c.0.s8 %v6112
      %v6114 = vlaneseq
      %v6115 = vshrl.u32 %v6114, 7
      %v6116 = vsub.s32 %v6113, %v6115
      %v6117 = vrot.slane %v6089, %v6116
      %v6118 = vcombine.low %v6096, %v6103
      %v6119 = vcombine.low %v6110, %v6117
      %v6121 = vunpack.c.l.s4 1966171168
      %v6122 = vunpack.c.0.s8 %v6121
      %v6123 = vlaneseq
      %v6124 = vshrl.u32 %v6123, 7
      %v6125 = vsub.s32 %v6122, %v6124
      %v6126 = vrot.slane %v6118, %v6125
      %v6128 = vunpack.c.l.s4 1966171168
      %v6129 = vunpack.c.0.s8 %v6128
      %v6130 = vlaneseq
      %v6131 = vshrl.u32 %v6130, 7
      %v6132 = vsub.s32 %v6129, %v6131
      %v6133 = vrot.slane %v6119, %v6132
      %v6134 = vcombine.low %v6126, %v6133
      %v6136 = vunpack.c.l.s4 1966171168
      %v6137 = vunpack.c.0.s8 %v6136
      %v6138 = vlaneseq
      %v6139 = vshrl.u32 %v6138, 7
      %v6140 = vsub.s32 %v6137, %v6139
      %v6141 = vrot.slane %v2432, %v6140
      %v6143 = vunpack.c.l.s4 1966171168
      %v6144 = vunpack.c.0.s8 %v6143
      %v6145 = vlaneseq
      %v6146 = vshrl.u32 %v6145, 7
      %v6147 = vsub.s32 %v6144, %v6146
      %v6148 = vrot.slane %v6141, %v6147
      %6149 = vrot.lane.b32.xlu0 %v4419, 4
      %v6150 = vpop.permute.xlu0 %6149
      %6151 = vrot.lane.b32.xlu0 %v4468, 4
      %v6152 = vpop.permute.xlu0 %6151
      %6153 = vrot.lane.b32.xlu0 %v4517, 4
      %v6154 = vpop.permute.xlu0 %6153
      %6155 = vrot.lane.b32.xlu0 %v4566, 4
      %v6156 = vpop.permute.xlu0 %6155
      %6157 = vrot.lane.b32.xlu0 %v4615, 4
      %v6158 = vpop.permute.xlu0 %6157
      %6159 = vrot.lane.b32.xlu0 %v4664, 4
      %v6160 = vpop.permute.xlu0 %6159
      %6161 = vrot.lane.b32.xlu0 %v4713, 4
      %v6162 = vpop.permute.xlu0 %6161
      %6163 = vrot.lane.b32.xlu0 %v4762, 4
      %v6164 = vpop.permute.xlu0 %6163
      %6165 = vrot.lane.b32.xlu0 %v4811, 4
      %v6166 = vpop.permute.xlu0 %6165
      %6167 = vrot.lane.b32.xlu0 %v4860, 4
      %v6168 = vpop.permute.xlu0 %6167
      %6169 = vrot.lane.b32.xlu0 %v4909, 4
      %v6170 = vpop.permute.xlu0 %6169
      %6171 = vrot.lane.b32.xlu0 %v4958, 4
      %v6172 = vpop.permute.xlu0 %6171
      %6173 = vrot.lane.b32.xlu0 %v5007, 4
      %v6174 = vpop.permute.xlu0 %6173
      %6175 = vrot.lane.b32.xlu0 %v5056, 4
      %v6176 = vpop.permute.xlu0 %6175
      %6177 = vrot.lane.b32.xlu0 %v5105, 4
      %v6178 = vpop.permute.xlu0 %6177
      %6179 = vrot.lane.b32.xlu0 %v5154, 4
      %v6180 = vpop.permute.xlu0 %6179
      %6181 = vrot.lane.b32.xlu0 %v5203, 4
      %v6182 = vpop.permute.xlu0 %6181
      %6183 = vrot.lane.b32.xlu0 %v5252, 4
      %v6184 = vpop.permute.xlu0 %6183
      %6185 = vrot.lane.b32.xlu0 %v5301, 4
      %v6186 = vpop.permute.xlu0 %6185
      %6187 = vrot.lane.b32.xlu0 %v5350, 4
      %v6188 = vpop.permute.xlu0 %6187
      %6189 = vrot.lane.b32.xlu0 %v5399, 4
      %v6190 = vpop.permute.xlu0 %6189
      %6191 = vrot.lane.b32.xlu0 %v5448, 4
      %v6192 = vpop.permute.xlu0 %6191
      %6193 = vrot.lane.b32.xlu0 %v5497, 4
      %v6194 = vpop.permute.xlu0 %6193
      %6195 = vrot.lane.b32.xlu0 %v5546, 4
      %v6196 = vpop.permute.xlu0 %6195
      %6197 = vrot.lane.b32.xlu0 %v5595, 4
      %v6198 = vpop.permute.xlu0 %6197
      %6199 = vrot.lane.b32.xlu0 %v5644, 4
      %v6200 = vpop.permute.xlu0 %6199
      %6201 = vrot.lane.b32.xlu0 %v5693, 4
      %v6202 = vpop.permute.xlu0 %6201
      %6203 = vrot.lane.b32.xlu0 %v5742, 4
      %v6204 = vpop.permute.xlu0 %6203
      %6205 = vrot.lane.b32.xlu0 %v5791, 4
      %v6206 = vpop.permute.xlu0 %6205
      %6207 = vrot.lane.b32.xlu0 %v5840, 4
      %v6208 = vpop.permute.xlu0 %6207
      %6209 = vrot.lane.b32.xlu0 %v5889, 4
      %v6210 = vpop.permute.xlu0 %6209
      %6211 = vrot.lane.b32.xlu0 %v5938, 4
      %v6212 = vpop.permute.xlu0 %6211
      %6213 = vrot.lane.b32.xlu0 %v5987, 4
      %v6214 = vpop.permute.xlu0 %6213
      %6215 = vrot.lane.b32.xlu0 %v6036, 4
      %v6216 = vpop.permute.xlu0 %6215
      %6217 = vrot.lane.b32.xlu0 %v6085, 4
      %v6218 = vpop.permute.xlu0 %6217
      %6219 = vrot.lane.b32.xlu0 %v6134, 4
      %v6220 = vpop.permute.xlu0 %6219
      %6221 = vrot.lane.b32.xlu0 %v6148, 4
      %v6222 = vpop.permute.xlu0 %6221
      %v6260 = vcombine.low %v528, %v542
      %v6262 = vunpack.c.l.s4 1966171168
      %v6263 = vunpack.c.0.s8 %v6262
      %v6264 = vlaneseq
      %v6265 = vshrl.u32 %v6264, 7
      %v6266 = vsub.s32 %v6263, %v6265
      %v6267 = vrot.slane %v6260, %v6266
      %v6268 = vcombine.low %v6267, %v4486
      %v6270 = vunpack.c.l.s4 1966171168
      %v6271 = vunpack.c.0.s8 %v6270
      %v6272 = vlaneseq
      %v6273 = vshrl.u32 %v6272, 7
      %v6274 = vsub.s32 %v6271, %v6273
      %v6275 = vrot.slane %v6268, %v6274
      %v6276 = vcombine.low %v6275, %v4516
      %v6277 = vcombine.low %v616, %v640
      %v6279 = vunpack.c.l.s4 1966171168
      %v6280 = vunpack.c.0.s8 %v6279
      %v6281 = vlaneseq
      %v6282 = vshrl.u32 %v6281, 7
      %v6283 = vsub.s32 %v6280, %v6282
      %v6284 = vrot.slane %v6277, %v6283
      %v6285 = vcombine.low %v6284, %v4584
      %v6287 = vunpack.c.l.s4 1966171168
      %v6288 = vunpack.c.0.s8 %v6287
      %v6289 = vlaneseq
      %v6290 = vshrl.u32 %v6289, 7
      %v6291 = vsub.s32 %v6288, %v6290
      %v6292 = vrot.slane %v6285, %v6291
      %v6293 = vcombine.low %v6292, %v4614
      %v6294 = vcombine.low %v752, %v766
      %v6296 = vunpack.c.l.s4 1966171168
      %v6297 = vunpack.c.0.s8 %v6296
      %v6298 = vlaneseq
      %v6299 = vshrl.u32 %v6298, 7
      %v6300 = vsub.s32 %v6297, %v6299
      %v6301 = vrot.slane %v6294, %v6300
      %v6302 = vcombine.low %v4675, %v6301
      %v6304 = vunpack.c.l.s4 1966171168
      %v6305 = vunpack.c.0.s8 %v6304
      %v6306 = vlaneseq
      %v6307 = vshrl.u32 %v6306, 7
      %v6308 = vsub.s32 %v6305, %v6307
      %v6309 = vrot.slane %v6302, %v6308
      %v6310 = vcombine.low %v6309, %v4712
      %v6311 = vcombine.low %v840, %v864
      %v6313 = vunpack.c.l.s4 1966171168
      %v6314 = vunpack.c.0.s8 %v6313
      %v6315 = vlaneseq
      %v6316 = vshrl.u32 %v6315, 7
      %v6317 = vsub.s32 %v6314, %v6316
      %v6318 = vrot.slane %v6311, %v6317
      %v6319 = vcombine.low %v4773, %v6318
      %v6321 = vunpack.c.l.s4 1966171168
      %v6322 = vunpack.c.0.s8 %v6321
      %v6323 = vlaneseq
      %v6324 = vshrl.u32 %v6323, 7
      %v6325 = vsub.s32 %v6322, %v6324
      %v6326 = vrot.slane %v6319, %v6325
      %v6327 = vcombine.low %v6326, %v4810
      %v6328 = vcombine.low %v976, %v990
      %v6330 = vunpack.c.l.s4 1966171168
      %v6331 = vunpack.c.0.s8 %v6330
      %v6332 = vlaneseq
      %v6333 = vshrl.u32 %v6332, 7
      %v6334 = vsub.s32 %v6331, %v6333
      %v6335 = vrot.slane %v6328, %v6334
      %v6336 = vcombine.low %v6335, %v4892
      %v6338 = vunpack.c.l.s4 1966171168
      %v6339 = vunpack.c.0.s8 %v6338
      %v6340 = vlaneseq
      %v6341 = vshrl.u32 %v6340, 7
      %v6342 = vsub.s32 %v6339, %v6341
      %v6343 = vrot.slane %v6336, %v6342
      %v6344 = vcombine.low %v4901, %v6343
      %v6345 = vcombine.low %v1064, %v1088
      %v6347 = vunpack.c.l.s4 1966171168
      %v6348 = vunpack.c.0.s8 %v6347
      %v6349 = vlaneseq
      %v6350 = vshrl.u32 %v6349, 7
      %v6351 = vsub.s32 %v6348, %v6350
      %v6352 = vrot.slane %v6345, %v6351
      %v6353 = vcombine.low %v6352, %v4990
      %v6355 = vunpack.c.l.s4 1966171168
      %v6356 = vunpack.c.0.s8 %v6355
      %v6357 = vlaneseq
      %v6358 = vshrl.u32 %v6357, 7
      %v6359 = vsub.s32 %v6356, %v6358
      %v6360 = vrot.slane %v6353, %v6359
      %v6361 = vcombine.low %v4999, %v6360
      %v6362 = vcombine.low %v1200, %v1214
      %v6364 = vunpack.c.l.s4 1966171168
      %v6365 = vunpack.c.0.s8 %v6364
      %v6366 = vlaneseq
      %v6367 = vshrl.u32 %v6366, 7
      %v6368 = vsub.s32 %v6365, %v6367
      %v6369 = vrot.slane %v6362, %v6368
      %v6370 = vcombine.low %v5081, %v6369
      %v6372 = vunpack.c.l.s4 1966171168
      %v6373 = vunpack.c.0.s8 %v6372
      %v6374 = vlaneseq
      %v6375 = vshrl.u32 %v6374, 7
      %v6376 = vsub.s32 %v6373, %v6375
      %v6377 = vrot.slane %v6370, %v6376
      %v6378 = vcombine.low %v5097, %v6377
      %v6379 = vcombine.low %v1288, %v1312
      %v6381 = vunpack.c.l.s4 1966171168
      %v6382 = vunpack.c.0.s8 %v6381
      %v6383 = vlaneseq
      %v6384 = vshrl.u32 %v6383, 7
      %v6385 = vsub.s32 %v6382, %v6384
      %v6386 = vrot.slane %v6379, %v6385
      %v6387 = vcombine.low %v5179, %v6386
      %v6389 = vunpack.c.l.s4 1966171168
      %v6390 = vunpack.c.0.s8 %v6389
      %v6391 = vlaneseq
      %v6392 = vshrl.u32 %v6391, 7
      %v6393 = vsub.s32 %v6390, %v6392
      %v6394 = vrot.slane %v6387, %v6393
      %v6395 = vcombine.low %v5195, %v6394
      %v6396 = vcombine.low %v1424, %v1438
      %v6398 = vunpack.c.l.s4 1966171168
      %v6399 = vunpack.c.0.s8 %v6398
      %v6400 = vlaneseq
      %v6401 = vshrl.u32 %v6400, 7
      %v6402 = vsub.s32 %v6399, %v6401
      %v6403 = vrot.slane %v6396, %v6402
      %v6404 = vcombine.low %v6403, %v5319
      %v6406 = vunpack.c.l.s4 1966171168
      %v6407 = vunpack.c.0.s8 %v6406
      %v6408 = vlaneseq
      %v6409 = vshrl.u32 %v6408, 7
      %v6410 = vsub.s32 %v6407, %v6409
      %v6411 = vrot.slane %v6404, %v6410
      %v6412 = vcombine.low %v6411, %v5349
      %v6413 = vcombine.low %v1512, %v1536
      %v6415 = vunpack.c.l.s4 1966171168
      %v6416 = vunpack.c.0.s8 %v6415
      %v6417 = vlaneseq
      %v6418 = vshrl.u32 %v6417, 7
      %v6419 = vsub.s32 %v6416, %v6418
      %v6420 = vrot.slane %v6413, %v6419
      %v6421 = vcombine.low %v6420, %v5417
      %v6423 = vunpack.c.l.s4 1966171168
      %v6424 = vunpack.c.0.s8 %v6423
      %v6425 = vlaneseq
      %v6426 = vshrl.u32 %v6425, 7
      %v6427 = vsub.s32 %v6424, %v6426
      %v6428 = vrot.slane %v6421, %v6427
      %v6429 = vcombine.low %v6428, %v5447
      %v6430 = vcombine.low %v1648, %v1662
      %v6432 = vunpack.c.l.s4 1966171168
      %v6433 = vunpack.c.0.s8 %v6432
      %v6434 = vlaneseq
      %v6435 = vshrl.u32 %v6434, 7
      %v6436 = vsub.s32 %v6433, %v6435
      %v6437 = vrot.slane %v6430, %v6436
      %v6438 = vcombine.low %v5508, %v6437
      %v6440 = vunpack.c.l.s4 1966171168
      %v6441 = vunpack.c.0.s8 %v6440
      %v6442 = vlaneseq
      %v6443 = vshrl.u32 %v6442, 7
      %v6444 = vsub.s32 %v6441, %v6443
      %v6445 = vrot.slane %v6438, %v6444
      %v6446 = vcombine.low %v6445, %v5545
      %v6447 = vcombine.low %v1736, %v1760
      %v6449 = vunpack.c.l.s4 1966171168
      %v6450 = vunpack.c.0.s8 %v6449
      %v6451 = vlaneseq
      %v6452 = vshrl.u32 %v6451, 7
      %v6453 = vsub.s32 %v6450, %v6452
      %v6454 = vrot.slane %v6447, %v6453
      %v6455 = vcombine.low %v5606, %v6454
      %v6457 = vunpack.c.l.s4 1966171168
      %v6458 = vunpack.c.0.s8 %v6457
      %v6459 = vlaneseq
      %v6460 = vshrl.u32 %v6459, 7
      %v6461 = vsub.s32 %v6458, %v6460
      %v6462 = vrot.slane %v6455, %v6461
      %v6463 = vcombine.low %v6462, %v5643
      %v6464 = vcombine.low %v1872, %v1886
      %v6466 = vunpack.c.l.s4 1966171168
      %v6467 = vunpack.c.0.s8 %v6466
      %v6468 = vlaneseq
      %v6469 = vshrl.u32 %v6468, 7
      %v6470 = vsub.s32 %v6467, %v6469
      %v6471 = vrot.slane %v6464, %v6470
      %v6472 = vcombine.low %v6471, %v5725
      %v6474 = vunpack.c.l.s4 1966171168
      %v6475 = vunpack.c.0.s8 %v6474
      %v6476 = vlaneseq
      %v6477 = vshrl.u32 %v6476, 7
      %v6478 = vsub.s32 %v6475, %v6477
      %v6479 = vrot.slane %v6472, %v6478
      %v6480 = vcombine.low %v5734, %v6479
      %v6481 = vcombine.low %v1960, %v1984
      %v6483 = vunpack.c.l.s4 1966171168
      %v6484 = vunpack.c.0.s8 %v6483
      %v6485 = vlaneseq
      %v6486 = vshrl.u32 %v6485, 7
      %v6487 = vsub.s32 %v6484, %v6486
      %v6488 = vrot.slane %v6481, %v6487
      %v6489 = vcombine.low %v6488, %v5823
      %v6491 = vunpack.c.l.s4 1966171168
      %v6492 = vunpack.c.0.s8 %v6491
      %v6493 = vlaneseq
      %v6494 = vshrl.u32 %v6493, 7
      %v6495 = vsub.s32 %v6492, %v6494
      %v6496 = vrot.slane %v6489, %v6495
      %v6497 = vcombine.low %v5832, %v6496
      %v6498 = vcombine.low %v2096, %v2110
      %v6500 = vunpack.c.l.s4 1966171168
      %v6501 = vunpack.c.0.s8 %v6500
      %v6502 = vlaneseq
      %v6503 = vshrl.u32 %v6502, 7
      %v6504 = vsub.s32 %v6501, %v6503
      %v6505 = vrot.slane %v6498, %v6504
      %v6506 = vcombine.low %v5914, %v6505
      %v6508 = vunpack.c.l.s4 1966171168
      %v6509 = vunpack.c.0.s8 %v6508
      %v6510 = vlaneseq
      %v6511 = vshrl.u32 %v6510, 7
      %v6512 = vsub.s32 %v6509, %v6511
      %v6513 = vrot.slane %v6506, %v6512
      %v6514 = vcombine.low %v5930, %v6513
      %v6515 = vcombine.low %v2184, %v2208
      %v6517 = vunpack.c.l.s4 1966171168
      %v6518 = vunpack.c.0.s8 %v6517
      %v6519 = vlaneseq
      %v6520 = vshrl.u32 %v6519, 7
      %v6521 = vsub.s32 %v6518, %v6520
      %v6522 = vrot.slane %v6515, %v6521
      %v6523 = vcombine.low %v6012, %v6522
      %v6525 = vunpack.c.l.s4 1966171168
      %v6526 = vunpack.c.0.s8 %v6525
      %v6527 = vlaneseq
      %v6528 = vshrl.u32 %v6527, 7
      %v6529 = vsub.s32 %v6526, %v6528
      %v6530 = vrot.slane %v6523, %v6529
      %v6531 = vcombine.low %v6028, %v6530
      %v6532 = vcombine.low %v2459, %v2473
      %v6533 = vcombine.low %v2481, %v2483
      %v6534 = vcombine.low %v2466, %v2480
      %v6535 = vcombine.low %v2482, %v2484
      %v6537 = vunpack.c.l.s4 1966171168
      %v6538 = vunpack.c.0.s8 %v6537
      %v6539 = vlaneseq
      %v6540 = vshrl.u32 %v6539, 7
      %v6541 = vsub.s32 %v6538, %v6540
      %v6542 = vrot.slane %v6532, %v6541
      %v6544 = vunpack.c.l.s4 1966171168
      %v6545 = vunpack.c.0.s8 %v6544
      %v6546 = vlaneseq
      %v6547 = vshrl.u32 %v6546, 7
      %v6548 = vsub.s32 %v6545, %v6547
      %v6549 = vrot.slane %v6533, %v6548
      %v6551 = vunpack.c.l.s4 1966171168
      %v6552 = vunpack.c.0.s8 %v6551
      %v6553 = vlaneseq
      %v6554 = vshrl.u32 %v6553, 7
      %v6555 = vsub.s32 %v6552, %v6554
      %v6556 = vrot.slane %v6534, %v6555
      %v6558 = vunpack.c.l.s4 1966171168
      %v6559 = vunpack.c.0.s8 %v6558
      %v6560 = vlaneseq
      %v6561 = vshrl.u32 %v6560, 7
      %v6562 = vsub.s32 %v6559, %v6561
      %v6563 = vrot.slane %v6535, %v6562
      %v6564 = vcombine.low %v6542, %v6549
      %v6565 = vcombine.low %v6556, %v6563
      %v6567 = vunpack.c.l.s4 1966171168
      %v6568 = vunpack.c.0.s8 %v6567
      %v6569 = vlaneseq
      %v6570 = vshrl.u32 %v6569, 7
      %v6571 = vsub.s32 %v6568, %v6570
      %v6572 = vrot.slane %v6564, %v6571
      %v6574 = vunpack.c.l.s4 1966171168
      %v6575 = vunpack.c.0.s8 %v6574
      %v6576 = vlaneseq
      %v6577 = vshrl.u32 %v6576, 7
      %v6578 = vsub.s32 %v6575, %v6577
      %v6579 = vrot.slane %v6565, %v6578
      %v6580 = vcombine.low %v6572, %v6579
      %v6581 = vcombine.low %v2508, %v2522
      %v6582 = vcombine.low %v2530, %v2532
      %v6583 = vcombine.low %v2515, %v2529
      %v6584 = vcombine.low %v2531, %v2533
      %v6586 = vunpack.c.l.s4 1966171168
      %v6587 = vunpack.c.0.s8 %v6586
      %v6588 = vlaneseq
      %v6589 = vshrl.u32 %v6588, 7
      %v6590 = vsub.s32 %v6587, %v6589
      %v6591 = vrot.slane %v6581, %v6590
      %v6593 = vunpack.c.l.s4 1966171168
      %v6594 = vunpack.c.0.s8 %v6593
      %v6595 = vlaneseq
      %v6596 = vshrl.u32 %v6595, 7
      %v6597 = vsub.s32 %v6594, %v6596
      %v6598 = vrot.slane %v6582, %v6597
      %v6600 = vunpack.c.l.s4 1966171168
      %v6601 = vunpack.c.0.s8 %v6600
      %v6602 = vlaneseq
      %v6603 = vshrl.u32 %v6602, 7
      %v6604 = vsub.s32 %v6601, %v6603
      %v6605 = vrot.slane %v6583, %v6604
      %v6607 = vunpack.c.l.s4 1966171168
      %v6608 = vunpack.c.0.s8 %v6607
      %v6609 = vlaneseq
      %v6610 = vshrl.u32 %v6609, 7
      %v6611 = vsub.s32 %v6608, %v6610
      %v6612 = vrot.slane %v6584, %v6611
      %v6613 = vcombine.low %v6591, %v6598
      %v6614 = vcombine.low %v6605, %v6612
      %v6616 = vunpack.c.l.s4 1966171168
      %v6617 = vunpack.c.0.s8 %v6616
      %v6618 = vlaneseq
      %v6619 = vshrl.u32 %v6618, 7
      %v6620 = vsub.s32 %v6617, %v6619
      %v6621 = vrot.slane %v6613, %v6620
      %v6623 = vunpack.c.l.s4 1966171168
      %v6624 = vunpack.c.0.s8 %v6623
      %v6625 = vlaneseq
      %v6626 = vshrl.u32 %v6625, 7
      %v6627 = vsub.s32 %v6624, %v6626
      %v6628 = vrot.slane %v6614, %v6627
      %v6629 = vcombine.low %v6621, %v6628
      %v6631 = vunpack.c.l.s4 1966171168
      %v6632 = vunpack.c.0.s8 %v6631
      %v6633 = vlaneseq
      %v6634 = vshrl.u32 %v6633, 7
      %v6635 = vsub.s32 %v6632, %v6634
      %v6636 = vrot.slane %v2547, %v6635
      %v6638 = vunpack.c.l.s4 1966171168
      %v6639 = vunpack.c.0.s8 %v6638
      %v6640 = vlaneseq
      %v6641 = vshrl.u32 %v6640, 7
      %v6642 = vsub.s32 %v6639, %v6641
      %v6643 = vrot.slane %v6636, %v6642
      %6644 = vrot.lane.b32.xlu0 %v6276, 8
      %v6645 = vpop.permute.xlu0 %6644
      %6646 = vrot.lane.b32.xlu0 %v4566, 8
      %v6647 = vpop.permute.xlu0 %6646
      %6648 = vrot.lane.b32.xlu0 %v6293, 8
      %v6649 = vpop.permute.xlu0 %6648
      %6650 = vrot.lane.b32.xlu0 %v4664, 8
      %v6651 = vpop.permute.xlu0 %6650
      %6652 = vrot.lane.b32.xlu0 %v6310, 8
      %v6653 = vpop.permute.xlu0 %6652
      %6654 = vrot.lane.b32.xlu0 %v4762, 8
      %v6655 = vpop.permute.xlu0 %6654
      %6656 = vrot.lane.b32.xlu0 %v6327, 8
      %v6657 = vpop.permute.xlu0 %6656
      %6658 = vrot.lane.b32.xlu0 %v4860, 8
      %v6659 = vpop.permute.xlu0 %6658
      %6660 = vrot.lane.b32.xlu0 %v6344, 8
      %v6661 = vpop.permute.xlu0 %6660
      %6662 = vrot.lane.b32.xlu0 %v4958, 8
      %v6663 = vpop.permute.xlu0 %6662
      %6664 = vrot.lane.b32.xlu0 %v6361, 8
      %v6665 = vpop.permute.xlu0 %6664
      %6666 = vrot.lane.b32.xlu0 %v5056, 8
      %v6667 = vpop.permute.xlu0 %6666
      %6668 = vrot.lane.b32.xlu0 %v6378, 8
      %v6669 = vpop.permute.xlu0 %6668
      %6670 = vrot.lane.b32.xlu0 %v5154, 8
      %v6671 = vpop.permute.xlu0 %6670
      %6672 = vrot.lane.b32.xlu0 %v6395, 8
      %v6673 = vpop.permute.xlu0 %6672
      %6674 = vrot.lane.b32.xlu0 %v5252, 8
      %v6675 = vpop.permute.xlu0 %6674
      %6676 = vrot.lane.b32.xlu0 %v5301, 8
      %v6677 = vpop.permute.xlu0 %6676
      %6678 = vrot.lane.b32.xlu0 %v6412, 8
      %v6679 = vpop.permute.xlu0 %6678
      %6680 = vrot.lane.b32.xlu0 %v5399, 8
      %v6681 = vpop.permute.xlu0 %6680
      %6682 = vrot.lane.b32.xlu0 %v6429, 8
      %v6683 = vpop.permute.xlu0 %6682
      %6684 = vrot.lane.b32.xlu0 %v5497, 8
      %v6685 = vpop.permute.xlu0 %6684
      %6686 = vrot.lane.b32.xlu0 %v6446, 8
      %v6687 = vpop.permute.xlu0 %6686
      %6688 = vrot.lane.b32.xlu0 %v5595, 8
      %v6689 = vpop.permute.xlu0 %6688
      %6690 = vrot.lane.b32.xlu0 %v6463, 8
      %v6691 = vpop.permute.xlu0 %6690
      %6692 = vrot.lane.b32.xlu0 %v5693, 8
      %v6693 = vpop.permute.xlu0 %6692
      %6694 = vrot.lane.b32.xlu0 %v6480, 8
      %v6695 = vpop.permute.xlu0 %6694
      %6696 = vrot.lane.b32.xlu0 %v5791, 8
      %v6697 = vpop.permute.xlu0 %6696
      %6698 = vrot.lane.b32.xlu0 %v6497, 8
      %v6699 = vpop.permute.xlu0 %6698
      %6700 = vrot.lane.b32.xlu0 %v5889, 8
      %v6701 = vpop.permute.xlu0 %6700
      %6702 = vrot.lane.b32.xlu0 %v6514, 8
      %v6703 = vpop.permute.xlu0 %6702
      %6704 = vrot.lane.b32.xlu0 %v5987, 8
      %v6705 = vpop.permute.xlu0 %6704
      %6706 = vrot.lane.b32.xlu0 %v6531, 8
      %v6707 = vpop.permute.xlu0 %6706
      %6708 = vrot.lane.b32.xlu0 %v6085, 8
      %v6709 = vpop.permute.xlu0 %6708
      %6710 = vrot.lane.b32.xlu0 %v6134, 8
      %v6711 = vpop.permute.xlu0 %6710
      %6712 = vrot.lane.b32.xlu0 %v6580, 8
      %v6713 = vpop.permute.xlu0 %6712
      %6714 = vrot.lane.b32.xlu0 %v6629, 8
      %v6715 = vpop.permute.xlu0 %6714
      %6716 = vrot.lane.b32.xlu0 %v6643, 8
      %v6717 = vpop.permute.xlu0 %6716
      %v6755 = vcombine.low %v2671, %v2678
      %v6756 = vcombine.low %v2685, %v2713
      %v6758 = vunpack.c.l.s4 1966171168
      %v6759 = vunpack.c.0.s8 %v6758
      %v6760 = vlaneseq
      %v6761 = vshrl.u32 %v6760, 7
      %v6762 = vsub.s32 %v6759, %v6761
      %v6763 = vrot.slane %v6755, %v6762
      %v6765 = vunpack.c.l.s4 1966171168
      %v6766 = vunpack.c.0.s8 %v6765
      %v6767 = vlaneseq
      %v6768 = vshrl.u32 %v6767, 7
      %v6769 = vsub.s32 %v6766, %v6768
      %v6770 = vrot.slane %v6756, %v6769
      %v6771 = vcombine.low %v6763, %v6770
      %v6772 = vcombine.low %v2720, %v2727
      %v6773 = vcombine.low %v2734, %v2762
      %v6775 = vunpack.c.l.s4 1966171168
      %v6776 = vunpack.c.0.s8 %v6775
      %v6777 = vlaneseq
      %v6778 = vshrl.u32 %v6777, 7
      %v6779 = vsub.s32 %v6776, %v6778
      %v6780 = vrot.slane %v6772, %v6779
      %v6782 = vunpack.c.l.s4 1966171168
      %v6783 = vunpack.c.0.s8 %v6782
      %v6784 = vlaneseq
      %v6785 = vshrl.u32 %v6784, 7
      %v6786 = vsub.s32 %v6783, %v6785
      %v6787 = vrot.slane %v6773, %v6786
      %v6788 = vcombine.low %v6780, %v6787
      %v6789 = vcombine.low %v2312, %v654
      %v6791 = vunpack.c.l.s4 1966171168
      %v6792 = vunpack.c.0.s8 %v6791
      %v6793 = vlaneseq
      %v6794 = vshrl.u32 %v6793, 7
      %v6795 = vsub.s32 %v6792, %v6794
      %v6796 = vrot.slane %v6789, %v6795
      %v6797 = vcombine.low %v6796, %v2776
      %v6798 = vcombine.low %v2783, %v2811
      %v6800 = vunpack.c.l.s4 1966171168
      %v6801 = vunpack.c.0.s8 %v6800
      %v6802 = vlaneseq
      %v6803 = vshrl.u32 %v6802, 7
      %v6804 = vsub.s32 %v6801, %v6803
      %v6805 = vrot.slane %v6797, %v6804
      %v6807 = vunpack.c.l.s4 1966171168
      %v6808 = vunpack.c.0.s8 %v6807
      %v6809 = vlaneseq
      %v6810 = vshrl.u32 %v6809, 7
      %v6811 = vsub.s32 %v6808, %v6810
      %v6812 = vrot.slane %v6798, %v6811
      %v6813 = vcombine.low %v6805, %v6812
      %v6814 = vcombine.low %v2818, %v2825
      %v6815 = vcombine.low %v2832, %v2860
      %v6817 = vunpack.c.l.s4 1966171168
      %v6818 = vunpack.c.0.s8 %v6817
      %v6819 = vlaneseq
      %v6820 = vshrl.u32 %v6819, 7
      %v6821 = vsub.s32 %v6818, %v6820
      %v6822 = vrot.slane %v6814, %v6821
      %v6824 = vunpack.c.l.s4 1966171168
      %v6825 = vunpack.c.0.s8 %v6824
      %v6826 = vlaneseq
      %v6827 = vshrl.u32 %v6826, 7
      %v6828 = vsub.s32 %v6825, %v6827
      %v6829 = vrot.slane %v6815, %v6828
      %v6830 = vcombine.low %v6822, %v6829
      %v6831 = vcombine.low %v728, %v2320
      %v6833 = vunpack.c.l.s4 1966171168
      %v6834 = vunpack.c.0.s8 %v6833
      %v6835 = vlaneseq
      %v6836 = vshrl.u32 %v6835, 7
      %v6837 = vsub.s32 %v6834, %v6836
      %v6838 = vrot.slane %v6831, %v6837
      %v6839 = vcombine.low %v6838, %v2874
      %v6840 = vcombine.low %v2881, %v2909
      %v6842 = vunpack.c.l.s4 1966171168
      %v6843 = vunpack.c.0.s8 %v6842
      %v6844 = vlaneseq
      %v6845 = vshrl.u32 %v6844, 7
      %v6846 = vsub.s32 %v6843, %v6845
      %v6847 = vrot.slane %v6839, %v6846
      %v6849 = vunpack.c.l.s4 1966171168
      %v6850 = vunpack.c.0.s8 %v6849
      %v6851 = vlaneseq
      %v6852 = vshrl.u32 %v6851, 7
      %v6853 = vsub.s32 %v6850, %v6852
      %v6854 = vrot.slane %v6840, %v6853
      %v6855 = vcombine.low %v6847, %v6854
      %v6856 = vcombine.low %v2916, %v2923
      %v6857 = vcombine.low %v2930, %v2958
      %v6859 = vunpack.c.l.s4 1966171168
      %v6860 = vunpack.c.0.s8 %v6859
      %v6861 = vlaneseq
      %v6862 = vshrl.u32 %v6861, 7
      %v6863 = vsub.s32 %v6860, %v6862
      %v6864 = vrot.slane %v6856, %v6863
      %v6866 = vunpack.c.l.s4 1966171168
      %v6867 = vunpack.c.0.s8 %v6866
      %v6868 = vlaneseq
      %v6869 = vshrl.u32 %v6868, 7
      %v6870 = vsub.s32 %v6867, %v6869
      %v6871 = vrot.slane %v6857, %v6870
      %v6872 = vcombine.low %v6864, %v6871
      %v6873 = vcombine.low %v2328, %v878
      %v6875 = vunpack.c.l.s4 1966171168
      %v6876 = vunpack.c.0.s8 %v6875
      %v6877 = vlaneseq
      %v6878 = vshrl.u32 %v6877, 7
      %v6879 = vsub.s32 %v6876, %v6878
      %v6880 = vrot.slane %v6873, %v6879
      %v6881 = vcombine.low %v2965, %v6880
      %v6882 = vcombine.low %v2979, %v3007
      %v6884 = vunpack.c.l.s4 1966171168
      %v6885 = vunpack.c.0.s8 %v6884
      %v6886 = vlaneseq
      %v6887 = vshrl.u32 %v6886, 7
      %v6888 = vsub.s32 %v6885, %v6887
      %v6889 = vrot.slane %v6881, %v6888
      %v6891 = vunpack.c.l.s4 1966171168
      %v6892 = vunpack.c.0.s8 %v6891
      %v6893 = vlaneseq
      %v6894 = vshrl.u32 %v6893, 7
      %v6895 = vsub.s32 %v6892, %v6894
      %v6896 = vrot.slane %v6882, %v6895
      %v6897 = vcombine.low %v6889, %v6896
      %v6898 = vcombine.low %v3014, %v3021
      %v6899 = vcombine.low %v3028, %v3056
      %v6901 = vunpack.c.l.s4 1966171168
      %v6902 = vunpack.c.0.s8 %v6901
      %v6903 = vlaneseq
      %v6904 = vshrl.u32 %v6903, 7
      %v6905 = vsub.s32 %v6902, %v6904
      %v6906 = vrot.slane %v6898, %v6905
      %v6908 = vunpack.c.l.s4 1966171168
      %v6909 = vunpack.c.0.s8 %v6908
      %v6910 = vlaneseq
      %v6911 = vshrl.u32 %v6910, 7
      %v6912 = vsub.s32 %v6909, %v6911
      %v6913 = vrot.slane %v6899, %v6912
      %v6914 = vcombine.low %v6906, %v6913
      %v6915 = vcombine.low %v952, %v2336
      %v6917 = vunpack.c.l.s4 1966171168
      %v6918 = vunpack.c.0.s8 %v6917
      %v6919 = vlaneseq
      %v6920 = vshrl.u32 %v6919, 7
      %v6921 = vsub.s32 %v6918, %v6920
      %v6922 = vrot.slane %v6915, %v6921
      %v6923 = vcombine.low %v3063, %v6922
      %v6924 = vcombine.low %v3077, %v3105
      %v6926 = vunpack.c.l.s4 1966171168
      %v6927 = vunpack.c.0.s8 %v6926
      %v6928 = vlaneseq
      %v6929 = vshrl.u32 %v6928, 7
      %v6930 = vsub.s32 %v6927, %v6929
      %v6931 = vrot.slane %v6923, %v6930
      %v6933 = vunpack.c.l.s4 1966171168
      %v6934 = vunpack.c.0.s8 %v6933
      %v6935 = vlaneseq
      %v6936 = vshrl.u32 %v6935, 7
      %v6937 = vsub.s32 %v6934, %v6936
      %v6938 = vrot.slane %v6924, %v6937
      %v6939 = vcombine.low %v6931, %v6938
      %v6940 = vcombine.low %v3112, %v3119
      %v6941 = vcombine.low %v3126, %v3154
      %v6943 = vunpack.c.l.s4 1966171168
      %v6944 = vunpack.c.0.s8 %v6943
      %v6945 = vlaneseq
      %v6946 = vshrl.u32 %v6945, 7
      %v6947 = vsub.s32 %v6944, %v6946
      %v6948 = vrot.slane %v6940, %v6947
      %v6950 = vunpack.c.l.s4 1966171168
      %v6951 = vunpack.c.0.s8 %v6950
      %v6952 = vlaneseq
      %v6953 = vshrl.u32 %v6952, 7
      %v6954 = vsub.s32 %v6951, %v6953
      %v6955 = vrot.slane %v6941, %v6954
      %v6956 = vcombine.low %v6948, %v6955
      %v6957 = vcombine.low %v2344, %v1102
      %v6959 = vunpack.c.l.s4 1966171168
      %v6960 = vunpack.c.0.s8 %v6959
      %v6961 = vlaneseq
      %v6962 = vshrl.u32 %v6961, 7
      %v6963 = vsub.s32 %v6960, %v6962
      %v6964 = vrot.slane %v6957, %v6963
      %v6965 = vcombine.low %v3161, %v3168
      %v6966 = vcombine.low %v6964, %v3203
      %v6968 = vunpack.c.l.s4 1966171168
      %v6969 = vunpack.c.0.s8 %v6968
      %v6970 = vlaneseq
      %v6971 = vshrl.u32 %v6970, 7
      %v6972 = vsub.s32 %v6969, %v6971
      %v6973 = vrot.slane %v6965, %v6972
      %v6975 = vunpack.c.l.s4 1966171168
      %v6976 = vunpack.c.0.s8 %v6975
      %v6977 = vlaneseq
      %v6978 = vshrl.u32 %v6977, 7
      %v6979 = vsub.s32 %v6976, %v6978
      %v6980 = vrot.slane %v6966, %v6979
      %v6981 = vcombine.low %v6973, %v6980
      %v6982 = vcombine.low %v3210, %v3217
      %v6983 = vcombine.low %v3224, %v3252
      %v6985 = vunpack.c.l.s4 1966171168
      %v6986 = vunpack.c.0.s8 %v6985
      %v6987 = vlaneseq
      %v6988 = vshrl.u32 %v6987, 7
      %v6989 = vsub.s32 %v6986, %v6988
      %v6990 = vrot.slane %v6982, %v6989
      %v6992 = vunpack.c.l.s4 1966171168
      %v6993 = vunpack.c.0.s8 %v6992
      %v6994 = vlaneseq
      %v6995 = vshrl.u32 %v6994, 7
      %v6996 = vsub.s32 %v6993, %v6995
      %v6997 = vrot.slane %v6983, %v6996
      %v6998 = vcombine.low %v6990, %v6997
      %v6999 = vcombine.low %v1176, %v2352
      %v7001 = vunpack.c.l.s4 1966171168
      %v7002 = vunpack.c.0.s8 %v7001
      %v7003 = vlaneseq
      %v7004 = vshrl.u32 %v7003, 7
      %v7005 = vsub.s32 %v7002, %v7004
      %v7006 = vrot.slane %v6999, %v7005
      %v7007 = vcombine.low %v3259, %v3266
      %v7008 = vcombine.low %v7006, %v3301
      %v7010 = vunpack.c.l.s4 1966171168
      %v7011 = vunpack.c.0.s8 %v7010
      %v7012 = vlaneseq
      %v7013 = vshrl.u32 %v7012, 7
      %v7014 = vsub.s32 %v7011, %v7013
      %v7015 = vrot.slane %v7007, %v7014
      %v7017 = vunpack.c.l.s4 1966171168
      %v7018 = vunpack.c.0.s8 %v7017
      %v7019 = vlaneseq
      %v7020 = vshrl.u32 %v7019, 7
      %v7021 = vsub.s32 %v7018, %v7020
      %v7022 = vrot.slane %v7008, %v7021
      %v7023 = vcombine.low %v7015, %v7022
      %v7024 = vcombine.low %v3308, %v3315
      %v7025 = vcombine.low %v3322, %v3350
      %v7027 = vunpack.c.l.s4 1966171168
      %v7028 = vunpack.c.0.s8 %v7027
      %v7029 = vlaneseq
      %v7030 = vshrl.u32 %v7029, 7
      %v7031 = vsub.s32 %v7028, %v7030
      %v7032 = vrot.slane %v7024, %v7031
      %v7034 = vunpack.c.l.s4 1966171168
      %v7035 = vunpack.c.0.s8 %v7034
      %v7036 = vlaneseq
      %v7037 = vshrl.u32 %v7036, 7
      %v7038 = vsub.s32 %v7035, %v7037
      %v7039 = vrot.slane %v7025, %v7038
      %v7040 = vcombine.low %v7032, %v7039
      %v7041 = vcombine.low %v2360, %v1326
      %v7043 = vunpack.c.l.s4 1966171168
      %v7044 = vunpack.c.0.s8 %v7043
      %v7045 = vlaneseq
      %v7046 = vshrl.u32 %v7045, 7
      %v7047 = vsub.s32 %v7044, %v7046
      %v7048 = vrot.slane %v7041, %v7047
      %v7049 = vcombine.low %v3357, %v3364
      %v7050 = vcombine.low %v3371, %v7048
      %v7052 = vunpack.c.l.s4 1966171168
      %v7053 = vunpack.c.0.s8 %v7052
      %v7054 = vlaneseq
      %v7055 = vshrl.u32 %v7054, 7
      %v7056 = vsub.s32 %v7053, %v7055
      %v7057 = vrot.slane %v7049, %v7056
      %v7059 = vunpack.c.l.s4 1966171168
      %v7060 = vunpack.c.0.s8 %v7059
      %v7061 = vlaneseq
      %v7062 = vshrl.u32 %v7061, 7
      %v7063 = vsub.s32 %v7060, %v7062
      %v7064 = vrot.slane %v7050, %v7063
      %v7065 = vcombine.low %v7057, %v7064
      %v7066 = vcombine.low %v3406, %v3413
      %v7067 = vcombine.low %v3420, %v3448
      %v7069 = vunpack.c.l.s4 1966171168
      %v7070 = vunpack.c.0.s8 %v7069
      %v7071 = vlaneseq
      %v7072 = vshrl.u32 %v7071, 7
      %v7073 = vsub.s32 %v7070, %v7072
      %v7074 = vrot.slane %v7066, %v7073
      %v7076 = vunpack.c.l.s4 1966171168
      %v7077 = vunpack.c.0.s8 %v7076
      %v7078 = vlaneseq
      %v7079 = vshrl.u32 %v7078, 7
      %v7080 = vsub.s32 %v7077, %v7079
      %v7081 = vrot.slane %v7067, %v7080
      %v7082 = vcombine.low %v7074, %v7081
      %v7083 = vcombine.low %v1400, %v2368
      %v7085 = vunpack.c.l.s4 1966171168
      %v7086 = vunpack.c.0.s8 %v7085
      %v7087 = vlaneseq
      %v7088 = vshrl.u32 %v7087, 7
      %v7089 = vsub.s32 %v7086, %v7088
      %v7090 = vrot.slane %v7083, %v7089
      %v7091 = vcombine.low %v3455, %v3462
      %v7092 = vcombine.low %v3469, %v7090
      %v7094 = vunpack.c.l.s4 1966171168
      %v7095 = vunpack.c.0.s8 %v7094
      %v7096 = vlaneseq
      %v7097 = vshrl.u32 %v7096, 7
      %v7098 = vsub.s32 %v7095, %v7097
      %v7099 = vrot.slane %v7091, %v7098
      %v7101 = vunpack.c.l.s4 1966171168
      %v7102 = vunpack.c.0.s8 %v7101
      %v7103 = vlaneseq
      %v7104 = vshrl.u32 %v7103, 7
      %v7105 = vsub.s32 %v7102, %v7104
      %v7106 = vrot.slane %v7092, %v7105
      %v7107 = vcombine.low %v7099, %v7106
      %v7108 = vcombine.low %v3504, %v3511
      %v7109 = vcombine.low %v3518, %v3546
      %v7111 = vunpack.c.l.s4 1966171168
      %v7112 = vunpack.c.0.s8 %v7111
      %v7113 = vlaneseq
      %v7114 = vshrl.u32 %v7113, 7
      %v7115 = vsub.s32 %v7112, %v7114
      %v7116 = vrot.slane %v7108, %v7115
      %v7118 = vunpack.c.l.s4 1966171168
      %v7119 = vunpack.c.0.s8 %v7118
      %v7120 = vlaneseq
      %v7121 = vshrl.u32 %v7120, 7
      %v7122 = vsub.s32 %v7119, %v7121
      %v7123 = vrot.slane %v7109, %v7122
      %v7124 = vcombine.low %v7116, %v7123
      %v7125 = vcombine.low %v3553, %v3560
      %v7126 = vcombine.low %v3567, %v3595
      %v7128 = vunpack.c.l.s4 1966171168
      %v7129 = vunpack.c.0.s8 %v7128
      %v7130 = vlaneseq
      %v7131 = vshrl.u32 %v7130, 7
      %v7132 = vsub.s32 %v7129, %v7131
      %v7133 = vrot.slane %v7125, %v7132
      %v7135 = vunpack.c.l.s4 1966171168
      %v7136 = vunpack.c.0.s8 %v7135
      %v7137 = vlaneseq
      %v7138 = vshrl.u32 %v7137, 7
      %v7139 = vsub.s32 %v7136, %v7138
      %v7140 = vrot.slane %v7126, %v7139
      %v7141 = vcombine.low %v7133, %v7140
      %v7142 = vcombine.low %v2376, %v1550
      %v7144 = vunpack.c.l.s4 1966171168
      %v7145 = vunpack.c.0.s8 %v7144
      %v7146 = vlaneseq
      %v7147 = vshrl.u32 %v7146, 7
      %v7148 = vsub.s32 %v7145, %v7147
      %v7149 = vrot.slane %v7142, %v7148
      %v7150 = vcombine.low %v7149, %v3609
      %v7151 = vcombine.low %v3616, %v3644
      %v7153 = vunpack.c.l.s4 1966171168
      %v7154 = vunpack.c.0.s8 %v7153
      %v7155 = vlaneseq
      %v7156 = vshrl.u32 %v7155, 7
      %v7157 = vsub.s32 %v7154, %v7156
      %v7158 = vrot.slane %v7150, %v7157
      %v7160 = vunpack.c.l.s4 1966171168
      %v7161 = vunpack.c.0.s8 %v7160
      %v7162 = vlaneseq
      %v7163 = vshrl.u32 %v7162, 7
      %v7164 = vsub.s32 %v7161, %v7163
      %v7165 = vrot.slane %v7151, %v7164
      %v7166 = vcombine.low %v7158, %v7165
      %v7167 = vcombine.low %v3651, %v3658
      %v7168 = vcombine.low %v3665, %v3693
      %v7170 = vunpack.c.l.s4 1966171168
      %v7171 = vunpack.c.0.s8 %v7170
      %v7172 = vlaneseq
      %v7173 = vshrl.u32 %v7172, 7
      %v7174 = vsub.s32 %v7171, %v7173
      %v7175 = vrot.slane %v7167, %v7174
      %v7177 = vunpack.c.l.s4 1966171168
      %v7178 = vunpack.c.0.s8 %v7177
      %v7179 = vlaneseq
      %v7180 = vshrl.u32 %v7179, 7
      %v7181 = vsub.s32 %v7178, %v7180
      %v7182 = vrot.slane %v7168, %v7181
      %v7183 = vcombine.low %v7175, %v7182
      %v7184 = vcombine.low %v1624, %v2384
      %v7186 = vunpack.c.l.s4 1966171168
      %v7187 = vunpack.c.0.s8 %v7186
      %v7188 = vlaneseq
      %v7189 = vshrl.u32 %v7188, 7
      %v7190 = vsub.s32 %v7187, %v7189
      %v7191 = vrot.slane %v7184, %v7190
      %v7192 = vcombine.low %v7191, %v3707
      %v7193 = vcombine.low %v3714, %v3742
      %v7195 = vunpack.c.l.s4 1966171168
      %v7196 = vunpack.c.0.s8 %v7195
      %v7197 = vlaneseq
      %v7198 = vshrl.u32 %v7197, 7
      %v7199 = vsub.s32 %v7196, %v7198
      %v7200 = vrot.slane %v7192, %v7199
      %v7202 = vunpack.c.l.s4 1966171168
      %v7203 = vunpack.c.0.s8 %v7202
      %v7204 = vlaneseq
      %v7205 = vshrl.u32 %v7204, 7
      %v7206 = vsub.s32 %v7203, %v7205
      %v7207 = vrot.slane %v7193, %v7206
      %v7208 = vcombine.low %v7200, %v7207
      %v7209 = vcombine.low %v3749, %v3756
      %v7210 = vcombine.low %v3763, %v3791
      %v7212 = vunpack.c.l.s4 1966171168
      %v7213 = vunpack.c.0.s8 %v7212
      %v7214 = vlaneseq
      %v7215 = vshrl.u32 %v7214, 7
      %v7216 = vsub.s32 %v7213, %v7215
      %v7217 = vrot.slane %v7209, %v7216
      %v7219 = vunpack.c.l.s4 1966171168
      %v7220 = vunpack.c.0.s8 %v7219
      %v7221 = vlaneseq
      %v7222 = vshrl.u32 %v7221, 7
      %v7223 = vsub.s32 %v7220, %v7222
      %v7224 = vrot.slane %v7210, %v7223
      %v7225 = vcombine.low %v7217, %v7224
      %v7226 = vcombine.low %v2392, %v1774
      %v7228 = vunpack.c.l.s4 1966171168
      %v7229 = vunpack.c.0.s8 %v7228
      %v7230 = vlaneseq
      %v7231 = vshrl.u32 %v7230, 7
      %v7232 = vsub.s32 %v7229, %v7231
      %v7233 = vrot.slane %v7226, %v7232
      %v7234 = vcombine.low %v3798, %v7233
      %v7235 = vcombine.low %v3812, %v3840
      %v7237 = vunpack.c.l.s4 1966171168
      %v7238 = vunpack.c.0.s8 %v7237
      %v7239 = vlaneseq
      %v7240 = vshrl.u32 %v7239, 7
      %v7241 = vsub.s32 %v7238, %v7240
      %v7242 = vrot.slane %v7234, %v7241
      %v7244 = vunpack.c.l.s4 1966171168
      %v7245 = vunpack.c.0.s8 %v7244
      %v7246 = vlaneseq
      %v7247 = vshrl.u32 %v7246, 7
      %v7248 = vsub.s32 %v7245, %v7247
      %v7249 = vrot.slane %v7235, %v7248
      %v7250 = vcombine.low %v7242, %v7249
      %v7251 = vcombine.low %v3847, %v3854
      %v7252 = vcombine.low %v3861, %v3889
      %v7254 = vunpack.c.l.s4 1966171168
      %v7255 = vunpack.c.0.s8 %v7254
      %v7256 = vlaneseq
      %v7257 = vshrl.u32 %v7256, 7
      %v7258 = vsub.s32 %v7255, %v7257
      %v7259 = vrot.slane %v7251, %v7258
      %v7261 = vunpack.c.l.s4 1966171168
      %v7262 = vunpack.c.0.s8 %v7261
      %v7263 = vlaneseq
      %v7264 = vshrl.u32 %v7263, 7
      %v7265 = vsub.s32 %v7262, %v7264
      %v7266 = vrot.slane %v7252, %v7265
      %v7267 = vcombine.low %v7259, %v7266
      %v7268 = vcombine.low %v1848, %v2400
      %v7270 = vunpack.c.l.s4 1966171168
      %v7271 = vunpack.c.0.s8 %v7270
      %v7272 = vlaneseq
      %v7273 = vshrl.u32 %v7272, 7
      %v7274 = vsub.s32 %v7271, %v7273
      %v7275 = vrot.slane %v7268, %v7274
      %v7276 = vcombine.low %v3896, %v7275
      %v7277 = vcombine.low %v3910, %v3938
      %v7279 = vunpack.c.l.s4 1966171168
      %v7280 = vunpack.c.0.s8 %v7279
      %v7281 = vlaneseq
      %v7282 = vshrl.u32 %v7281, 7
      %v7283 = vsub.s32 %v7280, %v7282
      %v7284 = vrot.slane %v7276, %v7283
      %v7286 = vunpack.c.l.s4 1966171168
      %v7287 = vunpack.c.0.s8 %v7286
      %v7288 = vlaneseq
      %v7289 = vshrl.u32 %v7288, 7
      %v7290 = vsub.s32 %v7287, %v7289
      %v7291 = vrot.slane %v7277, %v7290
      %v7292 = vcombine.low %v7284, %v7291
      %v7293 = vcombine.low %v3945, %v3952
      %v7294 = vcombine.low %v3959, %v3987
      %v7296 = vunpack.c.l.s4 1966171168
      %v7297 = vunpack.c.0.s8 %v7296
      %v7298 = vlaneseq
      %v7299 = vshrl.u32 %v7298, 7
      %v7300 = vsub.s32 %v7297, %v7299
      %v7301 = vrot.slane %v7293, %v7300
      %v7303 = vunpack.c.l.s4 1966171168
      %v7304 = vunpack.c.0.s8 %v7303
      %v7305 = vlaneseq
      %v7306 = vshrl.u32 %v7305, 7
      %v7307 = vsub.s32 %v7304, %v7306
      %v7308 = vrot.slane %v7294, %v7307
      %v7309 = vcombine.low %v7301, %v7308
      %v7310 = vcombine.low %v2408, %v1998
      %v7312 = vunpack.c.l.s4 1966171168
      %v7313 = vunpack.c.0.s8 %v7312
      %v7314 = vlaneseq
      %v7315 = vshrl.u32 %v7314, 7
      %v7316 = vsub.s32 %v7313, %v7315
      %v7317 = vrot.slane %v7310, %v7316
      %v7318 = vcombine.low %v3994, %v4001
      %v7319 = vcombine.low %v7317, %v4036
      %v7321 = vunpack.c.l.s4 1966171168
      %v7322 = vunpack.c.0.s8 %v7321
      %v7323 = vlaneseq
      %v7324 = vshrl.u32 %v7323, 7
      %v7325 = vsub.s32 %v7322, %v7324
      %v7326 = vrot.slane %v7318, %v7325
      %v7328 = vunpack.c.l.s4 1966171168
      %v7329 = vunpack.c.0.s8 %v7328
      %v7330 = vlaneseq
      %v7331 = vshrl.u32 %v7330, 7
      %v7332 = vsub.s32 %v7329, %v7331
      %v7333 = vrot.slane %v7319, %v7332
      %v7334 = vcombine.low %v7326, %v7333
      %v7335 = vcombine.low %v4043, %v4050
      %v7336 = vcombine.low %v4057, %v4085
      %v7338 = vunpack.c.l.s4 1966171168
      %v7339 = vunpack.c.0.s8 %v7338
      %v7340 = vlaneseq
      %v7341 = vshrl.u32 %v7340, 7
      %v7342 = vsub.s32 %v7339, %v7341
      %v7343 = vrot.slane %v7335, %v7342
      %v7345 = vunpack.c.l.s4 1966171168
      %v7346 = vunpack.c.0.s8 %v7345
      %v7347 = vlaneseq
      %v7348 = vshrl.u32 %v7347, 7
      %v7349 = vsub.s32 %v7346, %v7348
      %v7350 = vrot.slane %v7336, %v7349
      %v7351 = vcombine.low %v7343, %v7350
      %v7352 = vcombine.low %v2072, %v2416
      %v7354 = vunpack.c.l.s4 1966171168
      %v7355 = vunpack.c.0.s8 %v7354
      %v7356 = vlaneseq
      %v7357 = vshrl.u32 %v7356, 7
      %v7358 = vsub.s32 %v7355, %v7357
      %v7359 = vrot.slane %v7352, %v7358
      %v7360 = vcombine.low %v4092, %v4099
      %v7361 = vcombine.low %v7359, %v4134
      %v7363 = vunpack.c.l.s4 1966171168
      %v7364 = vunpack.c.0.s8 %v7363
      %v7365 = vlaneseq
      %v7366 = vshrl.u32 %v7365, 7
      %v7367 = vsub.s32 %v7364, %v7366
      %v7368 = vrot.slane %v7360, %v7367
      %v7370 = vunpack.c.l.s4 1966171168
      %v7371 = vunpack.c.0.s8 %v7370
      %v7372 = vlaneseq
      %v7373 = vshrl.u32 %v7372, 7
      %v7374 = vsub.s32 %v7371, %v7373
      %v7375 = vrot.slane %v7361, %v7374
      %v7376 = vcombine.low %v7368, %v7375
      %v7377 = vcombine.low %v4141, %v4148
      %v7378 = vcombine.low %v4155, %v4183
      %v7380 = vunpack.c.l.s4 1966171168
      %v7381 = vunpack.c.0.s8 %v7380
      %v7382 = vlaneseq
      %v7383 = vshrl.u32 %v7382, 7
      %v7384 = vsub.s32 %v7381, %v7383
      %v7385 = vrot.slane %v7377, %v7384
      %v7387 = vunpack.c.l.s4 1966171168
      %v7388 = vunpack.c.0.s8 %v7387
      %v7389 = vlaneseq
      %v7390 = vshrl.u32 %v7389, 7
      %v7391 = vsub.s32 %v7388, %v7390
      %v7392 = vrot.slane %v7378, %v7391
      %v7393 = vcombine.low %v7385, %v7392
      %v7394 = vcombine.low %v2424, %v2222
      %v7396 = vunpack.c.l.s4 1966171168
      %v7397 = vunpack.c.0.s8 %v7396
      %v7398 = vlaneseq
      %v7399 = vshrl.u32 %v7398, 7
      %v7400 = vsub.s32 %v7397, %v7399
      %v7401 = vrot.slane %v7394, %v7400
      %v7402 = vcombine.low %v4190, %v4197
      %v7403 = vcombine.low %v4204, %v7401
      %v7405 = vunpack.c.l.s4 1966171168
      %v7406 = vunpack.c.0.s8 %v7405
      %v7407 = vlaneseq
      %v7408 = vshrl.u32 %v7407, 7
      %v7409 = vsub.s32 %v7406, %v7408
      %v7410 = vrot.slane %v7402, %v7409
      %v7412 = vunpack.c.l.s4 1966171168
      %v7413 = vunpack.c.0.s8 %v7412
      %v7414 = vlaneseq
      %v7415 = vshrl.u32 %v7414, 7
      %v7416 = vsub.s32 %v7413, %v7415
      %v7417 = vrot.slane %v7403, %v7416
      %v7418 = vcombine.low %v7410, %v7417
      %v7419 = vcombine.low %v4239, %v4246
      %v7420 = vcombine.low %v4253, %v4281
      %v7422 = vunpack.c.l.s4 1966171168
      %v7423 = vunpack.c.0.s8 %v7422
      %v7424 = vlaneseq
      %v7425 = vshrl.u32 %v7424, 7
      %v7426 = vsub.s32 %v7423, %v7425
      %v7427 = vrot.slane %v7419, %v7426
      %v7429 = vunpack.c.l.s4 1966171168
      %v7430 = vunpack.c.0.s8 %v7429
      %v7431 = vlaneseq
      %v7432 = vshrl.u32 %v7431, 7
      %v7433 = vsub.s32 %v7430, %v7432
      %v7434 = vrot.slane %v7420, %v7433
      %v7435 = vcombine.low %v7427, %v7434
      %v7436 = vcombine.low %v2296, %v2432
      %v7438 = vunpack.c.l.s4 1966171168
      %v7439 = vunpack.c.0.s8 %v7438
      %v7440 = vlaneseq
      %v7441 = vshrl.u32 %v7440, 7
      %v7442 = vsub.s32 %v7439, %v7441
      %v7443 = vrot.slane %v7436, %v7442
      %v7444 = vcombine.low %v4288, %v4295
      %v7445 = vcombine.low %v4302, %v7443
      %v7447 = vunpack.c.l.s4 1966171168
      %v7448 = vunpack.c.0.s8 %v7447
      %v7449 = vlaneseq
      %v7450 = vshrl.u32 %v7449, 7
      %v7451 = vsub.s32 %v7448, %v7450
      %v7452 = vrot.slane %v7444, %v7451
      %v7454 = vunpack.c.l.s4 1966171168
      %v7455 = vunpack.c.0.s8 %v7454
      %v7456 = vlaneseq
      %v7457 = vshrl.u32 %v7456, 7
      %v7458 = vsub.s32 %v7455, %v7457
      %v7459 = vrot.slane %v7445, %v7458
      %v7460 = vcombine.low %v7452, %v7459
      %v7461 = vcombine.low %v2473, %v2481
      %v7462 = vcombine.low %v2483, %v2466
      %v7463 = vcombine.low %v2480, %v2482
      %v7464 = vcombine.low %v2484, %v2508
      %v7466 = vunpack.c.l.s4 1966171168
      %v7467 = vunpack.c.0.s8 %v7466
      %v7468 = vlaneseq
      %v7469 = vshrl.u32 %v7468, 7
      %v7470 = vsub.s32 %v7467, %v7469
      %v7471 = vrot.slane %v7461, %v7470
      %v7473 = vunpack.c.l.s4 1966171168
      %v7474 = vunpack.c.0.s8 %v7473
      %v7475 = vlaneseq
      %v7476 = vshrl.u32 %v7475, 7
      %v7477 = vsub.s32 %v7474, %v7476
      %v7478 = vrot.slane %v7462, %v7477
      %v7480 = vunpack.c.l.s4 1966171168
      %v7481 = vunpack.c.0.s8 %v7480
      %v7482 = vlaneseq
      %v7483 = vshrl.u32 %v7482, 7
      %v7484 = vsub.s32 %v7481, %v7483
      %v7485 = vrot.slane %v7463, %v7484
      %v7487 = vunpack.c.l.s4 1966171168
      %v7488 = vunpack.c.0.s8 %v7487
      %v7489 = vlaneseq
      %v7490 = vshrl.u32 %v7489, 7
      %v7491 = vsub.s32 %v7488, %v7490
      %v7492 = vrot.slane %v7464, %v7491
      %v7493 = vcombine.low %v7471, %v7478
      %v7494 = vcombine.low %v7485, %v7492
      %v7496 = vunpack.c.l.s4 1966171168
      %v7497 = vunpack.c.0.s8 %v7496
      %v7498 = vlaneseq
      %v7499 = vshrl.u32 %v7498, 7
      %v7500 = vsub.s32 %v7497, %v7499
      %v7501 = vrot.slane %v7493, %v7500
      %v7503 = vunpack.c.l.s4 1966171168
      %v7504 = vunpack.c.0.s8 %v7503
      %v7505 = vlaneseq
      %v7506 = vshrl.u32 %v7505, 7
      %v7507 = vsub.s32 %v7504, %v7506
      %v7508 = vrot.slane %v7494, %v7507
      %v7509 = vcombine.low %v7501, %v7508
      %v7510 = vcombine.low %v2522, %v2530
      %v7511 = vcombine.low %v2532, %v2515
      %v7512 = vcombine.low %v2529, %v2531
      %v7513 = vcombine.low %v2533, %v2547
      %v7515 = vunpack.c.l.s4 1966171168
      %v7516 = vunpack.c.0.s8 %v7515
      %v7517 = vlaneseq
      %v7518 = vshrl.u32 %v7517, 7
      %v7519 = vsub.s32 %v7516, %v7518
      %v7520 = vrot.slane %v7510, %v7519
      %v7522 = vunpack.c.l.s4 1966171168
      %v7523 = vunpack.c.0.s8 %v7522
      %v7524 = vlaneseq
      %v7525 = vshrl.u32 %v7524, 7
      %v7526 = vsub.s32 %v7523, %v7525
      %v7527 = vrot.slane %v7511, %v7526
      %v7529 = vunpack.c.l.s4 1966171168
      %v7530 = vunpack.c.0.s8 %v7529
      %v7531 = vlaneseq
      %v7532 = vshrl.u32 %v7531, 7
      %v7533 = vsub.s32 %v7530, %v7532
      %v7534 = vrot.slane %v7512, %v7533
      %v7536 = vunpack.c.l.s4 1966171168
      %v7537 = vunpack.c.0.s8 %v7536
      %v7538 = vlaneseq
      %v7539 = vshrl.u32 %v7538, 7
      %v7540 = vsub.s32 %v7537, %v7539
      %v7541 = vrot.slane %v7513, %v7540
      %v7542 = vcombine.low %v7520, %v7527
      %v7543 = vcombine.low %v7534, %v7541
      %v7545 = vunpack.c.l.s4 1966171168
      %v7546 = vunpack.c.0.s8 %v7545
      %v7547 = vlaneseq
      %v7548 = vshrl.u32 %v7547, 7
      %v7549 = vsub.s32 %v7546, %v7548
      %v7550 = vrot.slane %v7542, %v7549
      %v7552 = vunpack.c.l.s4 1966171168
      %v7553 = vunpack.c.0.s8 %v7552
      %v7554 = vlaneseq
      %v7555 = vshrl.u32 %v7554, 7
      %v7556 = vsub.s32 %v7553, %v7555
      %v7557 = vrot.slane %v7543, %v7556
      %v7558 = vcombine.low %v7550, %v7557
      %v7560 = vunpack.c.l.s4 1966171168
      %v7561 = vunpack.c.0.s8 %v7560
      %v7562 = vlaneseq
      %v7563 = vshrl.u32 %v7562, 7
      %v7564 = vsub.s32 %v7561, %v7563
      %v7565 = vrot.slane %v2555, %v7564
      %v7567 = vunpack.c.l.s4 1966171168
      %v7568 = vunpack.c.0.s8 %v7567
      %v7569 = vlaneseq
      %v7570 = vshrl.u32 %v7569, 7
      %v7571 = vsub.s32 %v7568, %v7570
      %v7572 = vrot.slane %v7565, %v7571
      %7573 = vrot.lane.b32.xlu0 %v6771, 12
      %v7574 = vpop.permute.xlu0 %7573
      %7575 = vrot.lane.b32.xlu0 %v6788, 12
      %v7576 = vpop.permute.xlu0 %7575
      %7577 = vrot.lane.b32.xlu0 %v6813, 12
      %v7578 = vpop.permute.xlu0 %7577
      %7579 = vrot.lane.b32.xlu0 %v6830, 12
      %v7580 = vpop.permute.xlu0 %7579
      %7581 = vrot.lane.b32.xlu0 %v6855, 12
      %v7582 = vpop.permute.xlu0 %7581
      %7583 = vrot.lane.b32.xlu0 %v6872, 12
      %v7584 = vpop.permute.xlu0 %7583
      %7585 = vrot.lane.b32.xlu0 %v6897, 12
      %v7586 = vpop.permute.xlu0 %7585
      %7587 = vrot.lane.b32.xlu0 %v6914, 12
      %v7588 = vpop.permute.xlu0 %7587
      %7589 = vrot.lane.b32.xlu0 %v6939, 12
      %v7590 = vpop.permute.xlu0 %7589
      %7591 = vrot.lane.b32.xlu0 %v6956, 12
      %v7592 = vpop.permute.xlu0 %7591
      %7593 = vrot.lane.b32.xlu0 %v6981, 12
      %v7594 = vpop.permute.xlu0 %7593
      %7595 = vrot.lane.b32.xlu0 %v6998, 12
      %v7596 = vpop.permute.xlu0 %7595
      %7597 = vrot.lane.b32.xlu0 %v7023, 12
      %v7598 = vpop.permute.xlu0 %7597
      %7599 = vrot.lane.b32.xlu0 %v7040, 12
      %v7600 = vpop.permute.xlu0 %7599
      %7601 = vrot.lane.b32.xlu0 %v7065, 12
      %v7602 = vpop.permute.xlu0 %7601
      %7603 = vrot.lane.b32.xlu0 %v7082, 12
      %v7604 = vpop.permute.xlu0 %7603
      %7605 = vrot.lane.b32.xlu0 %v7107, 12
      %v7606 = vpop.permute.xlu0 %7605
      %7607 = vrot.lane.b32.xlu0 %v7124, 12
      %v7608 = vpop.permute.xlu0 %7607
      %7609 = vrot.lane.b32.xlu0 %v7141, 12
      %v7610 = vpop.permute.xlu0 %7609
      %7611 = vrot.lane.b32.xlu0 %v7166, 12
      %v7612 = vpop.permute.xlu0 %7611
      %7613 = vrot.lane.b32.xlu0 %v7183, 12
      %v7614 = vpop.permute.xlu0 %7613
      %7615 = vrot.lane.b32.xlu0 %v7208, 12
      %v7616 = vpop.permute.xlu0 %7615
      %7617 = vrot.lane.b32.xlu0 %v7225, 12
      %v7618 = vpop.permute.xlu0 %7617
      %7619 = vrot.lane.b32.xlu0 %v7250, 12
      %v7620 = vpop.permute.xlu0 %7619
      %7621 = vrot.lane.b32.xlu0 %v7267, 12
      %v7622 = vpop.permute.xlu0 %7621
      %7623 = vrot.lane.b32.xlu0 %v7292, 12
      %v7624 = vpop.permute.xlu0 %7623
      %7625 = vrot.lane.b32.xlu0 %v7309, 12
      %v7626 = vpop.permute.xlu0 %7625
      %7627 = vrot.lane.b32.xlu0 %v7334, 12
      %v7628 = vpop.permute.xlu0 %7627
      %7629 = vrot.lane.b32.xlu0 %v7351, 12
      %v7630 = vpop.permute.xlu0 %7629
      %7631 = vrot.lane.b32.xlu0 %v7376, 12
      %v7632 = vpop.permute.xlu0 %7631
      %7633 = vrot.lane.b32.xlu0 %v7393, 12
      %v7634 = vpop.permute.xlu0 %7633
      %7635 = vrot.lane.b32.xlu0 %v7418, 12
      %v7636 = vpop.permute.xlu0 %7635
      %7637 = vrot.lane.b32.xlu0 %v7435, 12
      %v7638 = vpop.permute.xlu0 %7637
      %7639 = vrot.lane.b32.xlu0 %v7460, 12
      %v7640 = vpop.permute.xlu0 %7639
      %7641 = vrot.lane.b32.xlu0 %v7509, 12
      %v7642 = vpop.permute.xlu0 %7641
      %7643 = vrot.lane.b32.xlu0 %v7558, 12
      %v7644 = vpop.permute.xlu0 %7643
      %7645 = vrot.lane.b32.xlu0 %v7572, 12
      %v7646 = vpop.permute.xlu0 %7645
      %vm7684 = vcmask 31744
      %v7685 = vsel %vm7684, %v2604, %v6150
      %v7686 = vsel %vm7684, %v2653, %v6152
      %v7687 = vsel %vm7684, %v2702, %v6154
      %v7688 = vsel %vm7684, %v2751, %v6156
      %v7689 = vsel %vm7684, %v2800, %v6158
      %v7690 = vsel %vm7684, %v2849, %v6160
      %v7691 = vsel %vm7684, %v2898, %v6162
      %v7692 = vsel %vm7684, %v2947, %v6164
      %v7693 = vsel %vm7684, %v2996, %v6166
      %v7694 = vsel %vm7684, %v3045, %v6168
      %v7695 = vsel %vm7684, %v3094, %v6170
      %v7696 = vsel %vm7684, %v3143, %v6172
      %v7697 = vsel %vm7684, %v3192, %v6174
      %v7698 = vsel %vm7684, %v3241, %v6176
      %v7699 = vsel %vm7684, %v3290, %v6178
      %v7700 = vsel %vm7684, %v3339, %v6180
      %v7701 = vsel %vm7684, %v3388, %v6182
      %v7702 = vsel %vm7684, %v3437, %v6184
      %v7703 = vsel %vm7684, %v3486, %v6186
      %v7704 = vsel %vm7684, %v3535, %v6188
      %v7705 = vsel %vm7684, %v3584, %v6190
      %v7706 = vsel %vm7684, %v3633, %v6192
      %v7707 = vsel %vm7684, %v3682, %v6194
      %v7708 = vsel %vm7684, %v3731, %v6196
      %v7709 = vsel %vm7684, %v3780, %v6198
      %v7710 = vsel %vm7684, %v3829, %v6200
      %v7711 = vsel %vm7684, %v3878, %v6202
      %v7712 = vsel %vm7684, %v3927, %v6204
      %v7713 = vsel %vm7684, %v3976, %v6206
      %v7714 = vsel %vm7684, %v4025, %v6208
      %v7715 = vsel %vm7684, %v4074, %v6210
      %v7716 = vsel %vm7684, %v4123, %v6212
      %v7717 = vsel %vm7684, %v4172, %v6214
      %v7718 = vsel %vm7684, %v4221, %v6216
      %v7719 = vsel %vm7684, %v4270, %v6218
      %v7720 = vsel %vm7684, %v4319, %v6220
      %v7721 = vsel %vm7684, %v4333, %v6222
      %vm7722 = vcmask 64512
      %v7723 = vsel %vm7722, %v7685, %v6645
      %v7724 = vsel %vm7722, %v7686, %v6647
      %v7725 = vsel %vm7722, %v7687, %v6649
      %v7726 = vsel %vm7722, %v7688, %v6651
      %v7727 = vsel %vm7722, %v7689, %v6653
      %v7728 = vsel %vm7722, %v7690, %v6655
      %v7729 = vsel %vm7722, %v7691, %v6657
      %v7730 = vsel %vm7722, %v7692, %v6659
      %v7731 = vsel %vm7722, %v7693, %v6661
      %v7732 = vsel %vm7722, %v7694, %v6663
      %v7733 = vsel %vm7722, %v7695, %v6665
      %v7734 = vsel %vm7722, %v7696, %v6667
      %v7735 = vsel %vm7722, %v7697, %v6669
      %v7736 = vsel %vm7722, %v7698, %v6671
      %v7737 = vsel %vm7722, %v7699, %v6673
      %v7738 = vsel %vm7722, %v7700, %v6675
      %v7739 = vsel %vm7722, %v7701, %v6677
      %v7740 = vsel %vm7722, %v7702, %v6679
      %v7741 = vsel %vm7722, %v7703, %v6681
      %v7742 = vsel %vm7722, %v7704, %v6683
      %v7743 = vsel %vm7722, %v7705, %v6685
      %v7744 = vsel %vm7722, %v7706, %v6687
      %v7745 = vsel %vm7722, %v7707, %v6689
      %v7746 = vsel %vm7722, %v7708, %v6691
      %v7747 = vsel %vm7722, %v7709, %v6693
      %v7748 = vsel %vm7722, %v7710, %v6695
      %v7749 = vsel %vm7722, %v7711, %v6697
      %v7750 = vsel %vm7722, %v7712, %v6699
      %v7751 = vsel %vm7722, %v7713, %v6701
      %v7752 = vsel %vm7722, %v7714, %v6703
      %v7753 = vsel %vm7722, %v7715, %v6705
      %v7754 = vsel %vm7722, %v7716, %v6707
      %v7755 = vsel %vm7722, %v7717, %v6709
      %v7756 = vsel %vm7722, %v7718, %v6711
      %v7757 = vsel %vm7722, %v7719, %v6713
      %v7758 = vsel %vm7722, %v7720, %v6715
      %v7759 = vsel %vm7722, %v7721, %v6717
      %vm7760 = vcmask 97280
      %v7761 = vsel %vm7760, %v7723, %v7574
      %v7762 = vsel %vm7760, %v7724, %v7576
      %v7763 = vsel %vm7760, %v7725, %v7578
      %v7764 = vsel %vm7760, %v7726, %v7580
      %v7765 = vsel %vm7760, %v7727, %v7582
      %v7766 = vsel %vm7760, %v7728, %v7584
      %v7767 = vsel %vm7760, %v7729, %v7586
      %v7768 = vsel %vm7760, %v7730, %v7588
      %v7769 = vsel %vm7760, %v7731, %v7590
      %v7770 = vsel %vm7760, %v7732, %v7592
      %v7771 = vsel %vm7760, %v7733, %v7594
      %v7772 = vsel %vm7760, %v7734, %v7596
      %v7773 = vsel %vm7760, %v7735, %v7598
      %v7774 = vsel %vm7760, %v7736, %v7600
      %v7775 = vsel %vm7760, %v7737, %v7602
      %v7776 = vsel %vm7760, %v7738, %v7604
      %v7777 = vsel %vm7760, %v7739, %v7606
      %v7778 = vsel %vm7760, %v7740, %v7608
      %v7779 = vsel %vm7760, %v7741, %v7610
      %v7780 = vsel %vm7760, %v7742, %v7612
      %v7781 = vsel %vm7760, %v7743, %v7614
      %v7782 = vsel %vm7760, %v7744, %v7616
      %v7783 = vsel %vm7760, %v7745, %v7618
      %v7784 = vsel %vm7760, %v7746, %v7620
      %v7785 = vsel %vm7760, %v7747, %v7622
      %v7786 = vsel %vm7760, %v7748, %v7624
      %v7787 = vsel %vm7760, %v7749, %v7626
      %v7788 = vsel %vm7760, %v7750, %v7628
      %v7789 = vsel %vm7760, %v7751, %v7630
      %v7790 = vsel %vm7760, %v7752, %v7632
      %v7791 = vsel %vm7760, %v7753, %v7634
      %v7792 = vsel %vm7760, %v7754, %v7636
      %v7793 = vsel %vm7760, %v7755, %v7638
      %v7794 = vsel %vm7760, %v7756, %v7640
      %v7795 = vsel %vm7760, %v7757, %v7642
      %v7796 = vsel %vm7760, %v7758, %v7644
      %v7797 = vsel %vm7760, %v7759, %v7646
      %v7798 = vld [vmem:[%s2] sm:$0xff]
      %v7799 = vld [vmem:[%s2 + $0x8] sm:$0xff]
      %vm7800 = vcmask 130048
      %v7802 = vsel %vm7800, %v7761, 0
      %v7805 = vsel %vm7800, %v7762, 0
      %v7808 = vsel %vm7800, %v7763, 0
      %v7811 = vsel %vm7800, %v7764, 0
      %v7814 = vsel %vm7800, %v7765, 0
      %v7817 = vsel %vm7800, %v7766, 0
      %v7820 = vsel %vm7800, %v7767, 0
      %v7823 = vsel %vm7800, %v7768, 0
      %v7826 = vsel %vm7800, %v7769, 0
      %v7829 = vsel %vm7800, %v7770, 0
      %v7832 = vsel %vm7800, %v7771, 0
      %v7835 = vsel %vm7800, %v7772, 0
      %v7838 = vsel %vm7800, %v7773, 0
      %v7841 = vsel %vm7800, %v7774, 0
      %v7844 = vsel %vm7800, %v7775, 0
      %v7847 = vsel %vm7800, %v7776, 0
      %v7850 = vsel %vm7800, %v7777, 0
      %v7853 = vsel %vm7800, %v7778, 0
      %v7856 = vsel %vm7800, %v7779, 0
      %v7859 = vsel %vm7800, %v7780, 0
      %v7862 = vsel %vm7800, %v7781, 0
      %v7865 = vsel %vm7800, %v7782, 0
      %v7868 = vsel %vm7800, %v7783, 0
      %v7871 = vsel %vm7800, %v7784, 0
      %v7874 = vsel %vm7800, %v7785, 0
      %v7877 = vsel %vm7800, %v7786, 0
      %v7880 = vsel %vm7800, %v7787, 0
      %v7883 = vsel %vm7800, %v7788, 0
      %v7886 = vsel %vm7800, %v7789, 0
      %v7889 = vsel %vm7800, %v7790, 0
      %v7892 = vsel %vm7800, %v7791, 0
      %v7895 = vsel %vm7800, %v7792, 0
      %v7898 = vsel %vm7800, %v7793, 0
      %v7901 = vsel %vm7800, %v7794, 0
      %v7904 = vsel %vm7800, %v7795, 0
      %v7907 = vsel %vm7800, %v7796, 0
      %v7910 = vsel %vm7800, %v7797, 0
      %7912 = vmatprep.subr.mxu0 0.0
      %7913 = vmatpush1.msra.mxu0 %v7798
      %7914 = vmatprep.subr.mxu0 0.0
      %7915 = vmatpush1.msra.mxu0 %v7799
      %7916 = vmatprep.subr.mxu0 0.0
      %7917 = vmatpush1.msra.mxu0 0.0
      %7918 = vmatprep.subr.mxu0 0.0
      %7919 = vmatpush1.msra.mxu0 0.0
      %7920 = vmatprep.subr.mxu0 0.0
      %7921 = vmatpush1.msra.mxu0 0.0
      %7922 = vmatprep.subr.mxu0 0.0
      %7923 = vmatpush1.msra.mxu0 0.0
      %7924 = vmatprep.subr.mxu0 0.0
      %7925 = vmatpush1.msra.mxu0 0.0
      %7926 = vmatprep.subr.mxu0 0.0
      %7927 = vmatpush1.msra.mxu0 0.0
      %7928 = vmatprep.subr.mxu0 0.0
      %7929 = vmatpush1.msra.mxu0 0.0
      %7930 = vmatprep.subr.mxu0 0.0
      %7931 = vmatpush1.msra.mxu0 0.0
      %7932 = vmatprep.subr.mxu0 0.0
      %7933 = vmatpush1.msra.mxu0 0.0
      %7934 = vmatprep.subr.mxu0 0.0
      %7935 = vmatpush1.msra.mxu0 0.0
      %7936 = vmatprep.subr.mxu0 0.0
      %7937 = vmatpush1.msra.mxu0 0.0
      %7938 = vmatprep.subr.mxu0 0.0
      %7939 = vmatpush1.msra.mxu0 0.0
      %7940 = vmatprep.subr.mxu0 0.0
      %7941 = vmatpush1.msra.mxu0 0.0
      %7942 = vmatprep.subr.mxu0 0.0
      %7943 = vmatpush1.msra.mxu0 0.0
      %7944 = vmatprep.subr.mxu0 0.0
      %7945 = vmatpush1.msra.mxu0 0.0
      %7946 = vmatprep.subr.mxu0 0.0
      %7947 = vmatpush1.msra.mxu0 0.0
      %7948 = vmatprep.subr.mxu0 0.0
      %7949 = vmatpush1.msra.mxu0 0.0
      %7950 = vmatprep.subr.mxu0 0.0
      %7951 = vmatpush1.msra.mxu0 0.0
      %7952 = vmatprep.subr.mxu0 0.0
      %7953 = vmatpush1.msra.mxu0 0.0
      %7954 = vmatprep.subr.mxu0 0.0
      %7955 = vmatpush1.msra.mxu0 0.0
      %7956 = vmatprep.subr.mxu0 0.0
      %7957 = vmatpush1.msra.mxu0 0.0
      %7958 = vmatprep.subr.mxu0 0.0
      %7959 = vmatpush1.msra.mxu0 0.0
      %7960 = vmatprep.subr.mxu0 0.0
      %7961 = vmatpush1.msra.mxu0 0.0
      %7962 = vmatprep.subr.mxu0 0.0
      %7963 = vmatpush1.msra.mxu0 0.0
      %7964 = vmatprep.subr.mxu0 0.0
      %7965 = vmatpush1.msra.mxu0 0.0
      %7966 = vmatprep.subr.mxu0 0.0
      %7967 = vmatpush1.msra.mxu0 0.0
      %7968 = vmatprep.subr.mxu0 0.0
      %7969 = vmatpush1.msra.mxu0 0.0
      %7970 = vmatprep.subr.mxu0 0.0
      %7971 = vmatpush1.msra.mxu0 0.0
      %7972 = vmatprep.subr.mxu0 0.0
      %7973 = vmatpush1.msra.mxu0 0.0
      %7974 = vmatprep.subr.mxu0 0.0
      %7975 = vmatpush1.msra.mxu0 0.0
      %7976 = vmatprep.mubr.f32.mxu0 0.0
      %7977 = vmatmul.mubr.f32.gmra.mrb[0].mxu0 %v7802
      %v7978 = vpop.f32.mrb[0].mxu0
      %v7979 = vadd.f32 0.0, %v7978
      %v7980 = vpop.f32.mrb[0].mxu0
      %7981 = vmatprep.mubr.f32.mxu0 0.0
      %7982 = vmatmul.mubr.f32.gmra.mrb[0].mxu0 %v7805
      %v7983 = vpop.f32.mrb[0].mxu0
      %v7984 = vadd.f32 0.0, %v7983
      %v7985 = vpop.f32.mrb[0].mxu0
      %7986 = vmatprep.mubr.f32.mxu0 0.0
      %7987 = vmatmul.mubr.f32.gmra.mrb[0].mxu0 %v7808
      %v7988 = vpop.f32.mrb[0].mxu0
      %v7989 = vadd.f32 0.0, %v7988
      %v7990 = vpop.f32.mrb[0].mxu0
      %7991 = vmatprep.mubr.f32.mxu0 0.0
      %7992 = vmatmul.mubr.f32.gmra.mrb[0].mxu0 %v7811
      %v7993 = vpop.f32.mrb[0].mxu0
      %v7994 = vadd.f32 0.0, %v7993
      %v7995 = vpop.f32.mrb[0].mxu0
      %7996 = vmatprep.mubr.f32.mxu0 0.0
      %7997 = vmatmul.mubr.f32.gmra.mrb[0].mxu0 %v7814
      %v7998 = vpop.f32.mrb[0].mxu0
      %v7999 = vadd.f32 0.0, %v7998
      %v8000 = vpop.f32.mrb[0].mxu0
      %8001 = vmatprep.mubr.f32.mxu0 0.0
      %8002 = vmatmul.mubr.f32.gmra.mrb[0].mxu0 %v7817
      %v8003 = vpop.f32.mrb[0].mxu0
      %v8004 = vadd.f32 0.0, %v8003
      %v8005 = vpop.f32.mrb[0].mxu0
      %8006 = vmatprep.mubr.f32.mxu0 0.0
      %8007 = vmatmul.mubr.f32.gmra.mrb[0].mxu0 %v7820
      %v8008 = vpop.f32.mrb[0].mxu0
      %v8009 = vadd.f32 0.0, %v8008
      %v8010 = vpop.f32.mrb[0].mxu0
      %8011 = vmatprep.mubr.f32.mxu0 0.0
      %8012 = vmatmul.mubr.f32.gmra.mrb[0].mxu0 %v7823
      %v8013 = vpop.f32.mrb[0].mxu0
      %v8014 = vadd.f32 0.0, %v8013
      %v8015 = vpop.f32.mrb[0].mxu0
      %8016 = vmatprep.mubr.f32.mxu0 0.0
      %8017 = vmatmul.mubr.f32.gmra.mrb[0].mxu0 %v7826
      %v8018 = vpop.f32.mrb[0].mxu0
      %v8019 = vadd.f32 0.0, %v8018
      %v8020 = vpop.f32.mrb[0].mxu0
      %8021 = vmatprep.mubr.f32.mxu0 0.0
      %8022 = vmatmul.mubr.f32.gmra.mrb[0].mxu0 %v7829
      %v8023 = vpop.f32.mrb[0].mxu0
      %v8024 = vadd.f32 0.0, %v8023
      %v8025 = vpop.f32.mrb[0].mxu0
      %8026 = vmatprep.mubr.f32.mxu0 0.0
      %8027 = vmatmul.mubr.f32.gmra.mrb[0].mxu0 %v7832
      %v8028 = vpop.f32.mrb[0].mxu0
      %v8029 = vadd.f32 0.0, %v8028
      %v8030 = vpop.f32.mrb[0].mxu0
      %8031 = vmatprep.mubr.f32.mxu0 0.0
      %8032 = vmatmul.mubr.f32.gmra.mrb[0].mxu0 %v7835
      %v8033 = vpop.f32.mrb[0].mxu0
      %v8034 = vadd.f32 0.0, %v8033
      %v8035 = vpop.f32.mrb[0].mxu0
      %8036 = vmatprep.mubr.f32.mxu0 0.0
      %8037 = vmatmul.mubr.f32.gmra.mrb[0].mxu0 %v7838
      %v8038 = vpop.f32.mrb[0].mxu0
      %v8039 = vadd.f32 0.0, %v8038
      %v8040 = vpop.f32.mrb[0].mxu0
      %8041 = vmatprep.mubr.f32.mxu0 0.0
      %8042 = vmatmul.mubr.f32.gmra.mrb[0].mxu0 %v7841
      %v8043 = vpop.f32.mrb[0].mxu0
      %v8044 = vadd.f32 0.0, %v8043
      %v8045 = vpop.f32.mrb[0].mxu0
      %8046 = vmatprep.mubr.f32.mxu0 0.0
      %8047 = vmatmul.mubr.f32.gmra.mrb[0].mxu0 %v7844
      %v8048 = vpop.f32.mrb[0].mxu0
      %v8049 = vadd.f32 0.0, %v8048
      %v8050 = vpop.f32.mrb[0].mxu0
      %8051 = vmatprep.mubr.f32.mxu0 0.0
      %8052 = vmatmul.mubr.f32.gmra.mrb[0].mxu0 %v7847
      %v8053 = vpop.f32.mrb[0].mxu0
      %v8054 = vadd.f32 0.0, %v8053
      %v8055 = vpop.f32.mrb[0].mxu0
      %8056 = vmatprep.mubr.f32.mxu0 0.0
      %8057 = vmatmul.mubr.f32.gmra.mrb[0].mxu0 %v7850
      %v8058 = vpop.f32.mrb[0].mxu0
      %v8059 = vadd.f32 0.0, %v8058
      %v8060 = vpop.f32.mrb[0].mxu0
      %8061 = vmatprep.mubr.f32.mxu0 0.0
      %8062 = vmatmul.mubr.f32.gmra.mrb[0].mxu0 %v7853
      %v8063 = vpop.f32.mrb[0].mxu0
      %v8064 = vadd.f32 0.0, %v8063
      %v8065 = vpop.f32.mrb[0].mxu0
      %8066 = vmatprep.mubr.f32.mxu0 0.0
      %8067 = vmatmul.mubr.f32.gmra.mrb[0].mxu0 %v7856
      %v8068 = vpop.f32.mrb[0].mxu0
      %v8069 = vadd.f32 0.0, %v8068
      %v8070 = vpop.f32.mrb[0].mxu0
      %8071 = vmatprep.mubr.f32.mxu0 0.0
      %8072 = vmatmul.mubr.f32.gmra.mrb[0].mxu0 %v7859
      %v8073 = vpop.f32.mrb[0].mxu0
      %v8074 = vadd.f32 0.0, %v8073
      %v8075 = vpop.f32.mrb[0].mxu0
      %8076 = vmatprep.mubr.f32.mxu0 0.0
      %8077 = vmatmul.mubr.f32.gmra.mrb[0].mxu0 %v7862
      %v8078 = vpop.f32.mrb[0].mxu0
      %v8079 = vadd.f32 0.0, %v8078
      %v8080 = vpop.f32.mrb[0].mxu0
      %8081 = vmatprep.mubr.f32.mxu0 0.0
      %8082 = vmatmul.mubr.f32.gmra.mrb[0].mxu0 %v7865
      %v8083 = vpop.f32.mrb[0].mxu0
      %v8084 = vadd.f32 0.0, %v8083
      %v8085 = vpop.f32.mrb[0].mxu0
      %8086 = vmatprep.mubr.f32.mxu0 0.0
      %8087 = vmatmul.mubr.f32.gmra.mrb[0].mxu0 %v7868
      %v8088 = vpop.f32.mrb[0].mxu0
      %v8089 = vadd.f32 0.0, %v8088
      %v8090 = vpop.f32.mrb[0].mxu0
      %8091 = vmatprep.mubr.f32.mxu0 0.0
      %8092 = vmatmul.mubr.f32.gmra.mrb[0].mxu0 %v7871
      %v8093 = vpop.f32.mrb[0].mxu0
      %v8094 = vadd.f32 0.0, %v8093
      %v8095 = vpop.f32.mrb[0].mxu0
      %8096 = vmatprep.mubr.f32.mxu0 0.0
      %8097 = vmatmul.mubr.f32.gmra.mrb[0].mxu0 %v7874
      %v8098 = vpop.f32.mrb[0].mxu0
      %v8099 = vadd.f32 0.0, %v8098
      %v8100 = vpop.f32.mrb[0].mxu0
      %8101 = vmatprep.mubr.f32.mxu0 0.0
      %8102 = vmatmul.mubr.f32.gmra.mrb[0].mxu0 %v7877
      %v8103 = vpop.f32.mrb[0].mxu0
      %v8104 = vadd.f32 0.0, %v8103
      %v8105 = vpop.f32.mrb[0].mxu0
      %8106 = vmatprep.mubr.f32.mxu0 0.0
      %8107 = vmatmul.mubr.f32.gmra.mrb[0].mxu0 %v7880
      %v8108 = vpop.f32.mrb[0].mxu0
      %v8109 = vadd.f32 0.0, %v8108
      %v8110 = vpop.f32.mrb[0].mxu0
      %8111 = vmatprep.mubr.f32.mxu0 0.0
      %8112 = vmatmul.mubr.f32.gmra.mrb[0].mxu0 %v7883
      %v8113 = vpop.f32.mrb[0].mxu0
      %v8114 = vadd.f32 0.0, %v8113
      %v8115 = vpop.f32.mrb[0].mxu0
      %8116 = vmatprep.mubr.f32.mxu0 0.0
      %8117 = vmatmul.mubr.f32.gmra.mrb[0].mxu0 %v7886
      %v8118 = vpop.f32.mrb[0].mxu0
      %v8119 = vadd.f32 0.0, %v8118
      %v8120 = vpop.f32.mrb[0].mxu0
      %8121 = vmatprep.mubr.f32.mxu0 0.0
      %8122 = vmatmul.mubr.f32.gmra.mrb[0].mxu0 %v7889
      %v8123 = vpop.f32.mrb[0].mxu0
      %v8124 = vadd.f32 0.0, %v8123
      %v8125 = vpop.f32.mrb[0].mxu0
      %8126 = vmatprep.mubr.f32.mxu0 0.0
      %8127 = vmatmul.mubr.f32.gmra.mrb[0].mxu0 %v7892
      %v8128 = vpop.f32.mrb[0].mxu0
      %v8129 = vadd.f32 0.0, %v8128
      %v8130 = vpop.f32.mrb[0].mxu0
      %8131 = vmatprep.mubr.f32.mxu0 0.0
      %8132 = vmatmul.mubr.f32.gmra.mrb[0].mxu0 %v7895
      %v8133 = vpop.f32.mrb[0].mxu0
      %v8134 = vadd.f32 0.0, %v8133
      %v8135 = vpop.f32.mrb[0].mxu0
      %8136 = vmatprep.mubr.f32.mxu0 0.0
      %8137 = vmatmul.mubr.f32.gmra.mrb[0].mxu0 %v7898
      %v8138 = vpop.f32.mrb[0].mxu0
      %v8139 = vadd.f32 0.0, %v8138
      %v8140 = vpop.f32.mrb[0].mxu0
      %8141 = vmatprep.mubr.f32.mxu0 0.0
      %8142 = vmatmul.mubr.f32.gmra.mrb[0].mxu0 %v7901
      %v8143 = vpop.f32.mrb[0].mxu0
      %v8144 = vadd.f32 0.0, %v8143
      %v8145 = vpop.f32.mrb[0].mxu0
      %8146 = vmatprep.mubr.f32.mxu0 0.0
      %8147 = vmatmul.mubr.f32.gmra.mrb[0].mxu0 %v7904
      %v8148 = vpop.f32.mrb[0].mxu0
      %v8149 = vadd.f32 0.0, %v8148
      %v8150 = vpop.f32.mrb[0].mxu0
      %8151 = vmatprep.mubr.f32.mxu0 0.0
      %8152 = vmatmul.mubr.f32.gmra.mrb[0].mxu0 %v7907
      %v8153 = vpop.f32.mrb[0].mxu0
      %v8154 = vadd.f32 0.0, %v8153
      %v8155 = vpop.f32.mrb[0].mxu0
      %8156 = vmatprep.mubr.f32.mxu0 0.0
      %8157 = vmatmul.mubr.f32.gmra.mrb[0].mxu0 %v7910
      %v8158 = vpop.f32.mrb[0].mxu0
      %v8159 = vadd.f32 0.0, %v8158
      %v8160 = vpop.f32.mrb[0].mxu0
      %8161 = vdwg.mxu0
      %v8199 = vcombine.high %v7979, %v7979
      %v8201 = vunpack.c.l.s4 1966171168
      %v8202 = vunpack.c.0.s8 %v8201
      %v8203 = vlaneseq
      %v8204 = vshrl.u32 %v8203, 7
      %v8205 = vsub.s32 %v8202, %v8204
      %v8206 = vrot.slane %v7979, %v8205
      %v8208 = vunpack.c.l.s4 1966171168
      %v8209 = vunpack.c.0.s8 %v8208
      %v8210 = vlaneseq
      %v8211 = vshrl.u32 %v8210, 7
      %v8212 = vsub.s32 %v8209, %v8211
      %v8213 = vrot.slane %v8199, %v8212
      %v8214 = vcombine.high %v8206, %v8206
      %v8215 = vcombine.high %v8213, %v8213
      %v8217 = vunpack.c.l.s4 1966171168
      %v8218 = vunpack.c.0.s8 %v8217
      %v8219 = vlaneseq
      %v8220 = vshrl.u32 %v8219, 7
      %v8221 = vsub.s32 %v8218, %v8220
      %v8222 = vrot.slane %v8206, %v8221
      %v8224 = vunpack.c.l.s4 1966171168
      %v8225 = vunpack.c.0.s8 %v8224
      %v8226 = vlaneseq
      %v8227 = vshrl.u32 %v8226, 7
      %v8228 = vsub.s32 %v8225, %v8227
      %v8229 = vrot.slane %v8213, %v8228
      %v8231 = vunpack.c.l.s4 1966171168
      %v8232 = vunpack.c.0.s8 %v8231
      %v8233 = vlaneseq
      %v8234 = vshrl.u32 %v8233, 7
      %v8235 = vsub.s32 %v8232, %v8234
      %v8236 = vrot.slane %v8214, %v8235
      %v8238 = vunpack.c.l.s4 1966171168
      %v8239 = vunpack.c.0.s8 %v8238
      %v8240 = vlaneseq
      %v8241 = vshrl.u32 %v8240, 7
      %v8242 = vsub.s32 %v8239, %v8241
      %v8243 = vrot.slane %v8215, %v8242
      %v8244 = vcombine.high %v8222, %v8222
      %v8245 = vcombine.high %v8229, %v8229
      %v8246 = vcombine.high %v8236, %v8236
      %v8247 = vcombine.high %v8243, %v8243
      %v8248 = vcombine.high %v7984, %v7984
      %v8250 = vunpack.c.l.s4 1966171168
      %v8251 = vunpack.c.0.s8 %v8250
      %v8252 = vlaneseq
      %v8253 = vshrl.u32 %v8252, 7
      %v8254 = vsub.s32 %v8251, %v8253
      %v8255 = vrot.slane %v7984, %v8254
      %v8257 = vunpack.c.l.s4 1966171168
      %v8258 = vunpack.c.0.s8 %v8257
      %v8259 = vlaneseq
      %v8260 = vshrl.u32 %v8259, 7
      %v8261 = vsub.s32 %v8258, %v8260
      %v8262 = vrot.slane %v8248, %v8261
      %v8263 = vcombine.high %v8255, %v8255
      %v8264 = vcombine.high %v8262, %v8262
      %v8266 = vunpack.c.l.s4 1966171168
      %v8267 = vunpack.c.0.s8 %v8266
      %v8268 = vlaneseq
      %v8269 = vshrl.u32 %v8268, 7
      %v8270 = vsub.s32 %v8267, %v8269
      %v8271 = vrot.slane %v8255, %v8270
      %v8273 = vunpack.c.l.s4 1966171168
      %v8274 = vunpack.c.0.s8 %v8273
      %v8275 = vlaneseq
      %v8276 = vshrl.u32 %v8275, 7
      %v8277 = vsub.s32 %v8274, %v8276
      %v8278 = vrot.slane %v8262, %v8277
      %v8280 = vunpack.c.l.s4 1966171168
      %v8281 = vunpack.c.0.s8 %v8280
      %v8282 = vlaneseq
      %v8283 = vshrl.u32 %v8282, 7
      %v8284 = vsub.s32 %v8281, %v8283
      %v8285 = vrot.slane %v8263, %v8284
      %v8287 = vunpack.c.l.s4 1966171168
      %v8288 = vunpack.c.0.s8 %v8287
      %v8289 = vlaneseq
      %v8290 = vshrl.u32 %v8289, 7
      %v8291 = vsub.s32 %v8288, %v8290
      %v8292 = vrot.slane %v8264, %v8291
      %v8293 = vcombine.high %v8271, %v8271
      %v8294 = vcombine.high %v8278, %v8278
      %v8295 = vcombine.high %v8285, %v8285
      %v8296 = vcombine.high %v8292, %v8292
      %v8297 = vcombine.high %v7989, %v7989
      %v8299 = vunpack.c.l.s4 1966171168
      %v8300 = vunpack.c.0.s8 %v8299
      %v8301 = vlaneseq
      %v8302 = vshrl.u32 %v8301, 7
      %v8303 = vsub.s32 %v8300, %v8302
      %v8304 = vrot.slane %v7989, %v8303
      %v8306 = vunpack.c.l.s4 1966171168
      %v8307 = vunpack.c.0.s8 %v8306
      %v8308 = vlaneseq
      %v8309 = vshrl.u32 %v8308, 7
      %v8310 = vsub.s32 %v8307, %v8309
      %v8311 = vrot.slane %v8297, %v8310
      %v8312 = vcombine.high %v8304, %v8304
      %v8313 = vcombine.high %v8311, %v8311
      %v8315 = vunpack.c.l.s4 1966171168
      %v8316 = vunpack.c.0.s8 %v8315
      %v8317 = vlaneseq
      %v8318 = vshrl.u32 %v8317, 7
      %v8319 = vsub.s32 %v8316, %v8318
      %v8320 = vrot.slane %v8304, %v8319
      %v8322 = vunpack.c.l.s4 1966171168
      %v8323 = vunpack.c.0.s8 %v8322
      %v8324 = vlaneseq
      %v8325 = vshrl.u32 %v8324, 7
      %v8326 = vsub.s32 %v8323, %v8325
      %v8327 = vrot.slane %v8311, %v8326
      %v8329 = vunpack.c.l.s4 1966171168
      %v8330 = vunpack.c.0.s8 %v8329
      %v8331 = vlaneseq
      %v8332 = vshrl.u32 %v8331, 7
      %v8333 = vsub.s32 %v8330, %v8332
      %v8334 = vrot.slane %v8312, %v8333
      %v8336 = vunpack.c.l.s4 1966171168
      %v8337 = vunpack.c.0.s8 %v8336
      %v8338 = vlaneseq
      %v8339 = vshrl.u32 %v8338, 7
      %v8340 = vsub.s32 %v8337, %v8339
      %v8341 = vrot.slane %v8313, %v8340
      %v8342 = vcombine.high %v8320, %v8320
      %v8343 = vcombine.high %v8327, %v8327
      %v8344 = vcombine.high %v8334, %v8334
      %v8345 = vcombine.high %v8341, %v8341
      %v8346 = vcombine.high %v7994, %v7994
      %v8348 = vunpack.c.l.s4 1966171168
      %v8349 = vunpack.c.0.s8 %v8348
      %v8350 = vlaneseq
      %v8351 = vshrl.u32 %v8350, 7
      %v8352 = vsub.s32 %v8349, %v8351
      %v8353 = vrot.slane %v7994, %v8352
      %v8355 = vunpack.c.l.s4 1966171168
      %v8356 = vunpack.c.0.s8 %v8355
      %v8357 = vlaneseq
      %v8358 = vshrl.u32 %v8357, 7
      %v8359 = vsub.s32 %v8356, %v8358
      %v8360 = vrot.slane %v8346, %v8359
      %v8361 = vcombine.high %v8353, %v8353
      %v8362 = vcombine.high %v8360, %v8360
      %v8364 = vunpack.c.l.s4 1966171168
      %v8365 = vunpack.c.0.s8 %v8364
      %v8366 = vlaneseq
      %v8367 = vshrl.u32 %v8366, 7
      %v8368 = vsub.s32 %v8365, %v8367
      %v8369 = vrot.slane %v8353, %v8368
      %v8371 = vunpack.c.l.s4 1966171168
      %v8372 = vunpack.c.0.s8 %v8371
      %v8373 = vlaneseq
      %v8374 = vshrl.u32 %v8373, 7
      %v8375 = vsub.s32 %v8372, %v8374
      %v8376 = vrot.slane %v8360, %v8375
      %v8378 = vunpack.c.l.s4 1966171168
      %v8379 = vunpack.c.0.s8 %v8378
      %v8380 = vlaneseq
      %v8381 = vshrl.u32 %v8380, 7
      %v8382 = vsub.s32 %v8379, %v8381
      %v8383 = vrot.slane %v8361, %v8382
      %v8385 = vunpack.c.l.s4 1966171168
      %v8386 = vunpack.c.0.s8 %v8385
      %v8387 = vlaneseq
      %v8388 = vshrl.u32 %v8387, 7
      %v8389 = vsub.s32 %v8386, %v8388
      %v8390 = vrot.slane %v8362, %v8389
      %v8391 = vcombine.high %v8369, %v8369
      %v8392 = vcombine.high %v8376, %v8376
      %v8393 = vcombine.high %v8383, %v8383
      %v8394 = vcombine.high %v8390, %v8390
      %v8395 = vcombine.high %v7999, %v7999
      %v8397 = vunpack.c.l.s4 1966171168
      %v8398 = vunpack.c.0.s8 %v8397
      %v8399 = vlaneseq
      %v8400 = vshrl.u32 %v8399, 7
      %v8401 = vsub.s32 %v8398, %v8400
      %v8402 = vrot.slane %v7999, %v8401
      %v8404 = vunpack.c.l.s4 1966171168
      %v8405 = vunpack.c.0.s8 %v8404
      %v8406 = vlaneseq
      %v8407 = vshrl.u32 %v8406, 7
      %v8408 = vsub.s32 %v8405, %v8407
      %v8409 = vrot.slane %v8395, %v8408
      %v8410 = vcombine.high %v8402, %v8402
      %v8411 = vcombine.high %v8409, %v8409
      %v8413 = vunpack.c.l.s4 1966171168
      %v8414 = vunpack.c.0.s8 %v8413
      %v8415 = vlaneseq
      %v8416 = vshrl.u32 %v8415, 7
      %v8417 = vsub.s32 %v8414, %v8416
      %v8418 = vrot.slane %v8402, %v8417
      %v8420 = vunpack.c.l.s4 1966171168
      %v8421 = vunpack.c.0.s8 %v8420
      %v8422 = vlaneseq
      %v8423 = vshrl.u32 %v8422, 7
      %v8424 = vsub.s32 %v8421, %v8423
      %v8425 = vrot.slane %v8409, %v8424
      %v8427 = vunpack.c.l.s4 1966171168
      %v8428 = vunpack.c.0.s8 %v8427
      %v8429 = vlaneseq
      %v8430 = vshrl.u32 %v8429, 7
      %v8431 = vsub.s32 %v8428, %v8430
      %v8432 = vrot.slane %v8410, %v8431
      %v8434 = vunpack.c.l.s4 1966171168
      %v8435 = vunpack.c.0.s8 %v8434
      %v8436 = vlaneseq
      %v8437 = vshrl.u32 %v8436, 7
      %v8438 = vsub.s32 %v8435, %v8437
      %v8439 = vrot.slane %v8411, %v8438
      %v8440 = vcombine.high %v8418, %v8418
      %v8441 = vcombine.high %v8425, %v8425
      %v8442 = vcombine.high %v8432, %v8432
      %v8443 = vcombine.high %v8439, %v8439
      %v8444 = vcombine.high %v8004, %v8004
      %v8446 = vunpack.c.l.s4 1966171168
      %v8447 = vunpack.c.0.s8 %v8446
      %v8448 = vlaneseq
      %v8449 = vshrl.u32 %v8448, 7
      %v8450 = vsub.s32 %v8447, %v8449
      %v8451 = vrot.slane %v8004, %v8450
      %v8453 = vunpack.c.l.s4 1966171168
      %v8454 = vunpack.c.0.s8 %v8453
      %v8455 = vlaneseq
      %v8456 = vshrl.u32 %v8455, 7
      %v8457 = vsub.s32 %v8454, %v8456
      %v8458 = vrot.slane %v8444, %v8457
      %v8459 = vcombine.high %v8451, %v8451
      %v8460 = vcombine.high %v8458, %v8458
      %v8462 = vunpack.c.l.s4 1966171168
      %v8463 = vunpack.c.0.s8 %v8462
      %v8464 = vlaneseq
      %v8465 = vshrl.u32 %v8464, 7
      %v8466 = vsub.s32 %v8463, %v8465
      %v8467 = vrot.slane %v8451, %v8466
      %v8469 = vunpack.c.l.s4 1966171168
      %v8470 = vunpack.c.0.s8 %v8469
      %v8471 = vlaneseq
      %v8472 = vshrl.u32 %v8471, 7
      %v8473 = vsub.s32 %v8470, %v8472
      %v8474 = vrot.slane %v8458, %v8473
      %v8476 = vunpack.c.l.s4 1966171168
      %v8477 = vunpack.c.0.s8 %v8476
      %v8478 = vlaneseq
      %v8479 = vshrl.u32 %v8478, 7
      %v8480 = vsub.s32 %v8477, %v8479
      %v8481 = vrot.slane %v8459, %v8480
      %v8483 = vunpack.c.l.s4 1966171168
      %v8484 = vunpack.c.0.s8 %v8483
      %v8485 = vlaneseq
      %v8486 = vshrl.u32 %v8485, 7
      %v8487 = vsub.s32 %v8484, %v8486
      %v8488 = vrot.slane %v8460, %v8487
      %v8489 = vcombine.high %v8467, %v8467
      %v8490 = vcombine.high %v8474, %v8474
      %v8491 = vcombine.high %v8481, %v8481
      %v8492 = vcombine.high %v8488, %v8488
      %v8493 = vcombine.high %v8009, %v8009
      %v8495 = vunpack.c.l.s4 1966171168
      %v8496 = vunpack.c.0.s8 %v8495
      %v8497 = vlaneseq
      %v8498 = vshrl.u32 %v8497, 7
      %v8499 = vsub.s32 %v8496, %v8498
      %v8500 = vrot.slane %v8009, %v8499
      %v8502 = vunpack.c.l.s4 1966171168
      %v8503 = vunpack.c.0.s8 %v8502
      %v8504 = vlaneseq
      %v8505 = vshrl.u32 %v8504, 7
      %v8506 = vsub.s32 %v8503, %v8505
      %v8507 = vrot.slane %v8493, %v8506
      %v8508 = vcombine.high %v8500, %v8500
      %v8509 = vcombine.high %v8507, %v8507
      %v8511 = vunpack.c.l.s4 1966171168
      %v8512 = vunpack.c.0.s8 %v8511
      %v8513 = vlaneseq
      %v8514 = vshrl.u32 %v8513, 7
      %v8515 = vsub.s32 %v8512, %v8514
      %v8516 = vrot.slane %v8500, %v8515
      %v8518 = vunpack.c.l.s4 1966171168
      %v8519 = vunpack.c.0.s8 %v8518
      %v8520 = vlaneseq
      %v8521 = vshrl.u32 %v8520, 7
      %v8522 = vsub.s32 %v8519, %v8521
      %v8523 = vrot.slane %v8507, %v8522
      %v8525 = vunpack.c.l.s4 1966171168
      %v8526 = vunpack.c.0.s8 %v8525
      %v8527 = vlaneseq
      %v8528 = vshrl.u32 %v8527, 7
      %v8529 = vsub.s32 %v8526, %v8528
      %v8530 = vrot.slane %v8508, %v8529
      %v8532 = vunpack.c.l.s4 1966171168
      %v8533 = vunpack.c.0.s8 %v8532
      %v8534 = vlaneseq
      %v8535 = vshrl.u32 %v8534, 7
      %v8536 = vsub.s32 %v8533, %v8535
      %v8537 = vrot.slane %v8509, %v8536
      %v8538 = vcombine.high %v8516, %v8516
      %v8539 = vcombine.high %v8523, %v8523
      %v8540 = vcombine.high %v8530, %v8530
      %v8541 = vcombine.high %v8537, %v8537
      %v8542 = vcombine.high %v8014, %v8014
      %v8544 = vunpack.c.l.s4 1966171168
      %v8545 = vunpack.c.0.s8 %v8544
      %v8546 = vlaneseq
      %v8547 = vshrl.u32 %v8546, 7
      %v8548 = vsub.s32 %v8545, %v8547
      %v8549 = vrot.slane %v8014, %v8548
      %v8551 = vunpack.c.l.s4 1966171168
      %v8552 = vunpack.c.0.s8 %v8551
      %v8553 = vlaneseq
      %v8554 = vshrl.u32 %v8553, 7
      %v8555 = vsub.s32 %v8552, %v8554
      %v8556 = vrot.slane %v8542, %v8555
      %v8557 = vcombine.high %v8549, %v8549
      %v8558 = vcombine.high %v8556, %v8556
      %v8560 = vunpack.c.l.s4 1966171168
      %v8561 = vunpack.c.0.s8 %v8560
      %v8562 = vlaneseq
      %v8563 = vshrl.u32 %v8562, 7
      %v8564 = vsub.s32 %v8561, %v8563
      %v8565 = vrot.slane %v8549, %v8564
      %v8567 = vunpack.c.l.s4 1966171168
      %v8568 = vunpack.c.0.s8 %v8567
      %v8569 = vlaneseq
      %v8570 = vshrl.u32 %v8569, 7
      %v8571 = vsub.s32 %v8568, %v8570
      %v8572 = vrot.slane %v8556, %v8571
      %v8574 = vunpack.c.l.s4 1966171168
      %v8575 = vunpack.c.0.s8 %v8574
      %v8576 = vlaneseq
      %v8577 = vshrl.u32 %v8576, 7
      %v8578 = vsub.s32 %v8575, %v8577
      %v8579 = vrot.slane %v8557, %v8578
      %v8581 = vunpack.c.l.s4 1966171168
      %v8582 = vunpack.c.0.s8 %v8581
      %v8583 = vlaneseq
      %v8584 = vshrl.u32 %v8583, 7
      %v8585 = vsub.s32 %v8582, %v8584
      %v8586 = vrot.slane %v8558, %v8585
      %v8587 = vcombine.high %v8565, %v8565
      %v8588 = vcombine.high %v8572, %v8572
      %v8589 = vcombine.high %v8579, %v8579
      %v8590 = vcombine.high %v8586, %v8586
      %v8591 = vcombine.high %v8019, %v8019
      %v8593 = vunpack.c.l.s4 1966171168
      %v8594 = vunpack.c.0.s8 %v8593
      %v8595 = vlaneseq
      %v8596 = vshrl.u32 %v8595, 7
      %v8597 = vsub.s32 %v8594, %v8596
      %v8598 = vrot.slane %v8019, %v8597
      %v8600 = vunpack.c.l.s4 1966171168
      %v8601 = vunpack.c.0.s8 %v8600
      %v8602 = vlaneseq
      %v8603 = vshrl.u32 %v8602, 7
      %v8604 = vsub.s32 %v8601, %v8603
      %v8605 = vrot.slane %v8591, %v8604
      %v8606 = vcombine.high %v8598, %v8598
      %v8607 = vcombine.high %v8605, %v8605
      %v8609 = vunpack.c.l.s4 1966171168
      %v8610 = vunpack.c.0.s8 %v8609
      %v8611 = vlaneseq
      %v8612 = vshrl.u32 %v8611, 7
      %v8613 = vsub.s32 %v8610, %v8612
      %v8614 = vrot.slane %v8598, %v8613
      %v8616 = vunpack.c.l.s4 1966171168
      %v8617 = vunpack.c.0.s8 %v8616
      %v8618 = vlaneseq
      %v8619 = vshrl.u32 %v8618, 7
      %v8620 = vsub.s32 %v8617, %v8619
      %v8621 = vrot.slane %v8605, %v8620
      %v8623 = vunpack.c.l.s4 1966171168
      %v8624 = vunpack.c.0.s8 %v8623
      %v8625 = vlaneseq
      %v8626 = vshrl.u32 %v8625, 7
      %v8627 = vsub.s32 %v8624, %v8626
      %v8628 = vrot.slane %v8606, %v8627
      %v8630 = vunpack.c.l.s4 1966171168
      %v8631 = vunpack.c.0.s8 %v8630
      %v8632 = vlaneseq
      %v8633 = vshrl.u32 %v8632, 7
      %v8634 = vsub.s32 %v8631, %v8633
      %v8635 = vrot.slane %v8607, %v8634
      %v8636 = vcombine.high %v8614, %v8614
      %v8637 = vcombine.high %v8621, %v8621
      %v8638 = vcombine.high %v8628, %v8628
      %v8639 = vcombine.high %v8635, %v8635
      %v8640 = vcombine.high %v8024, %v8024
      %v8642 = vunpack.c.l.s4 1966171168
      %v8643 = vunpack.c.0.s8 %v8642
      %v8644 = vlaneseq
      %v8645 = vshrl.u32 %v8644, 7
      %v8646 = vsub.s32 %v8643, %v8645
      %v8647 = vrot.slane %v8024, %v8646
      %v8649 = vunpack.c.l.s4 1966171168
      %v8650 = vunpack.c.0.s8 %v8649
      %v8651 = vlaneseq
      %v8652 = vshrl.u32 %v8651, 7
      %v8653 = vsub.s32 %v8650, %v8652
      %v8654 = vrot.slane %v8640, %v8653
      %v8655 = vcombine.high %v8647, %v8647
      %v8656 = vcombine.high %v8654, %v8654
      %v8658 = vunpack.c.l.s4 1966171168
      %v8659 = vunpack.c.0.s8 %v8658
      %v8660 = vlaneseq
      %v8661 = vshrl.u32 %v8660, 7
      %v8662 = vsub.s32 %v8659, %v8661
      %v8663 = vrot.slane %v8647, %v8662
      %v8665 = vunpack.c.l.s4 1966171168
      %v8666 = vunpack.c.0.s8 %v8665
      %v8667 = vlaneseq
      %v8668 = vshrl.u32 %v8667, 7
      %v8669 = vsub.s32 %v8666, %v8668
      %v8670 = vrot.slane %v8654, %v8669
      %v8672 = vunpack.c.l.s4 1966171168
      %v8673 = vunpack.c.0.s8 %v8672
      %v8674 = vlaneseq
      %v8675 = vshrl.u32 %v8674, 7
      %v8676 = vsub.s32 %v8673, %v8675
      %v8677 = vrot.slane %v8655, %v8676
      %v8679 = vunpack.c.l.s4 1966171168
      %v8680 = vunpack.c.0.s8 %v8679
      %v8681 = vlaneseq
      %v8682 = vshrl.u32 %v8681, 7
      %v8683 = vsub.s32 %v8680, %v8682
      %v8684 = vrot.slane %v8656, %v8683
      %v8685 = vcombine.high %v8663, %v8663
      %v8686 = vcombine.high %v8670, %v8670
      %v8687 = vcombine.high %v8677, %v8677
      %v8688 = vcombine.high %v8684, %v8684
      %v8689 = vcombine.high %v8029, %v8029
      %v8691 = vunpack.c.l.s4 1966171168
      %v8692 = vunpack.c.0.s8 %v8691
      %v8693 = vlaneseq
      %v8694 = vshrl.u32 %v8693, 7
      %v8695 = vsub.s32 %v8692, %v8694
      %v8696 = vrot.slane %v8029, %v8695
      %v8698 = vunpack.c.l.s4 1966171168
      %v8699 = vunpack.c.0.s8 %v8698
      %v8700 = vlaneseq
      %v8701 = vshrl.u32 %v8700, 7
      %v8702 = vsub.s32 %v8699, %v8701
      %v8703 = vrot.slane %v8689, %v8702
      %v8704 = vcombine.high %v8696, %v8696
      %v8705 = vcombine.high %v8703, %v8703
      %v8707 = vunpack.c.l.s4 1966171168
      %v8708 = vunpack.c.0.s8 %v8707
      %v8709 = vlaneseq
      %v8710 = vshrl.u32 %v8709, 7
      %v8711 = vsub.s32 %v8708, %v8710
      %v8712 = vrot.slane %v8696, %v8711
      %v8714 = vunpack.c.l.s4 1966171168
      %v8715 = vunpack.c.0.s8 %v8714
      %v8716 = vlaneseq
      %v8717 = vshrl.u32 %v8716, 7
      %v8718 = vsub.s32 %v8715, %v8717
      %v8719 = vrot.slane %v8703, %v8718
      %v8721 = vunpack.c.l.s4 1966171168
      %v8722 = vunpack.c.0.s8 %v8721
      %v8723 = vlaneseq
      %v8724 = vshrl.u32 %v8723, 7
      %v8725 = vsub.s32 %v8722, %v8724
      %v8726 = vrot.slane %v8704, %v8725
      %v8728 = vunpack.c.l.s4 1966171168
      %v8729 = vunpack.c.0.s8 %v8728
      %v8730 = vlaneseq
      %v8731 = vshrl.u32 %v8730, 7
      %v8732 = vsub.s32 %v8729, %v8731
      %v8733 = vrot.slane %v8705, %v8732
      %v8734 = vcombine.high %v8712, %v8712
      %v8735 = vcombine.high %v8719, %v8719
      %v8736 = vcombine.high %v8726, %v8726
      %v8737 = vcombine.high %v8733, %v8733
      %v8738 = vcombine.high %v8034, %v8034
      %v8740 = vunpack.c.l.s4 1966171168
      %v8741 = vunpack.c.0.s8 %v8740
      %v8742 = vlaneseq
      %v8743 = vshrl.u32 %v8742, 7
      %v8744 = vsub.s32 %v8741, %v8743
      %v8745 = vrot.slane %v8034, %v8744
      %v8747 = vunpack.c.l.s4 1966171168
      %v8748 = vunpack.c.0.s8 %v8747
      %v8749 = vlaneseq
      %v8750 = vshrl.u32 %v8749, 7
      %v8751 = vsub.s32 %v8748, %v8750
      %v8752 = vrot.slane %v8738, %v8751
      %v8753 = vcombine.high %v8745, %v8745
      %v8754 = vcombine.high %v8752, %v8752
      %v8756 = vunpack.c.l.s4 1966171168
      %v8757 = vunpack.c.0.s8 %v8756
      %v8758 = vlaneseq
      %v8759 = vshrl.u32 %v8758, 7
      %v8760 = vsub.s32 %v8757, %v8759
      %v8761 = vrot.slane %v8745, %v8760
      %v8763 = vunpack.c.l.s4 1966171168
      %v8764 = vunpack.c.0.s8 %v8763
      %v8765 = vlaneseq
      %v8766 = vshrl.u32 %v8765, 7
      %v8767 = vsub.s32 %v8764, %v8766
      %v8768 = vrot.slane %v8752, %v8767
      %v8770 = vunpack.c.l.s4 1966171168
      %v8771 = vunpack.c.0.s8 %v8770
      %v8772 = vlaneseq
      %v8773 = vshrl.u32 %v8772, 7
      %v8774 = vsub.s32 %v8771, %v8773
      %v8775 = vrot.slane %v8753, %v8774
      %v8777 = vunpack.c.l.s4 1966171168
      %v8778 = vunpack.c.0.s8 %v8777
      %v8779 = vlaneseq
      %v8780 = vshrl.u32 %v8779, 7
      %v8781 = vsub.s32 %v8778, %v8780
      %v8782 = vrot.slane %v8754, %v8781
      %v8783 = vcombine.high %v8761, %v8761
      %v8784 = vcombine.high %v8768, %v8768
      %v8785 = vcombine.high %v8775, %v8775
      %v8786 = vcombine.high %v8782, %v8782
      %v8787 = vcombine.high %v8039, %v8039
      %v8789 = vunpack.c.l.s4 1966171168
      %v8790 = vunpack.c.0.s8 %v8789
      %v8791 = vlaneseq
      %v8792 = vshrl.u32 %v8791, 7
      %v8793 = vsub.s32 %v8790, %v8792
      %v8794 = vrot.slane %v8039, %v8793
      %v8796 = vunpack.c.l.s4 1966171168
      %v8797 = vunpack.c.0.s8 %v8796
      %v8798 = vlaneseq
      %v8799 = vshrl.u32 %v8798, 7
      %v8800 = vsub.s32 %v8797, %v8799
      %v8801 = vrot.slane %v8787, %v8800
      %v8802 = vcombine.high %v8794, %v8794
      %v8803 = vcombine.high %v8801, %v8801
      %v8805 = vunpack.c.l.s4 1966171168
      %v8806 = vunpack.c.0.s8 %v8805
      %v8807 = vlaneseq
      %v8808 = vshrl.u32 %v8807, 7
      %v8809 = vsub.s32 %v8806, %v8808
      %v8810 = vrot.slane %v8794, %v8809
      %v8812 = vunpack.c.l.s4 1966171168
      %v8813 = vunpack.c.0.s8 %v8812
      %v8814 = vlaneseq
      %v8815 = vshrl.u32 %v8814, 7
      %v8816 = vsub.s32 %v8813, %v8815
      %v8817 = vrot.slane %v8801, %v8816
      %v8819 = vunpack.c.l.s4 1966171168
      %v8820 = vunpack.c.0.s8 %v8819
      %v8821 = vlaneseq
      %v8822 = vshrl.u32 %v8821, 7
      %v8823 = vsub.s32 %v8820, %v8822
      %v8824 = vrot.slane %v8802, %v8823
      %v8826 = vunpack.c.l.s4 1966171168
      %v8827 = vunpack.c.0.s8 %v8826
      %v8828 = vlaneseq
      %v8829 = vshrl.u32 %v8828, 7
      %v8830 = vsub.s32 %v8827, %v8829
      %v8831 = vrot.slane %v8803, %v8830
      %v8832 = vcombine.high %v8810, %v8810
      %v8833 = vcombine.high %v8817, %v8817
      %v8834 = vcombine.high %v8824, %v8824
      %v8835 = vcombine.high %v8831, %v8831
      %v8836 = vcombine.high %v8044, %v8044
      %v8838 = vunpack.c.l.s4 1966171168
      %v8839 = vunpack.c.0.s8 %v8838
      %v8840 = vlaneseq
      %v8841 = vshrl.u32 %v8840, 7
      %v8842 = vsub.s32 %v8839, %v8841
      %v8843 = vrot.slane %v8044, %v8842
      %v8845 = vunpack.c.l.s4 1966171168
      %v8846 = vunpack.c.0.s8 %v8845
      %v8847 = vlaneseq
      %v8848 = vshrl.u32 %v8847, 7
      %v8849 = vsub.s32 %v8846, %v8848
      %v8850 = vrot.slane %v8836, %v8849
      %v8851 = vcombine.high %v8843, %v8843
      %v8852 = vcombine.high %v8850, %v8850
      %v8854 = vunpack.c.l.s4 1966171168
      %v8855 = vunpack.c.0.s8 %v8854
      %v8856 = vlaneseq
      %v8857 = vshrl.u32 %v8856, 7
      %v8858 = vsub.s32 %v8855, %v8857
      %v8859 = vrot.slane %v8843, %v8858
      %v8861 = vunpack.c.l.s4 1966171168
      %v8862 = vunpack.c.0.s8 %v8861
      %v8863 = vlaneseq
      %v8864 = vshrl.u32 %v8863, 7
      %v8865 = vsub.s32 %v8862, %v8864
      %v8866 = vrot.slane %v8850, %v8865
      %v8868 = vunpack.c.l.s4 1966171168
      %v8869 = vunpack.c.0.s8 %v8868
      %v8870 = vlaneseq
      %v8871 = vshrl.u32 %v8870, 7
      %v8872 = vsub.s32 %v8869, %v8871
      %v8873 = vrot.slane %v8851, %v8872
      %v8875 = vunpack.c.l.s4 1966171168
      %v8876 = vunpack.c.0.s8 %v8875
      %v8877 = vlaneseq
      %v8878 = vshrl.u32 %v8877, 7
      %v8879 = vsub.s32 %v8876, %v8878
      %v8880 = vrot.slane %v8852, %v8879
      %v8881 = vcombine.high %v8859, %v8859
      %v8882 = vcombine.high %v8866, %v8866
      %v8883 = vcombine.high %v8873, %v8873
      %v8884 = vcombine.high %v8880, %v8880
      %v8885 = vcombine.high %v8049, %v8049
      %v8887 = vunpack.c.l.s4 1966171168
      %v8888 = vunpack.c.0.s8 %v8887
      %v8889 = vlaneseq
      %v8890 = vshrl.u32 %v8889, 7
      %v8891 = vsub.s32 %v8888, %v8890
      %v8892 = vrot.slane %v8049, %v8891
      %v8894 = vunpack.c.l.s4 1966171168
      %v8895 = vunpack.c.0.s8 %v8894
      %v8896 = vlaneseq
      %v8897 = vshrl.u32 %v8896, 7
      %v8898 = vsub.s32 %v8895, %v8897
      %v8899 = vrot.slane %v8885, %v8898
      %v8900 = vcombine.high %v8892, %v8892
      %v8901 = vcombine.high %v8899, %v8899
      %v8903 = vunpack.c.l.s4 1966171168
      %v8904 = vunpack.c.0.s8 %v8903
      %v8905 = vlaneseq
      %v8906 = vshrl.u32 %v8905, 7
      %v8907 = vsub.s32 %v8904, %v8906
      %v8908 = vrot.slane %v8892, %v8907
      %v8910 = vunpack.c.l.s4 1966171168
      %v8911 = vunpack.c.0.s8 %v8910
      %v8912 = vlaneseq
      %v8913 = vshrl.u32 %v8912, 7
      %v8914 = vsub.s32 %v8911, %v8913
      %v8915 = vrot.slane %v8899, %v8914
      %v8917 = vunpack.c.l.s4 1966171168
      %v8918 = vunpack.c.0.s8 %v8917
      %v8919 = vlaneseq
      %v8920 = vshrl.u32 %v8919, 7
      %v8921 = vsub.s32 %v8918, %v8920
      %v8922 = vrot.slane %v8900, %v8921
      %v8924 = vunpack.c.l.s4 1966171168
      %v8925 = vunpack.c.0.s8 %v8924
      %v8926 = vlaneseq
      %v8927 = vshrl.u32 %v8926, 7
      %v8928 = vsub.s32 %v8925, %v8927
      %v8929 = vrot.slane %v8901, %v8928
      %v8930 = vcombine.high %v8908, %v8908
      %v8931 = vcombine.high %v8915, %v8915
      %v8932 = vcombine.high %v8922, %v8922
      %v8933 = vcombine.high %v8929, %v8929
      %v8934 = vcombine.high %v8054, %v8054
      %v8936 = vunpack.c.l.s4 1966171168
      %v8937 = vunpack.c.0.s8 %v8936
      %v8938 = vlaneseq
      %v8939 = vshrl.u32 %v8938, 7
      %v8940 = vsub.s32 %v8937, %v8939
      %v8941 = vrot.slane %v8054, %v8940
      %v8943 = vunpack.c.l.s4 1966171168
      %v8944 = vunpack.c.0.s8 %v8943
      %v8945 = vlaneseq
      %v8946 = vshrl.u32 %v8945, 7
      %v8947 = vsub.s32 %v8944, %v8946
      %v8948 = vrot.slane %v8934, %v8947
      %v8949 = vcombine.high %v8941, %v8941
      %v8950 = vcombine.high %v8948, %v8948
      %v8952 = vunpack.c.l.s4 1966171168
      %v8953 = vunpack.c.0.s8 %v8952
      %v8954 = vlaneseq
      %v8955 = vshrl.u32 %v8954, 7
      %v8956 = vsub.s32 %v8953, %v8955
      %v8957 = vrot.slane %v8941, %v8956
      %v8959 = vunpack.c.l.s4 1966171168
      %v8960 = vunpack.c.0.s8 %v8959
      %v8961 = vlaneseq
      %v8962 = vshrl.u32 %v8961, 7
      %v8963 = vsub.s32 %v8960, %v8962
      %v8964 = vrot.slane %v8948, %v8963
      %v8966 = vunpack.c.l.s4 1966171168
      %v8967 = vunpack.c.0.s8 %v8966
      %v8968 = vlaneseq
      %v8969 = vshrl.u32 %v8968, 7
      %v8970 = vsub.s32 %v8967, %v8969
      %v8971 = vrot.slane %v8949, %v8970
      %v8973 = vunpack.c.l.s4 1966171168
      %v8974 = vunpack.c.0.s8 %v8973
      %v8975 = vlaneseq
      %v8976 = vshrl.u32 %v8975, 7
      %v8977 = vsub.s32 %v8974, %v8976
      %v8978 = vrot.slane %v8950, %v8977
      %v8979 = vcombine.high %v8957, %v8957
      %v8980 = vcombine.high %v8964, %v8964
      %v8981 = vcombine.high %v8971, %v8971
      %v8982 = vcombine.high %v8978, %v8978
      %v8983 = vcombine.high %v8059, %v8059
      %v8985 = vunpack.c.l.s4 1966171168
      %v8986 = vunpack.c.0.s8 %v8985
      %v8987 = vlaneseq
      %v8988 = vshrl.u32 %v8987, 7
      %v8989 = vsub.s32 %v8986, %v8988
      %v8990 = vrot.slane %v8059, %v8989
      %v8992 = vunpack.c.l.s4 1966171168
      %v8993 = vunpack.c.0.s8 %v8992
      %v8994 = vlaneseq
      %v8995 = vshrl.u32 %v8994, 7
      %v8996 = vsub.s32 %v8993, %v8995
      %v8997 = vrot.slane %v8983, %v8996
      %v8998 = vcombine.high %v8990, %v8990
      %v8999 = vcombine.high %v8997, %v8997
      %v9001 = vunpack.c.l.s4 1966171168
      %v9002 = vunpack.c.0.s8 %v9001
      %v9003 = vlaneseq
      %v9004 = vshrl.u32 %v9003, 7
      %v9005 = vsub.s32 %v9002, %v9004
      %v9006 = vrot.slane %v8990, %v9005
      %v9008 = vunpack.c.l.s4 1966171168
      %v9009 = vunpack.c.0.s8 %v9008
      %v9010 = vlaneseq
      %v9011 = vshrl.u32 %v9010, 7
      %v9012 = vsub.s32 %v9009, %v9011
      %v9013 = vrot.slane %v8997, %v9012
      %v9015 = vunpack.c.l.s4 1966171168
      %v9016 = vunpack.c.0.s8 %v9015
      %v9017 = vlaneseq
      %v9018 = vshrl.u32 %v9017, 7
      %v9019 = vsub.s32 %v9016, %v9018
      %v9020 = vrot.slane %v8998, %v9019
      %v9022 = vunpack.c.l.s4 1966171168
      %v9023 = vunpack.c.0.s8 %v9022
      %v9024 = vlaneseq
      %v9025 = vshrl.u32 %v9024, 7
      %v9026 = vsub.s32 %v9023, %v9025
      %v9027 = vrot.slane %v8999, %v9026
      %v9028 = vcombine.high %v9006, %v9006
      %v9029 = vcombine.high %v9013, %v9013
      %v9030 = vcombine.high %v9020, %v9020
      %v9031 = vcombine.high %v9027, %v9027
      %v9032 = vcombine.high %v8064, %v8064
      %v9034 = vunpack.c.l.s4 1966171168
      %v9035 = vunpack.c.0.s8 %v9034
      %v9036 = vlaneseq
      %v9037 = vshrl.u32 %v9036, 7
      %v9038 = vsub.s32 %v9035, %v9037
      %v9039 = vrot.slane %v8064, %v9038
      %v9041 = vunpack.c.l.s4 1966171168
      %v9042 = vunpack.c.0.s8 %v9041
      %v9043 = vlaneseq
      %v9044 = vshrl.u32 %v9043, 7
      %v9045 = vsub.s32 %v9042, %v9044
      %v9046 = vrot.slane %v9032, %v9045
      %v9047 = vcombine.high %v9039, %v9039
      %v9048 = vcombine.high %v9046, %v9046
      %v9050 = vunpack.c.l.s4 1966171168
      %v9051 = vunpack.c.0.s8 %v9050
      %v9052 = vlaneseq
      %v9053 = vshrl.u32 %v9052, 7
      %v9054 = vsub.s32 %v9051, %v9053
      %v9055 = vrot.slane %v9039, %v9054
      %v9057 = vunpack.c.l.s4 1966171168
      %v9058 = vunpack.c.0.s8 %v9057
      %v9059 = vlaneseq
      %v9060 = vshrl.u32 %v9059, 7
      %v9061 = vsub.s32 %v9058, %v9060
      %v9062 = vrot.slane %v9046, %v9061
      %v9064 = vunpack.c.l.s4 1966171168
      %v9065 = vunpack.c.0.s8 %v9064
      %v9066 = vlaneseq
      %v9067 = vshrl.u32 %v9066, 7
      %v9068 = vsub.s32 %v9065, %v9067
      %v9069 = vrot.slane %v9047, %v9068
      %v9071 = vunpack.c.l.s4 1966171168
      %v9072 = vunpack.c.0.s8 %v9071
      %v9073 = vlaneseq
      %v9074 = vshrl.u32 %v9073, 7
      %v9075 = vsub.s32 %v9072, %v9074
      %v9076 = vrot.slane %v9048, %v9075
      %v9077 = vcombine.high %v9055, %v9055
      %v9078 = vcombine.high %v9062, %v9062
      %v9079 = vcombine.high %v9069, %v9069
      %v9080 = vcombine.high %v9076, %v9076
      %v9081 = vcombine.high %v8069, %v8069
      %v9083 = vunpack.c.l.s4 1966171168
      %v9084 = vunpack.c.0.s8 %v9083
      %v9085 = vlaneseq
      %v9086 = vshrl.u32 %v9085, 7
      %v9087 = vsub.s32 %v9084, %v9086
      %v9088 = vrot.slane %v8069, %v9087
      %v9090 = vunpack.c.l.s4 1966171168
      %v9091 = vunpack.c.0.s8 %v9090
      %v9092 = vlaneseq
      %v9093 = vshrl.u32 %v9092, 7
      %v9094 = vsub.s32 %v9091, %v9093
      %v9095 = vrot.slane %v9081, %v9094
      %v9096 = vcombine.high %v9088, %v9088
      %v9097 = vcombine.high %v9095, %v9095
      %v9099 = vunpack.c.l.s4 1966171168
      %v9100 = vunpack.c.0.s8 %v9099
      %v9101 = vlaneseq
      %v9102 = vshrl.u32 %v9101, 7
      %v9103 = vsub.s32 %v9100, %v9102
      %v9104 = vrot.slane %v9088, %v9103
      %v9106 = vunpack.c.l.s4 1966171168
      %v9107 = vunpack.c.0.s8 %v9106
      %v9108 = vlaneseq
      %v9109 = vshrl.u32 %v9108, 7
      %v9110 = vsub.s32 %v9107, %v9109
      %v9111 = vrot.slane %v9095, %v9110
      %v9113 = vunpack.c.l.s4 1966171168
      %v9114 = vunpack.c.0.s8 %v9113
      %v9115 = vlaneseq
      %v9116 = vshrl.u32 %v9115, 7
      %v9117 = vsub.s32 %v9114, %v9116
      %v9118 = vrot.slane %v9096, %v9117
      %v9120 = vunpack.c.l.s4 1966171168
      %v9121 = vunpack.c.0.s8 %v9120
      %v9122 = vlaneseq
      %v9123 = vshrl.u32 %v9122, 7
      %v9124 = vsub.s32 %v9121, %v9123
      %v9125 = vrot.slane %v9097, %v9124
      %v9126 = vcombine.high %v9104, %v9104
      %v9127 = vcombine.high %v9111, %v9111
      %v9128 = vcombine.high %v9118, %v9118
      %v9129 = vcombine.high %v9125, %v9125
      %v9130 = vcombine.high %v8074, %v8074
      %v9132 = vunpack.c.l.s4 1966171168
      %v9133 = vunpack.c.0.s8 %v9132
      %v9134 = vlaneseq
      %v9135 = vshrl.u32 %v9134, 7
      %v9136 = vsub.s32 %v9133, %v9135
      %v9137 = vrot.slane %v8074, %v9136
      %v9139 = vunpack.c.l.s4 1966171168
      %v9140 = vunpack.c.0.s8 %v9139
      %v9141 = vlaneseq
      %v9142 = vshrl.u32 %v9141, 7
      %v9143 = vsub.s32 %v9140, %v9142
      %v9144 = vrot.slane %v9130, %v9143
      %v9145 = vcombine.high %v9137, %v9137
      %v9146 = vcombine.high %v9144, %v9144
      %v9148 = vunpack.c.l.s4 1966171168
      %v9149 = vunpack.c.0.s8 %v9148
      %v9150 = vlaneseq
      %v9151 = vshrl.u32 %v9150, 7
      %v9152 = vsub.s32 %v9149, %v9151
      %v9153 = vrot.slane %v9137, %v9152
      %v9155 = vunpack.c.l.s4 1966171168
      %v9156 = vunpack.c.0.s8 %v9155
      %v9157 = vlaneseq
      %v9158 = vshrl.u32 %v9157, 7
      %v9159 = vsub.s32 %v9156, %v9158
      %v9160 = vrot.slane %v9144, %v9159
      %v9162 = vunpack.c.l.s4 1966171168
      %v9163 = vunpack.c.0.s8 %v9162
      %v9164 = vlaneseq
      %v9165 = vshrl.u32 %v9164, 7
      %v9166 = vsub.s32 %v9163, %v9165
      %v9167 = vrot.slane %v9145, %v9166
      %v9169 = vunpack.c.l.s4 1966171168
      %v9170 = vunpack.c.0.s8 %v9169
      %v9171 = vlaneseq
      %v9172 = vshrl.u32 %v9171, 7
      %v9173 = vsub.s32 %v9170, %v9172
      %v9174 = vrot.slane %v9146, %v9173
      %v9175 = vcombine.high %v9153, %v9153
      %v9176 = vcombine.high %v9160, %v9160
      %v9177 = vcombine.high %v9167, %v9167
      %v9178 = vcombine.high %v9174, %v9174
      %v9179 = vcombine.high %v8079, %v8079
      %v9181 = vunpack.c.l.s4 1966171168
      %v9182 = vunpack.c.0.s8 %v9181
      %v9183 = vlaneseq
      %v9184 = vshrl.u32 %v9183, 7
      %v9185 = vsub.s32 %v9182, %v9184
      %v9186 = vrot.slane %v8079, %v9185
      %v9188 = vunpack.c.l.s4 1966171168
      %v9189 = vunpack.c.0.s8 %v9188
      %v9190 = vlaneseq
      %v9191 = vshrl.u32 %v9190, 7
      %v9192 = vsub.s32 %v9189, %v9191
      %v9193 = vrot.slane %v9179, %v9192
      %v9194 = vcombine.high %v9186, %v9186
      %v9195 = vcombine.high %v9193, %v9193
      %v9197 = vunpack.c.l.s4 1966171168
      %v9198 = vunpack.c.0.s8 %v9197
      %v9199 = vlaneseq
      %v9200 = vshrl.u32 %v9199, 7
      %v9201 = vsub.s32 %v9198, %v9200
      %v9202 = vrot.slane %v9186, %v9201
      %v9204 = vunpack.c.l.s4 1966171168
      %v9205 = vunpack.c.0.s8 %v9204
      %v9206 = vlaneseq
      %v9207 = vshrl.u32 %v9206, 7
      %v9208 = vsub.s32 %v9205, %v9207
      %v9209 = vrot.slane %v9193, %v9208
      %v9211 = vunpack.c.l.s4 1966171168
      %v9212 = vunpack.c.0.s8 %v9211
      %v9213 = vlaneseq
      %v9214 = vshrl.u32 %v9213, 7
      %v9215 = vsub.s32 %v9212, %v9214
      %v9216 = vrot.slane %v9194, %v9215
      %v9218 = vunpack.c.l.s4 1966171168
      %v9219 = vunpack.c.0.s8 %v9218
      %v9220 = vlaneseq
      %v9221 = vshrl.u32 %v9220, 7
      %v9222 = vsub.s32 %v9219, %v9221
      %v9223 = vrot.slane %v9195, %v9222
      %v9224 = vcombine.high %v9202, %v9202
      %v9225 = vcombine.high %v9209, %v9209
      %v9226 = vcombine.high %v9216, %v9216
      %v9227 = vcombine.high %v9223, %v9223
      %v9228 = vcombine.high %v8084, %v8084
      %v9230 = vunpack.c.l.s4 1966171168
      %v9231 = vunpack.c.0.s8 %v9230
      %v9232 = vlaneseq
      %v9233 = vshrl.u32 %v9232, 7
      %v9234 = vsub.s32 %v9231, %v9233
      %v9235 = vrot.slane %v8084, %v9234
      %v9237 = vunpack.c.l.s4 1966171168
      %v9238 = vunpack.c.0.s8 %v9237
      %v9239 = vlaneseq
      %v9240 = vshrl.u32 %v9239, 7
      %v9241 = vsub.s32 %v9238, %v9240
      %v9242 = vrot.slane %v9228, %v9241
      %v9243 = vcombine.high %v9235, %v9235
      %v9244 = vcombine.high %v9242, %v9242
      %v9246 = vunpack.c.l.s4 1966171168
      %v9247 = vunpack.c.0.s8 %v9246
      %v9248 = vlaneseq
      %v9249 = vshrl.u32 %v9248, 7
      %v9250 = vsub.s32 %v9247, %v9249
      %v9251 = vrot.slane %v9235, %v9250
      %v9253 = vunpack.c.l.s4 1966171168
      %v9254 = vunpack.c.0.s8 %v9253
      %v9255 = vlaneseq
      %v9256 = vshrl.u32 %v9255, 7
      %v9257 = vsub.s32 %v9254, %v9256
      %v9258 = vrot.slane %v9242, %v9257
      %v9260 = vunpack.c.l.s4 1966171168
      %v9261 = vunpack.c.0.s8 %v9260
      %v9262 = vlaneseq
      %v9263 = vshrl.u32 %v9262, 7
      %v9264 = vsub.s32 %v9261, %v9263
      %v9265 = vrot.slane %v9243, %v9264
      %v9267 = vunpack.c.l.s4 1966171168
      %v9268 = vunpack.c.0.s8 %v9267
      %v9269 = vlaneseq
      %v9270 = vshrl.u32 %v9269, 7
      %v9271 = vsub.s32 %v9268, %v9270
      %v9272 = vrot.slane %v9244, %v9271
      %v9273 = vcombine.high %v9251, %v9251
      %v9274 = vcombine.high %v9258, %v9258
      %v9275 = vcombine.high %v9265, %v9265
      %v9276 = vcombine.high %v9272, %v9272
      %v9277 = vcombine.high %v8089, %v8089
      %v9279 = vunpack.c.l.s4 1966171168
      %v9280 = vunpack.c.0.s8 %v9279
      %v9281 = vlaneseq
      %v9282 = vshrl.u32 %v9281, 7
      %v9283 = vsub.s32 %v9280, %v9282
      %v9284 = vrot.slane %v8089, %v9283
      %v9286 = vunpack.c.l.s4 1966171168
      %v9287 = vunpack.c.0.s8 %v9286
      %v9288 = vlaneseq
      %v9289 = vshrl.u32 %v9288, 7
      %v9290 = vsub.s32 %v9287, %v9289
      %v9291 = vrot.slane %v9277, %v9290
      %v9292 = vcombine.high %v9284, %v9284
      %v9293 = vcombine.high %v9291, %v9291
      %v9295 = vunpack.c.l.s4 1966171168
      %v9296 = vunpack.c.0.s8 %v9295
      %v9297 = vlaneseq
      %v9298 = vshrl.u32 %v9297, 7
      %v9299 = vsub.s32 %v9296, %v9298
      %v9300 = vrot.slane %v9284, %v9299
      %v9302 = vunpack.c.l.s4 1966171168
      %v9303 = vunpack.c.0.s8 %v9302
      %v9304 = vlaneseq
      %v9305 = vshrl.u32 %v9304, 7
      %v9306 = vsub.s32 %v9303, %v9305
      %v9307 = vrot.slane %v9291, %v9306
      %v9309 = vunpack.c.l.s4 1966171168
      %v9310 = vunpack.c.0.s8 %v9309
      %v9311 = vlaneseq
      %v9312 = vshrl.u32 %v9311, 7
      %v9313 = vsub.s32 %v9310, %v9312
      %v9314 = vrot.slane %v9292, %v9313
      %v9316 = vunpack.c.l.s4 1966171168
      %v9317 = vunpack.c.0.s8 %v9316
      %v9318 = vlaneseq
      %v9319 = vshrl.u32 %v9318, 7
      %v9320 = vsub.s32 %v9317, %v9319
      %v9321 = vrot.slane %v9293, %v9320
      %v9322 = vcombine.high %v9300, %v9300
      %v9323 = vcombine.high %v9307, %v9307
      %v9324 = vcombine.high %v9314, %v9314
      %v9325 = vcombine.high %v9321, %v9321
      %v9326 = vcombine.high %v8094, %v8094
      %v9328 = vunpack.c.l.s4 1966171168
      %v9329 = vunpack.c.0.s8 %v9328
      %v9330 = vlaneseq
      %v9331 = vshrl.u32 %v9330, 7
      %v9332 = vsub.s32 %v9329, %v9331
      %v9333 = vrot.slane %v8094, %v9332
      %v9335 = vunpack.c.l.s4 1966171168
      %v9336 = vunpack.c.0.s8 %v9335
      %v9337 = vlaneseq
      %v9338 = vshrl.u32 %v9337, 7
      %v9339 = vsub.s32 %v9336, %v9338
      %v9340 = vrot.slane %v9326, %v9339
      %v9341 = vcombine.high %v9333, %v9333
      %v9342 = vcombine.high %v9340, %v9340
      %v9344 = vunpack.c.l.s4 1966171168
      %v9345 = vunpack.c.0.s8 %v9344
      %v9346 = vlaneseq
      %v9347 = vshrl.u32 %v9346, 7
      %v9348 = vsub.s32 %v9345, %v9347
      %v9349 = vrot.slane %v9333, %v9348
      %v9351 = vunpack.c.l.s4 1966171168
      %v9352 = vunpack.c.0.s8 %v9351
      %v9353 = vlaneseq
      %v9354 = vshrl.u32 %v9353, 7
      %v9355 = vsub.s32 %v9352, %v9354
      %v9356 = vrot.slane %v9340, %v9355
      %v9358 = vunpack.c.l.s4 1966171168
      %v9359 = vunpack.c.0.s8 %v9358
      %v9360 = vlaneseq
      %v9361 = vshrl.u32 %v9360, 7
      %v9362 = vsub.s32 %v9359, %v9361
      %v9363 = vrot.slane %v9341, %v9362
      %v9365 = vunpack.c.l.s4 1966171168
      %v9366 = vunpack.c.0.s8 %v9365
      %v9367 = vlaneseq
      %v9368 = vshrl.u32 %v9367, 7
      %v9369 = vsub.s32 %v9366, %v9368
      %v9370 = vrot.slane %v9342, %v9369
      %v9371 = vcombine.high %v9349, %v9349
      %v9372 = vcombine.high %v9356, %v9356
      %v9373 = vcombine.high %v9363, %v9363
      %v9374 = vcombine.high %v9370, %v9370
      %v9375 = vcombine.high %v8099, %v8099
      %v9377 = vunpack.c.l.s4 1966171168
      %v9378 = vunpack.c.0.s8 %v9377
      %v9379 = vlaneseq
      %v9380 = vshrl.u32 %v9379, 7
      %v9381 = vsub.s32 %v9378, %v9380
      %v9382 = vrot.slane %v8099, %v9381
      %v9384 = vunpack.c.l.s4 1966171168
      %v9385 = vunpack.c.0.s8 %v9384
      %v9386 = vlaneseq
      %v9387 = vshrl.u32 %v9386, 7
      %v9388 = vsub.s32 %v9385, %v9387
      %v9389 = vrot.slane %v9375, %v9388
      %v9390 = vcombine.high %v9382, %v9382
      %v9391 = vcombine.high %v9389, %v9389
      %v9393 = vunpack.c.l.s4 1966171168
      %v9394 = vunpack.c.0.s8 %v9393
      %v9395 = vlaneseq
      %v9396 = vshrl.u32 %v9395, 7
      %v9397 = vsub.s32 %v9394, %v9396
      %v9398 = vrot.slane %v9382, %v9397
      %v9400 = vunpack.c.l.s4 1966171168
      %v9401 = vunpack.c.0.s8 %v9400
      %v9402 = vlaneseq
      %v9403 = vshrl.u32 %v9402, 7
      %v9404 = vsub.s32 %v9401, %v9403
      %v9405 = vrot.slane %v9389, %v9404
      %v9407 = vunpack.c.l.s4 1966171168
      %v9408 = vunpack.c.0.s8 %v9407
      %v9409 = vlaneseq
      %v9410 = vshrl.u32 %v9409, 7
      %v9411 = vsub.s32 %v9408, %v9410
      %v9412 = vrot.slane %v9390, %v9411
      %v9414 = vunpack.c.l.s4 1966171168
      %v9415 = vunpack.c.0.s8 %v9414
      %v9416 = vlaneseq
      %v9417 = vshrl.u32 %v9416, 7
      %v9418 = vsub.s32 %v9415, %v9417
      %v9419 = vrot.slane %v9391, %v9418
      %v9420 = vcombine.high %v9398, %v9398
      %v9421 = vcombine.high %v9405, %v9405
      %v9422 = vcombine.high %v9412, %v9412
      %v9423 = vcombine.high %v9419, %v9419
      %v9424 = vcombine.high %v8104, %v8104
      %v9426 = vunpack.c.l.s4 1966171168
      %v9427 = vunpack.c.0.s8 %v9426
      %v9428 = vlaneseq
      %v9429 = vshrl.u32 %v9428, 7
      %v9430 = vsub.s32 %v9427, %v9429
      %v9431 = vrot.slane %v8104, %v9430
      %v9433 = vunpack.c.l.s4 1966171168
      %v9434 = vunpack.c.0.s8 %v9433
      %v9435 = vlaneseq
      %v9436 = vshrl.u32 %v9435, 7
      %v9437 = vsub.s32 %v9434, %v9436
      %v9438 = vrot.slane %v9424, %v9437
      %v9439 = vcombine.high %v9431, %v9431
      %v9440 = vcombine.high %v9438, %v9438
      %v9442 = vunpack.c.l.s4 1966171168
      %v9443 = vunpack.c.0.s8 %v9442
      %v9444 = vlaneseq
      %v9445 = vshrl.u32 %v9444, 7
      %v9446 = vsub.s32 %v9443, %v9445
      %v9447 = vrot.slane %v9431, %v9446
      %v9449 = vunpack.c.l.s4 1966171168
      %v9450 = vunpack.c.0.s8 %v9449
      %v9451 = vlaneseq
      %v9452 = vshrl.u32 %v9451, 7
      %v9453 = vsub.s32 %v9450, %v9452
      %v9454 = vrot.slane %v9438, %v9453
      %v9456 = vunpack.c.l.s4 1966171168
      %v9457 = vunpack.c.0.s8 %v9456
      %v9458 = vlaneseq
      %v9459 = vshrl.u32 %v9458, 7
      %v9460 = vsub.s32 %v9457, %v9459
      %v9461 = vrot.slane %v9439, %v9460
      %v9463 = vunpack.c.l.s4 1966171168
      %v9464 = vunpack.c.0.s8 %v9463
      %v9465 = vlaneseq
      %v9466 = vshrl.u32 %v9465, 7
      %v9467 = vsub.s32 %v9464, %v9466
      %v9468 = vrot.slane %v9440, %v9467
      %v9469 = vcombine.high %v9447, %v9447
      %v9470 = vcombine.high %v9454, %v9454
      %v9471 = vcombine.high %v9461, %v9461
      %v9472 = vcombine.high %v9468, %v9468
      %v9473 = vcombine.high %v8109, %v8109
      %v9475 = vunpack.c.l.s4 1966171168
      %v9476 = vunpack.c.0.s8 %v9475
      %v9477 = vlaneseq
      %v9478 = vshrl.u32 %v9477, 7
      %v9479 = vsub.s32 %v9476, %v9478
      %v9480 = vrot.slane %v8109, %v9479
      %v9482 = vunpack.c.l.s4 1966171168
      %v9483 = vunpack.c.0.s8 %v9482
      %v9484 = vlaneseq
      %v9485 = vshrl.u32 %v9484, 7
      %v9486 = vsub.s32 %v9483, %v9485
      %v9487 = vrot.slane %v9473, %v9486
      %v9488 = vcombine.high %v9480, %v9480
      %v9489 = vcombine.high %v9487, %v9487
      %v9491 = vunpack.c.l.s4 1966171168
      %v9492 = vunpack.c.0.s8 %v9491
      %v9493 = vlaneseq
      %v9494 = vshrl.u32 %v9493, 7
      %v9495 = vsub.s32 %v9492, %v9494
      %v9496 = vrot.slane %v9480, %v9495
      %v9498 = vunpack.c.l.s4 1966171168
      %v9499 = vunpack.c.0.s8 %v9498
      %v9500 = vlaneseq
      %v9501 = vshrl.u32 %v9500, 7
      %v9502 = vsub.s32 %v9499, %v9501
      %v9503 = vrot.slane %v9487, %v9502
      %v9505 = vunpack.c.l.s4 1966171168
      %v9506 = vunpack.c.0.s8 %v9505
      %v9507 = vlaneseq
      %v9508 = vshrl.u32 %v9507, 7
      %v9509 = vsub.s32 %v9506, %v9508
      %v9510 = vrot.slane %v9488, %v9509
      %v9512 = vunpack.c.l.s4 1966171168
      %v9513 = vunpack.c.0.s8 %v9512
      %v9514 = vlaneseq
      %v9515 = vshrl.u32 %v9514, 7
      %v9516 = vsub.s32 %v9513, %v9515
      %v9517 = vrot.slane %v9489, %v9516
      %v9518 = vcombine.high %v9496, %v9496
      %v9519 = vcombine.high %v9503, %v9503
      %v9520 = vcombine.high %v9510, %v9510
      %v9521 = vcombine.high %v9517, %v9517
      %v9522 = vcombine.high %v8114, %v8114
      %v9524 = vunpack.c.l.s4 1966171168
      %v9525 = vunpack.c.0.s8 %v9524
      %v9526 = vlaneseq
      %v9527 = vshrl.u32 %v9526, 7
      %v9528 = vsub.s32 %v9525, %v9527
      %v9529 = vrot.slane %v8114, %v9528
      %v9531 = vunpack.c.l.s4 1966171168
      %v9532 = vunpack.c.0.s8 %v9531
      %v9533 = vlaneseq
      %v9534 = vshrl.u32 %v9533, 7
      %v9535 = vsub.s32 %v9532, %v9534
      %v9536 = vrot.slane %v9522, %v9535
      %v9537 = vcombine.high %v9529, %v9529
      %v9538 = vcombine.high %v9536, %v9536
      %v9540 = vunpack.c.l.s4 1966171168
      %v9541 = vunpack.c.0.s8 %v9540
      %v9542 = vlaneseq
      %v9543 = vshrl.u32 %v9542, 7
      %v9544 = vsub.s32 %v9541, %v9543
      %v9545 = vrot.slane %v9529, %v9544
      %v9547 = vunpack.c.l.s4 1966171168
      %v9548 = vunpack.c.0.s8 %v9547
      %v9549 = vlaneseq
      %v9550 = vshrl.u32 %v9549, 7
      %v9551 = vsub.s32 %v9548, %v9550
      %v9552 = vrot.slane %v9536, %v9551
      %v9554 = vunpack.c.l.s4 1966171168
      %v9555 = vunpack.c.0.s8 %v9554
      %v9556 = vlaneseq
      %v9557 = vshrl.u32 %v9556, 7
      %v9558 = vsub.s32 %v9555, %v9557
      %v9559 = vrot.slane %v9537, %v9558
      %v9561 = vunpack.c.l.s4 1966171168
      %v9562 = vunpack.c.0.s8 %v9561
      %v9563 = vlaneseq
      %v9564 = vshrl.u32 %v9563, 7
      %v9565 = vsub.s32 %v9562, %v9564
      %v9566 = vrot.slane %v9538, %v9565
      %v9567 = vcombine.high %v9545, %v9545
      %v9568 = vcombine.high %v9552, %v9552
      %v9569 = vcombine.high %v9559, %v9559
      %v9570 = vcombine.high %v9566, %v9566
      %v9571 = vcombine.high %v8119, %v8119
      %v9573 = vunpack.c.l.s4 1966171168
      %v9574 = vunpack.c.0.s8 %v9573
      %v9575 = vlaneseq
      %v9576 = vshrl.u32 %v9575, 7
      %v9577 = vsub.s32 %v9574, %v9576
      %v9578 = vrot.slane %v8119, %v9577
      %v9580 = vunpack.c.l.s4 1966171168
      %v9581 = vunpack.c.0.s8 %v9580
      %v9582 = vlaneseq
      %v9583 = vshrl.u32 %v9582, 7
      %v9584 = vsub.s32 %v9581, %v9583
      %v9585 = vrot.slane %v9571, %v9584
      %v9586 = vcombine.high %v9578, %v9578
      %v9587 = vcombine.high %v9585, %v9585
      %v9589 = vunpack.c.l.s4 1966171168
      %v9590 = vunpack.c.0.s8 %v9589
      %v9591 = vlaneseq
      %v9592 = vshrl.u32 %v9591, 7
      %v9593 = vsub.s32 %v9590, %v9592
      %v9594 = vrot.slane %v9578, %v9593
      %v9596 = vunpack.c.l.s4 1966171168
      %v9597 = vunpack.c.0.s8 %v9596
      %v9598 = vlaneseq
      %v9599 = vshrl.u32 %v9598, 7
      %v9600 = vsub.s32 %v9597, %v9599
      %v9601 = vrot.slane %v9585, %v9600
      %v9603 = vunpack.c.l.s4 1966171168
      %v9604 = vunpack.c.0.s8 %v9603
      %v9605 = vlaneseq
      %v9606 = vshrl.u32 %v9605, 7
      %v9607 = vsub.s32 %v9604, %v9606
      %v9608 = vrot.slane %v9586, %v9607
      %v9610 = vunpack.c.l.s4 1966171168
      %v9611 = vunpack.c.0.s8 %v9610
      %v9612 = vlaneseq
      %v9613 = vshrl.u32 %v9612, 7
      %v9614 = vsub.s32 %v9611, %v9613
      %v9615 = vrot.slane %v9587, %v9614
      %v9616 = vcombine.high %v9594, %v9594
      %v9617 = vcombine.high %v9601, %v9601
      %v9618 = vcombine.high %v9608, %v9608
      %v9619 = vcombine.high %v9615, %v9615
      %v9620 = vcombine.high %v8124, %v8124
      %v9622 = vunpack.c.l.s4 1966171168
      %v9623 = vunpack.c.0.s8 %v9622
      %v9624 = vlaneseq
      %v9625 = vshrl.u32 %v9624, 7
      %v9626 = vsub.s32 %v9623, %v9625
      %v9627 = vrot.slane %v8124, %v9626
      %v9629 = vunpack.c.l.s4 1966171168
      %v9630 = vunpack.c.0.s8 %v9629
      %v9631 = vlaneseq
      %v9632 = vshrl.u32 %v9631, 7
      %v9633 = vsub.s32 %v9630, %v9632
      %v9634 = vrot.slane %v9620, %v9633
      %v9635 = vcombine.high %v9627, %v9627
      %v9636 = vcombine.high %v9634, %v9634
      %v9638 = vunpack.c.l.s4 1966171168
      %v9639 = vunpack.c.0.s8 %v9638
      %v9640 = vlaneseq
      %v9641 = vshrl.u32 %v9640, 7
      %v9642 = vsub.s32 %v9639, %v9641
      %v9643 = vrot.slane %v9627, %v9642
      %v9645 = vunpack.c.l.s4 1966171168
      %v9646 = vunpack.c.0.s8 %v9645
      %v9647 = vlaneseq
      %v9648 = vshrl.u32 %v9647, 7
      %v9649 = vsub.s32 %v9646, %v9648
      %v9650 = vrot.slane %v9634, %v9649
      %v9652 = vunpack.c.l.s4 1966171168
      %v9653 = vunpack.c.0.s8 %v9652
      %v9654 = vlaneseq
      %v9655 = vshrl.u32 %v9654, 7
      %v9656 = vsub.s32 %v9653, %v9655
      %v9657 = vrot.slane %v9635, %v9656
      %v9659 = vunpack.c.l.s4 1966171168
      %v9660 = vunpack.c.0.s8 %v9659
      %v9661 = vlaneseq
      %v9662 = vshrl.u32 %v9661, 7
      %v9663 = vsub.s32 %v9660, %v9662
      %v9664 = vrot.slane %v9636, %v9663
      %v9665 = vcombine.high %v9643, %v9643
      %v9666 = vcombine.high %v9650, %v9650
      %v9667 = vcombine.high %v9657, %v9657
      %v9668 = vcombine.high %v9664, %v9664
      %v9669 = vcombine.high %v8129, %v8129
      %v9671 = vunpack.c.l.s4 1966171168
      %v9672 = vunpack.c.0.s8 %v9671
      %v9673 = vlaneseq
      %v9674 = vshrl.u32 %v9673, 7
      %v9675 = vsub.s32 %v9672, %v9674
      %v9676 = vrot.slane %v8129, %v9675
      %v9678 = vunpack.c.l.s4 1966171168
      %v9679 = vunpack.c.0.s8 %v9678
      %v9680 = vlaneseq
      %v9681 = vshrl.u32 %v9680, 7
      %v9682 = vsub.s32 %v9679, %v9681
      %v9683 = vrot.slane %v9669, %v9682
      %v9684 = vcombine.high %v9676, %v9676
      %v9685 = vcombine.high %v9683, %v9683
      %v9687 = vunpack.c.l.s4 1966171168
      %v9688 = vunpack.c.0.s8 %v9687
      %v9689 = vlaneseq
      %v9690 = vshrl.u32 %v9689, 7
      %v9691 = vsub.s32 %v9688, %v9690
      %v9692 = vrot.slane %v9676, %v9691
      %v9694 = vunpack.c.l.s4 1966171168
      %v9695 = vunpack.c.0.s8 %v9694
      %v9696 = vlaneseq
      %v9697 = vshrl.u32 %v9696, 7
      %v9698 = vsub.s32 %v9695, %v9697
      %v9699 = vrot.slane %v9683, %v9698
      %v9701 = vunpack.c.l.s4 1966171168
      %v9702 = vunpack.c.0.s8 %v9701
      %v9703 = vlaneseq
      %v9704 = vshrl.u32 %v9703, 7
      %v9705 = vsub.s32 %v9702, %v9704
      %v9706 = vrot.slane %v9684, %v9705
      %v9708 = vunpack.c.l.s4 1966171168
      %v9709 = vunpack.c.0.s8 %v9708
      %v9710 = vlaneseq
      %v9711 = vshrl.u32 %v9710, 7
      %v9712 = vsub.s32 %v9709, %v9711
      %v9713 = vrot.slane %v9685, %v9712
      %v9714 = vcombine.high %v9692, %v9692
      %v9715 = vcombine.high %v9699, %v9699
      %v9716 = vcombine.high %v9706, %v9706
      %v9717 = vcombine.high %v9713, %v9713
      %v9718 = vcombine.high %v8134, %v8134
      %v9720 = vunpack.c.l.s4 1966171168
      %v9721 = vunpack.c.0.s8 %v9720
      %v9722 = vlaneseq
      %v9723 = vshrl.u32 %v9722, 7
      %v9724 = vsub.s32 %v9721, %v9723
      %v9725 = vrot.slane %v8134, %v9724
      %v9727 = vunpack.c.l.s4 1966171168
      %v9728 = vunpack.c.0.s8 %v9727
      %v9729 = vlaneseq
      %v9730 = vshrl.u32 %v9729, 7
      %v9731 = vsub.s32 %v9728, %v9730
      %v9732 = vrot.slane %v9718, %v9731
      %v9733 = vcombine.high %v9725, %v9725
      %v9734 = vcombine.high %v9732, %v9732
      %v9736 = vunpack.c.l.s4 1966171168
      %v9737 = vunpack.c.0.s8 %v9736
      %v9738 = vlaneseq
      %v9739 = vshrl.u32 %v9738, 7
      %v9740 = vsub.s32 %v9737, %v9739
      %v9741 = vrot.slane %v9725, %v9740
      %v9743 = vunpack.c.l.s4 1966171168
      %v9744 = vunpack.c.0.s8 %v9743
      %v9745 = vlaneseq
      %v9746 = vshrl.u32 %v9745, 7
      %v9747 = vsub.s32 %v9744, %v9746
      %v9748 = vrot.slane %v9732, %v9747
      %v9750 = vunpack.c.l.s4 1966171168
      %v9751 = vunpack.c.0.s8 %v9750
      %v9752 = vlaneseq
      %v9753 = vshrl.u32 %v9752, 7
      %v9754 = vsub.s32 %v9751, %v9753
      %v9755 = vrot.slane %v9733, %v9754
      %v9757 = vunpack.c.l.s4 1966171168
      %v9758 = vunpack.c.0.s8 %v9757
      %v9759 = vlaneseq
      %v9760 = vshrl.u32 %v9759, 7
      %v9761 = vsub.s32 %v9758, %v9760
      %v9762 = vrot.slane %v9734, %v9761
      %v9763 = vcombine.high %v9741, %v9741
      %v9764 = vcombine.high %v9748, %v9748
      %v9765 = vcombine.high %v9755, %v9755
      %v9766 = vcombine.high %v9762, %v9762
      %v9767 = vcombine.high %v8139, %v8139
      %v9769 = vunpack.c.l.s4 1966171168
      %v9770 = vunpack.c.0.s8 %v9769
      %v9771 = vlaneseq
      %v9772 = vshrl.u32 %v9771, 7
      %v9773 = vsub.s32 %v9770, %v9772
      %v9774 = vrot.slane %v8139, %v9773
      %v9776 = vunpack.c.l.s4 1966171168
      %v9777 = vunpack.c.0.s8 %v9776
      %v9778 = vlaneseq
      %v9779 = vshrl.u32 %v9778, 7
      %v9780 = vsub.s32 %v9777, %v9779
      %v9781 = vrot.slane %v9767, %v9780
      %v9782 = vcombine.high %v9774, %v9774
      %v9783 = vcombine.high %v9781, %v9781
      %v9785 = vunpack.c.l.s4 1966171168
      %v9786 = vunpack.c.0.s8 %v9785
      %v9787 = vlaneseq
      %v9788 = vshrl.u32 %v9787, 7
      %v9789 = vsub.s32 %v9786, %v9788
      %v9790 = vrot.slane %v9774, %v9789
      %v9792 = vunpack.c.l.s4 1966171168
      %v9793 = vunpack.c.0.s8 %v9792
      %v9794 = vlaneseq
      %v9795 = vshrl.u32 %v9794, 7
      %v9796 = vsub.s32 %v9793, %v9795
      %v9797 = vrot.slane %v9781, %v9796
      %v9799 = vunpack.c.l.s4 1966171168
      %v9800 = vunpack.c.0.s8 %v9799
      %v9801 = vlaneseq
      %v9802 = vshrl.u32 %v9801, 7
      %v9803 = vsub.s32 %v9800, %v9802
      %v9804 = vrot.slane %v9782, %v9803
      %v9806 = vunpack.c.l.s4 1966171168
      %v9807 = vunpack.c.0.s8 %v9806
      %v9808 = vlaneseq
      %v9809 = vshrl.u32 %v9808, 7
      %v9810 = vsub.s32 %v9807, %v9809
      %v9811 = vrot.slane %v9783, %v9810
      %v9812 = vcombine.high %v9790, %v9790
      %v9813 = vcombine.high %v9797, %v9797
      %v9814 = vcombine.high %v9804, %v9804
      %v9815 = vcombine.high %v9811, %v9811
      %v9816 = vcombine.high %v8144, %v8144
      %v9818 = vunpack.c.l.s4 1966171168
      %v9819 = vunpack.c.0.s8 %v9818
      %v9820 = vlaneseq
      %v9821 = vshrl.u32 %v9820, 7
      %v9822 = vsub.s32 %v9819, %v9821
      %v9823 = vrot.slane %v8144, %v9822
      %v9825 = vunpack.c.l.s4 1966171168
      %v9826 = vunpack.c.0.s8 %v9825
      %v9827 = vlaneseq
      %v9828 = vshrl.u32 %v9827, 7
      %v9829 = vsub.s32 %v9826, %v9828
      %v9830 = vrot.slane %v9816, %v9829
      %v9831 = vcombine.high %v9823, %v9823
      %v9832 = vcombine.high %v9830, %v9830
      %v9834 = vunpack.c.l.s4 1966171168
      %v9835 = vunpack.c.0.s8 %v9834
      %v9836 = vlaneseq
      %v9837 = vshrl.u32 %v9836, 7
      %v9838 = vsub.s32 %v9835, %v9837
      %v9839 = vrot.slane %v9823, %v9838
      %v9841 = vunpack.c.l.s4 1966171168
      %v9842 = vunpack.c.0.s8 %v9841
      %v9843 = vlaneseq
      %v9844 = vshrl.u32 %v9843, 7
      %v9845 = vsub.s32 %v9842, %v9844
      %v9846 = vrot.slane %v9830, %v9845
      %v9848 = vunpack.c.l.s4 1966171168
      %v9849 = vunpack.c.0.s8 %v9848
      %v9850 = vlaneseq
      %v9851 = vshrl.u32 %v9850, 7
      %v9852 = vsub.s32 %v9849, %v9851
      %v9853 = vrot.slane %v9831, %v9852
      %v9855 = vunpack.c.l.s4 1966171168
      %v9856 = vunpack.c.0.s8 %v9855
      %v9857 = vlaneseq
      %v9858 = vshrl.u32 %v9857, 7
      %v9859 = vsub.s32 %v9856, %v9858
      %v9860 = vrot.slane %v9832, %v9859
      %v9861 = vcombine.high %v9839, %v9839
      %v9862 = vcombine.high %v9846, %v9846
      %v9863 = vcombine.high %v9853, %v9853
      %v9864 = vcombine.high %v9860, %v9860
      %v9865 = vcombine.high %v8149, %v8149
      %v9867 = vunpack.c.l.s4 1966171168
      %v9868 = vunpack.c.0.s8 %v9867
      %v9869 = vlaneseq
      %v9870 = vshrl.u32 %v9869, 7
      %v9871 = vsub.s32 %v9868, %v9870
      %v9872 = vrot.slane %v8149, %v9871
      %v9874 = vunpack.c.l.s4 1966171168
      %v9875 = vunpack.c.0.s8 %v9874
      %v9876 = vlaneseq
      %v9877 = vshrl.u32 %v9876, 7
      %v9878 = vsub.s32 %v9875, %v9877
      %v9879 = vrot.slane %v9865, %v9878
      %v9880 = vcombine.high %v9872, %v9872
      %v9881 = vcombine.high %v9879, %v9879
      %v9883 = vunpack.c.l.s4 1966171168
      %v9884 = vunpack.c.0.s8 %v9883
      %v9885 = vlaneseq
      %v9886 = vshrl.u32 %v9885, 7
      %v9887 = vsub.s32 %v9884, %v9886
      %v9888 = vrot.slane %v9872, %v9887
      %v9890 = vunpack.c.l.s4 1966171168
      %v9891 = vunpack.c.0.s8 %v9890
      %v9892 = vlaneseq
      %v9893 = vshrl.u32 %v9892, 7
      %v9894 = vsub.s32 %v9891, %v9893
      %v9895 = vrot.slane %v9879, %v9894
      %v9897 = vunpack.c.l.s4 1966171168
      %v9898 = vunpack.c.0.s8 %v9897
      %v9899 = vlaneseq
      %v9900 = vshrl.u32 %v9899, 7
      %v9901 = vsub.s32 %v9898, %v9900
      %v9902 = vrot.slane %v9880, %v9901
      %v9904 = vunpack.c.l.s4 1966171168
      %v9905 = vunpack.c.0.s8 %v9904
      %v9906 = vlaneseq
      %v9907 = vshrl.u32 %v9906, 7
      %v9908 = vsub.s32 %v9905, %v9907
      %v9909 = vrot.slane %v9881, %v9908
      %v9910 = vcombine.high %v9888, %v9888
      %v9911 = vcombine.high %v9895, %v9895
      %v9912 = vcombine.high %v9902, %v9902
      %v9913 = vcombine.high %v9909, %v9909
      %v9914 = vcombine.high %v8154, %v8154
      %v9916 = vunpack.c.l.s4 1966171168
      %v9917 = vunpack.c.0.s8 %v9916
      %v9918 = vlaneseq
      %v9919 = vshrl.u32 %v9918, 7
      %v9920 = vsub.s32 %v9917, %v9919
      %v9921 = vrot.slane %v8154, %v9920
      %v9923 = vunpack.c.l.s4 1966171168
      %v9924 = vunpack.c.0.s8 %v9923
      %v9925 = vlaneseq
      %v9926 = vshrl.u32 %v9925, 7
      %v9927 = vsub.s32 %v9924, %v9926
      %v9928 = vrot.slane %v9914, %v9927
      %v9929 = vcombine.high %v9921, %v9921
      %v9930 = vcombine.high %v9928, %v9928
      %v9932 = vunpack.c.l.s4 1966171168
      %v9933 = vunpack.c.0.s8 %v9932
      %v9934 = vlaneseq
      %v9935 = vshrl.u32 %v9934, 7
      %v9936 = vsub.s32 %v9933, %v9935
      %v9937 = vrot.slane %v9921, %v9936
      %v9939 = vunpack.c.l.s4 1966171168
      %v9940 = vunpack.c.0.s8 %v9939
      %v9941 = vlaneseq
      %v9942 = vshrl.u32 %v9941, 7
      %v9943 = vsub.s32 %v9940, %v9942
      %v9944 = vrot.slane %v9928, %v9943
      %v9946 = vunpack.c.l.s4 1966171168
      %v9947 = vunpack.c.0.s8 %v9946
      %v9948 = vlaneseq
      %v9949 = vshrl.u32 %v9948, 7
      %v9950 = vsub.s32 %v9947, %v9949
      %v9951 = vrot.slane %v9929, %v9950
      %v9953 = vunpack.c.l.s4 1966171168
      %v9954 = vunpack.c.0.s8 %v9953
      %v9955 = vlaneseq
      %v9956 = vshrl.u32 %v9955, 7
      %v9957 = vsub.s32 %v9954, %v9956
      %v9958 = vrot.slane %v9930, %v9957
      %v9959 = vcombine.high %v9937, %v9937
      %v9960 = vcombine.high %v9944, %v9944
      %v9961 = vcombine.high %v9951, %v9951
      %v9962 = vcombine.high %v9958, %v9958
      %v9964 = vunpack.c.l.s4 1966171168
      %v9965 = vunpack.c.0.s8 %v9964
      %v9966 = vlaneseq
      %v9967 = vshrl.u32 %v9966, 7
      %v9968 = vsub.s32 %v9965, %v9967
      %v9969 = vrot.slane %v8159, %v9968
      %v9971 = vunpack.c.l.s4 1966171168
      %v9972 = vunpack.c.0.s8 %v9971
      %v9973 = vlaneseq
      %v9974 = vshrl.u32 %v9973, 7
      %v9975 = vsub.s32 %v9972, %v9974
      %v9976 = vrot.slane %v9969, %v9975
      %v9977 = vcombine.low %v8222, %v8236
      %v9978 = vcombine.low %v8244, %v8246
      %v9979 = vcombine.low %v8229, %v8243
      %v9980 = vcombine.low %v8245, %v8247
      %v9982 = vunpack.c.l.s4 1966171168
      %v9983 = vunpack.c.0.s8 %v9982
      %v9984 = vlaneseq
      %v9985 = vshrl.u32 %v9984, 7
      %v9986 = vsub.s32 %v9983, %v9985
      %v9987 = vrot.slane %v9977, %v9986
      %v9989 = vunpack.c.l.s4 1966171168
      %v9990 = vunpack.c.0.s8 %v9989
      %v9991 = vlaneseq
      %v9992 = vshrl.u32 %v9991, 7
      %v9993 = vsub.s32 %v9990, %v9992
      %v9994 = vrot.slane %v9978, %v9993
      %v9996 = vunpack.c.l.s4 1966171168
      %v9997 = vunpack.c.0.s8 %v9996
      %v9998 = vlaneseq
      %v9999 = vshrl.u32 %v9998, 7
      %v10000 = vsub.s32 %v9997, %v9999
      %v10001 = vrot.slane %v9979, %v10000
      %v10003 = vunpack.c.l.s4 1966171168
      %v10004 = vunpack.c.0.s8 %v10003
      %v10005 = vlaneseq
      %v10006 = vshrl.u32 %v10005, 7
      %v10007 = vsub.s32 %v10004, %v10006
      %v10008 = vrot.slane %v9980, %v10007
      %v10009 = vcombine.low %v9987, %v9994
      %v10010 = vcombine.low %v10001, %v10008
      %v10012 = vunpack.c.l.s4 1966171168
      %v10013 = vunpack.c.0.s8 %v10012
      %v10014 = vlaneseq
      %v10015 = vshrl.u32 %v10014, 7
      %v10016 = vsub.s32 %v10013, %v10015
      %v10017 = vrot.slane %v10009, %v10016
      %v10019 = vunpack.c.l.s4 1966171168
      %v10020 = vunpack.c.0.s8 %v10019
      %v10021 = vlaneseq
      %v10022 = vshrl.u32 %v10021, 7
      %v10023 = vsub.s32 %v10020, %v10022
      %v10024 = vrot.slane %v10010, %v10023
      %v10025 = vcombine.low %v10017, %v10024
      %v10026 = vcombine.low %v8271, %v8285
      %v10027 = vcombine.low %v8293, %v8295
      %v10028 = vcombine.low %v8278, %v8292
      %v10029 = vcombine.low %v8294, %v8296
      %v10031 = vunpack.c.l.s4 1966171168
      %v10032 = vunpack.c.0.s8 %v10031
      %v10033 = vlaneseq
      %v10034 = vshrl.u32 %v10033, 7
      %v10035 = vsub.s32 %v10032, %v10034
      %v10036 = vrot.slane %v10026, %v10035
      %v10038 = vunpack.c.l.s4 1966171168
      %v10039 = vunpack.c.0.s8 %v10038
      %v10040 = vlaneseq
      %v10041 = vshrl.u32 %v10040, 7
      %v10042 = vsub.s32 %v10039, %v10041
      %v10043 = vrot.slane %v10027, %v10042
      %v10045 = vunpack.c.l.s4 1966171168
      %v10046 = vunpack.c.0.s8 %v10045
      %v10047 = vlaneseq
      %v10048 = vshrl.u32 %v10047, 7
      %v10049 = vsub.s32 %v10046, %v10048
      %v10050 = vrot.slane %v10028, %v10049
      %v10052 = vunpack.c.l.s4 1966171168
      %v10053 = vunpack.c.0.s8 %v10052
      %v10054 = vlaneseq
      %v10055 = vshrl.u32 %v10054, 7
      %v10056 = vsub.s32 %v10053, %v10055
      %v10057 = vrot.slane %v10029, %v10056
      %v10058 = vcombine.low %v10036, %v10043
      %v10059 = vcombine.low %v10050, %v10057
      %v10061 = vunpack.c.l.s4 1966171168
      %v10062 = vunpack.c.0.s8 %v10061
      %v10063 = vlaneseq
      %v10064 = vshrl.u32 %v10063, 7
      %v10065 = vsub.s32 %v10062, %v10064
      %v10066 = vrot.slane %v10058, %v10065
      %v10068 = vunpack.c.l.s4 1966171168
      %v10069 = vunpack.c.0.s8 %v10068
      %v10070 = vlaneseq
      %v10071 = vshrl.u32 %v10070, 7
      %v10072 = vsub.s32 %v10069, %v10071
      %v10073 = vrot.slane %v10059, %v10072
      %v10074 = vcombine.low %v10066, %v10073
      %v10076 = vunpack.c.l.s4 1966171168
      %v10077 = vunpack.c.0.s8 %v10076
      %v10078 = vlaneseq
      %v10079 = vshrl.u32 %v10078, 7
      %v10080 = vsub.s32 %v10077, %v10079
      %v10081 = vrot.slane %v8320, %v10080
      %v10083 = vunpack.c.l.s4 1966171168
      %v10084 = vunpack.c.0.s8 %v10083
      %v10085 = vlaneseq
      %v10086 = vshrl.u32 %v10085, 7
      %v10087 = vsub.s32 %v10084, %v10086
      %v10088 = vrot.slane %v10081, %v10087
      %v10089 = vcombine.low %v8334, %v8342
      %v10090 = vcombine.low %v8344, %v8327
      %v10091 = vcombine.low %v8341, %v8343
      %v10092 = vcombine.low %v8345, %v8369
      %v10094 = vunpack.c.l.s4 1966171168
      %v10095 = vunpack.c.0.s8 %v10094
      %v10096 = vlaneseq
      %v10097 = vshrl.u32 %v10096, 7
      %v10098 = vsub.s32 %v10095, %v10097
      %v10099 = vrot.slane %v10089, %v10098
      %v10101 = vunpack.c.l.s4 1966171168
      %v10102 = vunpack.c.0.s8 %v10101
      %v10103 = vlaneseq
      %v10104 = vshrl.u32 %v10103, 7
      %v10105 = vsub.s32 %v10102, %v10104
      %v10106 = vrot.slane %v10090, %v10105
      %v10108 = vunpack.c.l.s4 1966171168
      %v10109 = vunpack.c.0.s8 %v10108
      %v10110 = vlaneseq
      %v10111 = vshrl.u32 %v10110, 7
      %v10112 = vsub.s32 %v10109, %v10111
      %v10113 = vrot.slane %v10091, %v10112
      %v10115 = vunpack.c.l.s4 1966171168
      %v10116 = vunpack.c.0.s8 %v10115
      %v10117 = vlaneseq
      %v10118 = vshrl.u32 %v10117, 7
      %v10119 = vsub.s32 %v10116, %v10118
      %v10120 = vrot.slane %v10092, %v10119
      %v10121 = vcombine.low %v10099, %v10106
      %v10122 = vcombine.low %v10113, %v10120
      %v10124 = vunpack.c.l.s4 1966171168
      %v10125 = vunpack.c.0.s8 %v10124
      %v10126 = vlaneseq
      %v10127 = vshrl.u32 %v10126, 7
      %v10128 = vsub.s32 %v10125, %v10127
      %v10129 = vrot.slane %v10121, %v10128
      %v10131 = vunpack.c.l.s4 1966171168
      %v10132 = vunpack.c.0.s8 %v10131
      %v10133 = vlaneseq
      %v10134 = vshrl.u32 %v10133, 7
      %v10135 = vsub.s32 %v10132, %v10134
      %v10136 = vrot.slane %v10122, %v10135
      %v10137 = vcombine.low %v10129, %v10136
      %v10138 = vcombine.low %v8383, %v8391
      %v10139 = vcombine.low %v8393, %v8376
      %v10140 = vcombine.low %v8390, %v8392
      %v10141 = vcombine.low %v8394, %v8418
      %v10143 = vunpack.c.l.s4 1966171168
      %v10144 = vunpack.c.0.s8 %v10143
      %v10145 = vlaneseq
      %v10146 = vshrl.u32 %v10145, 7
      %v10147 = vsub.s32 %v10144, %v10146
      %v10148 = vrot.slane %v10138, %v10147
      %v10150 = vunpack.c.l.s4 1966171168
      %v10151 = vunpack.c.0.s8 %v10150
      %v10152 = vlaneseq
      %v10153 = vshrl.u32 %v10152, 7
      %v10154 = vsub.s32 %v10151, %v10153
      %v10155 = vrot.slane %v10139, %v10154
      %v10157 = vunpack.c.l.s4 1966171168
      %v10158 = vunpack.c.0.s8 %v10157
      %v10159 = vlaneseq
      %v10160 = vshrl.u32 %v10159, 7
      %v10161 = vsub.s32 %v10158, %v10160
      %v10162 = vrot.slane %v10140, %v10161
      %v10164 = vunpack.c.l.s4 1966171168
      %v10165 = vunpack.c.0.s8 %v10164
      %v10166 = vlaneseq
      %v10167 = vshrl.u32 %v10166, 7
      %v10168 = vsub.s32 %v10165, %v10167
      %v10169 = vrot.slane %v10141, %v10168
      %v10170 = vcombine.low %v10148, %v10155
      %v10171 = vcombine.low %v10162, %v10169
      %v10173 = vunpack.c.l.s4 1966171168
      %v10174 = vunpack.c.0.s8 %v10173
      %v10175 = vlaneseq
      %v10176 = vshrl.u32 %v10175, 7
      %v10177 = vsub.s32 %v10174, %v10176
      %v10178 = vrot.slane %v10170, %v10177
      %v10180 = vunpack.c.l.s4 1966171168
      %v10181 = vunpack.c.0.s8 %v10180
      %v10182 = vlaneseq
      %v10183 = vshrl.u32 %v10182, 7
      %v10184 = vsub.s32 %v10181, %v10183
      %v10185 = vrot.slane %v10171, %v10184
      %v10186 = vcombine.low %v10178, %v10185
      %v10188 = vunpack.c.l.s4 1966171168
      %v10189 = vunpack.c.0.s8 %v10188
      %v10190 = vlaneseq
      %v10191 = vshrl.u32 %v10190, 7
      %v10192 = vsub.s32 %v10189, %v10191
      %v10193 = vrot.slane %v8432, %v10192
      %v10195 = vunpack.c.l.s4 1966171168
      %v10196 = vunpack.c.0.s8 %v10195
      %v10197 = vlaneseq
      %v10198 = vshrl.u32 %v10197, 7
      %v10199 = vsub.s32 %v10196, %v10198
      %v10200 = vrot.slane %v10193, %v10199
      %v10201 = vcombine.low %v8440, %v8442
      %v10202 = vcombine.low %v8425, %v8439
      %v10203 = vcombine.low %v8441, %v8443
      %v10204 = vcombine.low %v8467, %v8481
      %v10206 = vunpack.c.l.s4 1966171168
      %v10207 = vunpack.c.0.s8 %v10206
      %v10208 = vlaneseq
      %v10209 = vshrl.u32 %v10208, 7
      %v10210 = vsub.s32 %v10207, %v10209
      %v10211 = vrot.slane %v10201, %v10210
      %v10213 = vunpack.c.l.s4 1966171168
      %v10214 = vunpack.c.0.s8 %v10213
      %v10215 = vlaneseq
      %v10216 = vshrl.u32 %v10215, 7
      %v10217 = vsub.s32 %v10214, %v10216
      %v10218 = vrot.slane %v10202, %v10217
      %v10220 = vunpack.c.l.s4 1966171168
      %v10221 = vunpack.c.0.s8 %v10220
      %v10222 = vlaneseq
      %v10223 = vshrl.u32 %v10222, 7
      %v10224 = vsub.s32 %v10221, %v10223
      %v10225 = vrot.slane %v10203, %v10224
      %v10227 = vunpack.c.l.s4 1966171168
      %v10228 = vunpack.c.0.s8 %v10227
      %v10229 = vlaneseq
      %v10230 = vshrl.u32 %v10229, 7
      %v10231 = vsub.s32 %v10228, %v10230
      %v10232 = vrot.slane %v10204, %v10231
      %v10233 = vcombine.low %v10211, %v10218
      %v10234 = vcombine.low %v10225, %v10232
      %v10236 = vunpack.c.l.s4 1966171168
      %v10237 = vunpack.c.0.s8 %v10236
      %v10238 = vlaneseq
      %v10239 = vshrl.u32 %v10238, 7
      %v10240 = vsub.s32 %v10237, %v10239
      %v10241 = vrot.slane %v10233, %v10240
      %v10243 = vunpack.c.l.s4 1966171168
      %v10244 = vunpack.c.0.s8 %v10243
      %v10245 = vlaneseq
      %v10246 = vshrl.u32 %v10245, 7
      %v10247 = vsub.s32 %v10244, %v10246
      %v10248 = vrot.slane %v10234, %v10247
      %v10249 = vcombine.low %v10241, %v10248
      %v10250 = vcombine.low %v8489, %v8491
      %v10251 = vcombine.low %v8474, %v8488
      %v10252 = vcombine.low %v8490, %v8492
      %v10253 = vcombine.low %v8516, %v8530
      %v10255 = vunpack.c.l.s4 1966171168
      %v10256 = vunpack.c.0.s8 %v10255
      %v10257 = vlaneseq
      %v10258 = vshrl.u32 %v10257, 7
      %v10259 = vsub.s32 %v10256, %v10258
      %v10260 = vrot.slane %v10250, %v10259
      %v10262 = vunpack.c.l.s4 1966171168
      %v10263 = vunpack.c.0.s8 %v10262
      %v10264 = vlaneseq
      %v10265 = vshrl.u32 %v10264, 7
      %v10266 = vsub.s32 %v10263, %v10265
      %v10267 = vrot.slane %v10251, %v10266
      %v10269 = vunpack.c.l.s4 1966171168
      %v10270 = vunpack.c.0.s8 %v10269
      %v10271 = vlaneseq
      %v10272 = vshrl.u32 %v10271, 7
      %v10273 = vsub.s32 %v10270, %v10272
      %v10274 = vrot.slane %v10252, %v10273
      %v10276 = vunpack.c.l.s4 1966171168
      %v10277 = vunpack.c.0.s8 %v10276
      %v10278 = vlaneseq
      %v10279 = vshrl.u32 %v10278, 7
      %v10280 = vsub.s32 %v10277, %v10279
      %v10281 = vrot.slane %v10253, %v10280
      %v10282 = vcombine.low %v10260, %v10267
      %v10283 = vcombine.low %v10274, %v10281
      %v10285 = vunpack.c.l.s4 1966171168
      %v10286 = vunpack.c.0.s8 %v10285
      %v10287 = vlaneseq
      %v10288 = vshrl.u32 %v10287, 7
      %v10289 = vsub.s32 %v10286, %v10288
      %v10290 = vrot.slane %v10282, %v10289
      %v10292 = vunpack.c.l.s4 1966171168
      %v10293 = vunpack.c.0.s8 %v10292
      %v10294 = vlaneseq
      %v10295 = vshrl.u32 %v10294, 7
      %v10296 = vsub.s32 %v10293, %v10295
      %v10297 = vrot.slane %v10283, %v10296
      %v10298 = vcombine.low %v10290, %v10297
      %v10300 = vunpack.c.l.s4 1966171168
      %v10301 = vunpack.c.0.s8 %v10300
      %v10302 = vlaneseq
      %v10303 = vshrl.u32 %v10302, 7
      %v10304 = vsub.s32 %v10301, %v10303
      %v10305 = vrot.slane %v8538, %v10304
      %v10307 = vunpack.c.l.s4 1966171168
      %v10308 = vunpack.c.0.s8 %v10307
      %v10309 = vlaneseq
      %v10310 = vshrl.u32 %v10309, 7
      %v10311 = vsub.s32 %v10308, %v10310
      %v10312 = vrot.slane %v10305, %v10311
      %v10313 = vcombine.low %v8540, %v8523
      %v10314 = vcombine.low %v8537, %v8539
      %v10315 = vcombine.low %v8541, %v8565
      %v10316 = vcombine.low %v8579, %v8587
      %v10318 = vunpack.c.l.s4 1966171168
      %v10319 = vunpack.c.0.s8 %v10318
      %v10320 = vlaneseq
      %v10321 = vshrl.u32 %v10320, 7
      %v10322 = vsub.s32 %v10319, %v10321
      %v10323 = vrot.slane %v10313, %v10322
      %v10325 = vunpack.c.l.s4 1966171168
      %v10326 = vunpack.c.0.s8 %v10325
      %v10327 = vlaneseq
      %v10328 = vshrl.u32 %v10327, 7
      %v10329 = vsub.s32 %v10326, %v10328
      %v10330 = vrot.slane %v10314, %v10329
      %v10332 = vunpack.c.l.s4 1966171168
      %v10333 = vunpack.c.0.s8 %v10332
      %v10334 = vlaneseq
      %v10335 = vshrl.u32 %v10334, 7
      %v10336 = vsub.s32 %v10333, %v10335
      %v10337 = vrot.slane %v10315, %v10336
      %v10339 = vunpack.c.l.s4 1966171168
      %v10340 = vunpack.c.0.s8 %v10339
      %v10341 = vlaneseq
      %v10342 = vshrl.u32 %v10341, 7
      %v10343 = vsub.s32 %v10340, %v10342
      %v10344 = vrot.slane %v10316, %v10343
      %v10345 = vcombine.low %v10323, %v10330
      %v10346 = vcombine.low %v10337, %v10344
      %v10348 = vunpack.c.l.s4 1966171168
      %v10349 = vunpack.c.0.s8 %v10348
      %v10350 = vlaneseq
      %v10351 = vshrl.u32 %v10350, 7
      %v10352 = vsub.s32 %v10349, %v10351
      %v10353 = vrot.slane %v10345, %v10352
      %v10355 = vunpack.c.l.s4 1966171168
      %v10356 = vunpack.c.0.s8 %v10355
      %v10357 = vlaneseq
      %v10358 = vshrl.u32 %v10357, 7
      %v10359 = vsub.s32 %v10356, %v10358
      %v10360 = vrot.slane %v10346, %v10359
      %v10361 = vcombine.low %v10353, %v10360
      %v10362 = vcombine.low %v8589, %v8572
      %v10363 = vcombine.low %v8586, %v8588
      %v10364 = vcombine.low %v8590, %v8614
      %v10365 = vcombine.low %v8628, %v8636
      %v10367 = vunpack.c.l.s4 1966171168
      %v10368 = vunpack.c.0.s8 %v10367
      %v10369 = vlaneseq
      %v10370 = vshrl.u32 %v10369, 7
      %v10371 = vsub.s32 %v10368, %v10370
      %v10372 = vrot.slane %v10362, %v10371
      %v10374 = vunpack.c.l.s4 1966171168
      %v10375 = vunpack.c.0.s8 %v10374
      %v10376 = vlaneseq
      %v10377 = vshrl.u32 %v10376, 7
      %v10378 = vsub.s32 %v10375, %v10377
      %v10379 = vrot.slane %v10363, %v10378
      %v10381 = vunpack.c.l.s4 1966171168
      %v10382 = vunpack.c.0.s8 %v10381
      %v10383 = vlaneseq
      %v10384 = vshrl.u32 %v10383, 7
      %v10385 = vsub.s32 %v10382, %v10384
      %v10386 = vrot.slane %v10364, %v10385
      %v10388 = vunpack.c.l.s4 1966171168
      %v10389 = vunpack.c.0.s8 %v10388
      %v10390 = vlaneseq
      %v10391 = vshrl.u32 %v10390, 7
      %v10392 = vsub.s32 %v10389, %v10391
      %v10393 = vrot.slane %v10365, %v10392
      %v10394 = vcombine.low %v10372, %v10379
      %v10395 = vcombine.low %v10386, %v10393
      %v10397 = vunpack.c.l.s4 1966171168
      %v10398 = vunpack.c.0.s8 %v10397
      %v10399 = vlaneseq
      %v10400 = vshrl.u32 %v10399, 7
      %v10401 = vsub.s32 %v10398, %v10400
      %v10402 = vrot.slane %v10394, %v10401
      %v10404 = vunpack.c.l.s4 1966171168
      %v10405 = vunpack.c.0.s8 %v10404
      %v10406 = vlaneseq
      %v10407 = vshrl.u32 %v10406, 7
      %v10408 = vsub.s32 %v10405, %v10407
      %v10409 = vrot.slane %v10395, %v10408
      %v10410 = vcombine.low %v10402, %v10409
      %v10412 = vunpack.c.l.s4 1966171168
      %v10413 = vunpack.c.0.s8 %v10412
      %v10414 = vlaneseq
      %v10415 = vshrl.u32 %v10414, 7
      %v10416 = vsub.s32 %v10413, %v10415
      %v10417 = vrot.slane %v8638, %v10416
      %v10419 = vunpack.c.l.s4 1966171168
      %v10420 = vunpack.c.0.s8 %v10419
      %v10421 = vlaneseq
      %v10422 = vshrl.u32 %v10421, 7
      %v10423 = vsub.s32 %v10420, %v10422
      %v10424 = vrot.slane %v10417, %v10423
      %v10425 = vcombine.low %v8621, %v8635
      %v10426 = vcombine.low %v8637, %v8639
      %v10427 = vcombine.low %v8663, %v8677
      %v10428 = vcombine.low %v8685, %v8687
      %v10430 = vunpack.c.l.s4 1966171168
      %v10431 = vunpack.c.0.s8 %v10430
      %v10432 = vlaneseq
      %v10433 = vshrl.u32 %v10432, 7
      %v10434 = vsub.s32 %v10431, %v10433
      %v10435 = vrot.slane %v10425, %v10434
      %v10437 = vunpack.c.l.s4 1966171168
      %v10438 = vunpack.c.0.s8 %v10437
      %v10439 = vlaneseq
      %v10440 = vshrl.u32 %v10439, 7
      %v10441 = vsub.s32 %v10438, %v10440
      %v10442 = vrot.slane %v10426, %v10441
      %v10444 = vunpack.c.l.s4 1966171168
      %v10445 = vunpack.c.0.s8 %v10444
      %v10446 = vlaneseq
      %v10447 = vshrl.u32 %v10446, 7
      %v10448 = vsub.s32 %v10445, %v10447
      %v10449 = vrot.slane %v10427, %v10448
      %v10451 = vunpack.c.l.s4 1966171168
      %v10452 = vunpack.c.0.s8 %v10451
      %v10453 = vlaneseq
      %v10454 = vshrl.u32 %v10453, 7
      %v10455 = vsub.s32 %v10452, %v10454
      %v10456 = vrot.slane %v10428, %v10455
      %v10457 = vcombine.low %v10435, %v10442
      %v10458 = vcombine.low %v10449, %v10456
      %v10460 = vunpack.c.l.s4 1966171168
      %v10461 = vunpack.c.0.s8 %v10460
      %v10462 = vlaneseq
      %v10463 = vshrl.u32 %v10462, 7
      %v10464 = vsub.s32 %v10461, %v10463
      %v10465 = vrot.slane %v10457, %v10464
      %v10467 = vunpack.c.l.s4 1966171168
      %v10468 = vunpack.c.0.s8 %v10467
      %v10469 = vlaneseq
      %v10470 = vshrl.u32 %v10469, 7
      %v10471 = vsub.s32 %v10468, %v10470
      %v10472 = vrot.slane %v10458, %v10471
      %v10473 = vcombine.low %v10465, %v10472
      %v10474 = vcombine.low %v8670, %v8684
      %v10475 = vcombine.low %v8686, %v8688
      %v10476 = vcombine.low %v8712, %v8726
      %v10477 = vcombine.low %v8734, %v8736
      %v10479 = vunpack.c.l.s4 1966171168
      %v10480 = vunpack.c.0.s8 %v10479
      %v10481 = vlaneseq
      %v10482 = vshrl.u32 %v10481, 7
      %v10483 = vsub.s32 %v10480, %v10482
      %v10484 = vrot.slane %v10474, %v10483
      %v10486 = vunpack.c.l.s4 1966171168
      %v10487 = vunpack.c.0.s8 %v10486
      %v10488 = vlaneseq
      %v10489 = vshrl.u32 %v10488, 7
      %v10490 = vsub.s32 %v10487, %v10489
      %v10491 = vrot.slane %v10475, %v10490
      %v10493 = vunpack.c.l.s4 1966171168
      %v10494 = vunpack.c.0.s8 %v10493
      %v10495 = vlaneseq
      %v10496 = vshrl.u32 %v10495, 7
      %v10497 = vsub.s32 %v10494, %v10496
      %v10498 = vrot.slane %v10476, %v10497
      %v10500 = vunpack.c.l.s4 1966171168
      %v10501 = vunpack.c.0.s8 %v10500
      %v10502 = vlaneseq
      %v10503 = vshrl.u32 %v10502, 7
      %v10504 = vsub.s32 %v10501, %v10503
      %v10505 = vrot.slane %v10477, %v10504
      %v10506 = vcombine.low %v10484, %v10491
      %v10507 = vcombine.low %v10498, %v10505
      %v10509 = vunpack.c.l.s4 1966171168
      %v10510 = vunpack.c.0.s8 %v10509
      %v10511 = vlaneseq
      %v10512 = vshrl.u32 %v10511, 7
      %v10513 = vsub.s32 %v10510, %v10512
      %v10514 = vrot.slane %v10506, %v10513
      %v10516 = vunpack.c.l.s4 1966171168
      %v10517 = vunpack.c.0.s8 %v10516
      %v10518 = vlaneseq
      %v10519 = vshrl.u32 %v10518, 7
      %v10520 = vsub.s32 %v10517, %v10519
      %v10521 = vrot.slane %v10507, %v10520
      %v10522 = vcombine.low %v10514, %v10521
      %v10524 = vunpack.c.l.s4 1966171168
      %v10525 = vunpack.c.0.s8 %v10524
      %v10526 = vlaneseq
      %v10527 = vshrl.u32 %v10526, 7
      %v10528 = vsub.s32 %v10525, %v10527
      %v10529 = vrot.slane %v8719, %v10528
      %v10531 = vunpack.c.l.s4 1966171168
      %v10532 = vunpack.c.0.s8 %v10531
      %v10533 = vlaneseq
      %v10534 = vshrl.u32 %v10533, 7
      %v10535 = vsub.s32 %v10532, %v10534
      %v10536 = vrot.slane %v10529, %v10535
      %v10537 = vcombine.low %v8733, %v8735
      %v10538 = vcombine.low %v8737, %v8761
      %v10539 = vcombine.low %v8775, %v8783
      %v10540 = vcombine.low %v8785, %v8768
      %v10542 = vunpack.c.l.s4 1966171168
      %v10543 = vunpack.c.0.s8 %v10542
      %v10544 = vlaneseq
      %v10545 = vshrl.u32 %v10544, 7
      %v10546 = vsub.s32 %v10543, %v10545
      %v10547 = vrot.slane %v10537, %v10546
      %v10549 = vunpack.c.l.s4 1966171168
      %v10550 = vunpack.c.0.s8 %v10549
      %v10551 = vlaneseq
      %v10552 = vshrl.u32 %v10551, 7
      %v10553 = vsub.s32 %v10550, %v10552
      %v10554 = vrot.slane %v10538, %v10553
      %v10556 = vunpack.c.l.s4 1966171168
      %v10557 = vunpack.c.0.s8 %v10556
      %v10558 = vlaneseq
      %v10559 = vshrl.u32 %v10558, 7
      %v10560 = vsub.s32 %v10557, %v10559
      %v10561 = vrot.slane %v10539, %v10560
      %v10563 = vunpack.c.l.s4 1966171168
      %v10564 = vunpack.c.0.s8 %v10563
      %v10565 = vlaneseq
      %v10566 = vshrl.u32 %v10565, 7
      %v10567 = vsub.s32 %v10564, %v10566
      %v10568 = vrot.slane %v10540, %v10567
      %v10569 = vcombine.low %v10547, %v10554
      %v10570 = vcombine.low %v10561, %v10568
      %v10572 = vunpack.c.l.s4 1966171168
      %v10573 = vunpack.c.0.s8 %v10572
      %v10574 = vlaneseq
      %v10575 = vshrl.u32 %v10574, 7
      %v10576 = vsub.s32 %v10573, %v10575
      %v10577 = vrot.slane %v10569, %v10576
      %v10579 = vunpack.c.l.s4 1966171168
      %v10580 = vunpack.c.0.s8 %v10579
      %v10581 = vlaneseq
      %v10582 = vshrl.u32 %v10581, 7
      %v10583 = vsub.s32 %v10580, %v10582
      %v10584 = vrot.slane %v10570, %v10583
      %v10585 = vcombine.low %v10577, %v10584
      %v10586 = vcombine.low %v8782, %v8784
      %v10587 = vcombine.low %v8786, %v8810
      %v10588 = vcombine.low %v8824, %v8832
      %v10589 = vcombine.low %v8834, %v8817
      %v10591 = vunpack.c.l.s4 1966171168
      %v10592 = vunpack.c.0.s8 %v10591
      %v10593 = vlaneseq
      %v10594 = vshrl.u32 %v10593, 7
      %v10595 = vsub.s32 %v10592, %v10594
      %v10596 = vrot.slane %v10586, %v10595
      %v10598 = vunpack.c.l.s4 1966171168
      %v10599 = vunpack.c.0.s8 %v10598
      %v10600 = vlaneseq
      %v10601 = vshrl.u32 %v10600, 7
      %v10602 = vsub.s32 %v10599, %v10601
      %v10603 = vrot.slane %v10587, %v10602
      %v10605 = vunpack.c.l.s4 1966171168
      %v10606 = vunpack.c.0.s8 %v10605
      %v10607 = vlaneseq
      %v10608 = vshrl.u32 %v10607, 7
      %v10609 = vsub.s32 %v10606, %v10608
      %v10610 = vrot.slane %v10588, %v10609
      %v10612 = vunpack.c.l.s4 1966171168
      %v10613 = vunpack.c.0.s8 %v10612
      %v10614 = vlaneseq
      %v10615 = vshrl.u32 %v10614, 7
      %v10616 = vsub.s32 %v10613, %v10615
      %v10617 = vrot.slane %v10589, %v10616
      %v10618 = vcombine.low %v10596, %v10603
      %v10619 = vcombine.low %v10610, %v10617
      %v10621 = vunpack.c.l.s4 1966171168
      %v10622 = vunpack.c.0.s8 %v10621
      %v10623 = vlaneseq
      %v10624 = vshrl.u32 %v10623, 7
      %v10625 = vsub.s32 %v10622, %v10624
      %v10626 = vrot.slane %v10618, %v10625
      %v10628 = vunpack.c.l.s4 1966171168
      %v10629 = vunpack.c.0.s8 %v10628
      %v10630 = vlaneseq
      %v10631 = vshrl.u32 %v10630, 7
      %v10632 = vsub.s32 %v10629, %v10631
      %v10633 = vrot.slane %v10619, %v10632
      %v10634 = vcombine.low %v10626, %v10633
      %v10636 = vunpack.c.l.s4 1966171168
      %v10637 = vunpack.c.0.s8 %v10636
      %v10638 = vlaneseq
      %v10639 = vshrl.u32 %v10638, 7
      %v10640 = vsub.s32 %v10637, %v10639
      %v10641 = vrot.slane %v8831, %v10640
      %v10643 = vunpack.c.l.s4 1966171168
      %v10644 = vunpack.c.0.s8 %v10643
      %v10645 = vlaneseq
      %v10646 = vshrl.u32 %v10645, 7
      %v10647 = vsub.s32 %v10644, %v10646
      %v10648 = vrot.slane %v10641, %v10647
      %v10649 = vcombine.low %v8833, %v8835
      %v10650 = vcombine.low %v8859, %v8873
      %v10651 = vcombine.low %v8881, %v8883
      %v10652 = vcombine.low %v8866, %v8880
      %v10654 = vunpack.c.l.s4 1966171168
      %v10655 = vunpack.c.0.s8 %v10654
      %v10656 = vlaneseq
      %v10657 = vshrl.u32 %v10656, 7
      %v10658 = vsub.s32 %v10655, %v10657
      %v10659 = vrot.slane %v10649, %v10658
      %v10661 = vunpack.c.l.s4 1966171168
      %v10662 = vunpack.c.0.s8 %v10661
      %v10663 = vlaneseq
      %v10664 = vshrl.u32 %v10663, 7
      %v10665 = vsub.s32 %v10662, %v10664
      %v10666 = vrot.slane %v10650, %v10665
      %v10668 = vunpack.c.l.s4 1966171168
      %v10669 = vunpack.c.0.s8 %v10668
      %v10670 = vlaneseq
      %v10671 = vshrl.u32 %v10670, 7
      %v10672 = vsub.s32 %v10669, %v10671
      %v10673 = vrot.slane %v10651, %v10672
      %v10675 = vunpack.c.l.s4 1966171168
      %v10676 = vunpack.c.0.s8 %v10675
      %v10677 = vlaneseq
      %v10678 = vshrl.u32 %v10677, 7
      %v10679 = vsub.s32 %v10676, %v10678
      %v10680 = vrot.slane %v10652, %v10679
      %v10681 = vcombine.low %v10659, %v10666
      %v10682 = vcombine.low %v10673, %v10680
      %v10684 = vunpack.c.l.s4 1966171168
      %v10685 = vunpack.c.0.s8 %v10684
      %v10686 = vlaneseq
      %v10687 = vshrl.u32 %v10686, 7
      %v10688 = vsub.s32 %v10685, %v10687
      %v10689 = vrot.slane %v10681, %v10688
      %v10691 = vunpack.c.l.s4 1966171168
      %v10692 = vunpack.c.0.s8 %v10691
      %v10693 = vlaneseq
      %v10694 = vshrl.u32 %v10693, 7
      %v10695 = vsub.s32 %v10692, %v10694
      %v10696 = vrot.slane %v10682, %v10695
      %v10697 = vcombine.low %v10689, %v10696
      %v10698 = vcombine.low %v8882, %v8884
      %v10699 = vcombine.low %v8908, %v8922
      %v10700 = vcombine.low %v8930, %v8932
      %v10701 = vcombine.low %v8915, %v8929
      %v10703 = vunpack.c.l.s4 1966171168
      %v10704 = vunpack.c.0.s8 %v10703
      %v10705 = vlaneseq
      %v10706 = vshrl.u32 %v10705, 7
      %v10707 = vsub.s32 %v10704, %v10706
      %v10708 = vrot.slane %v10698, %v10707
      %v10710 = vunpack.c.l.s4 1966171168
      %v10711 = vunpack.c.0.s8 %v10710
      %v10712 = vlaneseq
      %v10713 = vshrl.u32 %v10712, 7
      %v10714 = vsub.s32 %v10711, %v10713
      %v10715 = vrot.slane %v10699, %v10714
      %v10717 = vunpack.c.l.s4 1966171168
      %v10718 = vunpack.c.0.s8 %v10717
      %v10719 = vlaneseq
      %v10720 = vshrl.u32 %v10719, 7
      %v10721 = vsub.s32 %v10718, %v10720
      %v10722 = vrot.slane %v10700, %v10721
      %v10724 = vunpack.c.l.s4 1966171168
      %v10725 = vunpack.c.0.s8 %v10724
      %v10726 = vlaneseq
      %v10727 = vshrl.u32 %v10726, 7
      %v10728 = vsub.s32 %v10725, %v10727
      %v10729 = vrot.slane %v10701, %v10728
      %v10730 = vcombine.low %v10708, %v10715
      %v10731 = vcombine.low %v10722, %v10729
      %v10733 = vunpack.c.l.s4 1966171168
      %v10734 = vunpack.c.0.s8 %v10733
      %v10735 = vlaneseq
      %v10736 = vshrl.u32 %v10735, 7
      %v10737 = vsub.s32 %v10734, %v10736
      %v10738 = vrot.slane %v10730, %v10737
      %v10740 = vunpack.c.l.s4 1966171168
      %v10741 = vunpack.c.0.s8 %v10740
      %v10742 = vlaneseq
      %v10743 = vshrl.u32 %v10742, 7
      %v10744 = vsub.s32 %v10741, %v10743
      %v10745 = vrot.slane %v10731, %v10744
      %v10746 = vcombine.low %v10738, %v10745
      %v10748 = vunpack.c.l.s4 1966171168
      %v10749 = vunpack.c.0.s8 %v10748
      %v10750 = vlaneseq
      %v10751 = vshrl.u32 %v10750, 7
      %v10752 = vsub.s32 %v10749, %v10751
      %v10753 = vrot.slane %v8931, %v10752
      %v10755 = vunpack.c.l.s4 1966171168
      %v10756 = vunpack.c.0.s8 %v10755
      %v10757 = vlaneseq
      %v10758 = vshrl.u32 %v10757, 7
      %v10759 = vsub.s32 %v10756, %v10758
      %v10760 = vrot.slane %v10753, %v10759
      %v10761 = vcombine.low %v8933, %v8957
      %v10762 = vcombine.low %v8971, %v8979
      %v10763 = vcombine.low %v8981, %v8964
      %v10764 = vcombine.low %v8978, %v8980
      %v10766 = vunpack.c.l.s4 1966171168
      %v10767 = vunpack.c.0.s8 %v10766
      %v10768 = vlaneseq
      %v10769 = vshrl.u32 %v10768, 7
      %v10770 = vsub.s32 %v10767, %v10769
      %v10771 = vrot.slane %v10761, %v10770
      %v10773 = vunpack.c.l.s4 1966171168
      %v10774 = vunpack.c.0.s8 %v10773
      %v10775 = vlaneseq
      %v10776 = vshrl.u32 %v10775, 7
      %v10777 = vsub.s32 %v10774, %v10776
      %v10778 = vrot.slane %v10762, %v10777
      %v10780 = vunpack.c.l.s4 1966171168
      %v10781 = vunpack.c.0.s8 %v10780
      %v10782 = vlaneseq
      %v10783 = vshrl.u32 %v10782, 7
      %v10784 = vsub.s32 %v10781, %v10783
      %v10785 = vrot.slane %v10763, %v10784
      %v10787 = vunpack.c.l.s4 1966171168
      %v10788 = vunpack.c.0.s8 %v10787
      %v10789 = vlaneseq
      %v10790 = vshrl.u32 %v10789, 7
      %v10791 = vsub.s32 %v10788, %v10790
      %v10792 = vrot.slane %v10764, %v10791
      %v10793 = vcombine.low %v10771, %v10778
      %v10794 = vcombine.low %v10785, %v10792
      %v10796 = vunpack.c.l.s4 1966171168
      %v10797 = vunpack.c.0.s8 %v10796
      %v10798 = vlaneseq
      %v10799 = vshrl.u32 %v10798, 7
      %v10800 = vsub.s32 %v10797, %v10799
      %v10801 = vrot.slane %v10793, %v10800
      %v10803 = vunpack.c.l.s4 1966171168
      %v10804 = vunpack.c.0.s8 %v10803
      %v10805 = vlaneseq
      %v10806 = vshrl.u32 %v10805, 7
      %v10807 = vsub.s32 %v10804, %v10806
      %v10808 = vrot.slane %v10794, %v10807
      %v10809 = vcombine.low %v10801, %v10808
      %v10810 = vcombine.low %v8982, %v9006
      %v10811 = vcombine.low %v9020, %v9028
      %v10812 = vcombine.low %v9030, %v9013
      %v10813 = vcombine.low %v9027, %v9029
      %v10815 = vunpack.c.l.s4 1966171168
      %v10816 = vunpack.c.0.s8 %v10815
      %v10817 = vlaneseq
      %v10818 = vshrl.u32 %v10817, 7
      %v10819 = vsub.s32 %v10816, %v10818
      %v10820 = vrot.slane %v10810, %v10819
      %v10822 = vunpack.c.l.s4 1966171168
      %v10823 = vunpack.c.0.s8 %v10822
      %v10824 = vlaneseq
      %v10825 = vshrl.u32 %v10824, 7
      %v10826 = vsub.s32 %v10823, %v10825
      %v10827 = vrot.slane %v10811, %v10826
      %v10829 = vunpack.c.l.s4 1966171168
      %v10830 = vunpack.c.0.s8 %v10829
      %v10831 = vlaneseq
      %v10832 = vshrl.u32 %v10831, 7
      %v10833 = vsub.s32 %v10830, %v10832
      %v10834 = vrot.slane %v10812, %v10833
      %v10836 = vunpack.c.l.s4 1966171168
      %v10837 = vunpack.c.0.s8 %v10836
      %v10838 = vlaneseq
      %v10839 = vshrl.u32 %v10838, 7
      %v10840 = vsub.s32 %v10837, %v10839
      %v10841 = vrot.slane %v10813, %v10840
      %v10842 = vcombine.low %v10820, %v10827
      %v10843 = vcombine.low %v10834, %v10841
      %v10845 = vunpack.c.l.s4 1966171168
      %v10846 = vunpack.c.0.s8 %v10845
      %v10847 = vlaneseq
      %v10848 = vshrl.u32 %v10847, 7
      %v10849 = vsub.s32 %v10846, %v10848
      %v10850 = vrot.slane %v10842, %v10849
      %v10852 = vunpack.c.l.s4 1966171168
      %v10853 = vunpack.c.0.s8 %v10852
      %v10854 = vlaneseq
      %v10855 = vshrl.u32 %v10854, 7
      %v10856 = vsub.s32 %v10853, %v10855
      %v10857 = vrot.slane %v10843, %v10856
      %v10858 = vcombine.low %v10850, %v10857
      %v10860 = vunpack.c.l.s4 1966171168
      %v10861 = vunpack.c.0.s8 %v10860
      %v10862 = vlaneseq
      %v10863 = vshrl.u32 %v10862, 7
      %v10864 = vsub.s32 %v10861, %v10863
      %v10865 = vrot.slane %v9031, %v10864
      %v10867 = vunpack.c.l.s4 1966171168
      %v10868 = vunpack.c.0.s8 %v10867
      %v10869 = vlaneseq
      %v10870 = vshrl.u32 %v10869, 7
      %v10871 = vsub.s32 %v10868, %v10870
      %v10872 = vrot.slane %v10865, %v10871
      %v10873 = vcombine.low %v9055, %v9069
      %v10874 = vcombine.low %v9077, %v9079
      %v10875 = vcombine.low %v9062, %v9076
      %v10876 = vcombine.low %v9078, %v9080
      %v10878 = vunpack.c.l.s4 1966171168
      %v10879 = vunpack.c.0.s8 %v10878
      %v10880 = vlaneseq
      %v10881 = vshrl.u32 %v10880, 7
      %v10882 = vsub.s32 %v10879, %v10881
      %v10883 = vrot.slane %v10873, %v10882
      %v10885 = vunpack.c.l.s4 1966171168
      %v10886 = vunpack.c.0.s8 %v10885
      %v10887 = vlaneseq
      %v10888 = vshrl.u32 %v10887, 7
      %v10889 = vsub.s32 %v10886, %v10888
      %v10890 = vrot.slane %v10874, %v10889
      %v10892 = vunpack.c.l.s4 1966171168
      %v10893 = vunpack.c.0.s8 %v10892
      %v10894 = vlaneseq
      %v10895 = vshrl.u32 %v10894, 7
      %v10896 = vsub.s32 %v10893, %v10895
      %v10897 = vrot.slane %v10875, %v10896
      %v10899 = vunpack.c.l.s4 1966171168
      %v10900 = vunpack.c.0.s8 %v10899
      %v10901 = vlaneseq
      %v10902 = vshrl.u32 %v10901, 7
      %v10903 = vsub.s32 %v10900, %v10902
      %v10904 = vrot.slane %v10876, %v10903
      %v10905 = vcombine.low %v10883, %v10890
      %v10906 = vcombine.low %v10897, %v10904
      %v10908 = vunpack.c.l.s4 1966171168
      %v10909 = vunpack.c.0.s8 %v10908
      %v10910 = vlaneseq
      %v10911 = vshrl.u32 %v10910, 7
      %v10912 = vsub.s32 %v10909, %v10911
      %v10913 = vrot.slane %v10905, %v10912
      %v10915 = vunpack.c.l.s4 1966171168
      %v10916 = vunpack.c.0.s8 %v10915
      %v10917 = vlaneseq
      %v10918 = vshrl.u32 %v10917, 7
      %v10919 = vsub.s32 %v10916, %v10918
      %v10920 = vrot.slane %v10906, %v10919
      %v10921 = vcombine.low %v10913, %v10920
      %v10922 = vcombine.low %v9104, %v9118
      %v10923 = vcombine.low %v9126, %v9128
      %v10924 = vcombine.low %v9111, %v9125
      %v10925 = vcombine.low %v9127, %v9129
      %v10927 = vunpack.c.l.s4 1966171168
      %v10928 = vunpack.c.0.s8 %v10927
      %v10929 = vlaneseq
      %v10930 = vshrl.u32 %v10929, 7
      %v10931 = vsub.s32 %v10928, %v10930
      %v10932 = vrot.slane %v10922, %v10931
      %v10934 = vunpack.c.l.s4 1966171168
      %v10935 = vunpack.c.0.s8 %v10934
      %v10936 = vlaneseq
      %v10937 = vshrl.u32 %v10936, 7
      %v10938 = vsub.s32 %v10935, %v10937
      %v10939 = vrot.slane %v10923, %v10938
      %v10941 = vunpack.c.l.s4 1966171168
      %v10942 = vunpack.c.0.s8 %v10941
      %v10943 = vlaneseq
      %v10944 = vshrl.u32 %v10943, 7
      %v10945 = vsub.s32 %v10942, %v10944
      %v10946 = vrot.slane %v10924, %v10945
      %v10948 = vunpack.c.l.s4 1966171168
      %v10949 = vunpack.c.0.s8 %v10948
      %v10950 = vlaneseq
      %v10951 = vshrl.u32 %v10950, 7
      %v10952 = vsub.s32 %v10949, %v10951
      %v10953 = vrot.slane %v10925, %v10952
      %v10954 = vcombine.low %v10932, %v10939
      %v10955 = vcombine.low %v10946, %v10953
      %v10957 = vunpack.c.l.s4 1966171168
      %v10958 = vunpack.c.0.s8 %v10957
      %v10959 = vlaneseq
      %v10960 = vshrl.u32 %v10959, 7
      %v10961 = vsub.s32 %v10958, %v10960
      %v10962 = vrot.slane %v10954, %v10961
      %v10964 = vunpack.c.l.s4 1966171168
      %v10965 = vunpack.c.0.s8 %v10964
      %v10966 = vlaneseq
      %v10967 = vshrl.u32 %v10966, 7
      %v10968 = vsub.s32 %v10965, %v10967
      %v10969 = vrot.slane %v10955, %v10968
      %v10970 = vcombine.low %v10962, %v10969
      %v10972 = vunpack.c.l.s4 1966171168
      %v10973 = vunpack.c.0.s8 %v10972
      %v10974 = vlaneseq
      %v10975 = vshrl.u32 %v10974, 7
      %v10976 = vsub.s32 %v10973, %v10975
      %v10977 = vrot.slane %v9153, %v10976
      %v10979 = vunpack.c.l.s4 1966171168
      %v10980 = vunpack.c.0.s8 %v10979
      %v10981 = vlaneseq
      %v10982 = vshrl.u32 %v10981, 7
      %v10983 = vsub.s32 %v10980, %v10982
      %v10984 = vrot.slane %v10977, %v10983
      %v10985 = vcombine.low %v9167, %v9175
      %v10986 = vcombine.low %v9177, %v9160
      %v10987 = vcombine.low %v9174, %v9176
      %v10988 = vcombine.low %v9178, %v9202
      %v10990 = vunpack.c.l.s4 1966171168
      %v10991 = vunpack.c.0.s8 %v10990
      %v10992 = vlaneseq
      %v10993 = vshrl.u32 %v10992, 7
      %v10994 = vsub.s32 %v10991, %v10993
      %v10995 = vrot.slane %v10985, %v10994
      %v10997 = vunpack.c.l.s4 1966171168
      %v10998 = vunpack.c.0.s8 %v10997
      %v10999 = vlaneseq
      %v11000 = vshrl.u32 %v10999, 7
      %v11001 = vsub.s32 %v10998, %v11000
      %v11002 = vrot.slane %v10986, %v11001
      %v11004 = vunpack.c.l.s4 1966171168
      %v11005 = vunpack.c.0.s8 %v11004
      %v11006 = vlaneseq
      %v11007 = vshrl.u32 %v11006, 7
      %v11008 = vsub.s32 %v11005, %v11007
      %v11009 = vrot.slane %v10987, %v11008
      %v11011 = vunpack.c.l.s4 1966171168
      %v11012 = vunpack.c.0.s8 %v11011
      %v11013 = vlaneseq
      %v11014 = vshrl.u32 %v11013, 7
      %v11015 = vsub.s32 %v11012, %v11014
      %v11016 = vrot.slane %v10988, %v11015
      %v11017 = vcombine.low %v10995, %v11002
      %v11018 = vcombine.low %v11009, %v11016
      %v11020 = vunpack.c.l.s4 1966171168
      %v11021 = vunpack.c.0.s8 %v11020
      %v11022 = vlaneseq
      %v11023 = vshrl.u32 %v11022, 7
      %v11024 = vsub.s32 %v11021, %v11023
      %v11025 = vrot.slane %v11017, %v11024
      %v11027 = vunpack.c.l.s4 1966171168
      %v11028 = vunpack.c.0.s8 %v11027
      %v11029 = vlaneseq
      %v11030 = vshrl.u32 %v11029, 7
      %v11031 = vsub.s32 %v11028, %v11030
      %v11032 = vrot.slane %v11018, %v11031
      %v11033 = vcombine.low %v11025, %v11032
      %v11034 = vcombine.low %v9216, %v9224
      %v11035 = vcombine.low %v9226, %v9209
      %v11036 = vcombine.low %v9223, %v9225
      %v11037 = vcombine.low %v9227, %v9251
      %v11039 = vunpack.c.l.s4 1966171168
      %v11040 = vunpack.c.0.s8 %v11039
      %v11041 = vlaneseq
      %v11042 = vshrl.u32 %v11041, 7
      %v11043 = vsub.s32 %v11040, %v11042
      %v11044 = vrot.slane %v11034, %v11043
      %v11046 = vunpack.c.l.s4 1966171168
      %v11047 = vunpack.c.0.s8 %v11046
      %v11048 = vlaneseq
      %v11049 = vshrl.u32 %v11048, 7
      %v11050 = vsub.s32 %v11047, %v11049
      %v11051 = vrot.slane %v11035, %v11050
      %v11053 = vunpack.c.l.s4 1966171168
      %v11054 = vunpack.c.0.s8 %v11053
      %v11055 = vlaneseq
      %v11056 = vshrl.u32 %v11055, 7
      %v11057 = vsub.s32 %v11054, %v11056
      %v11058 = vrot.slane %v11036, %v11057
      %v11060 = vunpack.c.l.s4 1966171168
      %v11061 = vunpack.c.0.s8 %v11060
      %v11062 = vlaneseq
      %v11063 = vshrl.u32 %v11062, 7
      %v11064 = vsub.s32 %v11061, %v11063
      %v11065 = vrot.slane %v11037, %v11064
      %v11066 = vcombine.low %v11044, %v11051
      %v11067 = vcombine.low %v11058, %v11065
      %v11069 = vunpack.c.l.s4 1966171168
      %v11070 = vunpack.c.0.s8 %v11069
      %v11071 = vlaneseq
      %v11072 = vshrl.u32 %v11071, 7
      %v11073 = vsub.s32 %v11070, %v11072
      %v11074 = vrot.slane %v11066, %v11073
      %v11076 = vunpack.c.l.s4 1966171168
      %v11077 = vunpack.c.0.s8 %v11076
      %v11078 = vlaneseq
      %v11079 = vshrl.u32 %v11078, 7
      %v11080 = vsub.s32 %v11077, %v11079
      %v11081 = vrot.slane %v11067, %v11080
      %v11082 = vcombine.low %v11074, %v11081
      %v11084 = vunpack.c.l.s4 1966171168
      %v11085 = vunpack.c.0.s8 %v11084
      %v11086 = vlaneseq
      %v11087 = vshrl.u32 %v11086, 7
      %v11088 = vsub.s32 %v11085, %v11087
      %v11089 = vrot.slane %v9265, %v11088
      %v11091 = vunpack.c.l.s4 1966171168
      %v11092 = vunpack.c.0.s8 %v11091
      %v11093 = vlaneseq
      %v11094 = vshrl.u32 %v11093, 7
      %v11095 = vsub.s32 %v11092, %v11094
      %v11096 = vrot.slane %v11089, %v11095
      %v11097 = vcombine.low %v9273, %v9275
      %v11098 = vcombine.low %v9258, %v9272
      %v11099 = vcombine.low %v9274, %v9276
      %v11100 = vcombine.low %v9300, %v9314
      %v11102 = vunpack.c.l.s4 1966171168
      %v11103 = vunpack.c.0.s8 %v11102
      %v11104 = vlaneseq
      %v11105 = vshrl.u32 %v11104, 7
      %v11106 = vsub.s32 %v11103, %v11105
      %v11107 = vrot.slane %v11097, %v11106
      %v11109 = vunpack.c.l.s4 1966171168
      %v11110 = vunpack.c.0.s8 %v11109
      %v11111 = vlaneseq
      %v11112 = vshrl.u32 %v11111, 7
      %v11113 = vsub.s32 %v11110, %v11112
      %v11114 = vrot.slane %v11098, %v11113
      %v11116 = vunpack.c.l.s4 1966171168
      %v11117 = vunpack.c.0.s8 %v11116
      %v11118 = vlaneseq
      %v11119 = vshrl.u32 %v11118, 7
      %v11120 = vsub.s32 %v11117, %v11119
      %v11121 = vrot.slane %v11099, %v11120
      %v11123 = vunpack.c.l.s4 1966171168
      %v11124 = vunpack.c.0.s8 %v11123
      %v11125 = vlaneseq
      %v11126 = vshrl.u32 %v11125, 7
      %v11127 = vsub.s32 %v11124, %v11126
      %v11128 = vrot.slane %v11100, %v11127
      %v11129 = vcombine.low %v11107, %v11114
      %v11130 = vcombine.low %v11121, %v11128
      %v11132 = vunpack.c.l.s4 1966171168
      %v11133 = vunpack.c.0.s8 %v11132
      %v11134 = vlaneseq
      %v11135 = vshrl.u32 %v11134, 7
      %v11136 = vsub.s32 %v11133, %v11135
      %v11137 = vrot.slane %v11129, %v11136
      %v11139 = vunpack.c.l.s4 1966171168
      %v11140 = vunpack.c.0.s8 %v11139
      %v11141 = vlaneseq
      %v11142 = vshrl.u32 %v11141, 7
      %v11143 = vsub.s32 %v11140, %v11142
      %v11144 = vrot.slane %v11130, %v11143
      %v11145 = vcombine.low %v11137, %v11144
      %v11146 = vcombine.low %v9322, %v9324
      %v11147 = vcombine.low %v9307, %v9321
      %v11148 = vcombine.low %v9323, %v9325
      %v11149 = vcombine.low %v9349, %v9363
      %v11151 = vunpack.c.l.s4 1966171168
      %v11152 = vunpack.c.0.s8 %v11151
      %v11153 = vlaneseq
      %v11154 = vshrl.u32 %v11153, 7
      %v11155 = vsub.s32 %v11152, %v11154
      %v11156 = vrot.slane %v11146, %v11155
      %v11158 = vunpack.c.l.s4 1966171168
      %v11159 = vunpack.c.0.s8 %v11158
      %v11160 = vlaneseq
      %v11161 = vshrl.u32 %v11160, 7
      %v11162 = vsub.s32 %v11159, %v11161
      %v11163 = vrot.slane %v11147, %v11162
      %v11165 = vunpack.c.l.s4 1966171168
      %v11166 = vunpack.c.0.s8 %v11165
      %v11167 = vlaneseq
      %v11168 = vshrl.u32 %v11167, 7
      %v11169 = vsub.s32 %v11166, %v11168
      %v11170 = vrot.slane %v11148, %v11169
      %v11172 = vunpack.c.l.s4 1966171168
      %v11173 = vunpack.c.0.s8 %v11172
      %v11174 = vlaneseq
      %v11175 = vshrl.u32 %v11174, 7
      %v11176 = vsub.s32 %v11173, %v11175
      %v11177 = vrot.slane %v11149, %v11176
      %v11178 = vcombine.low %v11156, %v11163
      %v11179 = vcombine.low %v11170, %v11177
      %v11181 = vunpack.c.l.s4 1966171168
      %v11182 = vunpack.c.0.s8 %v11181
      %v11183 = vlaneseq
      %v11184 = vshrl.u32 %v11183, 7
      %v11185 = vsub.s32 %v11182, %v11184
      %v11186 = vrot.slane %v11178, %v11185
      %v11188 = vunpack.c.l.s4 1966171168
      %v11189 = vunpack.c.0.s8 %v11188
      %v11190 = vlaneseq
      %v11191 = vshrl.u32 %v11190, 7
      %v11192 = vsub.s32 %v11189, %v11191
      %v11193 = vrot.slane %v11179, %v11192
      %v11194 = vcombine.low %v11186, %v11193
      %v11196 = vunpack.c.l.s4 1966171168
      %v11197 = vunpack.c.0.s8 %v11196
      %v11198 = vlaneseq
      %v11199 = vshrl.u32 %v11198, 7
      %v11200 = vsub.s32 %v11197, %v11199
      %v11201 = vrot.slane %v9371, %v11200
      %v11203 = vunpack.c.l.s4 1966171168
      %v11204 = vunpack.c.0.s8 %v11203
      %v11205 = vlaneseq
      %v11206 = vshrl.u32 %v11205, 7
      %v11207 = vsub.s32 %v11204, %v11206
      %v11208 = vrot.slane %v11201, %v11207
      %v11209 = vcombine.low %v9373, %v9356
      %v11210 = vcombine.low %v9370, %v9372
      %v11211 = vcombine.low %v9374, %v9398
      %v11212 = vcombine.low %v9412, %v9420
      %v11214 = vunpack.c.l.s4 1966171168
      %v11215 = vunpack.c.0.s8 %v11214
      %v11216 = vlaneseq
      %v11217 = vshrl.u32 %v11216, 7
      %v11218 = vsub.s32 %v11215, %v11217
      %v11219 = vrot.slane %v11209, %v11218
      %v11221 = vunpack.c.l.s4 1966171168
      %v11222 = vunpack.c.0.s8 %v11221
      %v11223 = vlaneseq
      %v11224 = vshrl.u32 %v11223, 7
      %v11225 = vsub.s32 %v11222, %v11224
      %v11226 = vrot.slane %v11210, %v11225
      %v11228 = vunpack.c.l.s4 1966171168
      %v11229 = vunpack.c.0.s8 %v11228
      %v11230 = vlaneseq
      %v11231 = vshrl.u32 %v11230, 7
      %v11232 = vsub.s32 %v11229, %v11231
      %v11233 = vrot.slane %v11211, %v11232
      %v11235 = vunpack.c.l.s4 1966171168
      %v11236 = vunpack.c.0.s8 %v11235
      %v11237 = vlaneseq
      %v11238 = vshrl.u32 %v11237, 7
      %v11239 = vsub.s32 %v11236, %v11238
      %v11240 = vrot.slane %v11212, %v11239
      %v11241 = vcombine.low %v11219, %v11226
      %v11242 = vcombine.low %v11233, %v11240
      %v11244 = vunpack.c.l.s4 1966171168
      %v11245 = vunpack.c.0.s8 %v11244
      %v11246 = vlaneseq
      %v11247 = vshrl.u32 %v11246, 7
      %v11248 = vsub.s32 %v11245, %v11247
      %v11249 = vrot.slane %v11241, %v11248
      %v11251 = vunpack.c.l.s4 1966171168
      %v11252 = vunpack.c.0.s8 %v11251
      %v11253 = vlaneseq
      %v11254 = vshrl.u32 %v11253, 7
      %v11255 = vsub.s32 %v11252, %v11254
      %v11256 = vrot.slane %v11242, %v11255
      %v11257 = vcombine.low %v11249, %v11256
      %v11258 = vcombine.low %v9422, %v9405
      %v11259 = vcombine.low %v9419, %v9421
      %v11260 = vcombine.low %v9423, %v9447
      %v11261 = vcombine.low %v9461, %v9469
      %v11263 = vunpack.c.l.s4 1966171168
      %v11264 = vunpack.c.0.s8 %v11263
      %v11265 = vlaneseq
      %v11266 = vshrl.u32 %v11265, 7
      %v11267 = vsub.s32 %v11264, %v11266
      %v11268 = vrot.slane %v11258, %v11267
      %v11270 = vunpack.c.l.s4 1966171168
      %v11271 = vunpack.c.0.s8 %v11270
      %v11272 = vlaneseq
      %v11273 = vshrl.u32 %v11272, 7
      %v11274 = vsub.s32 %v11271, %v11273
      %v11275 = vrot.slane %v11259, %v11274
      %v11277 = vunpack.c.l.s4 1966171168
      %v11278 = vunpack.c.0.s8 %v11277
      %v11279 = vlaneseq
      %v11280 = vshrl.u32 %v11279, 7
      %v11281 = vsub.s32 %v11278, %v11280
      %v11282 = vrot.slane %v11260, %v11281
      %v11284 = vunpack.c.l.s4 1966171168
      %v11285 = vunpack.c.0.s8 %v11284
      %v11286 = vlaneseq
      %v11287 = vshrl.u32 %v11286, 7
      %v11288 = vsub.s32 %v11285, %v11287
      %v11289 = vrot.slane %v11261, %v11288
      %v11290 = vcombine.low %v11268, %v11275
      %v11291 = vcombine.low %v11282, %v11289
      %v11293 = vunpack.c.l.s4 1966171168
      %v11294 = vunpack.c.0.s8 %v11293
      %v11295 = vlaneseq
      %v11296 = vshrl.u32 %v11295, 7
      %v11297 = vsub.s32 %v11294, %v11296
      %v11298 = vrot.slane %v11290, %v11297
      %v11300 = vunpack.c.l.s4 1966171168
      %v11301 = vunpack.c.0.s8 %v11300
      %v11302 = vlaneseq
      %v11303 = vshrl.u32 %v11302, 7
      %v11304 = vsub.s32 %v11301, %v11303
      %v11305 = vrot.slane %v11291, %v11304
      %v11306 = vcombine.low %v11298, %v11305
      %v11308 = vunpack.c.l.s4 1966171168
      %v11309 = vunpack.c.0.s8 %v11308
      %v11310 = vlaneseq
      %v11311 = vshrl.u32 %v11310, 7
      %v11312 = vsub.s32 %v11309, %v11311
      %v11313 = vrot.slane %v9471, %v11312
      %v11315 = vunpack.c.l.s4 1966171168
      %v11316 = vunpack.c.0.s8 %v11315
      %v11317 = vlaneseq
      %v11318 = vshrl.u32 %v11317, 7
      %v11319 = vsub.s32 %v11316, %v11318
      %v11320 = vrot.slane %v11313, %v11319
      %v11321 = vcombine.low %v9454, %v9468
      %v11322 = vcombine.low %v9470, %v9472
      %v11323 = vcombine.low %v9496, %v9510
      %v11324 = vcombine.low %v9518, %v9520
      %v11326 = vunpack.c.l.s4 1966171168
      %v11327 = vunpack.c.0.s8 %v11326
      %v11328 = vlaneseq
      %v11329 = vshrl.u32 %v11328, 7
      %v11330 = vsub.s32 %v11327, %v11329
      %v11331 = vrot.slane %v11321, %v11330
      %v11333 = vunpack.c.l.s4 1966171168
      %v11334 = vunpack.c.0.s8 %v11333
      %v11335 = vlaneseq
      %v11336 = vshrl.u32 %v11335, 7
      %v11337 = vsub.s32 %v11334, %v11336
      %v11338 = vrot.slane %v11322, %v11337
      %v11340 = vunpack.c.l.s4 1966171168
      %v11341 = vunpack.c.0.s8 %v11340
      %v11342 = vlaneseq
      %v11343 = vshrl.u32 %v11342, 7
      %v11344 = vsub.s32 %v11341, %v11343
      %v11345 = vrot.slane %v11323, %v11344
      %v11347 = vunpack.c.l.s4 1966171168
      %v11348 = vunpack.c.0.s8 %v11347
      %v11349 = vlaneseq
      %v11350 = vshrl.u32 %v11349, 7
      %v11351 = vsub.s32 %v11348, %v11350
      %v11352 = vrot.slane %v11324, %v11351
      %v11353 = vcombine.low %v11331, %v11338
      %v11354 = vcombine.low %v11345, %v11352
      %v11356 = vunpack.c.l.s4 1966171168
      %v11357 = vunpack.c.0.s8 %v11356
      %v11358 = vlaneseq
      %v11359 = vshrl.u32 %v11358, 7
      %v11360 = vsub.s32 %v11357, %v11359
      %v11361 = vrot.slane %v11353, %v11360
      %v11363 = vunpack.c.l.s4 1966171168
      %v11364 = vunpack.c.0.s8 %v11363
      %v11365 = vlaneseq
      %v11366 = vshrl.u32 %v11365, 7
      %v11367 = vsub.s32 %v11364, %v11366
      %v11368 = vrot.slane %v11354, %v11367
      %v11369 = vcombine.low %v11361, %v11368
      %v11370 = vcombine.low %v9503, %v9517
      %v11371 = vcombine.low %v9519, %v9521
      %v11372 = vcombine.low %v9545, %v9559
      %v11373 = vcombine.low %v9567, %v9569
      %v11375 = vunpack.c.l.s4 1966171168
      %v11376 = vunpack.c.0.s8 %v11375
      %v11377 = vlaneseq
      %v11378 = vshrl.u32 %v11377, 7
      %v11379 = vsub.s32 %v11376, %v11378
      %v11380 = vrot.slane %v11370, %v11379
      %v11382 = vunpack.c.l.s4 1966171168
      %v11383 = vunpack.c.0.s8 %v11382
      %v11384 = vlaneseq
      %v11385 = vshrl.u32 %v11384, 7
      %v11386 = vsub.s32 %v11383, %v11385
      %v11387 = vrot.slane %v11371, %v11386
      %v11389 = vunpack.c.l.s4 1966171168
      %v11390 = vunpack.c.0.s8 %v11389
      %v11391 = vlaneseq
      %v11392 = vshrl.u32 %v11391, 7
      %v11393 = vsub.s32 %v11390, %v11392
      %v11394 = vrot.slane %v11372, %v11393
      %v11396 = vunpack.c.l.s4 1966171168
      %v11397 = vunpack.c.0.s8 %v11396
      %v11398 = vlaneseq
      %v11399 = vshrl.u32 %v11398, 7
      %v11400 = vsub.s32 %v11397, %v11399
      %v11401 = vrot.slane %v11373, %v11400
      %v11402 = vcombine.low %v11380, %v11387
      %v11403 = vcombine.low %v11394, %v11401
      %v11405 = vunpack.c.l.s4 1966171168
      %v11406 = vunpack.c.0.s8 %v11405
      %v11407 = vlaneseq
      %v11408 = vshrl.u32 %v11407, 7
      %v11409 = vsub.s32 %v11406, %v11408
      %v11410 = vrot.slane %v11402, %v11409
      %v11412 = vunpack.c.l.s4 1966171168
      %v11413 = vunpack.c.0.s8 %v11412
      %v11414 = vlaneseq
      %v11415 = vshrl.u32 %v11414, 7
      %v11416 = vsub.s32 %v11413, %v11415
      %v11417 = vrot.slane %v11403, %v11416
      %v11418 = vcombine.low %v11410, %v11417
      %v11420 = vunpack.c.l.s4 1966171168
      %v11421 = vunpack.c.0.s8 %v11420
      %v11422 = vlaneseq
      %v11423 = vshrl.u32 %v11422, 7
      %v11424 = vsub.s32 %v11421, %v11423
      %v11425 = vrot.slane %v9552, %v11424
      %v11427 = vunpack.c.l.s4 1966171168
      %v11428 = vunpack.c.0.s8 %v11427
      %v11429 = vlaneseq
      %v11430 = vshrl.u32 %v11429, 7
      %v11431 = vsub.s32 %v11428, %v11430
      %v11432 = vrot.slane %v11425, %v11431
      %v11433 = vcombine.low %v9566, %v9568
      %v11434 = vcombine.low %v9570, %v9594
      %v11435 = vcombine.low %v9608, %v9616
      %v11436 = vcombine.low %v9618, %v9601
      %v11438 = vunpack.c.l.s4 1966171168
      %v11439 = vunpack.c.0.s8 %v11438
      %v11440 = vlaneseq
      %v11441 = vshrl.u32 %v11440, 7
      %v11442 = vsub.s32 %v11439, %v11441
      %v11443 = vrot.slane %v11433, %v11442
      %v11445 = vunpack.c.l.s4 1966171168
      %v11446 = vunpack.c.0.s8 %v11445
      %v11447 = vlaneseq
      %v11448 = vshrl.u32 %v11447, 7
      %v11449 = vsub.s32 %v11446, %v11448
      %v11450 = vrot.slane %v11434, %v11449
      %v11452 = vunpack.c.l.s4 1966171168
      %v11453 = vunpack.c.0.s8 %v11452
      %v11454 = vlaneseq
      %v11455 = vshrl.u32 %v11454, 7
      %v11456 = vsub.s32 %v11453, %v11455
      %v11457 = vrot.slane %v11435, %v11456
      %v11459 = vunpack.c.l.s4 1966171168
      %v11460 = vunpack.c.0.s8 %v11459
      %v11461 = vlaneseq
      %v11462 = vshrl.u32 %v11461, 7
      %v11463 = vsub.s32 %v11460, %v11462
      %v11464 = vrot.slane %v11436, %v11463
      %v11465 = vcombine.low %v11443, %v11450
      %v11466 = vcombine.low %v11457, %v11464
      %v11468 = vunpack.c.l.s4 1966171168
      %v11469 = vunpack.c.0.s8 %v11468
      %v11470 = vlaneseq
      %v11471 = vshrl.u32 %v11470, 7
      %v11472 = vsub.s32 %v11469, %v11471
      %v11473 = vrot.slane %v11465, %v11472
      %v11475 = vunpack.c.l.s4 1966171168
      %v11476 = vunpack.c.0.s8 %v11475
      %v11477 = vlaneseq
      %v11478 = vshrl.u32 %v11477, 7
      %v11479 = vsub.s32 %v11476, %v11478
      %v11480 = vrot.slane %v11466, %v11479
      %v11481 = vcombine.low %v11473, %v11480
      %v11482 = vcombine.low %v9615, %v9617
      %v11483 = vcombine.low %v9619, %v9643
      %v11484 = vcombine.low %v9657, %v9665
      %v11485 = vcombine.low %v9667, %v9650
      %v11487 = vunpack.c.l.s4 1966171168
      %v11488 = vunpack.c.0.s8 %v11487
      %v11489 = vlaneseq
      %v11490 = vshrl.u32 %v11489, 7
      %v11491 = vsub.s32 %v11488, %v11490
      %v11492 = vrot.slane %v11482, %v11491
      %v11494 = vunpack.c.l.s4 1966171168
      %v11495 = vunpack.c.0.s8 %v11494
      %v11496 = vlaneseq
      %v11497 = vshrl.u32 %v11496, 7
      %v11498 = vsub.s32 %v11495, %v11497
      %v11499 = vrot.slane %v11483, %v11498
      %v11501 = vunpack.c.l.s4 1966171168
      %v11502 = vunpack.c.0.s8 %v11501
      %v11503 = vlaneseq
      %v11504 = vshrl.u32 %v11503, 7
      %v11505 = vsub.s32 %v11502, %v11504
      %v11506 = vrot.slane %v11484, %v11505
      %v11508 = vunpack.c.l.s4 1966171168
      %v11509 = vunpack.c.0.s8 %v11508
      %v11510 = vlaneseq
      %v11511 = vshrl.u32 %v11510, 7
      %v11512 = vsub.s32 %v11509, %v11511
      %v11513 = vrot.slane %v11485, %v11512
      %v11514 = vcombine.low %v11492, %v11499
      %v11515 = vcombine.low %v11506, %v11513
      %v11517 = vunpack.c.l.s4 1966171168
      %v11518 = vunpack.c.0.s8 %v11517
      %v11519 = vlaneseq
      %v11520 = vshrl.u32 %v11519, 7
      %v11521 = vsub.s32 %v11518, %v11520
      %v11522 = vrot.slane %v11514, %v11521
      %v11524 = vunpack.c.l.s4 1966171168
      %v11525 = vunpack.c.0.s8 %v11524
      %v11526 = vlaneseq
      %v11527 = vshrl.u32 %v11526, 7
      %v11528 = vsub.s32 %v11525, %v11527
      %v11529 = vrot.slane %v11515, %v11528
      %v11530 = vcombine.low %v11522, %v11529
      %v11532 = vunpack.c.l.s4 1966171168
      %v11533 = vunpack.c.0.s8 %v11532
      %v11534 = vlaneseq
      %v11535 = vshrl.u32 %v11534, 7
      %v11536 = vsub.s32 %v11533, %v11535
      %v11537 = vrot.slane %v9664, %v11536
      %v11539 = vunpack.c.l.s4 1966171168
      %v11540 = vunpack.c.0.s8 %v11539
      %v11541 = vlaneseq
      %v11542 = vshrl.u32 %v11541, 7
      %v11543 = vsub.s32 %v11540, %v11542
      %v11544 = vrot.slane %v11537, %v11543
      %v11545 = vcombine.low %v9666, %v9668
      %v11546 = vcombine.low %v9692, %v9706
      %v11547 = vcombine.low %v9714, %v9716
      %v11548 = vcombine.low %v9699, %v9713
      %v11550 = vunpack.c.l.s4 1966171168
      %v11551 = vunpack.c.0.s8 %v11550
      %v11552 = vlaneseq
      %v11553 = vshrl.u32 %v11552, 7
      %v11554 = vsub.s32 %v11551, %v11553
      %v11555 = vrot.slane %v11545, %v11554
      %v11557 = vunpack.c.l.s4 1966171168
      %v11558 = vunpack.c.0.s8 %v11557
      %v11559 = vlaneseq
      %v11560 = vshrl.u32 %v11559, 7
      %v11561 = vsub.s32 %v11558, %v11560
      %v11562 = vrot.slane %v11546, %v11561
      %v11564 = vunpack.c.l.s4 1966171168
      %v11565 = vunpack.c.0.s8 %v11564
      %v11566 = vlaneseq
      %v11567 = vshrl.u32 %v11566, 7
      %v11568 = vsub.s32 %v11565, %v11567
      %v11569 = vrot.slane %v11547, %v11568
      %v11571 = vunpack.c.l.s4 1966171168
      %v11572 = vunpack.c.0.s8 %v11571
      %v11573 = vlaneseq
      %v11574 = vshrl.u32 %v11573, 7
      %v11575 = vsub.s32 %v11572, %v11574
      %v11576 = vrot.slane %v11548, %v11575
      %v11577 = vcombine.low %v11555, %v11562
      %v11578 = vcombine.low %v11569, %v11576
      %v11580 = vunpack.c.l.s4 1966171168
      %v11581 = vunpack.c.0.s8 %v11580
      %v11582 = vlaneseq
      %v11583 = vshrl.u32 %v11582, 7
      %v11584 = vsub.s32 %v11581, %v11583
      %v11585 = vrot.slane %v11577, %v11584
      %v11587 = vunpack.c.l.s4 1966171168
      %v11588 = vunpack.c.0.s8 %v11587
      %v11589 = vlaneseq
      %v11590 = vshrl.u32 %v11589, 7
      %v11591 = vsub.s32 %v11588, %v11590
      %v11592 = vrot.slane %v11578, %v11591
      %v11593 = vcombine.low %v11585, %v11592
      %v11594 = vcombine.low %v9715, %v9717
      %v11595 = vcombine.low %v9741, %v9755
      %v11596 = vcombine.low %v9763, %v9765
      %v11597 = vcombine.low %v9748, %v9762
      %v11599 = vunpack.c.l.s4 1966171168
      %v11600 = vunpack.c.0.s8 %v11599
      %v11601 = vlaneseq
      %v11602 = vshrl.u32 %v11601, 7
      %v11603 = vsub.s32 %v11600, %v11602
      %v11604 = vrot.slane %v11594, %v11603
      %v11606 = vunpack.c.l.s4 1966171168
      %v11607 = vunpack.c.0.s8 %v11606
      %v11608 = vlaneseq
      %v11609 = vshrl.u32 %v11608, 7
      %v11610 = vsub.s32 %v11607, %v11609
      %v11611 = vrot.slane %v11595, %v11610
      %v11613 = vunpack.c.l.s4 1966171168
      %v11614 = vunpack.c.0.s8 %v11613
      %v11615 = vlaneseq
      %v11616 = vshrl.u32 %v11615, 7
      %v11617 = vsub.s32 %v11614, %v11616
      %v11618 = vrot.slane %v11596, %v11617
      %v11620 = vunpack.c.l.s4 1966171168
      %v11621 = vunpack.c.0.s8 %v11620
      %v11622 = vlaneseq
      %v11623 = vshrl.u32 %v11622, 7
      %v11624 = vsub.s32 %v11621, %v11623
      %v11625 = vrot.slane %v11597, %v11624
      %v11626 = vcombine.low %v11604, %v11611
      %v11627 = vcombine.low %v11618, %v11625
      %v11629 = vunpack.c.l.s4 1966171168
      %v11630 = vunpack.c.0.s8 %v11629
      %v11631 = vlaneseq
      %v11632 = vshrl.u32 %v11631, 7
      %v11633 = vsub.s32 %v11630, %v11632
      %v11634 = vrot.slane %v11626, %v11633
      %v11636 = vunpack.c.l.s4 1966171168
      %v11637 = vunpack.c.0.s8 %v11636
      %v11638 = vlaneseq
      %v11639 = vshrl.u32 %v11638, 7
      %v11640 = vsub.s32 %v11637, %v11639
      %v11641 = vrot.slane %v11627, %v11640
      %v11642 = vcombine.low %v11634, %v11641
      %v11644 = vunpack.c.l.s4 1966171168
      %v11645 = vunpack.c.0.s8 %v11644
      %v11646 = vlaneseq
      %v11647 = vshrl.u32 %v11646, 7
      %v11648 = vsub.s32 %v11645, %v11647
      %v11649 = vrot.slane %v9764, %v11648
      %v11651 = vunpack.c.l.s4 1966171168
      %v11652 = vunpack.c.0.s8 %v11651
      %v11653 = vlaneseq
      %v11654 = vshrl.u32 %v11653, 7
      %v11655 = vsub.s32 %v11652, %v11654
      %v11656 = vrot.slane %v11649, %v11655
      %v11657 = vcombine.low %v9766, %v9790
      %v11658 = vcombine.low %v9804, %v9812
      %v11659 = vcombine.low %v9814, %v9797
      %v11660 = vcombine.low %v9811, %v9813
      %v11662 = vunpack.c.l.s4 1966171168
      %v11663 = vunpack.c.0.s8 %v11662
      %v11664 = vlaneseq
      %v11665 = vshrl.u32 %v11664, 7
      %v11666 = vsub.s32 %v11663, %v11665
      %v11667 = vrot.slane %v11657, %v11666
      %v11669 = vunpack.c.l.s4 1966171168
      %v11670 = vunpack.c.0.s8 %v11669
      %v11671 = vlaneseq
      %v11672 = vshrl.u32 %v11671, 7
      %v11673 = vsub.s32 %v11670, %v11672
      %v11674 = vrot.slane %v11658, %v11673
      %v11676 = vunpack.c.l.s4 1966171168
      %v11677 = vunpack.c.0.s8 %v11676
      %v11678 = vlaneseq
      %v11679 = vshrl.u32 %v11678, 7
      %v11680 = vsub.s32 %v11677, %v11679
      %v11681 = vrot.slane %v11659, %v11680
      %v11683 = vunpack.c.l.s4 1966171168
      %v11684 = vunpack.c.0.s8 %v11683
      %v11685 = vlaneseq
      %v11686 = vshrl.u32 %v11685, 7
      %v11687 = vsub.s32 %v11684, %v11686
      %v11688 = vrot.slane %v11660, %v11687
      %v11689 = vcombine.low %v11667, %v11674
      %v11690 = vcombine.low %v11681, %v11688
      %v11692 = vunpack.c.l.s4 1966171168
      %v11693 = vunpack.c.0.s8 %v11692
      %v11694 = vlaneseq
      %v11695 = vshrl.u32 %v11694, 7
      %v11696 = vsub.s32 %v11693, %v11695
      %v11697 = vrot.slane %v11689, %v11696
      %v11699 = vunpack.c.l.s4 1966171168
      %v11700 = vunpack.c.0.s8 %v11699
      %v11701 = vlaneseq
      %v11702 = vshrl.u32 %v11701, 7
      %v11703 = vsub.s32 %v11700, %v11702
      %v11704 = vrot.slane %v11690, %v11703
      %v11705 = vcombine.low %v11697, %v11704
      %v11706 = vcombine.low %v9815, %v9839
      %v11707 = vcombine.low %v9853, %v9861
      %v11708 = vcombine.low %v9863, %v9846
      %v11709 = vcombine.low %v9860, %v9862
      %v11711 = vunpack.c.l.s4 1966171168
      %v11712 = vunpack.c.0.s8 %v11711
      %v11713 = vlaneseq
      %v11714 = vshrl.u32 %v11713, 7
      %v11715 = vsub.s32 %v11712, %v11714
      %v11716 = vrot.slane %v11706, %v11715
      %v11718 = vunpack.c.l.s4 1966171168
      %v11719 = vunpack.c.0.s8 %v11718
      %v11720 = vlaneseq
      %v11721 = vshrl.u32 %v11720, 7
      %v11722 = vsub.s32 %v11719, %v11721
      %v11723 = vrot.slane %v11707, %v11722
      %v11725 = vunpack.c.l.s4 1966171168
      %v11726 = vunpack.c.0.s8 %v11725
      %v11727 = vlaneseq
      %v11728 = vshrl.u32 %v11727, 7
      %v11729 = vsub.s32 %v11726, %v11728
      %v11730 = vrot.slane %v11708, %v11729
      %v11732 = vunpack.c.l.s4 1966171168
      %v11733 = vunpack.c.0.s8 %v11732
      %v11734 = vlaneseq
      %v11735 = vshrl.u32 %v11734, 7
      %v11736 = vsub.s32 %v11733, %v11735
      %v11737 = vrot.slane %v11709, %v11736
      %v11738 = vcombine.low %v11716, %v11723
      %v11739 = vcombine.low %v11730, %v11737
      %v11741 = vunpack.c.l.s4 1966171168
      %v11742 = vunpack.c.0.s8 %v11741
      %v11743 = vlaneseq
      %v11744 = vshrl.u32 %v11743, 7
      %v11745 = vsub.s32 %v11742, %v11744
      %v11746 = vrot.slane %v11738, %v11745
      %v11748 = vunpack.c.l.s4 1966171168
      %v11749 = vunpack.c.0.s8 %v11748
      %v11750 = vlaneseq
      %v11751 = vshrl.u32 %v11750, 7
      %v11752 = vsub.s32 %v11749, %v11751
      %v11753 = vrot.slane %v11739, %v11752
      %v11754 = vcombine.low %v11746, %v11753
      %v11756 = vunpack.c.l.s4 1966171168
      %v11757 = vunpack.c.0.s8 %v11756
      %v11758 = vlaneseq
      %v11759 = vshrl.u32 %v11758, 7
      %v11760 = vsub.s32 %v11757, %v11759
      %v11761 = vrot.slane %v9864, %v11760
      %v11763 = vunpack.c.l.s4 1966171168
      %v11764 = vunpack.c.0.s8 %v11763
      %v11765 = vlaneseq
      %v11766 = vshrl.u32 %v11765, 7
      %v11767 = vsub.s32 %v11764, %v11766
      %v11768 = vrot.slane %v11761, %v11767
      %v11769 = vcombine.low %v9888, %v9902
      %v11770 = vcombine.low %v9910, %v9912
      %v11771 = vcombine.low %v9895, %v9909
      %v11772 = vcombine.low %v9911, %v9913
      %v11774 = vunpack.c.l.s4 1966171168
      %v11775 = vunpack.c.0.s8 %v11774
      %v11776 = vlaneseq
      %v11777 = vshrl.u32 %v11776, 7
      %v11778 = vsub.s32 %v11775, %v11777
      %v11779 = vrot.slane %v11769, %v11778
      %v11781 = vunpack.c.l.s4 1966171168
      %v11782 = vunpack.c.0.s8 %v11781
      %v11783 = vlaneseq
      %v11784 = vshrl.u32 %v11783, 7
      %v11785 = vsub.s32 %v11782, %v11784
      %v11786 = vrot.slane %v11770, %v11785
      %v11788 = vunpack.c.l.s4 1966171168
      %v11789 = vunpack.c.0.s8 %v11788
      %v11790 = vlaneseq
      %v11791 = vshrl.u32 %v11790, 7
      %v11792 = vsub.s32 %v11789, %v11791
      %v11793 = vrot.slane %v11771, %v11792
      %v11795 = vunpack.c.l.s4 1966171168
      %v11796 = vunpack.c.0.s8 %v11795
      %v11797 = vlaneseq
      %v11798 = vshrl.u32 %v11797, 7
      %v11799 = vsub.s32 %v11796, %v11798
      %v11800 = vrot.slane %v11772, %v11799
      %v11801 = vcombine.low %v11779, %v11786
      %v11802 = vcombine.low %v11793, %v11800
      %v11804 = vunpack.c.l.s4 1966171168
      %v11805 = vunpack.c.0.s8 %v11804
      %v11806 = vlaneseq
      %v11807 = vshrl.u32 %v11806, 7
      %v11808 = vsub.s32 %v11805, %v11807
      %v11809 = vrot.slane %v11801, %v11808
      %v11811 = vunpack.c.l.s4 1966171168
      %v11812 = vunpack.c.0.s8 %v11811
      %v11813 = vlaneseq
      %v11814 = vshrl.u32 %v11813, 7
      %v11815 = vsub.s32 %v11812, %v11814
      %v11816 = vrot.slane %v11802, %v11815
      %v11817 = vcombine.low %v11809, %v11816
      %v11818 = vcombine.low %v9937, %v9951
      %v11819 = vcombine.low %v9959, %v9961
      %v11820 = vcombine.low %v9944, %v9958
      %v11821 = vcombine.low %v9960, %v9962
      %v11823 = vunpack.c.l.s4 1966171168
      %v11824 = vunpack.c.0.s8 %v11823
      %v11825 = vlaneseq
      %v11826 = vshrl.u32 %v11825, 7
      %v11827 = vsub.s32 %v11824, %v11826
      %v11828 = vrot.slane %v11818, %v11827
      %v11830 = vunpack.c.l.s4 1966171168
      %v11831 = vunpack.c.0.s8 %v11830
      %v11832 = vlaneseq
      %v11833 = vshrl.u32 %v11832, 7
      %v11834 = vsub.s32 %v11831, %v11833
      %v11835 = vrot.slane %v11819, %v11834
      %v11837 = vunpack.c.l.s4 1966171168
      %v11838 = vunpack.c.0.s8 %v11837
      %v11839 = vlaneseq
      %v11840 = vshrl.u32 %v11839, 7
      %v11841 = vsub.s32 %v11838, %v11840
      %v11842 = vrot.slane %v11820, %v11841
      %v11844 = vunpack.c.l.s4 1966171168
      %v11845 = vunpack.c.0.s8 %v11844
      %v11846 = vlaneseq
      %v11847 = vshrl.u32 %v11846, 7
      %v11848 = vsub.s32 %v11845, %v11847
      %v11849 = vrot.slane %v11821, %v11848
      %v11850 = vcombine.low %v11828, %v11835
      %v11851 = vcombine.low %v11842, %v11849
      %v11853 = vunpack.c.l.s4 1966171168
      %v11854 = vunpack.c.0.s8 %v11853
      %v11855 = vlaneseq
      %v11856 = vshrl.u32 %v11855, 7
      %v11857 = vsub.s32 %v11854, %v11856
      %v11858 = vrot.slane %v11850, %v11857
      %v11860 = vunpack.c.l.s4 1966171168
      %v11861 = vunpack.c.0.s8 %v11860
      %v11862 = vlaneseq
      %v11863 = vshrl.u32 %v11862, 7
      %v11864 = vsub.s32 %v11861, %v11863
      %v11865 = vrot.slane %v11851, %v11864
      %v11866 = vcombine.low %v11858, %v11865
      %v11868 = vunpack.c.l.s4 1966171168
      %v11869 = vunpack.c.0.s8 %v11868
      %v11870 = vlaneseq
      %v11871 = vshrl.u32 %v11870, 7
      %v11872 = vsub.s32 %v11869, %v11871
      %v11873 = vrot.slane %v9976, %v11872
      %v11875 = vunpack.c.l.s4 1966171168
      %v11876 = vunpack.c.0.s8 %v11875
      %v11877 = vlaneseq
      %v11878 = vshrl.u32 %v11877, 7
      %v11879 = vsub.s32 %v11876, %v11878
      %v11880 = vrot.slane %v11873, %v11879
      %11932 = vst [vmem:[%s286] sm:$0xff] %v10025
      %11933 = vst [vmem:[%s286 + $0x8] sm:$0xff] %v10074
      %11934 = vst [vmem:[%s286 + $0x10] sm:$0x1] %v10088
      %11935 = vst [vmem:[%s286 + $0x18] sm:$0xff] %v10137
      %11936 = vst [vmem:[%s286 + $0x20] sm:$0xff] %v10186
      %11937 = vst [vmem:[%s286 + $0x28] sm:$0x1] %v10200
      %11938 = vst [vmem:[%s286 + $0x30] sm:$0xff] %v10249
      %11939 = vst [vmem:[%s286 + $0x38] sm:$0xff] %v10298
      %11940 = vst [vmem:[%s286 + $0x40] sm:$0x1] %v10312
      %11941 = vst [vmem:[%s286 + $0x48] sm:$0xff] %v10361
      %11942 = vst [vmem:[%s286 + $0x50] sm:$0xff] %v10410
      %11943 = vst [vmem:[%s286 + $0x58] sm:$0x1] %v10424
      %11944 = vst [vmem:[%s286 + $0x60] sm:$0xff] %v10473
      %11945 = vst [vmem:[%s286 + $0x68] sm:$0xff] %v10522
      %11946 = vst [vmem:[%s286 + $0x70] sm:$0x1] %v10536
      %11947 = vst [vmem:[%s286 + $0x78] sm:$0xff] %v10585
      %11948 = vst [vmem:[%s286 + $0x80] sm:$0xff] %v10634
      %11949 = vst [vmem:[%s286 + $0x88] sm:$0x1] %v10648
      %11950 = vst [vmem:[%s286 + $0x90] sm:$0xff] %v10697
      %11951 = vst [vmem:[%s286 + $0x98] sm:$0xff] %v10746
      %11952 = vst [vmem:[%s286 + $0xa0] sm:$0x1] %v10760
      %11953 = vst [vmem:[%s286 + $0xa8] sm:$0xff] %v10809
      %11954 = vst [vmem:[%s286 + $0xb0] sm:$0xff] %v10858
      %11955 = vst [vmem:[%s286 + $0xb8] sm:$0x1] %v10872
      %11956 = vst [vmem:[%s286 + $0xc0] sm:$0xff] %v10921
      %11957 = vst [vmem:[%s286 + $0xc8] sm:$0xff] %v10970
      %11958 = vst [vmem:[%s286 + $0xd0] sm:$0x1] %v10984
      %11959 = vst [vmem:[%s286 + $0xd8] sm:$0xff] %v11033
      %11960 = vst [vmem:[%s286 + $0xe0] sm:$0xff] %v11082
      %11961 = vst [vmem:[%s286 + $0xe8] sm:$0x1] %v11096
      %11962 = vst [vmem:[%s286 + $0xf0] sm:$0xff] %v11145
      %11963 = vst [vmem:[%s286 + $0xf8] sm:$0xff] %v11194
      %11964 = vst [vmem:[%s286 + $0x100] sm:$0x1] %v11208
      %11965 = vst [vmem:[%s286 + $0x108] sm:$0xff] %v11257
      %11966 = vst [vmem:[%s286 + $0x110] sm:$0xff] %v11306
      %11967 = vst [vmem:[%s286 + $0x118] sm:$0x1] %v11320
      %11968 = vst [vmem:[%s286 + $0x120] sm:$0xff] %v11369
      %11969 = vst [vmem:[%s286 + $0x128] sm:$0xff] %v11418
      %11970 = vst [vmem:[%s286 + $0x130] sm:$0x1] %v11432
      %11971 = vst [vmem:[%s286 + $0x138] sm:$0xff] %v11481
      %11972 = vst [vmem:[%s286 + $0x140] sm:$0xff] %v11530
      %11973 = vst [vmem:[%s286 + $0x148] sm:$0x1] %v11544
      %11974 = vst [vmem:[%s286 + $0x150] sm:$0xff] %v11593
      %11975 = vst [vmem:[%s286 + $0x158] sm:$0xff] %v11642
      %11976 = vst [vmem:[%s286 + $0x160] sm:$0x1] %v11656
      %11977 = vst [vmem:[%s286 + $0x168] sm:$0xff] %v11705
      %11978 = vst [vmem:[%s286 + $0x170] sm:$0xff] %v11754
      %11979 = vst [vmem:[%s286 + $0x178] sm:$0x1] %v11768
      %11980 = vst [vmem:[%s286 + $0x180] sm:$0xff] %v11817
      %11981 = vst [vmem:[%s286 + $0x188] sm:$0xff] %v11866
      %11982 = vst [vmem:[%s286 + $0x190] sm:$0x1] %v11880
      %s11983 = smul.u32 17, %s19
      %p11984 = scmp.lt.s32.totalorder %s18, 1
      %s11985 = scalar_select %p11984, %s18, 1
      %p11986 = scmp.lt.s32.totalorder %s11983, 16
      %s11987 = scalar_select %p11986, %s11983, 16
      %s11988 = smul.addr %s11987, 3
      %s11989 = smul.addr %s11985, 51
      %s11990 = sadd.s32 %s11988, %s11989
      %s11991 = smul.addr %s11990, 8
      %s11992 = scalar_lea.vmem %s3, %s11991
      // Predicated region
      $region33: #{deconv_forward.1} parent=31 // pred_check
        %p11993 = pneg %p127
      $region34: #{deconv_forward.1} parent=31 // pred_check_branch
        %11995 = sbr.rel (%p11993) target = $region36
      $region35: #{deconv_forward.1} parent=31 // pred_region
        %s11996 = smul.u32 17, %s19
      $region36: #{deconv_forward.1} parent=31 // pred_fallthru
        _
    $region32: #{deconv_forward.1} parent=5 // pred_fallthru
      _
    %p11997 = scmp.le.s32.totalorder 2, %s9
    // Predicated region
    $region37: #{deconv_forward.1} parent=5 // pred_check
      %p11998 = pneg %p11997
    $region38: #{deconv_forward.1} parent=5 // pred_check_branch
      %12000 = sbr.rel (%p11998) target = $region40
    $region39: #{deconv_forward.1} parent=5 // pred_region
      %s12001 = ssub.s32 %s9, 2
      // Predicated region
      $region41: #{deconv_forward.1} parent=39 // pred_check
        %p12002 = pneg %p133
      $region42: #{deconv_forward.1} parent=39 // pred_check_branch
        %12004 = sbr.rel (%p12002) target = $region44
      $region43: #{deconv_forward.1} parent=39 // pred_region
        %s12005 = smul.u32 17, %s21
        %p12006 = scmp.lt.s32.totalorder %s20, 1
        %s12007 = scalar_select %p12006, %s20, 1
        %p12008 = scmp.lt.s32.totalorder %s12005, 16
        %s12009 = scalar_select %p12008, %s12005, 16
        %s12010 = smul.addr %s12009, 3
        %s12011 = smul.addr %s12007, 51
        %s12012 = sadd.s32 %s12010, %s12011
        %s12013 = smul.addr %s12012, 8
        %s12014 = scalar_lea.vmem %s3, %s12013
      $region44: #{deconv_forward.1} parent=39 // pred_fallthru
        _
    $region40: #{deconv_forward.1} parent=5 // pred_fallthru
      _
  $region6: #{deconv_forward.1} parent=0 // loop_footer
    %s13 = sadd.s32 1, %s9
  $region7: #{deconv_forward.1} parent=0 // loop_footer_branch
    %8 = sbr.rel target = $region3
  $region8: #{deconv_forward.1} parent=0 // loop_exit
    _

</llo_original>
